<compile_context>
chip_gen: v6e
topology: v6e:2x2x1
jax: 0.10.0
libtpu: 0.0.40
codegen_flags: <defaults>
</compile_context>

<pallas_src>
import functools
import math

import jax
import jax.numpy as jnp
from jax.experimental import pallas as pl
from jax.experimental.pallas import tpu as pltpu


# ---------------------------------------------------------------------------
# In-kernel helpers (operate on values already loaded from VMEM refs)
# ---------------------------------------------------------------------------

def _layer_norm(z, g, b):
    """LayerNorm over the last dim, eps=1e-5 (matches nn.LayerNorm)."""
    mu = jnp.mean(z, axis=-1, keepdims=True)
    c = z - mu
    var = jnp.mean(c * c, axis=-1, keepdims=True)
    return c * jax.lax.rsqrt(var + 1e-5) * g + b


def _split_heads(x2d, batch, seq, n_heads, d_head):
    """(B*S, H*dh) -> (B*H, S, dh).

    Static lane slices + a leading-axis stack (no in-kernel vector transpose),
    then trivial leading-dim reshapes.
    """
    x3 = x2d.reshape(batch, seq, n_heads * d_head)
    heads = [x3[:, :, h * d_head:(h + 1) * d_head] for h in range(n_heads)]
    return jnp.stack(heads, axis=1).reshape(batch * n_heads, seq, d_head)


def _merge_heads(x3, batch, seq, n_heads, d_head):
    """(B*H, S, dh) -> (B*S, H*dh)."""
    x4 = x3.reshape(batch, n_heads, seq, d_head)
    heads = [x4[:, h, :, :] for h in range(n_heads)]
    return jnp.concatenate(heads, axis=-1).reshape(batch * seq, n_heads * d_head)


def _attend(q_h, k_h, v_h, w_out, b_out, batch, sq, sk, n_heads, d_head):
    """Scaled-dot-product attention batched over B*H + output projection."""
    s = jnp.einsum("zqd,zkd->zqk", q_h, k_h, preferred_element_type=jnp.float32)
    s = s * (1.0 / math.sqrt(d_head))
    # TODO(synk): masking hook would go here (masks are None in the reference).
    s = s - jnp.max(s, axis=-1, keepdims=True)
    e = jnp.exp(s)
    p = e * pl.reciprocal(jnp.sum(e, axis=-1, keepdims=True), approx=False)
    o = jnp.einsum("zqk,zkd->zqd", p, v_h, preferred_element_type=jnp.float32)
    attn = jnp.dot(_merge_heads(o, batch, sq, n_heads, d_head), w_out,
                   preferred_element_type=jnp.float32) + b_out
    return attn, p.reshape(batch, n_heads, sq, sk)


def _ffn(x2d, w1, w2):
    """relu(x @ W1) @ W2 (both linears bias-free)."""
    h = jnp.maximum(jnp.dot(x2d, w1, preferred_element_type=jnp.float32), 0.0)
    return jnp.dot(h, w2, preferred_element_type=jnp.float32)


# ---------------------------------------------------------------------------
# Single fused kernel: full encoder stack + full decoder stack in one call.
# `memory` stays resident in VMEM between the two stacks.
# ---------------------------------------------------------------------------

def _transformer_kernel(*refs, n_heads, n_enc_layers, n_dec_layers):
    (x_ref, y_ref,
     e_wqkv_ref, e_bqkv_ref, e_wo_ref, e_bo_ref, e_w1_ref, e_w2_ref,
     e_g1_ref, e_b1_ref, e_g2_ref, e_b2_ref,
     s_wqkv_ref, s_bqkv_ref, s_wo_ref, s_bo_ref,
     c_wq_ref, c_bq_ref, c_wkv_ref, c_bkv_ref, c_wo_ref, c_bo_ref,
     d_w1_ref, d_w2_ref,
     d_g1_ref, d_b1_ref, d_g2_ref, d_b2_ref, d_g3_ref, d_b3_ref) = refs[:30]
    mem_ref = refs[30]
    out_ref = refs[31]
    enc_score_refs = refs[32:32 + n_enc_layers]
    self_score_refs = refs[32 + n_enc_layers:32 + n_enc_layers + n_dec_layers]
    cross_score_refs = refs[32 + n_enc_layers + n_dec_layers:
                            32 + n_enc_layers + 2 * n_dec_layers]

    B, Sx, D = x_ref.shape
    Sy = y_ref.shape[1]
    H = n_heads
    dh = D // H

    # -------------------- encoder stack --------------------
    x = x_ref[...].reshape(B * Sx, D)      # fold batch*seq into the matmul M dim
    e_wqkv = e_wqkv_ref[...]; e_bqkv = e_bqkv_ref[...]
    e_wo = e_wo_ref[...];     e_bo = e_bo_ref[...]
    e_w1 = e_w1_ref[...];     e_w2 = e_w2_ref[...]
    e_g1 = e_g1_ref[...];     e_b1 = e_b1_ref[...]
    e_g2 = e_g2_ref[...];     e_b2 = e_b2_ref[...]

    for layer in range(n_enc_layers):      # static unroll; weights stay in vregs/VMEM
        qkv = jnp.dot(x, e_wqkv, preferred_element_type=jnp.float32) + e_bqkv
        q_h = _split_heads(qkv[:, 0 * D:1 * D], B, Sx, H, dh)
        k_h = _split_heads(qkv[:, 1 * D:2 * D], B, Sx, H, dh)
        v_h = _split_heads(qkv[:, 2 * D:3 * D], B, Sx, H, dh)
        attn, score = _attend(q_h, k_h, v_h, e_wo, e_bo, B, Sx, Sx, H, dh)
        enc_score_refs[layer][...] = score
        res = _layer_norm(x + attn, e_g1, e_b1)
        # NOTE: the reference adds the layer INPUT x (not `res`) here.
        x = _layer_norm(x + _ffn(res, e_w1, e_w2), e_g2, e_b2)

    mem_ref[...] = x.reshape(B, Sx, D)
    mem = x                                 # (B*Sx, D) stays in VMEM for the decoder

    # -------------------- decoder stack --------------------
    y = y_ref[...].reshape(B * Sy, D)
    s_wqkv = s_wqkv_ref[...]; s_bqkv = s_bqkv_ref[...]
    s_wo = s_wo_ref[...];     s_bo = s_bo_ref[...]
    c_wq = c_wq_ref[...];     c_bq = c_bq_ref[...]
    c_wkv = c_wkv_ref[...];   c_bkv = c_bkv_ref[...]
    c_wo = c_wo_ref[...];     c_bo = c_bo_ref[...]
    d_w1 = d_w1_ref[...];     d_w2 = d_w2_ref[...]
    d_g1 = d_g1_ref[...]; d_b1 = d_b1_ref[...]
    d_g2 = d_g2_ref[...]; d_b2 = d_b2_ref[...]
    d_g3 = d_g3_ref[...]; d_b3 = d_b3_ref[...]

    # Cross-attention K/V of `memory` is identical for every parameter-shared
    # layer -> project + head-split once, reuse in all layers.
    kv_mem = jnp.dot(mem, c_wkv, preferred_element_type=jnp.float32) + c_bkv
    k_mem = _split_heads(kv_mem[:, 0 * D:1 * D], B, Sx, H, dh)
    v_mem = _split_heads(kv_mem[:, 1 * D:2 * D], B, Sx, H, dh)

    for layer in range(n_dec_layers):
        # ---- self attention (no causal mask: reference passes mask=None) ----
        qkv = jnp.dot(y, s_wqkv, preferred_element_type=jnp.float32) + s_bqkv
        q_h = _split_heads(qkv[:, 0 * D:1 * D], B, Sy, H, dh)
        k_h = _split_heads(qkv[:, 1 * D:2 * D], B, Sy, H, dh)
        v_h = _split_heads(qkv[:, 2 * D:3 * D], B, Sy, H, dh)
        self_attn, self_score = _attend(q_h, k_h, v_h, s_wo, s_bo,
                                        B, Sy, Sy, H, dh)
        self_score_refs[layer][...] = self_score
        r1 = _layer_norm(y + self_attn, d_g1, d_b1)

        # ---- cross attention ----
        qc = jnp.dot(r1, c_wq, preferred_element_type=jnp.float32) + c_bq
        qc_h = _split_heads(qc, B, Sy, H, dh)
        cross_attn, cross_score = _attend(qc_h, k_mem, v_mem, c_wo, c_bo,
                                          B, Sy, Sx, H, dh)
        cross_score_refs[layer][...] = cross_score
        r2 = _layer_norm(r1 + cross_attn, d_g2, d_b2)

        # ---- FFN ----
        y = _layer_norm(r2 + _ffn(r2, d_w1, d_w2), d_g3, d_b3)

    out_ref[...] = y.reshape(B, Sy, D)


# ---------------------------------------------------------------------------
# Python wrapper: one pallas_call for the whole forward pass
# ---------------------------------------------------------------------------

def transformer_fwd(x, y, params, *, n_heads, n_enc_layers, n_dec_layers):
    B, Sx, D = x.shape
    Sy = y.shape[1]
    pe, pd = params["enc"], params["dec"]
    d_fc = pe["w1"].shape[1]

    operands = (x, y,
                pe["wqkv"], pe["bqkv"], pe["wo"], pe["bo"], pe["w1"], pe["w2"],
                pe["ln1_g"], pe["ln1_b"], pe["ln2_g"], pe["ln2_b"],
                pd["self_wqkv"], pd["self_bqkv"], pd["self_wo"], pd["self_bo"],
                pd["cross_wq"], pd["cross_bq"], pd["cross_wkv"], pd["cross_bkv"],
                pd["cross_wo"], pd["cross_bo"],
                pd["w1"], pd["w2"],
                pd["ln1_g"], pd["ln1_b"], pd["ln2_g"], pd["ln2_b"],
                pd["ln3_g"], pd["ln3_b"])

    out_shape = ((jax.ShapeDtypeStruct((B, Sx, D), jnp.float32),
                  jax.ShapeDtypeStruct((B, Sy, D), jnp.float32))
                 + tuple(jax.ShapeDtypeStruct((B, n_heads, Sx, Sx), jnp.float32)
                         for _ in range(n_enc_layers))
                 + tuple(jax.ShapeDtypeStruct((B, n_heads, Sy, Sy), jnp.float32)
                         for _ in range(n_dec_layers))
                 + tuple(jax.ShapeDtypeStruct((B, n_heads, Sy, Sx), jnp.float32)
                         for _ in range(n_dec_layers)))

    enc_flops = n_enc_layers * (2 * B * Sx * D * 3 * D       # fused QKV projection
                                + 4 * B * Sx * Sx * D        # QK^T + P@V
                                + 2 * B * Sx * D * D         # output projection
                                + 4 * B * Sx * D * d_fc)     # FFN
    dec_flops = (2 * B * Sx * D * 2 * D                      # hoisted memory K/V proj
                 + n_dec_layers * (2 * B * Sy * D * 3 * D    # self QKV
                                   + 4 * B * Sy * Sy * D     # self QK^T + P@V
                                   + 2 * B * Sy * D * D      # self out proj
                                   + 2 * B * Sy * D * D      # cross Q proj
                                   + 4 * B * Sy * Sx * D     # cross QK^T + P@V
                                   + 2 * B * Sy * D * D      # cross out proj
                                   + 4 * B * Sy * D * d_fc)) # FFN
    transcend = (n_enc_layers * B * n_heads * Sx * Sx
                 + n_dec_layers * B * n_heads * Sy * (Sy + Sx))
    out_bytes = (B * Sx * D + B * Sy * D
                 + n_enc_layers * B * n_heads * Sx * Sx
                 + n_dec_layers * B * n_heads * Sy * (Sy + Sx)) * 4
    bytes_acc = sum(int(a.size) * 4 for a in operands) + out_bytes

    outs = pl.pallas_call(
        functools.partial(_transformer_kernel, n_heads=n_heads,
                          n_enc_layers=n_enc_layers, n_dec_layers=n_dec_layers),
        out_shape=out_shape,
        compiler_params=pltpu.CompilerParams(vmem_limit_bytes=32 * 1024 * 1024),
        cost_estimate=pl.CostEstimate(
            flops=int(enc_flops + dec_flops),
            transcendentals=int(transcend),
            bytes_accessed=int(bytes_acc)),
    )(*operands)

    memory = outs[0]
    out = outs[1]
    x_self_scores = list(outs[2:2 + n_enc_layers])
    y_self_scores = list(outs[2 + n_enc_layers:2 + n_enc_layers + n_dec_layers])
    y_cross_scores = list(outs[2 + n_enc_layers + n_dec_layers:])
    return memory, out, [x_self_scores, y_self_scores, y_cross_scores]


# ---------------------------------------------------------------------------
# Deterministic parameter init (matches shapes / init styles of the module)
# ---------------------------------------------------------------------------

def _xavier_uniform(key, shape):
    fan_in, fan_out = shape
    a = math.sqrt(6.0 / (fan_in + fan_out))
    return jax.random.uniform(key, shape, jnp.float32, -a, a)


def _xavier_normal_bias(key, d):
    std = math.sqrt(2.0 / (d + d))          # xavier_normal_ on a (1,1,d) tensor
    return std * jax.random.normal(key, (1, d), jnp.float32)


def _linear_weight(key, fan_in, fan_out):
    bound = 1.0 / math.sqrt(fan_in)         # nn.Linear default (bias=False)
    return jax.random.uniform(key, (fan_in, fan_out), jnp.float32, -bound, bound)


def init_mha_params(key, d_model):
    ks = jax.random.split(key, 8)
    return dict(
        wq=_xavier_uniform(ks[0], (d_model, d_model)),
        wk=_xavier_uniform(ks[1], (d_model, d_model)),
        wv=_xavier_uniform(ks[2], (d_model, d_model)),
        wo=_xavier_uniform(ks[3], (d_model, d_model)),
        bq=_xavier_normal_bias(ks[4], d_model),
        bk=_xavier_normal_bias(ks[5], d_model),
        bv=_xavier_normal_bias(ks[6], d_model),
        bo=_xavier_normal_bias(ks[7], d_model),
    )


def init_encoder_params(key, d_model, d_fc):
    ks = jax.random.split(key, 3)
    m = init_mha_params(ks[0], d_model)
    return dict(
        # fused QKV weight (D, 3D) -> one GEMM in-kernel
        wqkv=jnp.concatenate([m["wq"], m["wk"], m["wv"]], axis=1),
        bqkv=jnp.concatenate([m["bq"], m["bk"], m["bv"]], axis=1),
        wo=m["wo"], bo=m["bo"],
        w1=_linear_weight(ks[1], d_model, d_fc),
        w2=_linear_weight(ks[2], d_fc, d_model),
        ln1_g=jnp.ones((1, d_model), jnp.float32),
        ln1_b=jnp.zeros((1, d_model), jnp.float32),
        ln2_g=jnp.ones((1, d_model), jnp.float32),
        ln2_b=jnp.zeros((1, d_model), jnp.float32),
    )


def init_decoder_params(key, d_model, d_fc):
    ks = jax.random.split(key, 4)
    sm = init_mha_params(ks[0], d_model)
    cm = init_mha_params(ks[1], d_model)
    return dict(
        self_wqkv=jnp.concatenate([sm["wq"], sm["wk"], sm["wv"]], axis=1),
        self_bqkv=jnp.concatenate([sm["bq"], sm["bk"], sm["bv"]], axis=1),
        self_wo=sm["wo"], self_bo=sm["bo"],
        cross_wq=cm["wq"], cross_bq=cm["bq"],
        cross_wkv=jnp.concatenate([cm["wk"], cm["wv"]], axis=1),
        cross_bkv=jnp.concatenate([cm["bk"], cm["bv"]], axis=1),
        cross_wo=cm["wo"], cross_bo=cm["bo"],
        w1=_linear_weight(ks[2], d_model, d_fc),
        w2=_linear_weight(ks[3], d_fc, d_model),
        ln1_g=jnp.ones((1, d_model), jnp.float32),
        ln1_b=jnp.zeros((1, d_model), jnp.float32),
        ln2_g=jnp.ones((1, d_model), jnp.float32),
        ln2_b=jnp.zeros((1, d_model), jnp.float32),
        ln3_g=jnp.ones((1, d_model), jnp.float32),
        ln3_b=jnp.zeros((1, d_model), jnp.float32),
    )


def init_transformer(key, d_model, d_fc):
    k_enc, k_dec = jax.random.split(key, 2)
    return dict(enc=init_encoder_params(k_enc, d_model, d_fc),
                dec=init_decoder_params(k_dec, d_model, d_fc))


# ---------------------------------------------------------------------------
if __name__ == "__main__":
    D_MODEL, D_FC, N_HEADS = 32, 64, 4
    N_ENC, N_DEC = 2, 2
    B, SX, SY = 2, 8, 8

    root = jax.random.PRNGKey(0)
    k_param, k_x, k_y = jax.random.split(root, 3)

    params = init_transformer(k_param, D_MODEL, D_FC)
    x = jax.random.normal(k_x, (B, SX, D_MODEL), jnp.float32)
    y = jax.random.normal(k_y, (B, SY, D_MODEL), jnp.float32)

    fwd = jax.jit(functools.partial(transformer_fwd, n_heads=N_HEADS,
                                    n_enc_layers=N_ENC, n_dec_layers=N_DEC))
    memory, out, scores = fwd(x, y, params)
    jax.block_until_ready((memory, out, scores))

    assert memory.shape == (B, SX, D_MODEL)
    assert out.shape == (B, SY, D_MODEL)
    assert len(scores[0]) == N_ENC and scores[0][0].shape == (B, N_HEADS, SX, SX)
    assert len(scores[1]) == N_DEC and scores[1][0].shape == (B, N_HEADS, SY, SY)
    assert len(scores[2]) == N_DEC and scores[2][0].shape == (B, N_HEADS, SY, SX)
    assert bool(jnp.all(jnp.isfinite(memory))) and bool(jnp.all(jnp.isfinite(out)))
    print("KERNEL_OK")
</pallas_src>

<mosaic_0001>
module attributes {stable_mosaic.version = 11 : i64} {
  func.func @_transformer_kernel(%arg0: memref<2x8x32xf32, #tpu.memory_space<vmem>>, %arg1: memref<2x8x32xf32, #tpu.memory_space<vmem>>, %arg2: memref<32x96xf32, #tpu.memory_space<vmem>>, %arg3: memref<1x96xf32, #tpu.memory_space<vmem>>, %arg4: memref<32x32xf32, #tpu.memory_space<vmem>>, %arg5: memref<1x32xf32, #tpu.memory_space<vmem>>, %arg6: memref<32x64xf32, #tpu.memory_space<vmem>>, %arg7: memref<64x32xf32, #tpu.memory_space<vmem>>, %arg8: memref<1x32xf32, #tpu.memory_space<vmem>>, %arg9: memref<1x32xf32, #tpu.memory_space<vmem>>, %arg10: memref<1x32xf32, #tpu.memory_space<vmem>>, %arg11: memref<1x32xf32, #tpu.memory_space<vmem>>, %arg12: memref<32x96xf32, #tpu.memory_space<vmem>>, %arg13: memref<1x96xf32, #tpu.memory_space<vmem>>, %arg14: memref<32x32xf32, #tpu.memory_space<vmem>>, %arg15: memref<1x32xf32, #tpu.memory_space<vmem>>, %arg16: memref<32x32xf32, #tpu.memory_space<vmem>>, %arg17: memref<1x32xf32, #tpu.memory_space<vmem>>, %arg18: memref<32x64xf32, #tpu.memory_space<vmem>>, %arg19: memref<1x64xf32, #tpu.memory_space<vmem>>, %arg20: memref<32x32xf32, #tpu.memory_space<vmem>>, %arg21: memref<1x32xf32, #tpu.memory_space<vmem>>, %arg22: memref<32x64xf32, #tpu.memory_space<vmem>>, %arg23: memref<64x32xf32, #tpu.memory_space<vmem>>, %arg24: memref<1x32xf32, #tpu.memory_space<vmem>>, %arg25: memref<1x32xf32, #tpu.memory_space<vmem>>, %arg26: memref<1x32xf32, #tpu.memory_space<vmem>>, %arg27: memref<1x32xf32, #tpu.memory_space<vmem>>, %arg28: memref<1x32xf32, #tpu.memory_space<vmem>>, %arg29: memref<1x32xf32, #tpu.memory_space<vmem>>, %arg30: memref<2x8x32xf32, #tpu.memory_space<vmem>>, %arg31: memref<2x8x32xf32, #tpu.memory_space<vmem>>, %arg32: memref<2x4x8x8xf32, #tpu.memory_space<vmem>>, %arg33: memref<2x4x8x8xf32, #tpu.memory_space<vmem>>, %arg34: memref<2x4x8x8xf32, #tpu.memory_space<vmem>>, %arg35: memref<2x4x8x8xf32, #tpu.memory_space<vmem>>, %arg36: memref<2x4x8x8xf32, #tpu.memory_space<vmem>>, %arg37: memref<2x4x8x8xf32, #tpu.memory_space<vmem>>) attributes {dimension_semantics = [], scalar_prefetch = 0 : i64, scratch_operands = 0 : i64, tpu.core_type = #tpu.core_type<tc>} {
    %c0 = arith.constant 0 : index
    %c0_0 = arith.constant 0 : index
    %c0_1 = arith.constant 0 : index
    %0 = vector.load %arg0[%c0, %c0_0, %c0_1] : memref<2x8x32xf32, #tpu.memory_space<vmem>>, vector<2x8x32xf32>
    %1 = vector.shape_cast %0 : vector<2x8x32xf32> to vector<16x32xf32>
    %c0_2 = arith.constant 0 : index
    %c0_3 = arith.constant 0 : index
    %2 = vector.load %arg2[%c0_2, %c0_3] : memref<32x96xf32, #tpu.memory_space<vmem>>, vector<32x96xf32>
    %c0_4 = arith.constant 0 : index
    %c0_5 = arith.constant 0 : index
    %3 = vector.load %arg3[%c0_4, %c0_5] : memref<1x96xf32, #tpu.memory_space<vmem>>, vector<1x96xf32>
    %c0_6 = arith.constant 0 : index
    %c0_7 = arith.constant 0 : index
    %4 = vector.load %arg4[%c0_6, %c0_7] : memref<32x32xf32, #tpu.memory_space<vmem>>, vector<32x32xf32>
    %c0_8 = arith.constant 0 : index
    %c0_9 = arith.constant 0 : index
    %5 = vector.load %arg5[%c0_8, %c0_9] : memref<1x32xf32, #tpu.memory_space<vmem>>, vector<1x32xf32>
    %c0_10 = arith.constant 0 : index
    %c0_11 = arith.constant 0 : index
    %6 = vector.load %arg6[%c0_10, %c0_11] : memref<32x64xf32, #tpu.memory_space<vmem>>, vector<32x64xf32>
    %c0_12 = arith.constant 0 : index
    %c0_13 = arith.constant 0 : index
    %7 = vector.load %arg7[%c0_12, %c0_13] : memref<64x32xf32, #tpu.memory_space<vmem>>, vector<64x32xf32>
    %c0_14 = arith.constant 0 : index
    %c0_15 = arith.constant 0 : index
    %8 = vector.load %arg8[%c0_14, %c0_15] : memref<1x32xf32, #tpu.memory_space<vmem>>, vector<1x32xf32>
    %c0_16 = arith.constant 0 : index
    %c0_17 = arith.constant 0 : index
    %9 = vector.load %arg9[%c0_16, %c0_17] : memref<1x32xf32, #tpu.memory_space<vmem>>, vector<1x32xf32>
    %c0_18 = arith.constant 0 : index
    %c0_19 = arith.constant 0 : index
    %10 = vector.load %arg10[%c0_18, %c0_19] : memref<1x32xf32, #tpu.memory_space<vmem>>, vector<1x32xf32>
    %c0_20 = arith.constant 0 : index
    %c0_21 = arith.constant 0 : index
    %11 = vector.load %arg11[%c0_20, %c0_21] : memref<1x32xf32, #tpu.memory_space<vmem>>, vector<1x32xf32>
    %cst = arith.constant dense<0.000000e+00> : vector<16x96xf32>
    %12 = tpu.matmul %1, %2, %cst {dimension_numbers = #tpu.dot_dimension_numbers<[1], [0], [0], [1], [0, 0, 1, 1], [], []>} : vector<16x32xf32>, vector<32x96xf32>, vector<16x96xf32> -> vector<16x96xf32>
    %13 = vector.broadcast %3 : vector<1x96xf32> to vector<16x96xf32>
    %14 = arith.addf %12, %13 : vector<16x96xf32>
    %15 = vector.extract_strided_slice %14 {offsets = [0, 0], sizes = [16, 32], strides = [1, 1]} : vector<16x96xf32> to vector<16x32xf32>
    %16 = vector.shape_cast %15 : vector<16x32xf32> to vector<2x8x32xf32>
    %17 = vector.extract_strided_slice %16 {offsets = [0, 0, 0], sizes = [2, 8, 8], strides = [1, 1, 1]} : vector<2x8x32xf32> to vector<2x8x8xf32>
    %18 = vector.extract_strided_slice %16 {offsets = [0, 0, 8], sizes = [2, 8, 8], strides = [1, 1, 1]} : vector<2x8x32xf32> to vector<2x8x8xf32>
    %19 = vector.extract_strided_slice %16 {offsets = [0, 0, 16], sizes = [2, 8, 8], strides = [1, 1, 1]} : vector<2x8x32xf32> to vector<2x8x8xf32>
    %20 = vector.extract_strided_slice %16 {offsets = [0, 0, 24], sizes = [2, 8, 8], strides = [1, 1, 1]} : vector<2x8x32xf32> to vector<2x8x8xf32>
    %21 = vector.shape_cast %17 : vector<2x8x8xf32> to vector<2x1x8x8xf32>
    %22 = vector.shape_cast %18 : vector<2x8x8xf32> to vector<2x1x8x8xf32>
    %23 = vector.shape_cast %19 : vector<2x8x8xf32> to vector<2x1x8x8xf32>
    %24 = vector.shape_cast %20 : vector<2x8x8xf32> to vector<2x1x8x8xf32>
    %25 = tpu.concatenate %21, %22, %23, %24 in 1 : vector<2x1x8x8xf32>, vector<2x1x8x8xf32>, vector<2x1x8x8xf32>, vector<2x1x8x8xf32> -> vector<2x4x8x8xf32>
    %26 = vector.shape_cast %25 : vector<2x4x8x8xf32> to vector<8x8x8xf32>
    %27 = vector.extract_strided_slice %14 {offsets = [0, 32], sizes = [16, 32], strides = [1, 1]} : vector<16x96xf32> to vector<16x32xf32>
    %28 = vector.shape_cast %27 : vector<16x32xf32> to vector<2x8x32xf32>
    %29 = vector.extract_strided_slice %28 {offsets = [0, 0, 0], sizes = [2, 8, 8], strides = [1, 1, 1]} : vector<2x8x32xf32> to vector<2x8x8xf32>
    %30 = vector.extract_strided_slice %28 {offsets = [0, 0, 8], sizes = [2, 8, 8], strides = [1, 1, 1]} : vector<2x8x32xf32> to vector<2x8x8xf32>
    %31 = vector.extract_strided_slice %28 {offsets = [0, 0, 16], sizes = [2, 8, 8], strides = [1, 1, 1]} : vector<2x8x32xf32> to vector<2x8x8xf32>
    %32 = vector.extract_strided_slice %28 {offsets = [0, 0, 24], sizes = [2, 8, 8], strides = [1, 1, 1]} : vector<2x8x32xf32> to vector<2x8x8xf32>
    %33 = vector.shape_cast %29 : vector<2x8x8xf32> to vector<2x1x8x8xf32>
    %34 = vector.shape_cast %30 : vector<2x8x8xf32> to vector<2x1x8x8xf32>
    %35 = vector.shape_cast %31 : vector<2x8x8xf32> to vector<2x1x8x8xf32>
    %36 = vector.shape_cast %32 : vector<2x8x8xf32> to vector<2x1x8x8xf32>
    %37 = tpu.concatenate %33, %34, %35, %36 in 1 : vector<2x1x8x8xf32>, vector<2x1x8x8xf32>, vector<2x1x8x8xf32>, vector<2x1x8x8xf32> -> vector<2x4x8x8xf32>
    %38 = vector.shape_cast %37 : vector<2x4x8x8xf32> to vector<8x8x8xf32>
    %39 = vector.extract_strided_slice %14 {offsets = [0, 64], sizes = [16, 32], strides = [1, 1]} : vector<16x96xf32> to vector<16x32xf32>
    %40 = vector.shape_cast %39 : vector<16x32xf32> to vector<2x8x32xf32>
    %41 = vector.extract_strided_slice %40 {offsets = [0, 0, 0], sizes = [2, 8, 8], strides = [1, 1, 1]} : vector<2x8x32xf32> to vector<2x8x8xf32>
    %42 = vector.extract_strided_slice %40 {offsets = [0, 0, 8], sizes = [2, 8, 8], strides = [1, 1, 1]} : vector<2x8x32xf32> to vector<2x8x8xf32>
    %43 = vector.extract_strided_slice %40 {offsets = [0, 0, 16], sizes = [2, 8, 8], strides = [1, 1, 1]} : vector<2x8x32xf32> to vector<2x8x8xf32>
    %44 = vector.extract_strided_slice %40 {offsets = [0, 0, 24], sizes = [2, 8, 8], strides = [1, 1, 1]} : vector<2x8x32xf32> to vector<2x8x8xf32>
    %45 = vector.shape_cast %41 : vector<2x8x8xf32> to vector<2x1x8x8xf32>
    %46 = vector.shape_cast %42 : vector<2x8x8xf32> to vector<2x1x8x8xf32>
    %47 = vector.shape_cast %43 : vector<2x8x8xf32> to vector<2x1x8x8xf32>
    %48 = vector.shape_cast %44 : vector<2x8x8xf32> to vector<2x1x8x8xf32>
    %49 = tpu.concatenate %45, %46, %47, %48 in 1 : vector<2x1x8x8xf32>, vector<2x1x8x8xf32>, vector<2x1x8x8xf32>, vector<2x1x8x8xf32> -> vector<2x4x8x8xf32>
    %50 = vector.shape_cast %49 : vector<2x4x8x8xf32> to vector<8x8x8xf32>
    "tpu.trace_start"() <{level = 10 : i32, message = "zqd,zkd->zqk"}> : () -> ()
    %cst_22 = arith.constant dense<0.000000e+00> : vector<8x8x8xf32>
    %51 = tpu.matmul %26, %38, %cst_22 {dimension_numbers = #tpu.dot_dimension_numbers<[2], [2], [1], [1], [0, 0, 0, 1, 1, 1], [0], [0]>} : vector<8x8x8xf32>, vector<8x8x8xf32>, vector<8x8x8xf32> -> vector<8x8x8xf32>
    "tpu.trace_stop"() : () -> ()
    %cst_23 = arith.constant 0.353553385 : f32
    %52 = vector.broadcast %cst_23 : f32 to vector<8x8x8xf32>
    %53 = arith.mulf %51, %52 : vector<8x8x8xf32>
    %cst_24 = arith.constant dense<0xFF800000> : vector<8x8xf32>
    %54 = vector.multi_reduction <maximumf>, %53, %cst_24 [2] : vector<8x8x8xf32> to vector<8x8xf32>
    %55 = vector.shape_cast %54 : vector<8x8xf32> to vector<8x8x1xf32>
    %56 = vector.broadcast %55 : vector<8x8x1xf32> to vector<8x8x8xf32>
    %57 = arith.subf %53, %56 : vector<8x8x8xf32>
    %58 = math.exp %57 : vector<8x8x8xf32>
    %cst_25 = arith.constant dense<0.000000e+00> : vector<8x8xf32>
    %59 = vector.multi_reduction <add>, %58, %cst_25 [2] : vector<8x8x8xf32> to vector<8x8xf32>
    %60 = vector.shape_cast %59 : vector<8x8xf32> to vector<8x8x1xf32>
    %61 = tpu.reciprocal %60 : vector<8x8x1xf32> -> vector<8x8x1xf32>
    %62 = vector.broadcast %61 : vector<8x8x1xf32> to vector<8x8x8xf32>
    %63 = arith.mulf %58, %62 : vector<8x8x8xf32>
    "tpu.trace_start"() <{level = 10 : i32, message = "zqk,zkd->zqd"}> : () -> ()
    %cst_26 = arith.constant dense<0.000000e+00> : vector<8x8x8xf32>
    %64 = tpu.matmul %63, %50, %cst_26 {dimension_numbers = #tpu.dot_dimension_numbers<[2], [1], [1], [2], [0, 0, 0, 1, 1, 2], [0], [0]>} : vector<8x8x8xf32>, vector<8x8x8xf32>, vector<8x8x8xf32> -> vector<8x8x8xf32>
    "tpu.trace_stop"() : () -> ()
    %65 = vector.shape_cast %64 : vector<8x8x8xf32> to vector<2x4x8x8xf32>
    %66 = vector.extract_strided_slice %65 {offsets = [0, 0, 0, 0], sizes = [2, 1, 8, 8], strides = [1, 1, 1, 1]} : vector<2x4x8x8xf32> to vector<2x1x8x8xf32>
    %67 = vector.shape_cast %66 : vector<2x1x8x8xf32> to vector<2x8x8xf32>
    %68 = vector.extract_strided_slice %65 {offsets = [0, 1, 0, 0], sizes = [2, 1, 8, 8], strides = [1, 1, 1, 1]} : vector<2x4x8x8xf32> to vector<2x1x8x8xf32>
    %69 = vector.shape_cast %68 : vector<2x1x8x8xf32> to vector<2x8x8xf32>
    %70 = vector.extract_strided_slice %65 {offsets = [0, 2, 0, 0], sizes = [2, 1, 8, 8], strides = [1, 1, 1, 1]} : vector<2x4x8x8xf32> to vector<2x1x8x8xf32>
    %71 = vector.shape_cast %70 : vector<2x1x8x8xf32> to vector<2x8x8xf32>
    %72 = vector.extract_strided_slice %65 {offsets = [0, 3, 0, 0], sizes = [2, 1, 8, 8], strides = [1, 1, 1, 1]} : vector<2x4x8x8xf32> to vector<2x1x8x8xf32>
    %73 = vector.shape_cast %72 : vector<2x1x8x8xf32> to vector<2x8x8xf32>
    %74 = tpu.concatenate %67, %69, %71, %73 in 2 : vector<2x8x8xf32>, vector<2x8x8xf32>, vector<2x8x8xf32>, vector<2x8x8xf32> -> vector<2x8x32xf32>
    %75 = vector.shape_cast %74 : vector<2x8x32xf32> to vector<16x32xf32>
    %cst_27 = arith.constant dense<0.000000e+00> : vector<16x32xf32>
    %76 = tpu.matmul %75, %4, %cst_27 {dimension_numbers = #tpu.dot_dimension_numbers<[1], [0], [0], [1], [0, 0, 1, 1], [], []>} : vector<16x32xf32>, vector<32x32xf32>, vector<16x32xf32> -> vector<16x32xf32>
    %77 = vector.broadcast %5 : vector<1x32xf32> to vector<16x32xf32>
    %78 = arith.addf %76, %77 : vector<16x32xf32>
    %79 = vector.shape_cast %63 : vector<8x8x8xf32> to vector<2x4x8x8xf32>
    %c0_28 = arith.constant 0 : index
    %c0_29 = arith.constant 0 : index
    %c0_30 = arith.constant 0 : index
    %c0_31 = arith.constant 0 : index
    %80 = vector.load %arg32[%c0_28, %c0_29, %c0_30, %c0_31] : memref<2x4x8x8xf32, #tpu.memory_space<vmem>>, vector<2x4x8x8xf32>
    tpu.vector_store %arg32[%c0_28, %c0_29, %c0_30, %c0_31], %79 {strides = array<i32>} : memref<2x4x8x8xf32, #tpu.memory_space<vmem>>, vector<2x4x8x8xf32>,
    %81 = arith.addf %1, %78 : vector<16x32xf32>
    %cst_32 = arith.constant dense<0.000000e+00> : vector<16xf32>
    %82 = vector.multi_reduction <add>, %81, %cst_32 [1] : vector<16x32xf32> to vector<16xf32>
    %83 = vector.shape_cast %82 : vector<16xf32> to vector<16x1xf32>
    %cst_33 = arith.constant 3.200000e+01 : f32
    %84 = vector.broadcast %cst_33 : f32 to vector<16x1xf32>
    %85 = arith.divf %83, %84 : vector<16x1xf32>
    %86 = vector.broadcast %85 : vector<16x1xf32> to vector<16x32xf32>
    %87 = arith.subf %81, %86 : vector<16x32xf32>
    %88 = arith.mulf %87, %87 : vector<16x32xf32>
    %cst_34 = arith.constant dense<0.000000e+00> : vector<16xf32>
    %89 = vector.multi_reduction <add>, %88, %cst_34 [1] : vector<16x32xf32> to vector<16xf32>
    %90 = vector.shape_cast %89 : vector<16xf32> to vector<16x1xf32>
    %cst_35 = arith.constant 3.200000e+01 : f32
    %91 = vector.broadcast %cst_35 : f32 to vector<16x1xf32>
    %92 = arith.divf %90, %91 : vector<16x1xf32>
    %cst_36 = arith.constant 9.99999974E-6 : f32
    %93 = vector.broadcast %cst_36 : f32 to vector<16x1xf32>
    %94 = arith.addf %92, %93 : vector<16x1xf32>
    %95 = math.rsqrt %94 : vector<16x1xf32>
    %96 = vector.broadcast %95 : vector<16x1xf32> to vector<16x32xf32>
    %97 = arith.mulf %87, %96 : vector<16x32xf32>
    %98 = vector.broadcast %8 : vector<1x32xf32> to vector<16x32xf32>
    %99 = arith.mulf %97, %98 : vector<16x32xf32>
    %100 = vector.broadcast %9 : vector<1x32xf32> to vector<16x32xf32>
    %101 = arith.addf %99, %100 : vector<16x32xf32>
    %cst_37 = arith.constant dense<0.000000e+00> : vector<16x64xf32>
    %102 = tpu.matmul %101, %6, %cst_37 {dimension_numbers = #tpu.dot_dimension_numbers<[1], [0], [0], [1], [0, 0, 1, 1], [], []>} : vector<16x32xf32>, vector<32x64xf32>, vector<16x64xf32> -> vector<16x64xf32>
    %cst_38 = arith.constant 0.000000e+00 : f32
    %103 = vector.broadcast %cst_38 : f32 to vector<16x64xf32>
    %104 = arith.maximumf %102, %103 : vector<16x64xf32>
    %cst_39 = arith.constant dense<0.000000e+00> : vector<16x32xf32>
    %105 = tpu.matmul %104, %7, %cst_39 {dimension_numbers = #tpu.dot_dimension_numbers<[1], [0], [0], [1], [0, 0, 1, 1], [], []>} : vector<16x64xf32>, vector<64x32xf32>, vector<16x32xf32> -> vector<16x32xf32>
    %106 = arith.addf %1, %105 : vector<16x32xf32>
    %cst_40 = arith.constant dense<0.000000e+00> : vector<16xf32>
    %107 = vector.multi_reduction <add>, %106, %cst_40 [1] : vector<16x32xf32> to vector<16xf32>
    %108 = vector.shape_cast %107 : vector<16xf32> to vector<16x1xf32>
    %cst_41 = arith.constant 3.200000e+01 : f32
    %109 = vector.broadcast %cst_41 : f32 to vector<16x1xf32>
    %110 = arith.divf %108, %109 : vector<16x1xf32>
    %111 = vector.broadcast %110 : vector<16x1xf32> to vector<16x32xf32>
    %112 = arith.subf %106, %111 : vector<16x32xf32>
    %113 = arith.mulf %112, %112 : vector<16x32xf32>
    %cst_42 = arith.constant dense<0.000000e+00> : vector<16xf32>
    %114 = vector.multi_reduction <add>, %113, %cst_42 [1] : vector<16x32xf32> to vector<16xf32>
    %115 = vector.shape_cast %114 : vector<16xf32> to vector<16x1xf32>
    %cst_43 = arith.constant 3.200000e+01 : f32
    %116 = vector.broadcast %cst_43 : f32 to vector<16x1xf32>
    %117 = arith.divf %115, %116 : vector<16x1xf32>
    %cst_44 = arith.constant 9.99999974E-6 : f32
    %118 = vector.broadcast %cst_44 : f32 to vector<16x1xf32>
    %119 = arith.addf %117, %118 : vector<16x1xf32>
    %120 = math.rsqrt %119 : vector<16x1xf32>
    %121 = vector.broadcast %120 : vector<16x1xf32> to vector<16x32xf32>
    %122 = arith.mulf %112, %121 : vector<16x32xf32>
    %123 = vector.broadcast %10 : vector<1x32xf32> to vector<16x32xf32>
    %124 = arith.mulf %122, %123 : vector<16x32xf32>
    %125 = vector.broadcast %11 : vector<1x32xf32> to vector<16x32xf32>
    %126 = arith.addf %124, %125 : vector<16x32xf32>
    %cst_45 = arith.constant dense<0.000000e+00> : vector<16x96xf32>
    %127 = tpu.matmul %126, %2, %cst_45 {dimension_numbers = #tpu.dot_dimension_numbers<[1], [0], [0], [1], [0, 0, 1, 1], [], []>} : vector<16x32xf32>, vector<32x96xf32>, vector<16x96xf32> -> vector<16x96xf32>
    %128 = vector.broadcast %3 : vector<1x96xf32> to vector<16x96xf32>
    %129 = arith.addf %127, %128 : vector<16x96xf32>
    %130 = vector.extract_strided_slice %129 {offsets = [0, 0], sizes = [16, 32], strides = [1, 1]} : vector<16x96xf32> to vector<16x32xf32>
    %131 = vector.shape_cast %130 : vector<16x32xf32> to vector<2x8x32xf32>
    %132 = vector.extract_strided_slice %131 {offsets = [0, 0, 0], sizes = [2, 8, 8], strides = [1, 1, 1]} : vector<2x8x32xf32> to vector<2x8x8xf32>
    %133 = vector.extract_strided_slice %131 {offsets = [0, 0, 8], sizes = [2, 8, 8], strides = [1, 1, 1]} : vector<2x8x32xf32> to vector<2x8x8xf32>
    %134 = vector.extract_strided_slice %131 {offsets = [0, 0, 16], sizes = [2, 8, 8], strides = [1, 1, 1]} : vector<2x8x32xf32> to vector<2x8x8xf32>
    %135 = vector.extract_strided_slice %131 {offsets = [0, 0, 24], sizes = [2, 8, 8], strides = [1, 1, 1]} : vector<2x8x32xf32> to vector<2x8x8xf32>
    %136 = vector.shape_cast %132 : vector<2x8x8xf32> to vector<2x1x8x8xf32>
    %137 = vector.shape_cast %133 : vector<2x8x8xf32> to vector<2x1x8x8xf32>
    %138 = vector.shape_cast %134 : vector<2x8x8xf32> to vector<2x1x8x8xf32>
    %139 = vector.shape_cast %135 : vector<2x8x8xf32> to vector<2x1x8x8xf32>
    %140 = tpu.concatenate %136, %137, %138, %139 in 1 : vector<2x1x8x8xf32>, vector<2x1x8x8xf32>, vector<2x1x8x8xf32>, vector<2x1x8x8xf32> -> vector<2x4x8x8xf32>
    %141 = vector.shape_cast %140 : vector<2x4x8x8xf32> to vector<8x8x8xf32>
    %142 = vector.extract_strided_slice %129 {offsets = [0, 32], sizes = [16, 32], strides = [1, 1]} : vector<16x96xf32> to vector<16x32xf32>
    %143 = vector.shape_cast %142 : vector<16x32xf32> to vector<2x8x32xf32>
    %144 = vector.extract_strided_slice %143 {offsets = [0, 0, 0], sizes = [2, 8, 8], strides = [1, 1, 1]} : vector<2x8x32xf32> to vector<2x8x8xf32>
    %145 = vector.extract_strided_slice %143 {offsets = [0, 0, 8], sizes = [2, 8, 8], strides = [1, 1, 1]} : vector<2x8x32xf32> to vector<2x8x8xf32>
    %146 = vector.extract_strided_slice %143 {offsets = [0, 0, 16], sizes = [2, 8, 8], strides = [1, 1, 1]} : vector<2x8x32xf32> to vector<2x8x8xf32>
    %147 = vector.extract_strided_slice %143 {offsets = [0, 0, 24], sizes = [2, 8, 8], strides = [1, 1, 1]} : vector<2x8x32xf32> to vector<2x8x8xf32>
    %148 = vector.shape_cast %144 : vector<2x8x8xf32> to vector<2x1x8x8xf32>
    %149 = vector.shape_cast %145 : vector<2x8x8xf32> to vector<2x1x8x8xf32>
    %150 = vector.shape_cast %146 : vector<2x8x8xf32> to vector<2x1x8x8xf32>
    %151 = vector.shape_cast %147 : vector<2x8x8xf32> to vector<2x1x8x8xf32>
    %152 = tpu.concatenate %148, %149, %150, %151 in 1 : vector<2x1x8x8xf32>, vector<2x1x8x8xf32>, vector<2x1x8x8xf32>, vector<2x1x8x8xf32> -> vector<2x4x8x8xf32>
    %153 = vector.shape_cast %152 : vector<2x4x8x8xf32> to vector<8x8x8xf32>
    %154 = vector.extract_strided_slice %129 {offsets = [0, 64], sizes = [16, 32], strides = [1, 1]} : vector<16x96xf32> to vector<16x32xf32>
    %155 = vector.shape_cast %154 : vector<16x32xf32> to vector<2x8x32xf32>
    %156 = vector.extract_strided_slice %155 {offsets = [0, 0, 0], sizes = [2, 8, 8], strides = [1, 1, 1]} : vector<2x8x32xf32> to vector<2x8x8xf32>
    %157 = vector.extract_strided_slice %155 {offsets = [0, 0, 8], sizes = [2, 8, 8], strides = [1, 1, 1]} : vector<2x8x32xf32> to vector<2x8x8xf32>
    %158 = vector.extract_strided_slice %155 {offsets = [0, 0, 16], sizes = [2, 8, 8], strides = [1, 1, 1]} : vector<2x8x32xf32> to vector<2x8x8xf32>
    %159 = vector.extract_strided_slice %155 {offsets = [0, 0, 24], sizes = [2, 8, 8], strides = [1, 1, 1]} : vector<2x8x32xf32> to vector<2x8x8xf32>
    %160 = vector.shape_cast %156 : vector<2x8x8xf32> to vector<2x1x8x8xf32>
    %161 = vector.shape_cast %157 : vector<2x8x8xf32> to vector<2x1x8x8xf32>
    %162 = vector.shape_cast %158 : vector<2x8x8xf32> to vector<2x1x8x8xf32>
    %163 = vector.shape_cast %159 : vector<2x8x8xf32> to vector<2x1x8x8xf32>
    %164 = tpu.concatenate %160, %161, %162, %163 in 1 : vector<2x1x8x8xf32>, vector<2x1x8x8xf32>, vector<2x1x8x8xf32>, vector<2x1x8x8xf32> -> vector<2x4x8x8xf32>
    %165 = vector.shape_cast %164 : vector<2x4x8x8xf32> to vector<8x8x8xf32>
    "tpu.trace_start"() <{level = 10 : i32, message = "zqd,zkd->zqk"}> : () -> ()
    %cst_46 = arith.constant dense<0.000000e+00> : vector<8x8x8xf32>
    %166 = tpu.matmul %141, %153, %cst_46 {dimension_numbers = #tpu.dot_dimension_numbers<[2], [2], [1], [1], [0, 0, 0, 1, 1, 1], [0], [0]>} : vector<8x8x8xf32>, vector<8x8x8xf32>, vector<8x8x8xf32> -> vector<8x8x8xf32>
    "tpu.trace_stop"() : () -> ()
    %cst_47 = arith.constant 0.353553385 : f32
    %167 = vector.broadcast %cst_47 : f32 to vector<8x8x8xf32>
    %168 = arith.mulf %166, %167 : vector<8x8x8xf32>
    %cst_48 = arith.constant dense<0xFF800000> : vector<8x8xf32>
    %169 = vector.multi_reduction <maximumf>, %168, %cst_48 [2] : vector<8x8x8xf32> to vector<8x8xf32>
    %170 = vector.shape_cast %169 : vector<8x8xf32> to vector<8x8x1xf32>
    %171 = vector.broadcast %170 : vector<8x8x1xf32> to vector<8x8x8xf32>
    %172 = arith.subf %168, %171 : vector<8x8x8xf32>
    %173 = math.exp %172 : vector<8x8x8xf32>
    %cst_49 = arith.constant dense<0.000000e+00> : vector<8x8xf32>
    %174 = vector.multi_reduction <add>, %173, %cst_49 [2] : vector<8x8x8xf32> to vector<8x8xf32>
    %175 = vector.shape_cast %174 : vector<8x8xf32> to vector<8x8x1xf32>
    %176 = tpu.reciprocal %175 : vector<8x8x1xf32> -> vector<8x8x1xf32>
    %177 = vector.broadcast %176 : vector<8x8x1xf32> to vector<8x8x8xf32>
    %178 = arith.mulf %173, %177 : vector<8x8x8xf32>
    "tpu.trace_start"() <{level = 10 : i32, message = "zqk,zkd->zqd"}> : () -> ()
    %cst_50 = arith.constant dense<0.000000e+00> : vector<8x8x8xf32>
    %179 = tpu.matmul %178, %165, %cst_50 {dimension_numbers = #tpu.dot_dimension_numbers<[2], [1], [1], [2], [0, 0, 0, 1, 1, 2], [0], [0]>} : vector<8x8x8xf32>, vector<8x8x8xf32>, vector<8x8x8xf32> -> vector<8x8x8xf32>
    "tpu.trace_stop"() : () -> ()
    %180 = vector.shape_cast %179 : vector<8x8x8xf32> to vector<2x4x8x8xf32>
    %181 = vector.extract_strided_slice %180 {offsets = [0, 0, 0, 0], sizes = [2, 1, 8, 8], strides = [1, 1, 1, 1]} : vector<2x4x8x8xf32> to vector<2x1x8x8xf32>
    %182 = vector.shape_cast %181 : vector<2x1x8x8xf32> to vector<2x8x8xf32>
    %183 = vector.extract_strided_slice %180 {offsets = [0, 1, 0, 0], sizes = [2, 1, 8, 8], strides = [1, 1, 1, 1]} : vector<2x4x8x8xf32> to vector<2x1x8x8xf32>
    %184 = vector.shape_cast %183 : vector<2x1x8x8xf32> to vector<2x8x8xf32>
    %185 = vector.extract_strided_slice %180 {offsets = [0, 2, 0, 0], sizes = [2, 1, 8, 8], strides = [1, 1, 1, 1]} : vector<2x4x8x8xf32> to vector<2x1x8x8xf32>
    %186 = vector.shape_cast %185 : vector<2x1x8x8xf32> to vector<2x8x8xf32>
    %187 = vector.extract_strided_slice %180 {offsets = [0, 3, 0, 0], sizes = [2, 1, 8, 8], strides = [1, 1, 1, 1]} : vector<2x4x8x8xf32> to vector<2x1x8x8xf32>
    %188 = vector.shape_cast %187 : vector<2x1x8x8xf32> to vector<2x8x8xf32>
    %189 = tpu.concatenate %182, %184, %186, %188 in 2 : vector<2x8x8xf32>, vector<2x8x8xf32>, vector<2x8x8xf32>, vector<2x8x8xf32> -> vector<2x8x32xf32>
    %190 = vector.shape_cast %189 : vector<2x8x32xf32> to vector<16x32xf32>
    %cst_51 = arith.constant dense<0.000000e+00> : vector<16x32xf32>
    %191 = tpu.matmul %190, %4, %cst_51 {dimension_numbers = #tpu.dot_dimension_numbers<[1], [0], [0], [1], [0, 0, 1, 1], [], []>} : vector<16x32xf32>, vector<32x32xf32>, vector<16x32xf32> -> vector<16x32xf32>
    %192 = vector.broadcast %5 : vector<1x32xf32> to vector<16x32xf32>
    %193 = arith.addf %191, %192 : vector<16x32xf32>
    %194 = vector.shape_cast %178 : vector<8x8x8xf32> to vector<2x4x8x8xf32>
    %c0_52 = arith.constant 0 : index
    %c0_53 = arith.constant 0 : index
    %c0_54 = arith.constant 0 : index
    %c0_55 = arith.constant 0 : index
    %195 = vector.load %arg33[%c0_52, %c0_53, %c0_54, %c0_55] : memref<2x4x8x8xf32, #tpu.memory_space<vmem>>, vector<2x4x8x8xf32>
    tpu.vector_store %arg33[%c0_52, %c0_53, %c0_54, %c0_55], %194 {strides = array<i32>} : memref<2x4x8x8xf32, #tpu.memory_space<vmem>>, vector<2x4x8x8xf32>,
    %196 = arith.addf %126, %193 : vector<16x32xf32>
    %cst_56 = arith.constant dense<0.000000e+00> : vector<16xf32>
    %197 = vector.multi_reduction <add>, %196, %cst_56 [1] : vector<16x32xf32> to vector<16xf32>
    %198 = vector.shape_cast %197 : vector<16xf32> to vector<16x1xf32>
    %cst_57 = arith.constant 3.200000e+01 : f32
    %199 = vector.broadcast %cst_57 : f32 to vector<16x1xf32>
    %200 = arith.divf %198, %199 : vector<16x1xf32>
    %201 = vector.broadcast %200 : vector<16x1xf32> to vector<16x32xf32>
    %202 = arith.subf %196, %201 : vector<16x32xf32>
    %203 = arith.mulf %202, %202 : vector<16x32xf32>
    %cst_58 = arith.constant dense<0.000000e+00> : vector<16xf32>
    %204 = vector.multi_reduction <add>, %203, %cst_58 [1] : vector<16x32xf32> to vector<16xf32>
    %205 = vector.shape_cast %204 : vector<16xf32> to vector<16x1xf32>
    %cst_59 = arith.constant 3.200000e+01 : f32
    %206 = vector.broadcast %cst_59 : f32 to vector<16x1xf32>
    %207 = arith.divf %205, %206 : vector<16x1xf32>
    %cst_60 = arith.constant 9.99999974E-6 : f32
    %208 = vector.broadcast %cst_60 : f32 to vector<16x1xf32>
    %209 = arith.addf %207, %208 : vector<16x1xf32>
    %210 = math.rsqrt %209 : vector<16x1xf32>
    %211 = vector.broadcast %210 : vector<16x1xf32> to vector<16x32xf32>
    %212 = arith.mulf %202, %211 : vector<16x32xf32>
    %213 = vector.broadcast %8 : vector<1x32xf32> to vector<16x32xf32>
    %214 = arith.mulf %212, %213 : vector<16x32xf32>
    %215 = vector.broadcast %9 : vector<1x32xf32> to vector<16x32xf32>
    %216 = arith.addf %214, %215 : vector<16x32xf32>
    %cst_61 = arith.constant dense<0.000000e+00> : vector<16x64xf32>
    %217 = tpu.matmul %216, %6, %cst_61 {dimension_numbers = #tpu.dot_dimension_numbers<[1], [0], [0], [1], [0, 0, 1, 1], [], []>} : vector<16x32xf32>, vector<32x64xf32>, vector<16x64xf32> -> vector<16x64xf32>
    %cst_62 = arith.constant 0.000000e+00 : f32
    %218 = vector.broadcast %cst_62 : f32 to vector<16x64xf32>
    %219 = arith.maximumf %217, %218 : vector<16x64xf32>
    %cst_63 = arith.constant dense<0.000000e+00> : vector<16x32xf32>
    %220 = tpu.matmul %219, %7, %cst_63 {dimension_numbers = #tpu.dot_dimension_numbers<[1], [0], [0], [1], [0, 0, 1, 1], [], []>} : vector<16x64xf32>, vector<64x32xf32>, vector<16x32xf32> -> vector<16x32xf32>
    %221 = arith.addf %126, %220 : vector<16x32xf32>
    %cst_64 = arith.constant dense<0.000000e+00> : vector<16xf32>
    %222 = vector.multi_reduction <add>, %221, %cst_64 [1] : vector<16x32xf32> to vector<16xf32>
    %223 = vector.shape_cast %222 : vector<16xf32> to vector<16x1xf32>
    %cst_65 = arith.constant 3.200000e+01 : f32
    %224 = vector.broadcast %cst_65 : f32 to vector<16x1xf32>
    %225 = arith.divf %223, %224 : vector<16x1xf32>
    %226 = vector.broadcast %225 : vector<16x1xf32> to vector<16x32xf32>
    %227 = arith.subf %221, %226 : vector<16x32xf32>
    %228 = arith.mulf %227, %227 : vector<16x32xf32>
    %cst_66 = arith.constant dense<0.000000e+00> : vector<16xf32>
    %229 = vector.multi_reduction <add>, %228, %cst_66 [1] : vector<16x32xf32> to vector<16xf32>
    %230 = vector.shape_cast %229 : vector<16xf32> to vector<16x1xf32>
    %cst_67 = arith.constant 3.200000e+01 : f32
    %231 = vector.broadcast %cst_67 : f32 to vector<16x1xf32>
    %232 = arith.divf %230, %231 : vector<16x1xf32>
    %cst_68 = arith.constant 9.99999974E-6 : f32
    %233 = vector.broadcast %cst_68 : f32 to vector<16x1xf32>
    %234 = arith.addf %232, %233 : vector<16x1xf32>
    %235 = math.rsqrt %234 : vector<16x1xf32>
    %236 = vector.broadcast %235 : vector<16x1xf32> to vector<16x32xf32>
    %237 = arith.mulf %227, %236 : vector<16x32xf32>
    %238 = vector.broadcast %10 : vector<1x32xf32> to vector<16x32xf32>
    %239 = arith.mulf %237, %238 : vector<16x32xf32>
    %240 = vector.broadcast %11 : vector<1x32xf32> to vector<16x32xf32>
    %241 = arith.addf %239, %240 : vector<16x32xf32>
    %242 = vector.shape_cast %241 : vector<16x32xf32> to vector<2x8x32xf32>
    %c0_69 = arith.constant 0 : index
    %c0_70 = arith.constant 0 : index
    %c0_71 = arith.constant 0 : index
    %243 = vector.load %arg30[%c0_69, %c0_70, %c0_71] : memref<2x8x32xf32, #tpu.memory_space<vmem>>, vector<2x8x32xf32>
    tpu.vector_store %arg30[%c0_69, %c0_70, %c0_71], %242 {strides = array<i32>} : memref<2x8x32xf32, #tpu.memory_space<vmem>>, vector<2x8x32xf32>,
    %c0_72 = arith.constant 0 : index
    %c0_73 = arith.constant 0 : index
    %c0_74 = arith.constant 0 : index
    %244 = vector.load %arg1[%c0_72, %c0_73, %c0_74] : memref<2x8x32xf32, #tpu.memory_space<vmem>>, vector<2x8x32xf32>
    %245 = vector.shape_cast %244 : vector<2x8x32xf32> to vector<16x32xf32>
    %c0_75 = arith.constant 0 : index
    %c0_76 = arith.constant 0 : index
    %246 = vector.load %arg12[%c0_75, %c0_76] : memref<32x96xf32, #tpu.memory_space<vmem>>, vector<32x96xf32>
    %c0_77 = arith.constant 0 : index
    %c0_78 = arith.constant 0 : index
    %247 = vector.load %arg13[%c0_77, %c0_78] : memref<1x96xf32, #tpu.memory_space<vmem>>, vector<1x96xf32>
    %c0_79 = arith.constant 0 : index
    %c0_80 = arith.constant 0 : index
    %248 = vector.load %arg14[%c0_79, %c0_80] : memref<32x32xf32, #tpu.memory_space<vmem>>, vector<32x32xf32>
    %c0_81 = arith.constant 0 : index
    %c0_82 = arith.constant 0 : index
    %249 = vector.load %arg15[%c0_81, %c0_82] : memref<1x32xf32, #tpu.memory_space<vmem>>, vector<1x32xf32>
    %c0_83 = arith.constant 0 : index
    %c0_84 = arith.constant 0 : index
    %250 = vector.load %arg16[%c0_83, %c0_84] : memref<32x32xf32, #tpu.memory_space<vmem>>, vector<32x32xf32>
    %c0_85 = arith.constant 0 : index
    %c0_86 = arith.constant 0 : index
    %251 = vector.load %arg17[%c0_85, %c0_86] : memref<1x32xf32, #tpu.memory_space<vmem>>, vector<1x32xf32>
    %c0_87 = arith.constant 0 : index
    %c0_88 = arith.constant 0 : index
    %252 = vector.load %arg18[%c0_87, %c0_88] : memref<32x64xf32, #tpu.memory_space<vmem>>, vector<32x64xf32>
    %c0_89 = arith.constant 0 : index
    %c0_90 = arith.constant 0 : index
    %253 = vector.load %arg19[%c0_89, %c0_90] : memref<1x64xf32, #tpu.memory_space<vmem>>, vector<1x64xf32>
    %c0_91 = arith.constant 0 : index
    %c0_92 = arith.constant 0 : index
    %254 = vector.load %arg20[%c0_91, %c0_92] : memref<32x32xf32, #tpu.memory_space<vmem>>, vector<32x32xf32>
    %c0_93 = arith.constant 0 : index
    %c0_94 = arith.constant 0 : index
    %255 = vector.load %arg21[%c0_93, %c0_94] : memref<1x32xf32, #tpu.memory_space<vmem>>, vector<1x32xf32>
    %c0_95 = arith.constant 0 : index
    %c0_96 = arith.constant 0 : index
    %256 = vector.load %arg22[%c0_95, %c0_96] : memref<32x64xf32, #tpu.memory_space<vmem>>, vector<32x64xf32>
    %c0_97 = arith.constant 0 : index
    %c0_98 = arith.constant 0 : index
    %257 = vector.load %arg23[%c0_97, %c0_98] : memref<64x32xf32, #tpu.memory_space<vmem>>, vector<64x32xf32>
    %c0_99 = arith.constant 0 : index
    %c0_100 = arith.constant 0 : index
    %258 = vector.load %arg24[%c0_99, %c0_100] : memref<1x32xf32, #tpu.memory_space<vmem>>, vector<1x32xf32>
    %c0_101 = arith.constant 0 : index
    %c0_102 = arith.constant 0 : index
    %259 = vector.load %arg25[%c0_101, %c0_102] : memref<1x32xf32, #tpu.memory_space<vmem>>, vector<1x32xf32>
    %c0_103 = arith.constant 0 : index
    %c0_104 = arith.constant 0 : index
    %260 = vector.load %arg26[%c0_103, %c0_104] : memref<1x32xf32, #tpu.memory_space<vmem>>, vector<1x32xf32>
    %c0_105 = arith.constant 0 : index
    %c0_106 = arith.constant 0 : index
    %261 = vector.load %arg27[%c0_105, %c0_106] : memref<1x32xf32, #tpu.memory_space<vmem>>, vector<1x32xf32>
    %c0_107 = arith.constant 0 : index
    %c0_108 = arith.constant 0 : index
    %262 = vector.load %arg28[%c0_107, %c0_108] : memref<1x32xf32, #tpu.memory_space<vmem>>, vector<1x32xf32>
    %c0_109 = arith.constant 0 : index
    %c0_110 = arith.constant 0 : index
    %263 = vector.load %arg29[%c0_109, %c0_110] : memref<1x32xf32, #tpu.memory_space<vmem>>, vector<1x32xf32>
    %cst_111 = arith.constant dense<0.000000e+00> : vector<16x64xf32>
    %264 = tpu.matmul %241, %252, %cst_111 {dimension_numbers = #tpu.dot_dimension_numbers<[1], [0], [0], [1], [0, 0, 1, 1], [], []>} : vector<16x32xf32>, vector<32x64xf32>, vector<16x64xf32> -> vector<16x64xf32>
    %265 = vector.broadcast %253 : vector<1x64xf32> to vector<16x64xf32>
    %266 = arith.addf %264, %265 : vector<16x64xf32>
    %267 = vector.extract_strided_slice %266 {offsets = [0, 0], sizes = [16, 32], strides = [1, 1]} : vector<16x64xf32> to vector<16x32xf32>
    %268 = vector.shape_cast %267 : vector<16x32xf32> to vector<2x8x32xf32>
    %269 = vector.extract_strided_slice %268 {offsets = [0, 0, 0], sizes = [2, 8, 8], strides = [1, 1, 1]} : vector<2x8x32xf32> to vector<2x8x8xf32>
    %270 = vector.extract_strided_slice %268 {offsets = [0, 0, 8], sizes = [2, 8, 8], strides = [1, 1, 1]} : vector<2x8x32xf32> to vector<2x8x8xf32>
    %271 = vector.extract_strided_slice %268 {offsets = [0, 0, 16], sizes = [2, 8, 8], strides = [1, 1, 1]} : vector<2x8x32xf32> to vector<2x8x8xf32>
    %272 = vector.extract_strided_slice %268 {offsets = [0, 0, 24], sizes = [2, 8, 8], strides = [1, 1, 1]} : vector<2x8x32xf32> to vector<2x8x8xf32>
    %273 = vector.shape_cast %269 : vector<2x8x8xf32> to vector<2x1x8x8xf32>
    %274 = vector.shape_cast %270 : vector<2x8x8xf32> to vector<2x1x8x8xf32>
    %275 = vector.shape_cast %271 : vector<2x8x8xf32> to vector<2x1x8x8xf32>
    %276 = vector.shape_cast %272 : vector<2x8x8xf32> to vector<2x1x8x8xf32>
    %277 = tpu.concatenate %273, %274, %275, %276 in 1 : vector<2x1x8x8xf32>, vector<2x1x8x8xf32>, vector<2x1x8x8xf32>, vector<2x1x8x8xf32> -> vector<2x4x8x8xf32>
    %278 = vector.shape_cast %277 : vector<2x4x8x8xf32> to vector<8x8x8xf32>
    %279 = vector.extract_strided_slice %266 {offsets = [0, 32], sizes = [16, 32], strides = [1, 1]} : vector<16x64xf32> to vector<16x32xf32>
    %280 = vector.shape_cast %279 : vector<16x32xf32> to vector<2x8x32xf32>
    %281 = vector.extract_strided_slice %280 {offsets = [0, 0, 0], sizes = [2, 8, 8], strides = [1, 1, 1]} : vector<2x8x32xf32> to vector<2x8x8xf32>
    %282 = vector.extract_strided_slice %280 {offsets = [0, 0, 8], sizes = [2, 8, 8], strides = [1, 1, 1]} : vector<2x8x32xf32> to vector<2x8x8xf32>
    %283 = vector.extract_strided_slice %280 {offsets = [0, 0, 16], sizes = [2, 8, 8], strides = [1, 1, 1]} : vector<2x8x32xf32> to vector<2x8x8xf32>
    %284 = vector.extract_strided_slice %280 {offsets = [0, 0, 24], sizes = [2, 8, 8], strides = [1, 1, 1]} : vector<2x8x32xf32> to vector<2x8x8xf32>
    %285 = vector.shape_cast %281 : vector<2x8x8xf32> to vector<2x1x8x8xf32>
    %286 = vector.shape_cast %282 : vector<2x8x8xf32> to vector<2x1x8x8xf32>
    %287 = vector.shape_cast %283 : vector<2x8x8xf32> to vector<2x1x8x8xf32>
    %288 = vector.shape_cast %284 : vector<2x8x8xf32> to vector<2x1x8x8xf32>
    %289 = tpu.concatenate %285, %286, %287, %288 in 1 : vector<2x1x8x8xf32>, vector<2x1x8x8xf32>, vector<2x1x8x8xf32>, vector<2x1x8x8xf32> -> vector<2x4x8x8xf32>
    %290 = vector.shape_cast %289 : vector<2x4x8x8xf32> to vector<8x8x8xf32>
    %cst_112 = arith.constant dense<0.000000e+00> : vector<16x96xf32>
    %291 = tpu.matmul %245, %246, %cst_112 {dimension_numbers = #tpu.dot_dimension_numbers<[1], [0], [0], [1], [0, 0, 1, 1], [], []>} : vector<16x32xf32>, vector<32x96xf32>, vector<16x96xf32> -> vector<16x96xf32>
    %292 = vector.broadcast %247 : vector<1x96xf32> to vector<16x96xf32>
    %293 = arith.addf %291, %292 : vector<16x96xf32>
    %294 = vector.extract_strided_slice %293 {offsets = [0, 0], sizes = [16, 32], strides = [1, 1]} : vector<16x96xf32> to vector<16x32xf32>
    %295 = vector.shape_cast %294 : vector<16x32xf32> to vector<2x8x32xf32>
    %296 = vector.extract_strided_slice %295 {offsets = [0, 0, 0], sizes = [2, 8, 8], strides = [1, 1, 1]} : vector<2x8x32xf32> to vector<2x8x8xf32>
    %297 = vector.extract_strided_slice %295 {offsets = [0, 0, 8], sizes = [2, 8, 8], strides = [1, 1, 1]} : vector<2x8x32xf32> to vector<2x8x8xf32>
    %298 = vector.extract_strided_slice %295 {offsets = [0, 0, 16], sizes = [2, 8, 8], strides = [1, 1, 1]} : vector<2x8x32xf32> to vector<2x8x8xf32>
    %299 = vector.extract_strided_slice %295 {offsets = [0, 0, 24], sizes = [2, 8, 8], strides = [1, 1, 1]} : vector<2x8x32xf32> to vector<2x8x8xf32>
    %300 = vector.shape_cast %296 : vector<2x8x8xf32> to vector<2x1x8x8xf32>
    %301 = vector.shape_cast %297 : vector<2x8x8xf32> to vector<2x1x8x8xf32>
    %302 = vector.shape_cast %298 : vector<2x8x8xf32> to vector<2x1x8x8xf32>
    %303 = vector.shape_cast %299 : vector<2x8x8xf32> to vector<2x1x8x8xf32>
    %304 = tpu.concatenate %300, %301, %302, %303 in 1 : vector<2x1x8x8xf32>, vector<2x1x8x8xf32>, vector<2x1x8x8xf32>, vector<2x1x8x8xf32> -> vector<2x4x8x8xf32>
    %305 = vector.shape_cast %304 : vector<2x4x8x8xf32> to vector<8x8x8xf32>
    %306 = vector.extract_strided_slice %293 {offsets = [0, 32], sizes = [16, 32], strides = [1, 1]} : vector<16x96xf32> to vector<16x32xf32>
    %307 = vector.shape_cast %306 : vector<16x32xf32> to vector<2x8x32xf32>
    %308 = vector.extract_strided_slice %307 {offsets = [0, 0, 0], sizes = [2, 8, 8], strides = [1, 1, 1]} : vector<2x8x32xf32> to vector<2x8x8xf32>
    %309 = vector.extract_strided_slice %307 {offsets = [0, 0, 8], sizes = [2, 8, 8], strides = [1, 1, 1]} : vector<2x8x32xf32> to vector<2x8x8xf32>
    %310 = vector.extract_strided_slice %307 {offsets = [0, 0, 16], sizes = [2, 8, 8], strides = [1, 1, 1]} : vector<2x8x32xf32> to vector<2x8x8xf32>
    %311 = vector.extract_strided_slice %307 {offsets = [0, 0, 24], sizes = [2, 8, 8], strides = [1, 1, 1]} : vector<2x8x32xf32> to vector<2x8x8xf32>
    %312 = vector.shape_cast %308 : vector<2x8x8xf32> to vector<2x1x8x8xf32>
    %313 = vector.shape_cast %309 : vector<2x8x8xf32> to vector<2x1x8x8xf32>
    %314 = vector.shape_cast %310 : vector<2x8x8xf32> to vector<2x1x8x8xf32>
    %315 = vector.shape_cast %311 : vector<2x8x8xf32> to vector<2x1x8x8xf32>
    %316 = tpu.concatenate %312, %313, %314, %315 in 1 : vector<2x1x8x8xf32>, vector<2x1x8x8xf32>, vector<2x1x8x8xf32>, vector<2x1x8x8xf32> -> vector<2x4x8x8xf32>
    %317 = vector.shape_cast %316 : vector<2x4x8x8xf32> to vector<8x8x8xf32>
    %318 = vector.extract_strided_slice %293 {offsets = [0, 64], sizes = [16, 32], strides = [1, 1]} : vector<16x96xf32> to vector<16x32xf32>
    %319 = vector.shape_cast %318 : vector<16x32xf32> to vector<2x8x32xf32>
    %320 = vector.extract_strided_slice %319 {offsets = [0, 0, 0], sizes = [2, 8, 8], strides = [1, 1, 1]} : vector<2x8x32xf32> to vector<2x8x8xf32>
    %321 = vector.extract_strided_slice %319 {offsets = [0, 0, 8], sizes = [2, 8, 8], strides = [1, 1, 1]} : vector<2x8x32xf32> to vector<2x8x8xf32>
    %322 = vector.extract_strided_slice %319 {offsets = [0, 0, 16], sizes = [2, 8, 8], strides = [1, 1, 1]} : vector<2x8x32xf32> to vector<2x8x8xf32>
    %323 = vector.extract_strided_slice %319 {offsets = [0, 0, 24], sizes = [2, 8, 8], strides = [1, 1, 1]} : vector<2x8x32xf32> to vector<2x8x8xf32>
    %324 = vector.shape_cast %320 : vector<2x8x8xf32> to vector<2x1x8x8xf32>
    %325 = vector.shape_cast %321 : vector<2x8x8xf32> to vector<2x1x8x8xf32>
    %326 = vector.shape_cast %322 : vector<2x8x8xf32> to vector<2x1x8x8xf32>
    %327 = vector.shape_cast %323 : vector<2x8x8xf32> to vector<2x1x8x8xf32>
    %328 = tpu.concatenate %324, %325, %326, %327 in 1 : vector<2x1x8x8xf32>, vector<2x1x8x8xf32>, vector<2x1x8x8xf32>, vector<2x1x8x8xf32> -> vector<2x4x8x8xf32>
    %329 = vector.shape_cast %328 : vector<2x4x8x8xf32> to vector<8x8x8xf32>
    "tpu.trace_start"() <{level = 10 : i32, message = "zqd,zkd->zqk"}> : () -> ()
    %cst_113 = arith.constant dense<0.000000e+00> : vector<8x8x8xf32>
    %330 = tpu.matmul %305, %317, %cst_113 {dimension_numbers = #tpu.dot_dimension_numbers<[2], [2], [1], [1], [0, 0, 0, 1, 1, 1], [0], [0]>} : vector<8x8x8xf32>, vector<8x8x8xf32>, vector<8x8x8xf32> -> vector<8x8x8xf32>
    "tpu.trace_stop"() : () -> ()
    %cst_114 = arith.constant 0.353553385 : f32
    %331 = vector.broadcast %cst_114 : f32 to vector<8x8x8xf32>
    %332 = arith.mulf %330, %331 : vector<8x8x8xf32>
    %cst_115 = arith.constant dense<0xFF800000> : vector<8x8xf32>
    %333 = vector.multi_reduction <maximumf>, %332, %cst_115 [2] : vector<8x8x8xf32> to vector<8x8xf32>
    %334 = vector.shape_cast %333 : vector<8x8xf32> to vector<8x8x1xf32>
    %335 = vector.broadcast %334 : vector<8x8x1xf32> to vector<8x8x8xf32>
    %336 = arith.subf %332, %335 : vector<8x8x8xf32>
    %337 = math.exp %336 : vector<8x8x8xf32>
    %cst_116 = arith.constant dense<0.000000e+00> : vector<8x8xf32>
    %338 = vector.multi_reduction <add>, %337, %cst_116 [2] : vector<8x8x8xf32> to vector<8x8xf32>
    %339 = vector.shape_cast %338 : vector<8x8xf32> to vector<8x8x1xf32>
    %340 = tpu.reciprocal %339 : vector<8x8x1xf32> -> vector<8x8x1xf32>
    %341 = vector.broadcast %340 : vector<8x8x1xf32> to vector<8x8x8xf32>
    %342 = arith.mulf %337, %341 : vector<8x8x8xf32>
    "tpu.trace_start"() <{level = 10 : i32, message = "zqk,zkd->zqd"}> : () -> ()
    %cst_117 = arith.constant dense<0.000000e+00> : vector<8x8x8xf32>
    %343 = tpu.matmul %342, %329, %cst_117 {dimension_numbers = #tpu.dot_dimension_numbers<[2], [1], [1], [2], [0, 0, 0, 1, 1, 2], [0], [0]>} : vector<8x8x8xf32>, vector<8x8x8xf32>, vector<8x8x8xf32> -> vector<8x8x8xf32>
    "tpu.trace_stop"() : () -> ()
    %344 = vector.shape_cast %343 : vector<8x8x8xf32> to vector<2x4x8x8xf32>
    %345 = vector.extract_strided_slice %344 {offsets = [0, 0, 0, 0], sizes = [2, 1, 8, 8], strides = [1, 1, 1, 1]} : vector<2x4x8x8xf32> to vector<2x1x8x8xf32>
    %346 = vector.shape_cast %345 : vector<2x1x8x8xf32> to vector<2x8x8xf32>
    %347 = vector.extract_strided_slice %344 {offsets = [0, 1, 0, 0], sizes = [2, 1, 8, 8], strides = [1, 1, 1, 1]} : vector<2x4x8x8xf32> to vector<2x1x8x8xf32>
    %348 = vector.shape_cast %347 : vector<2x1x8x8xf32> to vector<2x8x8xf32>
    %349 = vector.extract_strided_slice %344 {offsets = [0, 2, 0, 0], sizes = [2, 1, 8, 8], strides = [1, 1, 1, 1]} : vector<2x4x8x8xf32> to vector<2x1x8x8xf32>
    %350 = vector.shape_cast %349 : vector<2x1x8x8xf32> to vector<2x8x8xf32>
    %351 = vector.extract_strided_slice %344 {offsets = [0, 3, 0, 0], sizes = [2, 1, 8, 8], strides = [1, 1, 1, 1]} : vector<2x4x8x8xf32> to vector<2x1x8x8xf32>
    %352 = vector.shape_cast %351 : vector<2x1x8x8xf32> to vector<2x8x8xf32>
    %353 = tpu.concatenate %346, %348, %350, %352 in 2 : vector<2x8x8xf32>, vector<2x8x8xf32>, vector<2x8x8xf32>, vector<2x8x8xf32> -> vector<2x8x32xf32>
    %354 = vector.shape_cast %353 : vector<2x8x32xf32> to vector<16x32xf32>
    %cst_118 = arith.constant dense<0.000000e+00> : vector<16x32xf32>
    %355 = tpu.matmul %354, %248, %cst_118 {dimension_numbers = #tpu.dot_dimension_numbers<[1], [0], [0], [1], [0, 0, 1, 1], [], []>} : vector<16x32xf32>, vector<32x32xf32>, vector<16x32xf32> -> vector<16x32xf32>
    %356 = vector.broadcast %249 : vector<1x32xf32> to vector<16x32xf32>
    %357 = arith.addf %355, %356 : vector<16x32xf32>
    %358 = vector.shape_cast %342 : vector<8x8x8xf32> to vector<2x4x8x8xf32>
    %c0_119 = arith.constant 0 : index
    %c0_120 = arith.constant 0 : index
    %c0_121 = arith.constant 0 : index
    %c0_122 = arith.constant 0 : index
    %359 = vector.load %arg34[%c0_119, %c0_120, %c0_121, %c0_122] : memref<2x4x8x8xf32, #tpu.memory_space<vmem>>, vector<2x4x8x8xf32>
    tpu.vector_store %arg34[%c0_119, %c0_120, %c0_121, %c0_122], %358 {strides = array<i32>} : memref<2x4x8x8xf32, #tpu.memory_space<vmem>>, vector<2x4x8x8xf32>,
    %360 = arith.addf %245, %357 : vector<16x32xf32>
    %cst_123 = arith.constant dense<0.000000e+00> : vector<16xf32>
    %361 = vector.multi_reduction <add>, %360, %cst_123 [1] : vector<16x32xf32> to vector<16xf32>
    %362 = vector.shape_cast %361 : vector<16xf32> to vector<16x1xf32>
    %cst_124 = arith.constant 3.200000e+01 : f32
    %363 = vector.broadcast %cst_124 : f32 to vector<16x1xf32>
    %364 = arith.divf %362, %363 : vector<16x1xf32>
    %365 = vector.broadcast %364 : vector<16x1xf32> to vector<16x32xf32>
    %366 = arith.subf %360, %365 : vector<16x32xf32>
    %367 = arith.mulf %366, %366 : vector<16x32xf32>
    %cst_125 = arith.constant dense<0.000000e+00> : vector<16xf32>
    %368 = vector.multi_reduction <add>, %367, %cst_125 [1] : vector<16x32xf32> to vector<16xf32>
    %369 = vector.shape_cast %368 : vector<16xf32> to vector<16x1xf32>
    %cst_126 = arith.constant 3.200000e+01 : f32
    %370 = vector.broadcast %cst_126 : f32 to vector<16x1xf32>
    %371 = arith.divf %369, %370 : vector<16x1xf32>
    %cst_127 = arith.constant 9.99999974E-6 : f32
    %372 = vector.broadcast %cst_127 : f32 to vector<16x1xf32>
    %373 = arith.addf %371, %372 : vector<16x1xf32>
    %374 = math.rsqrt %373 : vector<16x1xf32>
    %375 = vector.broadcast %374 : vector<16x1xf32> to vector<16x32xf32>
    %376 = arith.mulf %366, %375 : vector<16x32xf32>
    %377 = vector.broadcast %258 : vector<1x32xf32> to vector<16x32xf32>
    %378 = arith.mulf %376, %377 : vector<16x32xf32>
    %379 = vector.broadcast %259 : vector<1x32xf32> to vector<16x32xf32>
    %380 = arith.addf %378, %379 : vector<16x32xf32>
    %cst_128 = arith.constant dense<0.000000e+00> : vector<16x32xf32>
    %381 = tpu.matmul %380, %250, %cst_128 {dimension_numbers = #tpu.dot_dimension_numbers<[1], [0], [0], [1], [0, 0, 1, 1], [], []>} : vector<16x32xf32>, vector<32x32xf32>, vector<16x32xf32> -> vector<16x32xf32>
    %382 = vector.broadcast %251 : vector<1x32xf32> to vector<16x32xf32>
    %383 = arith.addf %381, %382 : vector<16x32xf32>
    %384 = vector.shape_cast %383 : vector<16x32xf32> to vector<2x8x32xf32>
    %385 = vector.extract_strided_slice %384 {offsets = [0, 0, 0], sizes = [2, 8, 8], strides = [1, 1, 1]} : vector<2x8x32xf32> to vector<2x8x8xf32>
    %386 = vector.extract_strided_slice %384 {offsets = [0, 0, 8], sizes = [2, 8, 8], strides = [1, 1, 1]} : vector<2x8x32xf32> to vector<2x8x8xf32>
    %387 = vector.extract_strided_slice %384 {offsets = [0, 0, 16], sizes = [2, 8, 8], strides = [1, 1, 1]} : vector<2x8x32xf32> to vector<2x8x8xf32>
    %388 = vector.extract_strided_slice %384 {offsets = [0, 0, 24], sizes = [2, 8, 8], strides = [1, 1, 1]} : vector<2x8x32xf32> to vector<2x8x8xf32>
    %389 = vector.shape_cast %385 : vector<2x8x8xf32> to vector<2x1x8x8xf32>
    %390 = vector.shape_cast %386 : vector<2x8x8xf32> to vector<2x1x8x8xf32>
    %391 = vector.shape_cast %387 : vector<2x8x8xf32> to vector<2x1x8x8xf32>
    %392 = vector.shape_cast %388 : vector<2x8x8xf32> to vector<2x1x8x8xf32>
    %393 = tpu.concatenate %389, %390, %391, %392 in 1 : vector<2x1x8x8xf32>, vector<2x1x8x8xf32>, vector<2x1x8x8xf32>, vector<2x1x8x8xf32> -> vector<2x4x8x8xf32>
    %394 = vector.shape_cast %393 : vector<2x4x8x8xf32> to vector<8x8x8xf32>
    "tpu.trace_start"() <{level = 10 : i32, message = "zqd,zkd->zqk"}> : () -> ()
    %cst_129 = arith.constant dense<0.000000e+00> : vector<8x8x8xf32>
    %395 = tpu.matmul %394, %278, %cst_129 {dimension_numbers = #tpu.dot_dimension_numbers<[2], [2], [1], [1], [0, 0, 0, 1, 1, 1], [0], [0]>} : vector<8x8x8xf32>, vector<8x8x8xf32>, vector<8x8x8xf32> -> vector<8x8x8xf32>
    "tpu.trace_stop"() : () -> ()
    %cst_130 = arith.constant 0.353553385 : f32
    %396 = vector.broadcast %cst_130 : f32 to vector<8x8x8xf32>
    %397 = arith.mulf %395, %396 : vector<8x8x8xf32>
    %cst_131 = arith.constant dense<0xFF800000> : vector<8x8xf32>
    %398 = vector.multi_reduction <maximumf>, %397, %cst_131 [2] : vector<8x8x8xf32> to vector<8x8xf32>
    %399 = vector.shape_cast %398 : vector<8x8xf32> to vector<8x8x1xf32>
    %400 = vector.broadcast %399 : vector<8x8x1xf32> to vector<8x8x8xf32>
    %401 = arith.subf %397, %400 : vector<8x8x8xf32>
    %402 = math.exp %401 : vector<8x8x8xf32>
    %cst_132 = arith.constant dense<0.000000e+00> : vector<8x8xf32>
    %403 = vector.multi_reduction <add>, %402, %cst_132 [2] : vector<8x8x8xf32> to vector<8x8xf32>
    %404 = vector.shape_cast %403 : vector<8x8xf32> to vector<8x8x1xf32>
    %405 = tpu.reciprocal %404 : vector<8x8x1xf32> -> vector<8x8x1xf32>
    %406 = vector.broadcast %405 : vector<8x8x1xf32> to vector<8x8x8xf32>
    %407 = arith.mulf %402, %406 : vector<8x8x8xf32>
    "tpu.trace_start"() <{level = 10 : i32, message = "zqk,zkd->zqd"}> : () -> ()
    %cst_133 = arith.constant dense<0.000000e+00> : vector<8x8x8xf32>
    %408 = tpu.matmul %407, %290, %cst_133 {dimension_numbers = #tpu.dot_dimension_numbers<[2], [1], [1], [2], [0, 0, 0, 1, 1, 2], [0], [0]>} : vector<8x8x8xf32>, vector<8x8x8xf32>, vector<8x8x8xf32> -> vector<8x8x8xf32>
    "tpu.trace_stop"() : () -> ()
    %409 = vector.shape_cast %408 : vector<8x8x8xf32> to vector<2x4x8x8xf32>
    %410 = vector.extract_strided_slice %409 {offsets = [0, 0, 0, 0], sizes = [2, 1, 8, 8], strides = [1, 1, 1, 1]} : vector<2x4x8x8xf32> to vector<2x1x8x8xf32>
    %411 = vector.shape_cast %410 : vector<2x1x8x8xf32> to vector<2x8x8xf32>
    %412 = vector.extract_strided_slice %409 {offsets = [0, 1, 0, 0], sizes = [2, 1, 8, 8], strides = [1, 1, 1, 1]} : vector<2x4x8x8xf32> to vector<2x1x8x8xf32>
    %413 = vector.shape_cast %412 : vector<2x1x8x8xf32> to vector<2x8x8xf32>
    %414 = vector.extract_strided_slice %409 {offsets = [0, 2, 0, 0], sizes = [2, 1, 8, 8], strides = [1, 1, 1, 1]} : vector<2x4x8x8xf32> to vector<2x1x8x8xf32>
    %415 = vector.shape_cast %414 : vector<2x1x8x8xf32> to vector<2x8x8xf32>
    %416 = vector.extract_strided_slice %409 {offsets = [0, 3, 0, 0], sizes = [2, 1, 8, 8], strides = [1, 1, 1, 1]} : vector<2x4x8x8xf32> to vector<2x1x8x8xf32>
    %417 = vector.shape_cast %416 : vector<2x1x8x8xf32> to vector<2x8x8xf32>
    %418 = tpu.concatenate %411, %413, %415, %417 in 2 : vector<2x8x8xf32>, vector<2x8x8xf32>, vector<2x8x8xf32>, vector<2x8x8xf32> -> vector<2x8x32xf32>
    %419 = vector.shape_cast %418 : vector<2x8x32xf32> to vector<16x32xf32>
    %cst_134 = arith.constant dense<0.000000e+00> : vector<16x32xf32>
    %420 = tpu.matmul %419, %254, %cst_134 {dimension_numbers = #tpu.dot_dimension_numbers<[1], [0], [0], [1], [0, 0, 1, 1], [], []>} : vector<16x32xf32>, vector<32x32xf32>, vector<16x32xf32> -> vector<16x32xf32>
    %421 = vector.broadcast %255 : vector<1x32xf32> to vector<16x32xf32>
    %422 = arith.addf %420, %421 : vector<16x32xf32>
    %423 = vector.shape_cast %407 : vector<8x8x8xf32> to vector<2x4x8x8xf32>
    %c0_135 = arith.constant 0 : index
    %c0_136 = arith.constant 0 : index
    %c0_137 = arith.constant 0 : index
    %c0_138 = arith.constant 0 : index
    %424 = vector.load %arg36[%c0_135, %c0_136, %c0_137, %c0_138] : memref<2x4x8x8xf32, #tpu.memory_space<vmem>>, vector<2x4x8x8xf32>
    tpu.vector_store %arg36[%c0_135, %c0_136, %c0_137, %c0_138], %423 {strides = array<i32>} : memref<2x4x8x8xf32, #tpu.memory_space<vmem>>, vector<2x4x8x8xf32>,
    %425 = arith.addf %380, %422 : vector<16x32xf32>
    %cst_139 = arith.constant dense<0.000000e+00> : vector<16xf32>
    %426 = vector.multi_reduction <add>, %425, %cst_139 [1] : vector<16x32xf32> to vector<16xf32>
    %427 = vector.shape_cast %426 : vector<16xf32> to vector<16x1xf32>
    %cst_140 = arith.constant 3.200000e+01 : f32
    %428 = vector.broadcast %cst_140 : f32 to vector<16x1xf32>
    %429 = arith.divf %427, %428 : vector<16x1xf32>
    %430 = vector.broadcast %429 : vector<16x1xf32> to vector<16x32xf32>
    %431 = arith.subf %425, %430 : vector<16x32xf32>
    %432 = arith.mulf %431, %431 : vector<16x32xf32>
    %cst_141 = arith.constant dense<0.000000e+00> : vector<16xf32>
    %433 = vector.multi_reduction <add>, %432, %cst_141 [1] : vector<16x32xf32> to vector<16xf32>
    %434 = vector.shape_cast %433 : vector<16xf32> to vector<16x1xf32>
    %cst_142 = arith.constant 3.200000e+01 : f32
    %435 = vector.broadcast %cst_142 : f32 to vector<16x1xf32>
    %436 = arith.divf %434, %435 : vector<16x1xf32>
    %cst_143 = arith.constant 9.99999974E-6 : f32
    %437 = vector.broadcast %cst_143 : f32 to vector<16x1xf32>
    %438 = arith.addf %436, %437 : vector<16x1xf32>
    %439 = math.rsqrt %438 : vector<16x1xf32>
    %440 = vector.broadcast %439 : vector<16x1xf32> to vector<16x32xf32>
    %441 = arith.mulf %431, %440 : vector<16x32xf32>
    %442 = vector.broadcast %260 : vector<1x32xf32> to vector<16x32xf32>
    %443 = arith.mulf %441, %442 : vector<16x32xf32>
    %444 = vector.broadcast %261 : vector<1x32xf32> to vector<16x32xf32>
    %445 = arith.addf %443, %444 : vector<16x32xf32>
    %cst_144 = arith.constant dense<0.000000e+00> : vector<16x64xf32>
    %446 = tpu.matmul %445, %256, %cst_144 {dimension_numbers = #tpu.dot_dimension_numbers<[1], [0], [0], [1], [0, 0, 1, 1], [], []>} : vector<16x32xf32>, vector<32x64xf32>, vector<16x64xf32> -> vector<16x64xf32>
    %cst_145 = arith.constant 0.000000e+00 : f32
    %447 = vector.broadcast %cst_145 : f32 to vector<16x64xf32>
    %448 = arith.maximumf %446, %447 : vector<16x64xf32>
    %cst_146 = arith.constant dense<0.000000e+00> : vector<16x32xf32>
    %449 = tpu.matmul %448, %257, %cst_146 {dimension_numbers = #tpu.dot_dimension_numbers<[1], [0], [0], [1], [0, 0, 1, 1], [], []>} : vector<16x64xf32>, vector<64x32xf32>, vector<16x32xf32> -> vector<16x32xf32>
    %450 = arith.addf %445, %449 : vector<16x32xf32>
    %cst_147 = arith.constant dense<0.000000e+00> : vector<16xf32>
    %451 = vector.multi_reduction <add>, %450, %cst_147 [1] : vector<16x32xf32> to vector<16xf32>
    %452 = vector.shape_cast %451 : vector<16xf32> to vector<16x1xf32>
    %cst_148 = arith.constant 3.200000e+01 : f32
    %453 = vector.broadcast %cst_148 : f32 to vector<16x1xf32>
    %454 = arith.divf %452, %453 : vector<16x1xf32>
    %455 = vector.broadcast %454 : vector<16x1xf32> to vector<16x32xf32>
    %456 = arith.subf %450, %455 : vector<16x32xf32>
    %457 = arith.mulf %456, %456 : vector<16x32xf32>
    %cst_149 = arith.constant dense<0.000000e+00> : vector<16xf32>
    %458 = vector.multi_reduction <add>, %457, %cst_149 [1] : vector<16x32xf32> to vector<16xf32>
    %459 = vector.shape_cast %458 : vector<16xf32> to vector<16x1xf32>
    %cst_150 = arith.constant 3.200000e+01 : f32
    %460 = vector.broadcast %cst_150 : f32 to vector<16x1xf32>
    %461 = arith.divf %459, %460 : vector<16x1xf32>
    %cst_151 = arith.constant 9.99999974E-6 : f32
    %462 = vector.broadcast %cst_151 : f32 to vector<16x1xf32>
    %463 = arith.addf %461, %462 : vector<16x1xf32>
    %464 = math.rsqrt %463 : vector<16x1xf32>
    %465 = vector.broadcast %464 : vector<16x1xf32> to vector<16x32xf32>
    %466 = arith.mulf %456, %465 : vector<16x32xf32>
    %467 = vector.broadcast %262 : vector<1x32xf32> to vector<16x32xf32>
    %468 = arith.mulf %466, %467 : vector<16x32xf32>
    %469 = vector.broadcast %263 : vector<1x32xf32> to vector<16x32xf32>
    %470 = arith.addf %468, %469 : vector<16x32xf32>
    %cst_152 = arith.constant dense<0.000000e+00> : vector<16x96xf32>
    %471 = tpu.matmul %470, %246, %cst_152 {dimension_numbers = #tpu.dot_dimension_numbers<[1], [0], [0], [1], [0, 0, 1, 1], [], []>} : vector<16x32xf32>, vector<32x96xf32>, vector<16x96xf32> -> vector<16x96xf32>
    %472 = vector.broadcast %247 : vector<1x96xf32> to vector<16x96xf32>
    %473 = arith.addf %471, %472 : vector<16x96xf32>
    %474 = vector.extract_strided_slice %473 {offsets = [0, 0], sizes = [16, 32], strides = [1, 1]} : vector<16x96xf32> to vector<16x32xf32>
    %475 = vector.shape_cast %474 : vector<16x32xf32> to vector<2x8x32xf32>
    %476 = vector.extract_strided_slice %475 {offsets = [0, 0, 0], sizes = [2, 8, 8], strides = [1, 1, 1]} : vector<2x8x32xf32> to vector<2x8x8xf32>
    %477 = vector.extract_strided_slice %475 {offsets = [0, 0, 8], sizes = [2, 8, 8], strides = [1, 1, 1]} : vector<2x8x32xf32> to vector<2x8x8xf32>
    %478 = vector.extract_strided_slice %475 {offsets = [0, 0, 16], sizes = [2, 8, 8], strides = [1, 1, 1]} : vector<2x8x32xf32> to vector<2x8x8xf32>
    %479 = vector.extract_strided_slice %475 {offsets = [0, 0, 24], sizes = [2, 8, 8], strides = [1, 1, 1]} : vector<2x8x32xf32> to vector<2x8x8xf32>
    %480 = vector.shape_cast %476 : vector<2x8x8xf32> to vector<2x1x8x8xf32>
    %481 = vector.shape_cast %477 : vector<2x8x8xf32> to vector<2x1x8x8xf32>
    %482 = vector.shape_cast %478 : vector<2x8x8xf32> to vector<2x1x8x8xf32>
    %483 = vector.shape_cast %479 : vector<2x8x8xf32> to vector<2x1x8x8xf32>
    %484 = tpu.concatenate %480, %481, %482, %483 in 1 : vector<2x1x8x8xf32>, vector<2x1x8x8xf32>, vector<2x1x8x8xf32>, vector<2x1x8x8xf32> -> vector<2x4x8x8xf32>
    %485 = vector.shape_cast %484 : vector<2x4x8x8xf32> to vector<8x8x8xf32>
    %486 = vector.extract_strided_slice %473 {offsets = [0, 32], sizes = [16, 32], strides = [1, 1]} : vector<16x96xf32> to vector<16x32xf32>
    %487 = vector.shape_cast %486 : vector<16x32xf32> to vector<2x8x32xf32>
    %488 = vector.extract_strided_slice %487 {offsets = [0, 0, 0], sizes = [2, 8, 8], strides = [1, 1, 1]} : vector<2x8x32xf32> to vector<2x8x8xf32>
    %489 = vector.extract_strided_slice %487 {offsets = [0, 0, 8], sizes = [2, 8, 8], strides = [1, 1, 1]} : vector<2x8x32xf32> to vector<2x8x8xf32>
    %490 = vector.extract_strided_slice %487 {offsets = [0, 0, 16], sizes = [2, 8, 8], strides = [1, 1, 1]} : vector<2x8x32xf32> to vector<2x8x8xf32>
    %491 = vector.extract_strided_slice %487 {offsets = [0, 0, 24], sizes = [2, 8, 8], strides = [1, 1, 1]} : vector<2x8x32xf32> to vector<2x8x8xf32>
    %492 = vector.shape_cast %488 : vector<2x8x8xf32> to vector<2x1x8x8xf32>
    %493 = vector.shape_cast %489 : vector<2x8x8xf32> to vector<2x1x8x8xf32>
    %494 = vector.shape_cast %490 : vector<2x8x8xf32> to vector<2x1x8x8xf32>
    %495 = vector.shape_cast %491 : vector<2x8x8xf32> to vector<2x1x8x8xf32>
    %496 = tpu.concatenate %492, %493, %494, %495 in 1 : vector<2x1x8x8xf32>, vector<2x1x8x8xf32>, vector<2x1x8x8xf32>, vector<2x1x8x8xf32> -> vector<2x4x8x8xf32>
    %497 = vector.shape_cast %496 : vector<2x4x8x8xf32> to vector<8x8x8xf32>
    %498 = vector.extract_strided_slice %473 {offsets = [0, 64], sizes = [16, 32], strides = [1, 1]} : vector<16x96xf32> to vector<16x32xf32>
    %499 = vector.shape_cast %498 : vector<16x32xf32> to vector<2x8x32xf32>
    %500 = vector.extract_strided_slice %499 {offsets = [0, 0, 0], sizes = [2, 8, 8], strides = [1, 1, 1]} : vector<2x8x32xf32> to vector<2x8x8xf32>
    %501 = vector.extract_strided_slice %499 {offsets = [0, 0, 8], sizes = [2, 8, 8], strides = [1, 1, 1]} : vector<2x8x32xf32> to vector<2x8x8xf32>
    %502 = vector.extract_strided_slice %499 {offsets = [0, 0, 16], sizes = [2, 8, 8], strides = [1, 1, 1]} : vector<2x8x32xf32> to vector<2x8x8xf32>
    %503 = vector.extract_strided_slice %499 {offsets = [0, 0, 24], sizes = [2, 8, 8], strides = [1, 1, 1]} : vector<2x8x32xf32> to vector<2x8x8xf32>
    %504 = vector.shape_cast %500 : vector<2x8x8xf32> to vector<2x1x8x8xf32>
    %505 = vector.shape_cast %501 : vector<2x8x8xf32> to vector<2x1x8x8xf32>
    %506 = vector.shape_cast %502 : vector<2x8x8xf32> to vector<2x1x8x8xf32>
    %507 = vector.shape_cast %503 : vector<2x8x8xf32> to vector<2x1x8x8xf32>
    %508 = tpu.concatenate %504, %505, %506, %507 in 1 : vector<2x1x8x8xf32>, vector<2x1x8x8xf32>, vector<2x1x8x8xf32>, vector<2x1x8x8xf32> -> vector<2x4x8x8xf32>
    %509 = vector.shape_cast %508 : vector<2x4x8x8xf32> to vector<8x8x8xf32>
    "tpu.trace_start"() <{level = 10 : i32, message = "zqd,zkd->zqk"}> : () -> ()
    %cst_153 = arith.constant dense<0.000000e+00> : vector<8x8x8xf32>
    %510 = tpu.matmul %485, %497, %cst_153 {dimension_numbers = #tpu.dot_dimension_numbers<[2], [2], [1], [1], [0, 0, 0, 1, 1, 1], [0], [0]>} : vector<8x8x8xf32>, vector<8x8x8xf32>, vector<8x8x8xf32> -> vector<8x8x8xf32>
    "tpu.trace_stop"() : () -> ()
    %cst_154 = arith.constant 0.353553385 : f32
    %511 = vector.broadcast %cst_154 : f32 to vector<8x8x8xf32>
    %512 = arith.mulf %510, %511 : vector<8x8x8xf32>
    %cst_155 = arith.constant dense<0xFF800000> : vector<8x8xf32>
    %513 = vector.multi_reduction <maximumf>, %512, %cst_155 [2] : vector<8x8x8xf32> to vector<8x8xf32>
    %514 = vector.shape_cast %513 : vector<8x8xf32> to vector<8x8x1xf32>
    %515 = vector.broadcast %514 : vector<8x8x1xf32> to vector<8x8x8xf32>
    %516 = arith.subf %512, %515 : vector<8x8x8xf32>
    %517 = math.exp %516 : vector<8x8x8xf32>
    %cst_156 = arith.constant dense<0.000000e+00> : vector<8x8xf32>
    %518 = vector.multi_reduction <add>, %517, %cst_156 [2] : vector<8x8x8xf32> to vector<8x8xf32>
    %519 = vector.shape_cast %518 : vector<8x8xf32> to vector<8x8x1xf32>
    %520 = tpu.reciprocal %519 : vector<8x8x1xf32> -> vector<8x8x1xf32>
    %521 = vector.broadcast %520 : vector<8x8x1xf32> to vector<8x8x8xf32>
    %522 = arith.mulf %517, %521 : vector<8x8x8xf32>
    "tpu.trace_start"() <{level = 10 : i32, message = "zqk,zkd->zqd"}> : () -> ()
    %cst_157 = arith.constant dense<0.000000e+00> : vector<8x8x8xf32>
    %523 = tpu.matmul %522, %509, %cst_157 {dimension_numbers = #tpu.dot_dimension_numbers<[2], [1], [1], [2], [0, 0, 0, 1, 1, 2], [0], [0]>} : vector<8x8x8xf32>, vector<8x8x8xf32>, vector<8x8x8xf32> -> vector<8x8x8xf32>
    "tpu.trace_stop"() : () -> ()
    %524 = vector.shape_cast %523 : vector<8x8x8xf32> to vector<2x4x8x8xf32>
    %525 = vector.extract_strided_slice %524 {offsets = [0, 0, 0, 0], sizes = [2, 1, 8, 8], strides = [1, 1, 1, 1]} : vector<2x4x8x8xf32> to vector<2x1x8x8xf32>
    %526 = vector.shape_cast %525 : vector<2x1x8x8xf32> to vector<2x8x8xf32>
    %527 = vector.extract_strided_slice %524 {offsets = [0, 1, 0, 0], sizes = [2, 1, 8, 8], strides = [1, 1, 1, 1]} : vector<2x4x8x8xf32> to vector<2x1x8x8xf32>
    %528 = vector.shape_cast %527 : vector<2x1x8x8xf32> to vector<2x8x8xf32>
    %529 = vector.extract_strided_slice %524 {offsets = [0, 2, 0, 0], sizes = [2, 1, 8, 8], strides = [1, 1, 1, 1]} : vector<2x4x8x8xf32> to vector<2x1x8x8xf32>
    %530 = vector.shape_cast %529 : vector<2x1x8x8xf32> to vector<2x8x8xf32>
    %531 = vector.extract_strided_slice %524 {offsets = [0, 3, 0, 0], sizes = [2, 1, 8, 8], strides = [1, 1, 1, 1]} : vector<2x4x8x8xf32> to vector<2x1x8x8xf32>
    %532 = vector.shape_cast %531 : vector<2x1x8x8xf32> to vector<2x8x8xf32>
    %533 = tpu.concatenate %526, %528, %530, %532 in 2 : vector<2x8x8xf32>, vector<2x8x8xf32>, vector<2x8x8xf32>, vector<2x8x8xf32> -> vector<2x8x32xf32>
    %534 = vector.shape_cast %533 : vector<2x8x32xf32> to vector<16x32xf32>
    %cst_158 = arith.constant dense<0.000000e+00> : vector<16x32xf32>
    %535 = tpu.matmul %534, %248, %cst_158 {dimension_numbers = #tpu.dot_dimension_numbers<[1], [0], [0], [1], [0, 0, 1, 1], [], []>} : vector<16x32xf32>, vector<32x32xf32>, vector<16x32xf32> -> vector<16x32xf32>
    %536 = vector.broadcast %249 : vector<1x32xf32> to vector<16x32xf32>
    %537 = arith.addf %535, %536 : vector<16x32xf32>
    %538 = vector.shape_cast %522 : vector<8x8x8xf32> to vector<2x4x8x8xf32>
    %c0_159 = arith.constant 0 : index
    %c0_160 = arith.constant 0 : index
    %c0_161 = arith.constant 0 : index
    %c0_162 = arith.constant 0 : index
    %539 = vector.load %arg35[%c0_159, %c0_160, %c0_161, %c0_162] : memref<2x4x8x8xf32, #tpu.memory_space<vmem>>, vector<2x4x8x8xf32>
    tpu.vector_store %arg35[%c0_159, %c0_160, %c0_161, %c0_162], %538 {strides = array<i32>} : memref<2x4x8x8xf32, #tpu.memory_space<vmem>>, vector<2x4x8x8xf32>,
    %540 = arith.addf %470, %537 : vector<16x32xf32>
    %cst_163 = arith.constant dense<0.000000e+00> : vector<16xf32>
    %541 = vector.multi_reduction <add>, %540, %cst_163 [1] : vector<16x32xf32> to vector<16xf32>
    %542 = vector.shape_cast %541 : vector<16xf32> to vector<16x1xf32>
    %cst_164 = arith.constant 3.200000e+01 : f32
    %543 = vector.broadcast %cst_164 : f32 to vector<16x1xf32>
    %544 = arith.divf %542, %543 : vector<16x1xf32>
    %545 = vector.broadcast %544 : vector<16x1xf32> to vector<16x32xf32>
    %546 = arith.subf %540, %545 : vector<16x32xf32>
    %547 = arith.mulf %546, %546 : vector<16x32xf32>
    %cst_165 = arith.constant dense<0.000000e+00> : vector<16xf32>
    %548 = vector.multi_reduction <add>, %547, %cst_165 [1] : vector<16x32xf32> to vector<16xf32>
    %549 = vector.shape_cast %548 : vector<16xf32> to vector<16x1xf32>
    %cst_166 = arith.constant 3.200000e+01 : f32
    %550 = vector.broadcast %cst_166 : f32 to vector<16x1xf32>
    %551 = arith.divf %549, %550 : vector<16x1xf32>
    %cst_167 = arith.constant 9.99999974E-6 : f32
    %552 = vector.broadcast %cst_167 : f32 to vector<16x1xf32>
    %553 = arith.addf %551, %552 : vector<16x1xf32>
    %554 = math.rsqrt %553 : vector<16x1xf32>
    %555 = vector.broadcast %554 : vector<16x1xf32> to vector<16x32xf32>
    %556 = arith.mulf %546, %555 : vector<16x32xf32>
    %557 = vector.broadcast %258 : vector<1x32xf32> to vector<16x32xf32>
    %558 = arith.mulf %556, %557 : vector<16x32xf32>
    %559 = vector.broadcast %259 : vector<1x32xf32> to vector<16x32xf32>
    %560 = arith.addf %558, %559 : vector<16x32xf32>
    %cst_168 = arith.constant dense<0.000000e+00> : vector<16x32xf32>
    %561 = tpu.matmul %560, %250, %cst_168 {dimension_numbers = #tpu.dot_dimension_numbers<[1], [0], [0], [1], [0, 0, 1, 1], [], []>} : vector<16x32xf32>, vector<32x32xf32>, vector<16x32xf32> -> vector<16x32xf32>
    %562 = vector.broadcast %251 : vector<1x32xf32> to vector<16x32xf32>
    %563 = arith.addf %561, %562 : vector<16x32xf32>
    %564 = vector.shape_cast %563 : vector<16x32xf32> to vector<2x8x32xf32>
    %565 = vector.extract_strided_slice %564 {offsets = [0, 0, 0], sizes = [2, 8, 8], strides = [1, 1, 1]} : vector<2x8x32xf32> to vector<2x8x8xf32>
    %566 = vector.extract_strided_slice %564 {offsets = [0, 0, 8], sizes = [2, 8, 8], strides = [1, 1, 1]} : vector<2x8x32xf32> to vector<2x8x8xf32>
    %567 = vector.extract_strided_slice %564 {offsets = [0, 0, 16], sizes = [2, 8, 8], strides = [1, 1, 1]} : vector<2x8x32xf32> to vector<2x8x8xf32>
    %568 = vector.extract_strided_slice %564 {offsets = [0, 0, 24], sizes = [2, 8, 8], strides = [1, 1, 1]} : vector<2x8x32xf32> to vector<2x8x8xf32>
    %569 = vector.shape_cast %565 : vector<2x8x8xf32> to vector<2x1x8x8xf32>
    %570 = vector.shape_cast %566 : vector<2x8x8xf32> to vector<2x1x8x8xf32>
    %571 = vector.shape_cast %567 : vector<2x8x8xf32> to vector<2x1x8x8xf32>
    %572 = vector.shape_cast %568 : vector<2x8x8xf32> to vector<2x1x8x8xf32>
    %573 = tpu.concatenate %569, %570, %571, %572 in 1 : vector<2x1x8x8xf32>, vector<2x1x8x8xf32>, vector<2x1x8x8xf32>, vector<2x1x8x8xf32> -> vector<2x4x8x8xf32>
    %574 = vector.shape_cast %573 : vector<2x4x8x8xf32> to vector<8x8x8xf32>
    "tpu.trace_start"() <{level = 10 : i32, message = "zqd,zkd->zqk"}> : () -> ()
    %cst_169 = arith.constant dense<0.000000e+00> : vector<8x8x8xf32>
    %575 = tpu.matmul %574, %278, %cst_169 {dimension_numbers = #tpu.dot_dimension_numbers<[2], [2], [1], [1], [0, 0, 0, 1, 1, 1], [0], [0]>} : vector<8x8x8xf32>, vector<8x8x8xf32>, vector<8x8x8xf32> -> vector<8x8x8xf32>
    "tpu.trace_stop"() : () -> ()
    %cst_170 = arith.constant 0.353553385 : f32
    %576 = vector.broadcast %cst_170 : f32 to vector<8x8x8xf32>
    %577 = arith.mulf %575, %576 : vector<8x8x8xf32>
    %cst_171 = arith.constant dense<0xFF800000> : vector<8x8xf32>
    %578 = vector.multi_reduction <maximumf>, %577, %cst_171 [2] : vector<8x8x8xf32> to vector<8x8xf32>
    %579 = vector.shape_cast %578 : vector<8x8xf32> to vector<8x8x1xf32>
    %580 = vector.broadcast %579 : vector<8x8x1xf32> to vector<8x8x8xf32>
    %581 = arith.subf %577, %580 : vector<8x8x8xf32>
    %582 = math.exp %581 : vector<8x8x8xf32>
    %cst_172 = arith.constant dense<0.000000e+00> : vector<8x8xf32>
    %583 = vector.multi_reduction <add>, %582, %cst_172 [2] : vector<8x8x8xf32> to vector<8x8xf32>
    %584 = vector.shape_cast %583 : vector<8x8xf32> to vector<8x8x1xf32>
    %585 = tpu.reciprocal %584 : vector<8x8x1xf32> -> vector<8x8x1xf32>
    %586 = vector.broadcast %585 : vector<8x8x1xf32> to vector<8x8x8xf32>
    %587 = arith.mulf %582, %586 : vector<8x8x8xf32>
    "tpu.trace_start"() <{level = 10 : i32, message = "zqk,zkd->zqd"}> : () -> ()
    %cst_173 = arith.constant dense<0.000000e+00> : vector<8x8x8xf32>
    %588 = tpu.matmul %587, %290, %cst_173 {dimension_numbers = #tpu.dot_dimension_numbers<[2], [1], [1], [2], [0, 0, 0, 1, 1, 2], [0], [0]>} : vector<8x8x8xf32>, vector<8x8x8xf32>, vector<8x8x8xf32> -> vector<8x8x8xf32>
    "tpu.trace_stop"() : () -> ()
    %589 = vector.shape_cast %588 : vector<8x8x8xf32> to vector<2x4x8x8xf32>
    %590 = vector.extract_strided_slice %589 {offsets = [0, 0, 0, 0], sizes = [2, 1, 8, 8], strides = [1, 1, 1, 1]} : vector<2x4x8x8xf32> to vector<2x1x8x8xf32>
    %591 = vector.shape_cast %590 : vector<2x1x8x8xf32> to vector<2x8x8xf32>
    %592 = vector.extract_strided_slice %589 {offsets = [0, 1, 0, 0], sizes = [2, 1, 8, 8], strides = [1, 1, 1, 1]} : vector<2x4x8x8xf32> to vector<2x1x8x8xf32>
    %593 = vector.shape_cast %592 : vector<2x1x8x8xf32> to vector<2x8x8xf32>
    %594 = vector.extract_strided_slice %589 {offsets = [0, 2, 0, 0], sizes = [2, 1, 8, 8], strides = [1, 1, 1, 1]} : vector<2x4x8x8xf32> to vector<2x1x8x8xf32>
    %595 = vector.shape_cast %594 : vector<2x1x8x8xf32> to vector<2x8x8xf32>
    %596 = vector.extract_strided_slice %589 {offsets = [0, 3, 0, 0], sizes = [2, 1, 8, 8], strides = [1, 1, 1, 1]} : vector<2x4x8x8xf32> to vector<2x1x8x8xf32>
    %597 = vector.shape_cast %596 : vector<2x1x8x8xf32> to vector<2x8x8xf32>
    %598 = tpu.concatenate %591, %593, %595, %597 in 2 : vector<2x8x8xf32>, vector<2x8x8xf32>, vector<2x8x8xf32>, vector<2x8x8xf32> -> vector<2x8x32xf32>
    %599 = vector.shape_cast %598 : vector<2x8x32xf32> to vector<16x32xf32>
    %cst_174 = arith.constant dense<0.000000e+00> : vector<16x32xf32>
    %600 = tpu.matmul %599, %254, %cst_174 {dimension_numbers = #tpu.dot_dimension_numbers<[1], [0], [0], [1], [0, 0, 1, 1], [], []>} : vector<16x32xf32>, vector<32x32xf32>, vector<16x32xf32> -> vector<16x32xf32>
    %601 = vector.broadcast %255 : vector<1x32xf32> to vector<16x32xf32>
    %602 = arith.addf %600, %601 : vector<16x32xf32>
    %603 = vector.shape_cast %587 : vector<8x8x8xf32> to vector<2x4x8x8xf32>
    %c0_175 = arith.constant 0 : index
    %c0_176 = arith.constant 0 : index
    %c0_177 = arith.constant 0 : index
    %c0_178 = arith.constant 0 : index
    %604 = vector.load %arg37[%c0_175, %c0_176, %c0_177, %c0_178] : memref<2x4x8x8xf32, #tpu.memory_space<vmem>>, vector<2x4x8x8xf32>
    tpu.vector_store %arg37[%c0_175, %c0_176, %c0_177, %c0_178], %603 {strides = array<i32>} : memref<2x4x8x8xf32, #tpu.memory_space<vmem>>, vector<2x4x8x8xf32>,
    %605 = arith.addf %560, %602 : vector<16x32xf32>
    %cst_179 = arith.constant dense<0.000000e+00> : vector<16xf32>
    %606 = vector.multi_reduction <add>, %605, %cst_179 [1] : vector<16x32xf32> to vector<16xf32>
    %607 = vector.shape_cast %606 : vector<16xf32> to vector<16x1xf32>
    %cst_180 = arith.constant 3.200000e+01 : f32
    %608 = vector.broadcast %cst_180 : f32 to vector<16x1xf32>
    %609 = arith.divf %607, %608 : vector<16x1xf32>
    %610 = vector.broadcast %609 : vector<16x1xf32> to vector<16x32xf32>
    %611 = arith.subf %605, %610 : vector<16x32xf32>
    %612 = arith.mulf %611, %611 : vector<16x32xf32>
    %cst_181 = arith.constant dense<0.000000e+00> : vector<16xf32>
    %613 = vector.multi_reduction <add>, %612, %cst_181 [1] : vector<16x32xf32> to vector<16xf32>
    %614 = vector.shape_cast %613 : vector<16xf32> to vector<16x1xf32>
    %cst_182 = arith.constant 3.200000e+01 : f32
    %615 = vector.broadcast %cst_182 : f32 to vector<16x1xf32>
    %616 = arith.divf %614, %615 : vector<16x1xf32>
    %cst_183 = arith.constant 9.99999974E-6 : f32
    %617 = vector.broadcast %cst_183 : f32 to vector<16x1xf32>
    %618 = arith.addf %616, %617 : vector<16x1xf32>
    %619 = math.rsqrt %618 : vector<16x1xf32>
    %620 = vector.broadcast %619 : vector<16x1xf32> to vector<16x32xf32>
    %621 = arith.mulf %611, %620 : vector<16x32xf32>
    %622 = vector.broadcast %260 : vector<1x32xf32> to vector<16x32xf32>
    %623 = arith.mulf %621, %622 : vector<16x32xf32>
    %624 = vector.broadcast %261 : vector<1x32xf32> to vector<16x32xf32>
    %625 = arith.addf %623, %624 : vector<16x32xf32>
    %cst_184 = arith.constant dense<0.000000e+00> : vector<16x64xf32>
    %626 = tpu.matmul %625, %256, %cst_184 {dimension_numbers = #tpu.dot_dimension_numbers<[1], [0], [0], [1], [0, 0, 1, 1], [], []>} : vector<16x32xf32>, vector<32x64xf32>, vector<16x64xf32> -> vector<16x64xf32>
    %cst_185 = arith.constant 0.000000e+00 : f32
    %627 = vector.broadcast %cst_185 : f32 to vector<16x64xf32>
    %628 = arith.maximumf %626, %627 : vector<16x64xf32>
    %cst_186 = arith.constant dense<0.000000e+00> : vector<16x32xf32>
    %629 = tpu.matmul %628, %257, %cst_186 {dimension_numbers = #tpu.dot_dimension_numbers<[1], [0], [0], [1], [0, 0, 1, 1], [], []>} : vector<16x64xf32>, vector<64x32xf32>, vector<16x32xf32> -> vector<16x32xf32>
    %630 = arith.addf %625, %629 : vector<16x32xf32>
    %cst_187 = arith.constant dense<0.000000e+00> : vector<16xf32>
    %631 = vector.multi_reduction <add>, %630, %cst_187 [1] : vector<16x32xf32> to vector<16xf32>
    %632 = vector.shape_cast %631 : vector<16xf32> to vector<16x1xf32>
    %cst_188 = arith.constant 3.200000e+01 : f32
    %633 = vector.broadcast %cst_188 : f32 to vector<16x1xf32>
    %634 = arith.divf %632, %633 : vector<16x1xf32>
    %635 = vector.broadcast %634 : vector<16x1xf32> to vector<16x32xf32>
    %636 = arith.subf %630, %635 : vector<16x32xf32>
    %637 = arith.mulf %636, %636 : vector<16x32xf32>
    %cst_189 = arith.constant dense<0.000000e+00> : vector<16xf32>
    %638 = vector.multi_reduction <add>, %637, %cst_189 [1] : vector<16x32xf32> to vector<16xf32>
    %639 = vector.shape_cast %638 : vector<16xf32> to vector<16x1xf32>
    %cst_190 = arith.constant 3.200000e+01 : f32
    %640 = vector.broadcast %cst_190 : f32 to vector<16x1xf32>
    %641 = arith.divf %639, %640 : vector<16x1xf32>
    %cst_191 = arith.constant 9.99999974E-6 : f32
    %642 = vector.broadcast %cst_191 : f32 to vector<16x1xf32>
    %643 = arith.addf %641, %642 : vector<16x1xf32>
    %644 = math.rsqrt %643 : vector<16x1xf32>
    %645 = vector.broadcast %644 : vector<16x1xf32> to vector<16x32xf32>
    %646 = arith.mulf %636, %645 : vector<16x32xf32>
    %647 = vector.broadcast %262 : vector<1x32xf32> to vector<16x32xf32>
    %648 = arith.mulf %646, %647 : vector<16x32xf32>
    %649 = vector.broadcast %263 : vector<1x32xf32> to vector<16x32xf32>
    %650 = arith.addf %648, %649 : vector<16x32xf32>
    %651 = vector.shape_cast %650 : vector<16x32xf32> to vector<2x8x32xf32>
    %c0_192 = arith.constant 0 : index
    %c0_193 = arith.constant 0 : index
    %c0_194 = arith.constant 0 : index
    %652 = vector.load %arg31[%c0_192, %c0_193, %c0_194] : memref<2x8x32xf32, #tpu.memory_space<vmem>>, vector<2x8x32xf32>
    tpu.vector_store %arg31[%c0_192, %c0_193, %c0_194], %651 {strides = array<i32>} : memref<2x8x32xf32, #tpu.memory_space<vmem>>, vector<2x8x32xf32>,
    return
  }
}

</mosaic_0001>

<llo_original>
// kernel: transformer_fwd.1
$region0: #{transformer_fwd.1}
  #allocation0 [shape = 'u32[]', space=smem, size = 0x4, offset = 0x4, fixed_abs, tag = 'smem constant byte address 0x4 - core index']
  #allocation1 [shape = 'u32[144,128]{1,0:T(1,128)}', space=vmem, size = 0x12000, scoped, tag = 'internal scratch']
  %s0 = inlined_call_operand.smem [shape: u32[38], index: -1, kind: input, shape index: {}]
  %s1 = sld [smem:[%s0]]
  %s2 = scalar_lea.smem %s0, 1
  %s3 = sld [smem:[%s2]]
  %s4 = scalar_lea.smem %s0, 2
  %s5 = sld [smem:[%s4]]
  %s6 = scalar_lea.smem %s0, 3
  %s7 = sld [smem:[%s6]]
  %s8 = scalar_lea.smem %s0, 4
  %s9 = sld [smem:[%s8]]
  %s10 = scalar_lea.smem %s0, 5
  %s11 = sld [smem:[%s10]]
  %s12 = scalar_lea.smem %s0, 6
  %s13 = sld [smem:[%s12]]
  %s14 = scalar_lea.smem %s0, 7
  %s15 = sld [smem:[%s14]]
  %s16 = scalar_lea.smem %s0, 8
  %s17 = sld [smem:[%s16]]
  %s18 = scalar_lea.smem %s0, 9
  %s19 = sld [smem:[%s18]]
  %s20 = scalar_lea.smem %s0, 10
  %s21 = sld [smem:[%s20]]
  %s22 = scalar_lea.smem %s0, 11
  %s23 = sld [smem:[%s22]]
  %s24 = scalar_lea.smem %s0, 12
  %s25 = sld [smem:[%s24]]
  %s26 = scalar_lea.smem %s0, 13
  %s27 = sld [smem:[%s26]]
  %s28 = scalar_lea.smem %s0, 14
  %s29 = sld [smem:[%s28]]
  %s30 = scalar_lea.smem %s0, 15
  %s31 = sld [smem:[%s30]]
  %s32 = scalar_lea.smem %s0, 16
  %s33 = sld [smem:[%s32]]
  %s34 = scalar_lea.smem %s0, 17
  %s35 = sld [smem:[%s34]]
  %s36 = scalar_lea.smem %s0, 18
  %s37 = sld [smem:[%s36]]
  %s38 = scalar_lea.smem %s0, 19
  %s39 = sld [smem:[%s38]]
  %s40 = scalar_lea.smem %s0, 20
  %s41 = sld [smem:[%s40]]
  %s42 = scalar_lea.smem %s0, 21
  %s43 = sld [smem:[%s42]]
  %s44 = scalar_lea.smem %s0, 22
  %s45 = sld [smem:[%s44]]
  %s46 = scalar_lea.smem %s0, 23
  %s47 = sld [smem:[%s46]]
  %s48 = scalar_lea.smem %s0, 24
  %s49 = sld [smem:[%s48]]
  %s50 = scalar_lea.smem %s0, 25
  %s51 = sld [smem:[%s50]]
  %s52 = scalar_lea.smem %s0, 26
  %s53 = sld [smem:[%s52]]
  %s54 = scalar_lea.smem %s0, 27
  %s55 = sld [smem:[%s54]]
  %s56 = scalar_lea.smem %s0, 28
  %s57 = sld [smem:[%s56]]
  %s58 = scalar_lea.smem %s0, 29
  %s59 = sld [smem:[%s58]]
  %s60 = scalar_lea.smem %s0, 30
  %s61 = sld [smem:[%s60]]
  %s62 = scalar_lea.smem %s0, 31
  %s63 = sld [smem:[%s62]]
  %s64 = scalar_lea.smem %s0, 32
  %s65 = sld [smem:[%s64]]
  %s66 = scalar_lea.smem %s0, 33
  %s67 = sld [smem:[%s66]]
  %s68 = scalar_lea.smem %s0, 34
  %s69 = sld [smem:[%s68]]
  %s70 = scalar_lea.smem %s0, 35
  %s71 = sld [smem:[%s70]]
  %s72 = scalar_lea.smem %s0, 36
  %s73 = sld [smem:[%s72]]
  %s74 = scalar_lea.smem %s0, 37
  %s75 = sld [smem:[%s74]]
  %76 = xla_tuple %s61, %s63, %s65, %s67, %s69, %s71, %s73, %s75
  %s77 = sld [smem:[#allocation0]]
  $region254: #{transformer_fwd.1} parent=0
    _
  %s79 = ssub.s32 1, %s77
  %s80 = scalar_select 0, %s79, %s77
  $region1: #{transformer_fwd.1} parent=0
    #allocation2 [shape = 'u8[8192]{0}', space=vmem, size = 0x2000, scoped, tag = 'input window, operand 0, single buffered']
    #allocation3 [shape = 's32[1]{0}', space=sflag, size = 0x4, scoped, tag = 'scoped memory for transformer_fwd.1']
    #allocation4 [shape = 's32[1]{0}', space=sflag, size = 0x4, scoped, tag = 'scoped memory for transformer_fwd.1']
    #allocation5 [shape = 'u8[8192]{0}', space=vmem, size = 0x2000, scoped, tag = 'input window, operand 1, single buffered']
    #allocation6 [shape = 's32[1]{0}', space=sflag, size = 0x4, scoped, tag = 'scoped memory for transformer_fwd.1']
    #allocation7 [shape = 'u8[512]{0}', space=vmem, size = 0x400, scoped, tag = 'input window, operand 13, single buffered']
    #allocation8 [shape = 'u8[512]{0}', space=vmem, size = 0x400, scoped, tag = 'input window, operand 15, single buffered']
    #allocation9 [shape = 's32[1]{0}', space=sflag, size = 0x4, scoped, tag = 'scoped memory for transformer_fwd.1']
    #allocation10 [shape = 'u8[16384]{0}', space=vmem, size = 0x4000, scoped, tag = 'input window, operand 16, single buffered']
    #allocation11 [shape = 'u8[512]{0}', space=vmem, size = 0x400, scoped, tag = 'input window, operand 17, single buffered']
    #allocation12 [shape = 's32[1]{0}', space=sflag, size = 0x4, scoped, tag = 'scoped memory for transformer_fwd.1']
    #allocation13 [shape = 'u8[16384]{0}', space=vmem, size = 0x4000, scoped, tag = 'input window, operand 18, single buffered']
    #allocation14 [shape = 'u8[512]{0}', space=vmem, size = 0x400, scoped, tag = 'input window, operand 19, single buffered']
    #allocation15 [shape = 's32[1]{0}', space=sflag, size = 0x4, scoped, tag = 'scoped memory for transformer_fwd.1']
    #allocation16 [shape = 'u8[16384]{0}', space=vmem, size = 0x4000, scoped, tag = 'input window, operand 20, single buffered']
    #allocation17 [shape = 'u8[512]{0}', space=vmem, size = 0x400, scoped, tag = 'input window, operand 21, single buffered']
    #allocation18 [shape = 's32[1]{0}', space=sflag, size = 0x4, scoped, tag = 'scoped memory for transformer_fwd.1']
    #allocation19 [shape = 'u8[16384]{0}', space=vmem, size = 0x4000, scoped, tag = 'input window, operand 22, single buffered']
    #allocation20 [shape = 'u8[512]{0}', space=vmem, size = 0x400, scoped, tag = 'input window, operand 24, single buffered']
    #allocation21 [shape = 's32[1]{0}', space=sflag, size = 0x4, scoped, tag = 'scoped memory for transformer_fwd.1']
    #allocation22 [shape = 'u8[512]{0}', space=vmem, size = 0x400, scoped, tag = 'input window, operand 25, single buffered']
    #allocation23 [shape = 'u8[512]{0}', space=vmem, size = 0x400, scoped, tag = 'input window, operand 26, single buffered']
    #allocation24 [shape = 's32[1]{0}', space=sflag, size = 0x4, scoped, tag = 'scoped memory for transformer_fwd.1']
    #allocation25 [shape = 'u8[512]{0}', space=vmem, size = 0x400, scoped, tag = 'input window, operand 27, single buffered']
    #allocation26 [shape = 'u8[512]{0}', space=vmem, size = 0x400, scoped, tag = 'input window, operand 28, single buffered']
    #allocation27 [shape = 's32[1]{0}', space=sflag, size = 0x4, scoped, tag = 'scoped memory for transformer_fwd.1']
    #allocation28 [shape = 'u8[512]{0}', space=vmem, size = 0x400, scoped, tag = 'input window, operand 29, single buffered']
    #allocation29 [shape = 'u8[8192]{0}', space=vmem, size = 0x2000, scoped, tag = 'output window, operand 0, single buffered']
    #allocation30 [shape = 'u8[8192]{0}', space=vmem, size = 0x2000, scoped, tag = 'output window, operand 1, single buffered']
    #allocation31 [shape = 's32[1]{0}', space=sflag, size = 0x4, scoped, tag = 'scoped memory for transformer_fwd.1']
    #allocation32 [shape = 'u8[32768]{0}', space=vmem, size = 0x8000, scoped, tag = 'output window, operand 2, single buffered']
    #allocation33 [shape = 'u8[32768]{0}', space=vmem, size = 0x8000, scoped, tag = 'output window, operand 3, single buffered']
    #allocation34 [shape = 's32[1]{0}', space=sflag, size = 0x4, scoped, tag = 'scoped memory for transformer_fwd.1']
    #allocation35 [shape = 'u8[32768]{0}', space=vmem, size = 0x8000, scoped, tag = 'output window, operand 4, single buffered']
    #allocation36 [shape = 'u8[32768]{0}', space=vmem, size = 0x8000, scoped, tag = 'output window, operand 5, single buffered']
    #allocation37 [shape = 's32[1]{0}', space=sflag, size = 0x4, scoped, tag = 'scoped memory for transformer_fwd.1']
    #allocation38 [shape = 'u8[32768]{0}', space=vmem, size = 0x8000, scoped, tag = 'output window, operand 6, single buffered']
    #allocation39 [shape = 'u8[32768]{0}', space=vmem, size = 0x8000, scoped, tag = 'output window, operand 7, single buffered']
    #allocation40 [shape = 's32[1]{0}', space=sflag, size = 0x4, scoped, tag = 'scoped memory for transformer_fwd.1']
    %81 = vsyncpa [#allocation3], 0
    %82 = vsyncpa [#allocation6], 0
    %83 = vsyncpa [#allocation9], 0
    %84 = vsyncpa [#allocation12], 0
    %85 = vsyncpa [#allocation15], 0
    %86 = vsyncpa [#allocation18], 0
    %87 = vsyncpa [#allocation21], 0
    %88 = vsyncpa [#allocation24], 0
    %89 = vsyncpa [#allocation27], 0
    %90 = vsyncpa [#allocation4], 0
    %91 = vsyncpa [#allocation31], 0
    %92 = vsyncpa [#allocation34], 0
    %93 = vsyncpa [#allocation37], 0
    %94 = vsyncpa [#allocation40], 0
    // Predicated region
    $region2: #{transformer_fwd.1} parent=1 // pred_check
      _
    $region3: #{transformer_fwd.1} parent=1 // pred_check_branch
      %96 = sbr.rel (0) target = $region5
    $region4: #{transformer_fwd.1} parent=1 // pred_region
      %s98 = ssub.s32 256, 256
      %99 = vsyncadd [#allocation3], %s98
      %s100 = sshll.u32 [#allocation2], 4
      %s101 = int_to_ptr.vmem [resolvable:$true] %s100
      %106 = dma.hbm_to_vmem [thread:$0]  %s1, 256, %s101, [#allocation3], 128, 128, 8
    $region5: #{transformer_fwd.1} parent=1 // pred_fallthru
      _
    // Predicated region
    $region6: #{transformer_fwd.1} parent=1 // pred_check
      _
    $region7: #{transformer_fwd.1} parent=1 // pred_check_branch
      %108 = sbr.rel (0) target = $region9
    $region8: #{transformer_fwd.1} parent=1 // pred_region
      %s110 = ssub.s32 256, 256
      %111 = vsyncadd [#allocation6], %s110
      %s112 = sshll.u32 [#allocation5], 4
      %s113 = int_to_ptr.vmem [resolvable:$true] %s112
      %118 = dma.hbm_to_vmem [thread:$0]  %s3, 256, %s113, [#allocation6], 128, 128, 8
    $region9: #{transformer_fwd.1} parent=1 // pred_fallthru
      _
    // Predicated region
    $region10: #{transformer_fwd.1} parent=1 // pred_check
      _
    $region11: #{transformer_fwd.1} parent=1 // pred_check_branch
      %120 = sbr.rel (0) target = $region13
    $region12: #{transformer_fwd.1} parent=1 // pred_region
      _
    $region13: #{transformer_fwd.1} parent=1 // pred_fallthru
      _
    // Predicated region
    $region14: #{transformer_fwd.1} parent=1 // pred_check
      _
    $region15: #{transformer_fwd.1} parent=1 // pred_check_branch
      %122 = sbr.rel (0) target = $region17
    $region16: #{transformer_fwd.1} parent=1 // pred_region
      _
    $region17: #{transformer_fwd.1} parent=1 // pred_fallthru
      _
    // Predicated region
    $region18: #{transformer_fwd.1} parent=1 // pred_check
      _
    $region19: #{transformer_fwd.1} parent=1 // pred_check_branch
      %124 = sbr.rel (0) target = $region21
    $region20: #{transformer_fwd.1} parent=1 // pred_region
      _
    $region21: #{transformer_fwd.1} parent=1 // pred_fallthru
      _
    // Predicated region
    $region22: #{transformer_fwd.1} parent=1 // pred_check
      _
    $region23: #{transformer_fwd.1} parent=1 // pred_check_branch
      %126 = sbr.rel (0) target = $region25
    $region24: #{transformer_fwd.1} parent=1 // pred_region
      _
    $region25: #{transformer_fwd.1} parent=1 // pred_fallthru
      _
    // Predicated region
    $region26: #{transformer_fwd.1} parent=1 // pred_check
      _
    $region27: #{transformer_fwd.1} parent=1 // pred_check_branch
      %128 = sbr.rel (0) target = $region29
    $region28: #{transformer_fwd.1} parent=1 // pred_region
      _
    $region29: #{transformer_fwd.1} parent=1 // pred_fallthru
      _
    // Predicated region
    $region30: #{transformer_fwd.1} parent=1 // pred_check
      _
    $region31: #{transformer_fwd.1} parent=1 // pred_check_branch
      %130 = sbr.rel (0) target = $region33
    $region32: #{transformer_fwd.1} parent=1 // pred_region
      _
    $region33: #{transformer_fwd.1} parent=1 // pred_fallthru
      _
    // Predicated region
    $region34: #{transformer_fwd.1} parent=1 // pred_check
      _
    $region35: #{transformer_fwd.1} parent=1 // pred_check_branch
      %132 = sbr.rel (0) target = $region37
    $region36: #{transformer_fwd.1} parent=1 // pred_region
      _
    $region37: #{transformer_fwd.1} parent=1 // pred_fallthru
      _
    // Predicated region
    $region38: #{transformer_fwd.1} parent=1 // pred_check
      _
    $region39: #{transformer_fwd.1} parent=1 // pred_check_branch
      %134 = sbr.rel (0) target = $region41
    $region40: #{transformer_fwd.1} parent=1 // pred_region
      _
    $region41: #{transformer_fwd.1} parent=1 // pred_fallthru
      _
    // Predicated region
    $region42: #{transformer_fwd.1} parent=1 // pred_check
      _
    $region43: #{transformer_fwd.1} parent=1 // pred_check_branch
      %136 = sbr.rel (0) target = $region45
    $region44: #{transformer_fwd.1} parent=1 // pred_region
      _
    $region45: #{transformer_fwd.1} parent=1 // pred_fallthru
      _
    // Predicated region
    $region46: #{transformer_fwd.1} parent=1 // pred_check
      _
    $region47: #{transformer_fwd.1} parent=1 // pred_check_branch
      %138 = sbr.rel (0) target = $region49
    $region48: #{transformer_fwd.1} parent=1 // pred_region
      _
    $region49: #{transformer_fwd.1} parent=1 // pred_fallthru
      _
    // Predicated region
    $region50: #{transformer_fwd.1} parent=1 // pred_check
      _
    $region51: #{transformer_fwd.1} parent=1 // pred_check_branch
      %140 = sbr.rel (0) target = $region53
    $region52: #{transformer_fwd.1} parent=1 // pred_region
      _
    $region53: #{transformer_fwd.1} parent=1 // pred_fallthru
      _
    // Predicated region
    $region54: #{transformer_fwd.1} parent=1 // pred_check
      _
    $region55: #{transformer_fwd.1} parent=1 // pred_check_branch
      %142 = sbr.rel (0) target = $region57
    $region56: #{transformer_fwd.1} parent=1 // pred_region
      %s144 = ssub.s32 16, 16
      %145 = vsyncadd [#allocation6], %s144
      %s147 = sshll.u32 [#allocation7], 4
      %s148 = int_to_ptr.vmem [resolvable:$true] %s147
      %150 = dma.hbm_to_vmem [thread:$0]  %s27, 16, %s148, [#allocation6]
    $region57: #{transformer_fwd.1} parent=1 // pred_fallthru
      _
    // Predicated region
    $region58: #{transformer_fwd.1} parent=1 // pred_check
      _
    $region59: #{transformer_fwd.1} parent=1 // pred_check_branch
      %152 = sbr.rel (0) target = $region61
    $region60: #{transformer_fwd.1} parent=1 // pred_region
      _
    $region61: #{transformer_fwd.1} parent=1 // pred_fallthru
      _
    // Predicated region
    $region62: #{transformer_fwd.1} parent=1 // pred_check
      _
    $region63: #{transformer_fwd.1} parent=1 // pred_check_branch
      %154 = sbr.rel (0) target = $region65
    $region64: #{transformer_fwd.1} parent=1 // pred_region
      %s156 = ssub.s32 16, 16
      %157 = vsyncadd [#allocation9], %s156
      %s159 = sshll.u32 [#allocation8], 4
      %s160 = int_to_ptr.vmem [resolvable:$true] %s159
      %162 = dma.hbm_to_vmem [thread:$0]  %s31, 16, %s160, [#allocation9]
    $region65: #{transformer_fwd.1} parent=1 // pred_fallthru
      _
    // Predicated region
    $region66: #{transformer_fwd.1} parent=1 // pred_check
      _
    $region67: #{transformer_fwd.1} parent=1 // pred_check_branch
      %164 = sbr.rel (0) target = $region69
    $region68: #{transformer_fwd.1} parent=1 // pred_region
      %s166 = ssub.s32 512, 512
      %167 = vsyncadd [#allocation9], %s166
      %s168 = sshll.u32 [#allocation10], 4
      %s169 = int_to_ptr.vmem [resolvable:$true] %s168
      %174 = dma.hbm_to_vmem [thread:$0]  %s33, 512, %s169, [#allocation9], 128, 128, 8
    $region69: #{transformer_fwd.1} parent=1 // pred_fallthru
      _
    // Predicated region
    $region70: #{transformer_fwd.1} parent=1 // pred_check
      _
    $region71: #{transformer_fwd.1} parent=1 // pred_check_branch
      %176 = sbr.rel (0) target = $region73
    $region72: #{transformer_fwd.1} parent=1 // pred_region
      %s178 = ssub.s32 16, 16
      %179 = vsyncadd [#allocation12], %s178
      %s181 = sshll.u32 [#allocation11], 4
      %s182 = int_to_ptr.vmem [resolvable:$true] %s181
      %184 = dma.hbm_to_vmem [thread:$0]  %s35, 16, %s182, [#allocation12]
    $region73: #{transformer_fwd.1} parent=1 // pred_fallthru
      _
    // Predicated region
    $region74: #{transformer_fwd.1} parent=1 // pred_check
      _
    $region75: #{transformer_fwd.1} parent=1 // pred_check_branch
      %186 = sbr.rel (0) target = $region77
    $region76: #{transformer_fwd.1} parent=1 // pred_region
      %s188 = ssub.s32 512, 512
      %189 = vsyncadd [#allocation12], %s188
      %s190 = sshll.u32 [#allocation13], 4
      %s191 = int_to_ptr.vmem [resolvable:$true] %s190
      %196 = dma.hbm_to_vmem [thread:$0]  %s37, 512, %s191, [#allocation12], 128, 128, 8
    $region77: #{transformer_fwd.1} parent=1 // pred_fallthru
      _
    // Predicated region
    $region78: #{transformer_fwd.1} parent=1 // pred_check
      _
    $region79: #{transformer_fwd.1} parent=1 // pred_check_branch
      %198 = sbr.rel (0) target = $region81
    $region80: #{transformer_fwd.1} parent=1 // pred_region
      %s200 = ssub.s32 16, 16
      %201 = vsyncadd [#allocation15], %s200
      %s203 = sshll.u32 [#allocation14], 4
      %s204 = int_to_ptr.vmem [resolvable:$true] %s203
      %206 = dma.hbm_to_vmem [thread:$0]  %s39, 16, %s204, [#allocation15]
    $region81: #{transformer_fwd.1} parent=1 // pred_fallthru
      _
    // Predicated region
    $region82: #{transformer_fwd.1} parent=1 // pred_check
      _
    $region83: #{transformer_fwd.1} parent=1 // pred_check_branch
      %208 = sbr.rel (0) target = $region85
    $region84: #{transformer_fwd.1} parent=1 // pred_region
      %s210 = ssub.s32 512, 512
      %211 = vsyncadd [#allocation15], %s210
      %s212 = sshll.u32 [#allocation16], 4
      %s213 = int_to_ptr.vmem [resolvable:$true] %s212
      %218 = dma.hbm_to_vmem [thread:$0]  %s41, 512, %s213, [#allocation15], 128, 128, 8
    $region85: #{transformer_fwd.1} parent=1 // pred_fallthru
      _
    // Predicated region
    $region86: #{transformer_fwd.1} parent=1 // pred_check
      _
    $region87: #{transformer_fwd.1} parent=1 // pred_check_branch
      %220 = sbr.rel (0) target = $region89
    $region88: #{transformer_fwd.1} parent=1 // pred_region
      %s222 = ssub.s32 16, 16
      %223 = vsyncadd [#allocation18], %s222
      %s225 = sshll.u32 [#allocation17], 4
      %s226 = int_to_ptr.vmem [resolvable:$true] %s225
      %228 = dma.hbm_to_vmem [thread:$0]  %s43, 16, %s226, [#allocation18]
    $region89: #{transformer_fwd.1} parent=1 // pred_fallthru
      _
    // Predicated region
    $region90: #{transformer_fwd.1} parent=1 // pred_check
      _
    $region91: #{transformer_fwd.1} parent=1 // pred_check_branch
      %230 = sbr.rel (0) target = $region93
    $region92: #{transformer_fwd.1} parent=1 // pred_region
      %s232 = ssub.s32 512, 512
      %233 = vsyncadd [#allocation18], %s232
      %s234 = sshll.u32 [#allocation19], 4
      %s235 = int_to_ptr.vmem [resolvable:$true] %s234
      %240 = dma.hbm_to_vmem [thread:$0]  %s45, 512, %s235, [#allocation18], 128, 128, 8
    $region93: #{transformer_fwd.1} parent=1 // pred_fallthru
      _
    // Predicated region
    $region94: #{transformer_fwd.1} parent=1 // pred_check
      _
    $region95: #{transformer_fwd.1} parent=1 // pred_check_branch
      %242 = sbr.rel (0) target = $region97
    $region96: #{transformer_fwd.1} parent=1 // pred_region
      _
    $region97: #{transformer_fwd.1} parent=1 // pred_fallthru
      _
    // Predicated region
    $region98: #{transformer_fwd.1} parent=1 // pred_check
      _
    $region99: #{transformer_fwd.1} parent=1 // pred_check_branch
      %244 = sbr.rel (0) target = $region101
    $region100: #{transformer_fwd.1} parent=1 // pred_region
      %s246 = ssub.s32 16, 16
      %247 = vsyncadd [#allocation21], %s246
      %s249 = sshll.u32 [#allocation20], 4
      %s250 = int_to_ptr.vmem [resolvable:$true] %s249
      %252 = dma.hbm_to_vmem [thread:$0]  %s49, 16, %s250, [#allocation21]
    $region101: #{transformer_fwd.1} parent=1 // pred_fallthru
      _
    // Predicated region
    $region102: #{transformer_fwd.1} parent=1 // pred_check
      _
    $region103: #{transformer_fwd.1} parent=1 // pred_check_branch
      %254 = sbr.rel (0) target = $region105
    $region104: #{transformer_fwd.1} parent=1 // pred_region
      %s256 = ssub.s32 16, 16
      %257 = vsyncadd [#allocation21], %s256
      %s259 = sshll.u32 [#allocation22], 4
      %s260 = int_to_ptr.vmem [resolvable:$true] %s259
      %262 = dma.hbm_to_vmem [thread:$0]  %s51, 16, %s260, [#allocation21]
    $region105: #{transformer_fwd.1} parent=1 // pred_fallthru
      _
    // Predicated region
    $region106: #{transformer_fwd.1} parent=1 // pred_check
      _
    $region107: #{transformer_fwd.1} parent=1 // pred_check_branch
      %264 = sbr.rel (0) target = $region109
    $region108: #{transformer_fwd.1} parent=1 // pred_region
      %s266 = ssub.s32 16, 16
      %267 = vsyncadd [#allocation24], %s266
      %s269 = sshll.u32 [#allocation23], 4
      %s270 = int_to_ptr.vmem [resolvable:$true] %s269
      %272 = dma.hbm_to_vmem [thread:$0]  %s53, 16, %s270, [#allocation24]
    $region109: #{transformer_fwd.1} parent=1 // pred_fallthru
      _
    // Predicated region
    $region110: #{transformer_fwd.1} parent=1 // pred_check
      _
    $region111: #{transformer_fwd.1} parent=1 // pred_check_branch
      %274 = sbr.rel (0) target = $region113
    $region112: #{transformer_fwd.1} parent=1 // pred_region
      %s276 = ssub.s32 16, 16
      %277 = vsyncadd [#allocation24], %s276
      %s279 = sshll.u32 [#allocation25], 4
      %s280 = int_to_ptr.vmem [resolvable:$true] %s279
      %282 = dma.hbm_to_vmem [thread:$0]  %s55, 16, %s280, [#allocation24]
    $region113: #{transformer_fwd.1} parent=1 // pred_fallthru
      _
    // Predicated region
    $region114: #{transformer_fwd.1} parent=1 // pred_check
      _
    $region115: #{transformer_fwd.1} parent=1 // pred_check_branch
      %284 = sbr.rel (0) target = $region117
    $region116: #{transformer_fwd.1} parent=1 // pred_region
      %s286 = ssub.s32 16, 16
      %287 = vsyncadd [#allocation27], %s286
      %s289 = sshll.u32 [#allocation26], 4
      %s290 = int_to_ptr.vmem [resolvable:$true] %s289
      %292 = dma.hbm_to_vmem [thread:$0]  %s57, 16, %s290, [#allocation27]
    $region117: #{transformer_fwd.1} parent=1 // pred_fallthru
      _
    // Predicated region
    $region118: #{transformer_fwd.1} parent=1 // pred_check
      _
    $region119: #{transformer_fwd.1} parent=1 // pred_check_branch
      %294 = sbr.rel (0) target = $region121
    $region120: #{transformer_fwd.1} parent=1 // pred_region
      %s296 = ssub.s32 16, 16
      %297 = vsyncadd [#allocation27], %s296
      %s299 = sshll.u32 [#allocation28], 4
      %s300 = int_to_ptr.vmem [resolvable:$true] %s299
      %302 = dma.hbm_to_vmem [thread:$0]  %s59, 16, %s300, [#allocation27]
    $region121: #{transformer_fwd.1} parent=1 // pred_fallthru
      _
    // Predicated region
    $region122: #{transformer_fwd.1} parent=1 // pred_check
      _
    $region123: #{transformer_fwd.1} parent=1 // pred_check_branch
      %304 = sbr.rel (0) target = $region125
    $region124: #{transformer_fwd.1} parent=1 // pred_region
      %305 = dma.done [#allocation3], 256
    $region125: #{transformer_fwd.1} parent=1 // pred_fallthru
      _
    // Predicated region
    $region126: #{transformer_fwd.1} parent=1 // pred_check
      _
    $region127: #{transformer_fwd.1} parent=1 // pred_check_branch
      %307 = sbr.rel (0) target = $region129
    $region128: #{transformer_fwd.1} parent=1 // pred_region
      %308 = dma.done [#allocation6], 256
    $region129: #{transformer_fwd.1} parent=1 // pred_fallthru
      _
    // Predicated region
    $region130: #{transformer_fwd.1} parent=1 // pred_check
      _
    $region131: #{transformer_fwd.1} parent=1 // pred_check_branch
      %310 = sbr.rel (0) target = $region133
    $region132: #{transformer_fwd.1} parent=1 // pred_region
      %311 = dma.done [#allocation6], 16
    $region133: #{transformer_fwd.1} parent=1 // pred_fallthru
      _
    // Predicated region
    $region134: #{transformer_fwd.1} parent=1 // pred_check
      _
    $region135: #{transformer_fwd.1} parent=1 // pred_check_branch
      %313 = sbr.rel (0) target = $region137
    $region136: #{transformer_fwd.1} parent=1 // pred_region
      %314 = dma.done [#allocation9], 16
    $region137: #{transformer_fwd.1} parent=1 // pred_fallthru
      _
    // Predicated region
    $region138: #{transformer_fwd.1} parent=1 // pred_check
      _
    $region139: #{transformer_fwd.1} parent=1 // pred_check_branch
      %316 = sbr.rel (0) target = $region141
    $region140: #{transformer_fwd.1} parent=1 // pred_region
      %317 = dma.done [#allocation9], 512
    $region141: #{transformer_fwd.1} parent=1 // pred_fallthru
      _
    // Predicated region
    $region142: #{transformer_fwd.1} parent=1 // pred_check
      _
    $region143: #{transformer_fwd.1} parent=1 // pred_check_branch
      %319 = sbr.rel (0) target = $region145
    $region144: #{transformer_fwd.1} parent=1 // pred_region
      %320 = dma.done [#allocation12], 16
    $region145: #{transformer_fwd.1} parent=1 // pred_fallthru
      _
    // Predicated region
    $region146: #{transformer_fwd.1} parent=1 // pred_check
      _
    $region147: #{transformer_fwd.1} parent=1 // pred_check_branch
      %322 = sbr.rel (0) target = $region149
    $region148: #{transformer_fwd.1} parent=1 // pred_region
      %323 = dma.done [#allocation12], 512
    $region149: #{transformer_fwd.1} parent=1 // pred_fallthru
      _
    // Predicated region
    $region150: #{transformer_fwd.1} parent=1 // pred_check
      _
    $region151: #{transformer_fwd.1} parent=1 // pred_check_branch
      %325 = sbr.rel (0) target = $region153
    $region152: #{transformer_fwd.1} parent=1 // pred_region
      %326 = dma.done [#allocation15], 16
    $region153: #{transformer_fwd.1} parent=1 // pred_fallthru
      _
    // Predicated region
    $region154: #{transformer_fwd.1} parent=1 // pred_check
      _
    $region155: #{transformer_fwd.1} parent=1 // pred_check_branch
      %328 = sbr.rel (0) target = $region157
    $region156: #{transformer_fwd.1} parent=1 // pred_region
      %329 = dma.done [#allocation15], 512
    $region157: #{transformer_fwd.1} parent=1 // pred_fallthru
      _
    // Predicated region
    $region158: #{transformer_fwd.1} parent=1 // pred_check
      _
    $region159: #{transformer_fwd.1} parent=1 // pred_check_branch
      %331 = sbr.rel (0) target = $region161
    $region160: #{transformer_fwd.1} parent=1 // pred_region
      %332 = dma.done [#allocation18], 16
    $region161: #{transformer_fwd.1} parent=1 // pred_fallthru
      _
    // Predicated region
    $region162: #{transformer_fwd.1} parent=1 // pred_check
      _
    $region163: #{transformer_fwd.1} parent=1 // pred_check_branch
      %334 = sbr.rel (0) target = $region165
    $region164: #{transformer_fwd.1} parent=1 // pred_region
      %335 = dma.done [#allocation18], 512
    $region165: #{transformer_fwd.1} parent=1 // pred_fallthru
      _
    // Predicated region
    $region166: #{transformer_fwd.1} parent=1 // pred_check
      _
    $region167: #{transformer_fwd.1} parent=1 // pred_check_branch
      %337 = sbr.rel (0) target = $region169
    $region168: #{transformer_fwd.1} parent=1 // pred_region
      %338 = dma.done [#allocation21], 16
    $region169: #{transformer_fwd.1} parent=1 // pred_fallthru
      _
    // Predicated region
    $region170: #{transformer_fwd.1} parent=1 // pred_check
      _
    $region171: #{transformer_fwd.1} parent=1 // pred_check_branch
      %340 = sbr.rel (0) target = $region173
    $region172: #{transformer_fwd.1} parent=1 // pred_region
      %341 = dma.done [#allocation21], 16
    $region173: #{transformer_fwd.1} parent=1 // pred_fallthru
      _
    // Predicated region
    $region174: #{transformer_fwd.1} parent=1 // pred_check
      _
    $region175: #{transformer_fwd.1} parent=1 // pred_check_branch
      %343 = sbr.rel (0) target = $region177
    $region176: #{transformer_fwd.1} parent=1 // pred_region
      %344 = dma.done [#allocation24], 16
    $region177: #{transformer_fwd.1} parent=1 // pred_fallthru
      _
    // Predicated region
    $region178: #{transformer_fwd.1} parent=1 // pred_check
      _
    $region179: #{transformer_fwd.1} parent=1 // pred_check_branch
      %346 = sbr.rel (0) target = $region181
    $region180: #{transformer_fwd.1} parent=1 // pred_region
      %347 = dma.done [#allocation24], 16
    $region181: #{transformer_fwd.1} parent=1 // pred_fallthru
      _
    // Predicated region
    $region182: #{transformer_fwd.1} parent=1 // pred_check
      _
    $region183: #{transformer_fwd.1} parent=1 // pred_check_branch
      %349 = sbr.rel (0) target = $region185
    $region184: #{transformer_fwd.1} parent=1 // pred_region
      %350 = dma.done [#allocation27], 16
    $region185: #{transformer_fwd.1} parent=1 // pred_fallthru
      _
    // Predicated region
    $region186: #{transformer_fwd.1} parent=1 // pred_check
      _
    $region187: #{transformer_fwd.1} parent=1 // pred_check_branch
      %352 = sbr.rel (0) target = $region189
    $region188: #{transformer_fwd.1} parent=1 // pred_region
      %353 = dma.done [#allocation27], 16
    $region189: #{transformer_fwd.1} parent=1 // pred_fallthru
      _
    %v354 = vld [vmem:[#allocation2] sm:$0xff]
    %v355 = vld [vmem:[#allocation2 + $0x8] sm:$0xff]
    %v356 = vld [vmem:[%s5] sm:$0xff]
    %v357 = vld [vmem:[%s5 + $0x8] sm:$0xff]
    %v358 = vld [vmem:[%s5 + $0x10] sm:$0xff]
    %v359 = vld [vmem:[%s5 + $0x18] sm:$0xff]
    %v360 = vld [vmem:[%s7] sm:$0x1]
    %v361 = vld [vmem:[%s9] sm:$0xff]
    %v362 = vld [vmem:[%s9 + $0x8] sm:$0xff]
    %v363 = vld [vmem:[%s9 + $0x10] sm:$0xff]
    %v364 = vld [vmem:[%s9 + $0x18] sm:$0xff]
    %v365 = vld [vmem:[%s11] sm:$0x1]
    %v366 = vld [vmem:[%s13] sm:$0xff]
    %v367 = vld [vmem:[%s13 + $0x8] sm:$0xff]
    %v368 = vld [vmem:[%s13 + $0x10] sm:$0xff]
    %v369 = vld [vmem:[%s13 + $0x18] sm:$0xff]
    %v370 = vld [vmem:[%s15] sm:$0xff]
    %v371 = vld [vmem:[%s15 + $0x8] sm:$0xff]
    %v372 = vld [vmem:[%s15 + $0x10] sm:$0xff]
    %v373 = vld [vmem:[%s15 + $0x18] sm:$0xff]
    %v374 = vld [vmem:[%s15 + $0x20] sm:$0xff]
    %v375 = vld [vmem:[%s15 + $0x28] sm:$0xff]
    %v376 = vld [vmem:[%s15 + $0x30] sm:$0xff]
    %v377 = vld [vmem:[%s15 + $0x38] sm:$0xff]
    %v378 = vld [vmem:[%s17] sm:$0x1]
    %v379 = vld [vmem:[%s19] sm:$0x1]
    %v380 = vld [vmem:[%s21] sm:$0x1]
    %v381 = vld [vmem:[%s23] sm:$0x1]
    %v383 = vlaneseq
    %v384 = vshrl.u32 %v383, 7
    %v385 = vsub.s32 0, %v384
    %v386 = vrot.slane %v360, %v385
    %vm388 = vcmask 261120
    %v390 = vsel %vm388, %v354, 0
    %v393 = vsel %vm388, %v355, 0
    %395 = vmatprep.subr.mxu0 0.0
    %396 = vmatpush1.msra.mxu0 0.0
    %397 = vmatprep.subr.mxu0 0.0
    %398 = vmatpush1.msra.mxu0 0.0
    %399 = vmatprep.subr.mxu0 0.0
    %400 = vmatpush1.msra.mxu0 0.0
    %401 = vmatprep.subr.mxu0 0.0
    %402 = vmatpush1.msra.mxu0 0.0
    %403 = vmatprep.subr.mxu0 0.0
    %404 = vmatpush1.msra.mxu0 0.0
    %405 = vmatprep.subr.mxu0 0.0
    %406 = vmatpush1.msra.mxu0 0.0
    %407 = vmatprep.subr.mxu0 0.0
    %408 = vmatpush1.msra.mxu0 0.0
    %409 = vmatprep.subr.mxu0 0.0
    %410 = vmatpush1.msra.mxu0 0.0
    %411 = vmatprep.subr.mxu0 0.0
    %412 = vmatpush1.msra.mxu0 0.0
    %413 = vmatprep.subr.mxu0 0.0
    %414 = vmatpush1.msra.mxu0 0.0
    %415 = vmatprep.subr.mxu0 0.0
    %416 = vmatpush1.msra.mxu0 0.0
    %417 = vmatprep.subr.mxu0 0.0
    %418 = vmatpush1.msra.mxu0 0.0
    %419 = vmatprep.subr.mxu0 0.0
    %420 = vmatpush1.msra.mxu0 %v359
    %421 = vmatprep.subr.mxu0 0.0
    %422 = vmatpush1.msra.mxu0 %v358
    %423 = vmatprep.subr.mxu0 0.0
    %424 = vmatpush1.msra.mxu0 %v357
    %425 = vmatprep.subr.mxu0 0.0
    %426 = vmatpush1.msra.mxu0 %v356
    %427 = vmatprep.subr.mxu0 0.0
    %428 = vmatpush2.msra.mxu0 0.0
    %429 = vmatprep.subr.mxu0 0.0
    %430 = vmatpush2.msra.mxu0 0.0
    %431 = vmatprep.subr.mxu0 0.0
    %432 = vmatpush2.msra.mxu0 0.0
    %433 = vmatprep.subr.mxu0 0.0
    %434 = vmatpush2.msra.mxu0 0.0
    %435 = vmatprep.subr.mxu0 0.0
    %436 = vmatpush2.msra.mxu0 0.0
    %437 = vmatprep.subr.mxu0 0.0
    %438 = vmatpush2.msra.mxu0 0.0
    %439 = vmatprep.subr.mxu0 0.0
    %440 = vmatpush2.msra.mxu0 0.0
    %441 = vmatprep.subr.mxu0 0.0
    %442 = vmatpush2.msra.mxu0 0.0
    %443 = vmatprep.subr.mxu0 0.0
    %444 = vmatpush2.msra.mxu0 0.0
    %445 = vmatprep.subr.mxu0 0.0
    %446 = vmatpush2.msra.mxu0 0.0
    %447 = vmatprep.subr.mxu0 0.0
    %448 = vmatpush2.msra.mxu0 0.0
    %449 = vmatprep.subr.mxu0 0.0
    %450 = vmatpush2.msra.mxu0 0.0
    %451 = vmatprep.subr.mxu0 0.0
    %452 = vmatpush2.msra.mxu0 0.0
    %453 = vmatprep.subr.mxu0 0.0
    %454 = vmatpush2.msra.mxu0 0.0
    %455 = vmatprep.subr.mxu0 0.0
    %456 = vmatpush2.msra.mxu0 0.0
    %457 = vmatprep.subr.mxu0 0.0
    %458 = vmatpush2.msra.mxu0 0.0
    %459 = vmatprep.mubr.f32.mxu0 0.0
    %460 = vmatmul.mubr.f32.gmra.mxu0 %v390
    %v461 = vpop.f32.mrf.mxu0
    %v462 = vadd.f32 %v386, %v461
    %v463 = vpop.f32.mrf.mxu0
    %464 = vmatprep.mubr.f32.mxu0 0.0
    %465 = vmatmul.mubr.f32.gmra.mxu0 %v393
    %v466 = vpop.f32.mrf.mxu0
    %v467 = vadd.f32 %v386, %v466
    %v468 = vpop.f32.mrf.mxu0
    %469 = vdwg.mxu0
    %472 = vrot.lane.b32.xlu0 %v462, 120
    %v473 = vpop.permute.xlu0 %472
    %474 = vrot.lane.b32.xlu0 %v467, 120
    %v475 = vpop.permute.xlu0 %474
    %476 = vrot.lane.b32.xlu0 %v462, 112
    %v477 = vpop.permute.xlu0 %476
    %478 = vrot.lane.b32.xlu0 %v467, 112
    %v479 = vpop.permute.xlu0 %478
    %480 = vrot.lane.b32.xlu0 %v462, 104
    %v481 = vpop.permute.xlu0 %480
    %482 = vrot.lane.b32.xlu0 %v467, 104
    %v483 = vpop.permute.xlu0 %482
    %484 = vrot.lane.b32.xlu0 %v462, 96
    %v485 = vpop.permute.xlu0 %484
    %vm486 = vcmask 64512
    %v487 = vsel %vm486, %v462, 0
    %v489 = vsel %vm486, %v485, 0
    %491 = vmatprep.subr.mxu0 0.0
    %492 = vmatpush1.xpose.msra.mxu0 0.0
    %493 = vmatprep.subr.mxu0 0.0
    %494 = vmatpush1.xpose.msra.mxu0 0.0
    %495 = vmatprep.subr.mxu0 0.0
    %496 = vmatpush1.xpose.msra.mxu0 0.0
    %497 = vmatprep.subr.mxu0 0.0
    %498 = vmatpush1.xpose.msra.mxu0 0.0
    %499 = vmatprep.subr.mxu0 0.0
    %500 = vmatpush1.xpose.msra.mxu0 0.0
    %501 = vmatprep.subr.mxu0 0.0
    %502 = vmatpush1.xpose.msra.mxu0 0.0
    %503 = vmatprep.subr.mxu0 0.0
    %504 = vmatpush1.xpose.msra.mxu0 0.0
    %505 = vmatprep.subr.mxu0 0.0
    %506 = vmatpush1.xpose.msra.mxu0 0.0
    %507 = vmatprep.subr.mxu0 0.0
    %508 = vmatpush1.xpose.msra.mxu0 0.0
    %509 = vmatprep.subr.mxu0 0.0
    %510 = vmatpush1.xpose.msra.mxu0 0.0
    %511 = vmatprep.subr.mxu0 0.0
    %512 = vmatpush1.xpose.msra.mxu0 0.0
    %513 = vmatprep.subr.mxu0 0.0
    %514 = vmatpush1.xpose.msra.mxu0 0.0
    %515 = vmatprep.subr.mxu0 0.0
    %516 = vmatpush1.xpose.msra.mxu0 0.0
    %517 = vmatprep.subr.mxu0 0.0
    %518 = vmatpush1.xpose.msra.mxu0 0.0
    %519 = vmatprep.subr.mxu0 0.0
    %520 = vmatpush1.xpose.msra.mxu0 0.0
    %521 = vmatprep.subr.mxu0 0.0
    %522 = vmatpush1.xpose.msra.mxu0 %v489
    %523 = vmatprep.subr.mxu0 0.0
    %524 = vmatpush2.xpose.msra.mxu0 0.0
    %525 = vmatprep.subr.mxu0 0.0
    %526 = vmatpush2.xpose.msra.mxu0 0.0
    %527 = vmatprep.subr.mxu0 0.0
    %528 = vmatpush2.xpose.msra.mxu0 0.0
    %529 = vmatprep.subr.mxu0 0.0
    %530 = vmatpush2.xpose.msra.mxu0 0.0
    %531 = vmatprep.subr.mxu0 0.0
    %532 = vmatpush2.xpose.msra.mxu0 0.0
    %533 = vmatprep.subr.mxu0 0.0
    %534 = vmatpush2.xpose.msra.mxu0 0.0
    %535 = vmatprep.subr.mxu0 0.0
    %536 = vmatpush2.xpose.msra.mxu0 0.0
    %537 = vmatprep.subr.mxu0 0.0
    %538 = vmatpush2.xpose.msra.mxu0 0.0
    %539 = vmatprep.subr.mxu0 0.0
    %540 = vmatpush2.xpose.msra.mxu0 0.0
    %541 = vmatprep.subr.mxu0 0.0
    %542 = vmatpush2.xpose.msra.mxu0 0.0
    %543 = vmatprep.subr.mxu0 0.0
    %544 = vmatpush2.xpose.msra.mxu0 0.0
    %545 = vmatprep.subr.mxu0 0.0
    %546 = vmatpush2.xpose.msra.mxu0 0.0
    %547 = vmatprep.subr.mxu0 0.0
    %548 = vmatpush2.xpose.msra.mxu0 0.0
    %549 = vmatprep.subr.mxu0 0.0
    %550 = vmatpush2.xpose.msra.mxu0 0.0
    %551 = vmatprep.subr.mxu0 0.0
    %552 = vmatpush2.xpose.msra.mxu0 0.0
    %553 = vmatprep.subr.mxu0 0.0
    %554 = vmatpush2.xpose.msra.mxu0 0.0
    %555 = vmatprep.mubr.f32.mxu0 0.0
    %556 = vmatmul.mubr.f32.gmra.mxu0 %v487
    %v557 = vpop.f32.mrf.mxu0
    %v558 = vadd.f32 0.0, %v557
    %v559 = vpop.f32.mrf.mxu0
    %560 = vdwg.mxu0
    %561 = vrot.lane.b32.xlu0 %v473, 96
    %v562 = vpop.permute.xlu0 %561
    %v563 = vsel %vm486, %v473, 0
    %v565 = vsel %vm486, %v562, 0
    %567 = vmatprep.subr.mxu0 0.0
    %568 = vmatpush1.xpose.msra.mxu0 0.0
    %569 = vmatprep.subr.mxu0 0.0
    %570 = vmatpush1.xpose.msra.mxu0 0.0
    %571 = vmatprep.subr.mxu0 0.0
    %572 = vmatpush1.xpose.msra.mxu0 0.0
    %573 = vmatprep.subr.mxu0 0.0
    %574 = vmatpush1.xpose.msra.mxu0 0.0
    %575 = vmatprep.subr.mxu0 0.0
    %576 = vmatpush1.xpose.msra.mxu0 0.0
    %577 = vmatprep.subr.mxu0 0.0
    %578 = vmatpush1.xpose.msra.mxu0 0.0
    %579 = vmatprep.subr.mxu0 0.0
    %580 = vmatpush1.xpose.msra.mxu0 0.0
    %581 = vmatprep.subr.mxu0 0.0
    %582 = vmatpush1.xpose.msra.mxu0 0.0
    %583 = vmatprep.subr.mxu0 0.0
    %584 = vmatpush1.xpose.msra.mxu0 0.0
    %585 = vmatprep.subr.mxu0 0.0
    %586 = vmatpush1.xpose.msra.mxu0 0.0
    %587 = vmatprep.subr.mxu0 0.0
    %588 = vmatpush1.xpose.msra.mxu0 0.0
    %589 = vmatprep.subr.mxu0 0.0
    %590 = vmatpush1.xpose.msra.mxu0 0.0
    %591 = vmatprep.subr.mxu0 0.0
    %592 = vmatpush1.xpose.msra.mxu0 0.0
    %593 = vmatprep.subr.mxu0 0.0
    %594 = vmatpush1.xpose.msra.mxu0 0.0
    %595 = vmatprep.subr.mxu0 0.0
    %596 = vmatpush1.xpose.msra.mxu0 0.0
    %597 = vmatprep.subr.mxu0 0.0
    %598 = vmatpush1.xpose.msra.mxu0 %v565
    %599 = vmatprep.subr.mxu0 0.0
    %600 = vmatpush2.xpose.msra.mxu0 0.0
    %601 = vmatprep.subr.mxu0 0.0
    %602 = vmatpush2.xpose.msra.mxu0 0.0
    %603 = vmatprep.subr.mxu0 0.0
    %604 = vmatpush2.xpose.msra.mxu0 0.0
    %605 = vmatprep.subr.mxu0 0.0
    %606 = vmatpush2.xpose.msra.mxu0 0.0
    %607 = vmatprep.subr.mxu0 0.0
    %608 = vmatpush2.xpose.msra.mxu0 0.0
    %609 = vmatprep.subr.mxu0 0.0
    %610 = vmatpush2.xpose.msra.mxu0 0.0
    %611 = vmatprep.subr.mxu0 0.0
    %612 = vmatpush2.xpose.msra.mxu0 0.0
    %613 = vmatprep.subr.mxu0 0.0
    %614 = vmatpush2.xpose.msra.mxu0 0.0
    %615 = vmatprep.subr.mxu0 0.0
    %616 = vmatpush2.xpose.msra.mxu0 0.0
    %617 = vmatprep.subr.mxu0 0.0
    %618 = vmatpush2.xpose.msra.mxu0 0.0
    %619 = vmatprep.subr.mxu0 0.0
    %620 = vmatpush2.xpose.msra.mxu0 0.0
    %621 = vmatprep.subr.mxu0 0.0
    %622 = vmatpush2.xpose.msra.mxu0 0.0
    %623 = vmatprep.subr.mxu0 0.0
    %624 = vmatpush2.xpose.msra.mxu0 0.0
    %625 = vmatprep.subr.mxu0 0.0
    %626 = vmatpush2.xpose.msra.mxu0 0.0
    %627 = vmatprep.subr.mxu0 0.0
    %628 = vmatpush2.xpose.msra.mxu0 0.0
    %629 = vmatprep.subr.mxu0 0.0
    %630 = vmatpush2.xpose.msra.mxu0 0.0
    %631 = vmatprep.mubr.f32.mxu0 0.0
    %632 = vmatmul.mubr.f32.gmra.mxu0 %v563
    %v633 = vpop.f32.mrf.mxu0
    %v634 = vadd.f32 0.0, %v633
    %v635 = vpop.f32.mrf.mxu0
    %636 = vdwg.mxu0
    %637 = vrot.lane.b32.xlu0 %v477, 96
    %v638 = vpop.permute.xlu0 %637
    %v639 = vsel %vm486, %v477, 0
    %v641 = vsel %vm486, %v638, 0
    %643 = vmatprep.subr.mxu0 0.0
    %644 = vmatpush1.xpose.msra.mxu0 0.0
    %645 = vmatprep.subr.mxu0 0.0
    %646 = vmatpush1.xpose.msra.mxu0 0.0
    %647 = vmatprep.subr.mxu0 0.0
    %648 = vmatpush1.xpose.msra.mxu0 0.0
    %649 = vmatprep.subr.mxu0 0.0
    %650 = vmatpush1.xpose.msra.mxu0 0.0
    %651 = vmatprep.subr.mxu0 0.0
    %652 = vmatpush1.xpose.msra.mxu0 0.0
    %653 = vmatprep.subr.mxu0 0.0
    %654 = vmatpush1.xpose.msra.mxu0 0.0
    %655 = vmatprep.subr.mxu0 0.0
    %656 = vmatpush1.xpose.msra.mxu0 0.0
    %657 = vmatprep.subr.mxu0 0.0
    %658 = vmatpush1.xpose.msra.mxu0 0.0
    %659 = vmatprep.subr.mxu0 0.0
    %660 = vmatpush1.xpose.msra.mxu0 0.0
    %661 = vmatprep.subr.mxu0 0.0
    %662 = vmatpush1.xpose.msra.mxu0 0.0
    %663 = vmatprep.subr.mxu0 0.0
    %664 = vmatpush1.xpose.msra.mxu0 0.0
    %665 = vmatprep.subr.mxu0 0.0
    %666 = vmatpush1.xpose.msra.mxu0 0.0
    %667 = vmatprep.subr.mxu0 0.0
    %668 = vmatpush1.xpose.msra.mxu0 0.0
    %669 = vmatprep.subr.mxu0 0.0
    %670 = vmatpush1.xpose.msra.mxu0 0.0
    %671 = vmatprep.subr.mxu0 0.0
    %672 = vmatpush1.xpose.msra.mxu0 0.0
    %673 = vmatprep.subr.mxu0 0.0
    %674 = vmatpush1.xpose.msra.mxu0 %v641
    %675 = vmatprep.subr.mxu0 0.0
    %676 = vmatpush2.xpose.msra.mxu0 0.0
    %677 = vmatprep.subr.mxu0 0.0
    %678 = vmatpush2.xpose.msra.mxu0 0.0
    %679 = vmatprep.subr.mxu0 0.0
    %680 = vmatpush2.xpose.msra.mxu0 0.0
    %681 = vmatprep.subr.mxu0 0.0
    %682 = vmatpush2.xpose.msra.mxu0 0.0
    %683 = vmatprep.subr.mxu0 0.0
    %684 = vmatpush2.xpose.msra.mxu0 0.0
    %685 = vmatprep.subr.mxu0 0.0
    %686 = vmatpush2.xpose.msra.mxu0 0.0
    %687 = vmatprep.subr.mxu0 0.0
    %688 = vmatpush2.xpose.msra.mxu0 0.0
    %689 = vmatprep.subr.mxu0 0.0
    %690 = vmatpush2.xpose.msra.mxu0 0.0
    %691 = vmatprep.subr.mxu0 0.0
    %692 = vmatpush2.xpose.msra.mxu0 0.0
    %693 = vmatprep.subr.mxu0 0.0
    %694 = vmatpush2.xpose.msra.mxu0 0.0
    %695 = vmatprep.subr.mxu0 0.0
    %696 = vmatpush2.xpose.msra.mxu0 0.0
    %697 = vmatprep.subr.mxu0 0.0
    %698 = vmatpush2.xpose.msra.mxu0 0.0
    %699 = vmatprep.subr.mxu0 0.0
    %700 = vmatpush2.xpose.msra.mxu0 0.0
    %701 = vmatprep.subr.mxu0 0.0
    %702 = vmatpush2.xpose.msra.mxu0 0.0
    %703 = vmatprep.subr.mxu0 0.0
    %704 = vmatpush2.xpose.msra.mxu0 0.0
    %705 = vmatprep.subr.mxu0 0.0
    %706 = vmatpush2.xpose.msra.mxu0 0.0
    %707 = vmatprep.mubr.f32.mxu0 0.0
    %708 = vmatmul.mubr.f32.gmra.mxu0 %v639
    %v709 = vpop.f32.mrf.mxu0
    %v710 = vadd.f32 0.0, %v709
    %v711 = vpop.f32.mrf.mxu0
    %712 = vdwg.mxu0
    %713 = vrot.lane.b32.xlu0 %v481, 96
    %v714 = vpop.permute.xlu0 %713
    %v715 = vsel %vm486, %v481, 0
    %v717 = vsel %vm486, %v714, 0
    %719 = vmatprep.subr.mxu0 0.0
    %720 = vmatpush1.xpose.msra.mxu0 0.0
    %721 = vmatprep.subr.mxu0 0.0
    %722 = vmatpush1.xpose.msra.mxu0 0.0
    %723 = vmatprep.subr.mxu0 0.0
    %724 = vmatpush1.xpose.msra.mxu0 0.0
    %725 = vmatprep.subr.mxu0 0.0
    %726 = vmatpush1.xpose.msra.mxu0 0.0
    %727 = vmatprep.subr.mxu0 0.0
    %728 = vmatpush1.xpose.msra.mxu0 0.0
    %729 = vmatprep.subr.mxu0 0.0
    %730 = vmatpush1.xpose.msra.mxu0 0.0
    %731 = vmatprep.subr.mxu0 0.0
    %732 = vmatpush1.xpose.msra.mxu0 0.0
    %733 = vmatprep.subr.mxu0 0.0
    %734 = vmatpush1.xpose.msra.mxu0 0.0
    %735 = vmatprep.subr.mxu0 0.0
    %736 = vmatpush1.xpose.msra.mxu0 0.0
    %737 = vmatprep.subr.mxu0 0.0
    %738 = vmatpush1.xpose.msra.mxu0 0.0
    %739 = vmatprep.subr.mxu0 0.0
    %740 = vmatpush1.xpose.msra.mxu0 0.0
    %741 = vmatprep.subr.mxu0 0.0
    %742 = vmatpush1.xpose.msra.mxu0 0.0
    %743 = vmatprep.subr.mxu0 0.0
    %744 = vmatpush1.xpose.msra.mxu0 0.0
    %745 = vmatprep.subr.mxu0 0.0
    %746 = vmatpush1.xpose.msra.mxu0 0.0
    %747 = vmatprep.subr.mxu0 0.0
    %748 = vmatpush1.xpose.msra.mxu0 0.0
    %749 = vmatprep.subr.mxu0 0.0
    %750 = vmatpush1.xpose.msra.mxu0 %v717
    %751 = vmatprep.subr.mxu0 0.0
    %752 = vmatpush2.xpose.msra.mxu0 0.0
    %753 = vmatprep.subr.mxu0 0.0
    %754 = vmatpush2.xpose.msra.mxu0 0.0
    %755 = vmatprep.subr.mxu0 0.0
    %756 = vmatpush2.xpose.msra.mxu0 0.0
    %757 = vmatprep.subr.mxu0 0.0
    %758 = vmatpush2.xpose.msra.mxu0 0.0
    %759 = vmatprep.subr.mxu0 0.0
    %760 = vmatpush2.xpose.msra.mxu0 0.0
    %761 = vmatprep.subr.mxu0 0.0
    %762 = vmatpush2.xpose.msra.mxu0 0.0
    %763 = vmatprep.subr.mxu0 0.0
    %764 = vmatpush2.xpose.msra.mxu0 0.0
    %765 = vmatprep.subr.mxu0 0.0
    %766 = vmatpush2.xpose.msra.mxu0 0.0
    %767 = vmatprep.subr.mxu0 0.0
    %768 = vmatpush2.xpose.msra.mxu0 0.0
    %769 = vmatprep.subr.mxu0 0.0
    %770 = vmatpush2.xpose.msra.mxu0 0.0
    %771 = vmatprep.subr.mxu0 0.0
    %772 = vmatpush2.xpose.msra.mxu0 0.0
    %773 = vmatprep.subr.mxu0 0.0
    %774 = vmatpush2.xpose.msra.mxu0 0.0
    %775 = vmatprep.subr.mxu0 0.0
    %776 = vmatpush2.xpose.msra.mxu0 0.0
    %777 = vmatprep.subr.mxu0 0.0
    %778 = vmatpush2.xpose.msra.mxu0 0.0
    %779 = vmatprep.subr.mxu0 0.0
    %780 = vmatpush2.xpose.msra.mxu0 0.0
    %781 = vmatprep.subr.mxu0 0.0
    %782 = vmatpush2.xpose.msra.mxu0 0.0
    %783 = vmatprep.mubr.f32.mxu0 0.0
    %784 = vmatmul.mubr.f32.gmra.mxu0 %v715
    %v785 = vpop.f32.mrf.mxu0
    %v786 = vadd.f32 0.0, %v785
    %v787 = vpop.f32.mrf.mxu0
    %788 = vdwg.mxu0
    %789 = vrot.lane.b32.xlu0 %v467, 96
    %v790 = vpop.permute.xlu0 %789
    %v791 = vsel %vm486, %v467, 0
    %v793 = vsel %vm486, %v790, 0
    %795 = vmatprep.subr.mxu0 0.0
    %796 = vmatpush1.xpose.msra.mxu0 0.0
    %797 = vmatprep.subr.mxu0 0.0
    %798 = vmatpush1.xpose.msra.mxu0 0.0
    %799 = vmatprep.subr.mxu0 0.0
    %800 = vmatpush1.xpose.msra.mxu0 0.0
    %801 = vmatprep.subr.mxu0 0.0
    %802 = vmatpush1.xpose.msra.mxu0 0.0
    %803 = vmatprep.subr.mxu0 0.0
    %804 = vmatpush1.xpose.msra.mxu0 0.0
    %805 = vmatprep.subr.mxu0 0.0
    %806 = vmatpush1.xpose.msra.mxu0 0.0
    %807 = vmatprep.subr.mxu0 0.0
    %808 = vmatpush1.xpose.msra.mxu0 0.0
    %809 = vmatprep.subr.mxu0 0.0
    %810 = vmatpush1.xpose.msra.mxu0 0.0
    %811 = vmatprep.subr.mxu0 0.0
    %812 = vmatpush1.xpose.msra.mxu0 0.0
    %813 = vmatprep.subr.mxu0 0.0
    %814 = vmatpush1.xpose.msra.mxu0 0.0
    %815 = vmatprep.subr.mxu0 0.0
    %816 = vmatpush1.xpose.msra.mxu0 0.0
    %817 = vmatprep.subr.mxu0 0.0
    %818 = vmatpush1.xpose.msra.mxu0 0.0
    %819 = vmatprep.subr.mxu0 0.0
    %820 = vmatpush1.xpose.msra.mxu0 0.0
    %821 = vmatprep.subr.mxu0 0.0
    %822 = vmatpush1.xpose.msra.mxu0 0.0
    %823 = vmatprep.subr.mxu0 0.0
    %824 = vmatpush1.xpose.msra.mxu0 0.0
    %825 = vmatprep.subr.mxu0 0.0
    %826 = vmatpush1.xpose.msra.mxu0 %v793
    %827 = vmatprep.subr.mxu0 0.0
    %828 = vmatpush2.xpose.msra.mxu0 0.0
    %829 = vmatprep.subr.mxu0 0.0
    %830 = vmatpush2.xpose.msra.mxu0 0.0
    %831 = vmatprep.subr.mxu0 0.0
    %832 = vmatpush2.xpose.msra.mxu0 0.0
    %833 = vmatprep.subr.mxu0 0.0
    %834 = vmatpush2.xpose.msra.mxu0 0.0
    %835 = vmatprep.subr.mxu0 0.0
    %836 = vmatpush2.xpose.msra.mxu0 0.0
    %837 = vmatprep.subr.mxu0 0.0
    %838 = vmatpush2.xpose.msra.mxu0 0.0
    %839 = vmatprep.subr.mxu0 0.0
    %840 = vmatpush2.xpose.msra.mxu0 0.0
    %841 = vmatprep.subr.mxu0 0.0
    %842 = vmatpush2.xpose.msra.mxu0 0.0
    %843 = vmatprep.subr.mxu0 0.0
    %844 = vmatpush2.xpose.msra.mxu0 0.0
    %845 = vmatprep.subr.mxu0 0.0
    %846 = vmatpush2.xpose.msra.mxu0 0.0
    %847 = vmatprep.subr.mxu0 0.0
    %848 = vmatpush2.xpose.msra.mxu0 0.0
    %849 = vmatprep.subr.mxu0 0.0
    %850 = vmatpush2.xpose.msra.mxu0 0.0
    %851 = vmatprep.subr.mxu0 0.0
    %852 = vmatpush2.xpose.msra.mxu0 0.0
    %853 = vmatprep.subr.mxu0 0.0
    %854 = vmatpush2.xpose.msra.mxu0 0.0
    %855 = vmatprep.subr.mxu0 0.0
    %856 = vmatpush2.xpose.msra.mxu0 0.0
    %857 = vmatprep.subr.mxu0 0.0
    %858 = vmatpush2.xpose.msra.mxu0 0.0
    %859 = vmatprep.mubr.f32.mxu0 0.0
    %860 = vmatmul.mubr.f32.gmra.mxu0 %v791
    %v861 = vpop.f32.mrf.mxu0
    %v862 = vadd.f32 0.0, %v861
    %v863 = vpop.f32.mrf.mxu0
    %864 = vdwg.mxu0
    %865 = vrot.lane.b32.xlu0 %v475, 96
    %v866 = vpop.permute.xlu0 %865
    %v867 = vsel %vm486, %v475, 0
    %v869 = vsel %vm486, %v866, 0
    %871 = vmatprep.subr.mxu0 0.0
    %872 = vmatpush1.xpose.msra.mxu0 0.0
    %873 = vmatprep.subr.mxu0 0.0
    %874 = vmatpush1.xpose.msra.mxu0 0.0
    %875 = vmatprep.subr.mxu0 0.0
    %876 = vmatpush1.xpose.msra.mxu0 0.0
    %877 = vmatprep.subr.mxu0 0.0
    %878 = vmatpush1.xpose.msra.mxu0 0.0
    %879 = vmatprep.subr.mxu0 0.0
    %880 = vmatpush1.xpose.msra.mxu0 0.0
    %881 = vmatprep.subr.mxu0 0.0
    %882 = vmatpush1.xpose.msra.mxu0 0.0
    %883 = vmatprep.subr.mxu0 0.0
    %884 = vmatpush1.xpose.msra.mxu0 0.0
    %885 = vmatprep.subr.mxu0 0.0
    %886 = vmatpush1.xpose.msra.mxu0 0.0
    %887 = vmatprep.subr.mxu0 0.0
    %888 = vmatpush1.xpose.msra.mxu0 0.0
    %889 = vmatprep.subr.mxu0 0.0
    %890 = vmatpush1.xpose.msra.mxu0 0.0
    %891 = vmatprep.subr.mxu0 0.0
    %892 = vmatpush1.xpose.msra.mxu0 0.0
    %893 = vmatprep.subr.mxu0 0.0
    %894 = vmatpush1.xpose.msra.mxu0 0.0
    %895 = vmatprep.subr.mxu0 0.0
    %896 = vmatpush1.xpose.msra.mxu0 0.0
    %897 = vmatprep.subr.mxu0 0.0
    %898 = vmatpush1.xpose.msra.mxu0 0.0
    %899 = vmatprep.subr.mxu0 0.0
    %900 = vmatpush1.xpose.msra.mxu0 0.0
    %901 = vmatprep.subr.mxu0 0.0
    %902 = vmatpush1.xpose.msra.mxu0 %v869
    %903 = vmatprep.subr.mxu0 0.0
    %904 = vmatpush2.xpose.msra.mxu0 0.0
    %905 = vmatprep.subr.mxu0 0.0
    %906 = vmatpush2.xpose.msra.mxu0 0.0
    %907 = vmatprep.subr.mxu0 0.0
    %908 = vmatpush2.xpose.msra.mxu0 0.0
    %909 = vmatprep.subr.mxu0 0.0
    %910 = vmatpush2.xpose.msra.mxu0 0.0
    %911 = vmatprep.subr.mxu0 0.0
    %912 = vmatpush2.xpose.msra.mxu0 0.0
    %913 = vmatprep.subr.mxu0 0.0
    %914 = vmatpush2.xpose.msra.mxu0 0.0
    %915 = vmatprep.subr.mxu0 0.0
    %916 = vmatpush2.xpose.msra.mxu0 0.0
    %917 = vmatprep.subr.mxu0 0.0
    %918 = vmatpush2.xpose.msra.mxu0 0.0
    %919 = vmatprep.subr.mxu0 0.0
    %920 = vmatpush2.xpose.msra.mxu0 0.0
    %921 = vmatprep.subr.mxu0 0.0
    %922 = vmatpush2.xpose.msra.mxu0 0.0
    %923 = vmatprep.subr.mxu0 0.0
    %924 = vmatpush2.xpose.msra.mxu0 0.0
    %925 = vmatprep.subr.mxu0 0.0
    %926 = vmatpush2.xpose.msra.mxu0 0.0
    %927 = vmatprep.subr.mxu0 0.0
    %928 = vmatpush2.xpose.msra.mxu0 0.0
    %929 = vmatprep.subr.mxu0 0.0
    %930 = vmatpush2.xpose.msra.mxu0 0.0
    %931 = vmatprep.subr.mxu0 0.0
    %932 = vmatpush2.xpose.msra.mxu0 0.0
    %933 = vmatprep.subr.mxu0 0.0
    %934 = vmatpush2.xpose.msra.mxu0 0.0
    %935 = vmatprep.mubr.f32.mxu0 0.0
    %936 = vmatmul.mubr.f32.gmra.mxu0 %v867
    %v937 = vpop.f32.mrf.mxu0
    %v938 = vadd.f32 0.0, %v937
    %v939 = vpop.f32.mrf.mxu0
    %940 = vdwg.mxu0
    %941 = vrot.lane.b32.xlu0 %v479, 96
    %v942 = vpop.permute.xlu0 %941
    %v943 = vsel %vm486, %v479, 0
    %v945 = vsel %vm486, %v942, 0
    %947 = vmatprep.subr.mxu0 0.0
    %948 = vmatpush1.xpose.msra.mxu0 0.0
    %949 = vmatprep.subr.mxu0 0.0
    %950 = vmatpush1.xpose.msra.mxu0 0.0
    %951 = vmatprep.subr.mxu0 0.0
    %952 = vmatpush1.xpose.msra.mxu0 0.0
    %953 = vmatprep.subr.mxu0 0.0
    %954 = vmatpush1.xpose.msra.mxu0 0.0
    %955 = vmatprep.subr.mxu0 0.0
    %956 = vmatpush1.xpose.msra.mxu0 0.0
    %957 = vmatprep.subr.mxu0 0.0
    %958 = vmatpush1.xpose.msra.mxu0 0.0
    %959 = vmatprep.subr.mxu0 0.0
    %960 = vmatpush1.xpose.msra.mxu0 0.0
    %961 = vmatprep.subr.mxu0 0.0
    %962 = vmatpush1.xpose.msra.mxu0 0.0
    %963 = vmatprep.subr.mxu0 0.0
    %964 = vmatpush1.xpose.msra.mxu0 0.0
    %965 = vmatprep.subr.mxu0 0.0
    %966 = vmatpush1.xpose.msra.mxu0 0.0
    %967 = vmatprep.subr.mxu0 0.0
    %968 = vmatpush1.xpose.msra.mxu0 0.0
    %969 = vmatprep.subr.mxu0 0.0
    %970 = vmatpush1.xpose.msra.mxu0 0.0
    %971 = vmatprep.subr.mxu0 0.0
    %972 = vmatpush1.xpose.msra.mxu0 0.0
    %973 = vmatprep.subr.mxu0 0.0
    %974 = vmatpush1.xpose.msra.mxu0 0.0
    %975 = vmatprep.subr.mxu0 0.0
    %976 = vmatpush1.xpose.msra.mxu0 0.0
    %977 = vmatprep.subr.mxu0 0.0
    %978 = vmatpush1.xpose.msra.mxu0 %v945
    %979 = vmatprep.subr.mxu0 0.0
    %980 = vmatpush2.xpose.msra.mxu0 0.0
    %981 = vmatprep.subr.mxu0 0.0
    %982 = vmatpush2.xpose.msra.mxu0 0.0
    %983 = vmatprep.subr.mxu0 0.0
    %984 = vmatpush2.xpose.msra.mxu0 0.0
    %985 = vmatprep.subr.mxu0 0.0
    %986 = vmatpush2.xpose.msra.mxu0 0.0
    %987 = vmatprep.subr.mxu0 0.0
    %988 = vmatpush2.xpose.msra.mxu0 0.0
    %989 = vmatprep.subr.mxu0 0.0
    %990 = vmatpush2.xpose.msra.mxu0 0.0
    %991 = vmatprep.subr.mxu0 0.0
    %992 = vmatpush2.xpose.msra.mxu0 0.0
    %993 = vmatprep.subr.mxu0 0.0
    %994 = vmatpush2.xpose.msra.mxu0 0.0
    %995 = vmatprep.subr.mxu0 0.0
    %996 = vmatpush2.xpose.msra.mxu0 0.0
    %997 = vmatprep.subr.mxu0 0.0
    %998 = vmatpush2.xpose.msra.mxu0 0.0
    %999 = vmatprep.subr.mxu0 0.0
    %1000 = vmatpush2.xpose.msra.mxu0 0.0
    %1001 = vmatprep.subr.mxu0 0.0
    %1002 = vmatpush2.xpose.msra.mxu0 0.0
    %1003 = vmatprep.subr.mxu0 0.0
    %1004 = vmatpush2.xpose.msra.mxu0 0.0
    %1005 = vmatprep.subr.mxu0 0.0
    %1006 = vmatpush2.xpose.msra.mxu0 0.0
    %1007 = vmatprep.subr.mxu0 0.0
    %1008 = vmatpush2.xpose.msra.mxu0 0.0
    %1009 = vmatprep.subr.mxu0 0.0
    %1010 = vmatpush2.xpose.msra.mxu0 0.0
    %1011 = vmatprep.mubr.f32.mxu0 0.0
    %1012 = vmatmul.mubr.f32.gmra.mxu0 %v943
    %v1013 = vpop.f32.mrf.mxu0
    %v1014 = vadd.f32 0.0, %v1013
    %v1015 = vpop.f32.mrf.mxu0
    %1016 = vdwg.mxu0
    %1017 = vrot.lane.b32.xlu0 %v483, 96
    %v1018 = vpop.permute.xlu0 %1017
    %v1019 = vsel %vm486, %v483, 0
    %v1021 = vsel %vm486, %v1018, 0
    %1023 = vmatprep.subr.mxu0 0.0
    %1024 = vmatpush1.xpose.msra.mxu0 0.0
    %1025 = vmatprep.subr.mxu0 0.0
    %1026 = vmatpush1.xpose.msra.mxu0 0.0
    %1027 = vmatprep.subr.mxu0 0.0
    %1028 = vmatpush1.xpose.msra.mxu0 0.0
    %1029 = vmatprep.subr.mxu0 0.0
    %1030 = vmatpush1.xpose.msra.mxu0 0.0
    %1031 = vmatprep.subr.mxu0 0.0
    %1032 = vmatpush1.xpose.msra.mxu0 0.0
    %1033 = vmatprep.subr.mxu0 0.0
    %1034 = vmatpush1.xpose.msra.mxu0 0.0
    %1035 = vmatprep.subr.mxu0 0.0
    %1036 = vmatpush1.xpose.msra.mxu0 0.0
    %1037 = vmatprep.subr.mxu0 0.0
    %1038 = vmatpush1.xpose.msra.mxu0 0.0
    %1039 = vmatprep.subr.mxu0 0.0
    %1040 = vmatpush1.xpose.msra.mxu0 0.0
    %1041 = vmatprep.subr.mxu0 0.0
    %1042 = vmatpush1.xpose.msra.mxu0 0.0
    %1043 = vmatprep.subr.mxu0 0.0
    %1044 = vmatpush1.xpose.msra.mxu0 0.0
    %1045 = vmatprep.subr.mxu0 0.0
    %1046 = vmatpush1.xpose.msra.mxu0 0.0
    %1047 = vmatprep.subr.mxu0 0.0
    %1048 = vmatpush1.xpose.msra.mxu0 0.0
    %1049 = vmatprep.subr.mxu0 0.0
    %1050 = vmatpush1.xpose.msra.mxu0 0.0
    %1051 = vmatprep.subr.mxu0 0.0
    %1052 = vmatpush1.xpose.msra.mxu0 0.0
    %1053 = vmatprep.subr.mxu0 0.0
    %1054 = vmatpush1.xpose.msra.mxu0 %v1021
    %1055 = vmatprep.subr.mxu0 0.0
    %1056 = vmatpush2.xpose.msra.mxu0 0.0
    %1057 = vmatprep.subr.mxu0 0.0
    %1058 = vmatpush2.xpose.msra.mxu0 0.0
    %1059 = vmatprep.subr.mxu0 0.0
    %1060 = vmatpush2.xpose.msra.mxu0 0.0
    %1061 = vmatprep.subr.mxu0 0.0
    %1062 = vmatpush2.xpose.msra.mxu0 0.0
    %1063 = vmatprep.subr.mxu0 0.0
    %1064 = vmatpush2.xpose.msra.mxu0 0.0
    %1065 = vmatprep.subr.mxu0 0.0
    %1066 = vmatpush2.xpose.msra.mxu0 0.0
    %1067 = vmatprep.subr.mxu0 0.0
    %1068 = vmatpush2.xpose.msra.mxu0 0.0
    %1069 = vmatprep.subr.mxu0 0.0
    %1070 = vmatpush2.xpose.msra.mxu0 0.0
    %1071 = vmatprep.subr.mxu0 0.0
    %1072 = vmatpush2.xpose.msra.mxu0 0.0
    %1073 = vmatprep.subr.mxu0 0.0
    %1074 = vmatpush2.xpose.msra.mxu0 0.0
    %1075 = vmatprep.subr.mxu0 0.0
    %1076 = vmatpush2.xpose.msra.mxu0 0.0
    %1077 = vmatprep.subr.mxu0 0.0
    %1078 = vmatpush2.xpose.msra.mxu0 0.0
    %1079 = vmatprep.subr.mxu0 0.0
    %1080 = vmatpush2.xpose.msra.mxu0 0.0
    %1081 = vmatprep.subr.mxu0 0.0
    %1082 = vmatpush2.xpose.msra.mxu0 0.0
    %1083 = vmatprep.subr.mxu0 0.0
    %1084 = vmatpush2.xpose.msra.mxu0 0.0
    %1085 = vmatprep.subr.mxu0 0.0
    %1086 = vmatpush2.xpose.msra.mxu0 0.0
    %1087 = vmatprep.mubr.f32.mxu0 0.0
    %1088 = vmatmul.mubr.f32.gmra.mxu0 %v1019
    %v1089 = vpop.f32.mrf.mxu0
    %v1090 = vadd.f32 0.0, %v1089
    %v1091 = vpop.f32.mrf.mxu0
    %1092 = vdwg.mxu0
    %v1093 = vmul.f32 %v558, 0.35355338
    %v1094 = vmul.f32 %v634, 0.35355338
    %v1095 = vmul.f32 %v710, 0.35355338
    %v1096 = vmul.f32 %v786, 0.35355338
    %v1097 = vmul.f32 %v862, 0.35355338
    %v1098 = vmul.f32 %v938, 0.35355338
    %v1099 = vmul.f32 %v1014, 0.35355338
    %v1100 = vmul.f32 %v1090, 0.35355338
    %v1101 = vsel %vm486, %v1093, -inf
    %1102 = vmax.xlane.f32.xlu0 %v1101
    %v1103 = vpop.xlane.xlu0 %1102
    %v1104 = vsel %vm486, %v1094, -inf
    %1105 = vmax.xlane.f32.xlu0 %v1104
    %v1106 = vpop.xlane.xlu0 %1105
    %v1107 = vsel %vm486, %v1095, -inf
    %1108 = vmax.xlane.f32.xlu0 %v1107
    %v1109 = vpop.xlane.xlu0 %1108
    %v1110 = vsel %vm486, %v1096, -inf
    %1111 = vmax.xlane.f32.xlu0 %v1110
    %v1112 = vpop.xlane.xlu0 %1111
    %v1113 = vsel %vm486, %v1097, -inf
    %1114 = vmax.xlane.f32.xlu0 %v1113
    %v1115 = vpop.xlane.xlu0 %1114
    %v1116 = vsel %vm486, %v1098, -inf
    %1117 = vmax.xlane.f32.xlu0 %v1116
    %v1118 = vpop.xlane.xlu0 %1117
    %v1119 = vsel %vm486, %v1099, -inf
    %1120 = vmax.xlane.f32.xlu0 %v1119
    %v1121 = vpop.xlane.xlu0 %1120
    %v1122 = vsel %vm486, %v1100, -inf
    %1123 = vmax.xlane.f32.xlu0 %v1122
    %v1124 = vpop.xlane.xlu0 %1123
    %v1125 = vsub.f32 %v1093, %v1103
    %v1126 = vsub.f32 %v1094, %v1106
    %v1127 = vsub.f32 %v1095, %v1109
    %v1128 = vsub.f32 %v1096, %v1112
    %v1129 = vsub.f32 %v1097, %v1115
    %v1130 = vsub.f32 %v1098, %v1118
    %v1131 = vsub.f32 %v1099, %v1121
    %v1132 = vsub.f32 %v1100, %v1124
    %v1133 = vmul.f32 %v1125, 1.442695
    %v1134 = vpow.pop %v1133
    %v1135 = vmul.f32 %v1126, 1.442695
    %v1136 = vpow.pop %v1135
    %v1137 = vmul.f32 %v1127, 1.442695
    %v1138 = vpow.pop %v1137
    %v1139 = vmul.f32 %v1128, 1.442695
    %v1140 = vpow.pop %v1139
    %v1141 = vmul.f32 %v1129, 1.442695
    %v1142 = vpow.pop %v1141
    %v1143 = vmul.f32 %v1130, 1.442695
    %v1144 = vpow.pop %v1143
    %v1145 = vmul.f32 %v1131, 1.442695
    %v1146 = vpow.pop %v1145
    %v1147 = vmul.f32 %v1132, 1.442695
    %v1148 = vpow.pop %v1147
    %v1149 = vsel %vm486, %v1134, 0.0
    %1150 = vadd.xlane.f32.xlu0 %v1149
    %v1151 = vpop.xlane.xlu0 %1150
    %v1152 = vsel %vm486, %v1136, 0.0
    %1153 = vadd.xlane.f32.xlu0 %v1152
    %v1154 = vpop.xlane.xlu0 %1153
    %v1155 = vsel %vm486, %v1138, 0.0
    %1156 = vadd.xlane.f32.xlu0 %v1155
    %v1157 = vpop.xlane.xlu0 %1156
    %v1158 = vsel %vm486, %v1140, 0.0
    %1159 = vadd.xlane.f32.xlu0 %v1158
    %v1160 = vpop.xlane.xlu0 %1159
    %v1161 = vsel %vm486, %v1142, 0.0
    %1162 = vadd.xlane.f32.xlu0 %v1161
    %v1163 = vpop.xlane.xlu0 %1162
    %v1164 = vsel %vm486, %v1144, 0.0
    %1165 = vadd.xlane.f32.xlu0 %v1164
    %v1166 = vpop.xlane.xlu0 %1165
    %v1167 = vsel %vm486, %v1146, 0.0
    %1168 = vadd.xlane.f32.xlu0 %v1167
    %v1169 = vpop.xlane.xlu0 %1168
    %v1170 = vsel %vm486, %v1148, 0.0
    %1171 = vadd.xlane.f32.xlu0 %v1170
    %v1172 = vpop.xlane.xlu0 %1171
    %v1173 = vrcp.pop %v1151
    %v1174 = vrcp.pop %v1154
    %v1175 = vrcp.pop %v1157
    %v1176 = vrcp.pop %v1160
    %v1177 = vrcp.pop %v1163
    %v1178 = vrcp.pop %v1166
    %v1179 = vrcp.pop %v1169
    %v1180 = vrcp.pop %v1172
    %v1181 = vmul.f32 %v1134, %v1173
    %v1182 = vmul.f32 %v1136, %v1174
    %v1183 = vmul.f32 %v1138, %v1175
    %v1184 = vmul.f32 %v1140, %v1176
    %v1185 = vmul.f32 %v1142, %v1177
    %v1186 = vmul.f32 %v1144, %v1178
    %v1187 = vmul.f32 %v1146, %v1179
    %v1188 = vmul.f32 %v1148, %v1180
    %1189 = vrot.lane.b32.xlu0 %v462, 64
    %v1190 = vpop.permute.xlu0 %1189
    %v1193 = vsel %vm486, %v1181, 0
    %1195 = vmatprep.subr.mxu0 0.0
    %1196 = vmatpush1.msra.mxu0 0.0
    %1197 = vmatprep.subr.mxu0 0.0
    %1198 = vmatpush1.msra.mxu0 0.0
    %1199 = vmatprep.subr.mxu0 0.0
    %1200 = vmatpush1.msra.mxu0 0.0
    %1201 = vmatprep.subr.mxu0 0.0
    %1202 = vmatpush1.msra.mxu0 0.0
    %1203 = vmatprep.subr.mxu0 0.0
    %1204 = vmatpush1.msra.mxu0 0.0
    %1205 = vmatprep.subr.mxu0 0.0
    %1206 = vmatpush1.msra.mxu0 0.0
    %1207 = vmatprep.subr.mxu0 0.0
    %1208 = vmatpush1.msra.mxu0 0.0
    %1209 = vmatprep.subr.mxu0 0.0
    %1210 = vmatpush1.msra.mxu0 0.0
    %1211 = vmatprep.subr.mxu0 0.0
    %1212 = vmatpush1.msra.mxu0 0.0
    %1213 = vmatprep.subr.mxu0 0.0
    %1214 = vmatpush1.msra.mxu0 0.0
    %1215 = vmatprep.subr.mxu0 0.0
    %1216 = vmatpush1.msra.mxu0 0.0
    %1217 = vmatprep.subr.mxu0 0.0
    %1218 = vmatpush1.msra.mxu0 0.0
    %1219 = vmatprep.subr.mxu0 0.0
    %1220 = vmatpush1.msra.mxu0 0.0
    %1221 = vmatprep.subr.mxu0 0.0
    %1222 = vmatpush1.msra.mxu0 0.0
    %1223 = vmatprep.subr.mxu0 0.0
    %1224 = vmatpush1.msra.mxu0 0.0
    %1225 = vmatprep.subr.mxu0 0.0
    %1226 = vmatpush1.msra.mxu0 %v1190
    %1227 = vmatprep.subr.mxu0 0.0
    %1228 = vmatpush2.msra.mxu0 0.0
    %1229 = vmatprep.subr.mxu0 0.0
    %1230 = vmatpush2.msra.mxu0 0.0
    %1231 = vmatprep.subr.mxu0 0.0
    %1232 = vmatpush2.msra.mxu0 0.0
    %1233 = vmatprep.subr.mxu0 0.0
    %1234 = vmatpush2.msra.mxu0 0.0
    %1235 = vmatprep.subr.mxu0 0.0
    %1236 = vmatpush2.msra.mxu0 0.0
    %1237 = vmatprep.subr.mxu0 0.0
    %1238 = vmatpush2.msra.mxu0 0.0
    %1239 = vmatprep.subr.mxu0 0.0
    %1240 = vmatpush2.msra.mxu0 0.0
    %1241 = vmatprep.subr.mxu0 0.0
    %1242 = vmatpush2.msra.mxu0 0.0
    %1243 = vmatprep.subr.mxu0 0.0
    %1244 = vmatpush2.msra.mxu0 0.0
    %1245 = vmatprep.subr.mxu0 0.0
    %1246 = vmatpush2.msra.mxu0 0.0
    %1247 = vmatprep.subr.mxu0 0.0
    %1248 = vmatpush2.msra.mxu0 0.0
    %1249 = vmatprep.subr.mxu0 0.0
    %1250 = vmatpush2.msra.mxu0 0.0
    %1251 = vmatprep.subr.mxu0 0.0
    %1252 = vmatpush2.msra.mxu0 0.0
    %1253 = vmatprep.subr.mxu0 0.0
    %1254 = vmatpush2.msra.mxu0 0.0
    %1255 = vmatprep.subr.mxu0 0.0
    %1256 = vmatpush2.msra.mxu0 0.0
    %1257 = vmatprep.subr.mxu0 0.0
    %1258 = vmatpush2.msra.mxu0 0.0
    %1259 = vmatprep.mubr.f32.mxu0 0.0
    %1260 = vmatmul.mubr.f32.gmra.mxu0 %v1193
    %v1261 = vpop.f32.mrf.mxu0
    %v1262 = vadd.f32 0.0, %v1261
    %v1263 = vpop.f32.mrf.mxu0
    %1264 = vdwg.mxu0
    %1265 = vrot.lane.b32.xlu0 %v473, 64
    %v1266 = vpop.permute.xlu0 %1265
    %v1269 = vsel %vm486, %v1182, 0
    %1271 = vmatprep.subr.mxu0 0.0
    %1272 = vmatpush1.msra.mxu0 0.0
    %1273 = vmatprep.subr.mxu0 0.0
    %1274 = vmatpush1.msra.mxu0 0.0
    %1275 = vmatprep.subr.mxu0 0.0
    %1276 = vmatpush1.msra.mxu0 0.0
    %1277 = vmatprep.subr.mxu0 0.0
    %1278 = vmatpush1.msra.mxu0 0.0
    %1279 = vmatprep.subr.mxu0 0.0
    %1280 = vmatpush1.msra.mxu0 0.0
    %1281 = vmatprep.subr.mxu0 0.0
    %1282 = vmatpush1.msra.mxu0 0.0
    %1283 = vmatprep.subr.mxu0 0.0
    %1284 = vmatpush1.msra.mxu0 0.0
    %1285 = vmatprep.subr.mxu0 0.0
    %1286 = vmatpush1.msra.mxu0 0.0
    %1287 = vmatprep.subr.mxu0 0.0
    %1288 = vmatpush1.msra.mxu0 0.0
    %1289 = vmatprep.subr.mxu0 0.0
    %1290 = vmatpush1.msra.mxu0 0.0
    %1291 = vmatprep.subr.mxu0 0.0
    %1292 = vmatpush1.msra.mxu0 0.0
    %1293 = vmatprep.subr.mxu0 0.0
    %1294 = vmatpush1.msra.mxu0 0.0
    %1295 = vmatprep.subr.mxu0 0.0
    %1296 = vmatpush1.msra.mxu0 0.0
    %1297 = vmatprep.subr.mxu0 0.0
    %1298 = vmatpush1.msra.mxu0 0.0
    %1299 = vmatprep.subr.mxu0 0.0
    %1300 = vmatpush1.msra.mxu0 0.0
    %1301 = vmatprep.subr.mxu0 0.0
    %1302 = vmatpush1.msra.mxu0 %v1266
    %1303 = vmatprep.subr.mxu0 0.0
    %1304 = vmatpush2.msra.mxu0 0.0
    %1305 = vmatprep.subr.mxu0 0.0
    %1306 = vmatpush2.msra.mxu0 0.0
    %1307 = vmatprep.subr.mxu0 0.0
    %1308 = vmatpush2.msra.mxu0 0.0
    %1309 = vmatprep.subr.mxu0 0.0
    %1310 = vmatpush2.msra.mxu0 0.0
    %1311 = vmatprep.subr.mxu0 0.0
    %1312 = vmatpush2.msra.mxu0 0.0
    %1313 = vmatprep.subr.mxu0 0.0
    %1314 = vmatpush2.msra.mxu0 0.0
    %1315 = vmatprep.subr.mxu0 0.0
    %1316 = vmatpush2.msra.mxu0 0.0
    %1317 = vmatprep.subr.mxu0 0.0
    %1318 = vmatpush2.msra.mxu0 0.0
    %1319 = vmatprep.subr.mxu0 0.0
    %1320 = vmatpush2.msra.mxu0 0.0
    %1321 = vmatprep.subr.mxu0 0.0
    %1322 = vmatpush2.msra.mxu0 0.0
    %1323 = vmatprep.subr.mxu0 0.0
    %1324 = vmatpush2.msra.mxu0 0.0
    %1325 = vmatprep.subr.mxu0 0.0
    %1326 = vmatpush2.msra.mxu0 0.0
    %1327 = vmatprep.subr.mxu0 0.0
    %1328 = vmatpush2.msra.mxu0 0.0
    %1329 = vmatprep.subr.mxu0 0.0
    %1330 = vmatpush2.msra.mxu0 0.0
    %1331 = vmatprep.subr.mxu0 0.0
    %1332 = vmatpush2.msra.mxu0 0.0
    %1333 = vmatprep.subr.mxu0 0.0
    %1334 = vmatpush2.msra.mxu0 0.0
    %1335 = vmatprep.mubr.f32.mxu0 0.0
    %1336 = vmatmul.mubr.f32.gmra.mxu0 %v1269
    %v1337 = vpop.f32.mrf.mxu0
    %v1338 = vadd.f32 0.0, %v1337
    %v1339 = vpop.f32.mrf.mxu0
    %1340 = vdwg.mxu0
    %1341 = vrot.lane.b32.xlu0 %v477, 64
    %v1342 = vpop.permute.xlu0 %1341
    %v1345 = vsel %vm486, %v1183, 0
    %1347 = vmatprep.subr.mxu0 0.0
    %1348 = vmatpush1.msra.mxu0 0.0
    %1349 = vmatprep.subr.mxu0 0.0
    %1350 = vmatpush1.msra.mxu0 0.0
    %1351 = vmatprep.subr.mxu0 0.0
    %1352 = vmatpush1.msra.mxu0 0.0
    %1353 = vmatprep.subr.mxu0 0.0
    %1354 = vmatpush1.msra.mxu0 0.0
    %1355 = vmatprep.subr.mxu0 0.0
    %1356 = vmatpush1.msra.mxu0 0.0
    %1357 = vmatprep.subr.mxu0 0.0
    %1358 = vmatpush1.msra.mxu0 0.0
    %1359 = vmatprep.subr.mxu0 0.0
    %1360 = vmatpush1.msra.mxu0 0.0
    %1361 = vmatprep.subr.mxu0 0.0
    %1362 = vmatpush1.msra.mxu0 0.0
    %1363 = vmatprep.subr.mxu0 0.0
    %1364 = vmatpush1.msra.mxu0 0.0
    %1365 = vmatprep.subr.mxu0 0.0
    %1366 = vmatpush1.msra.mxu0 0.0
    %1367 = vmatprep.subr.mxu0 0.0
    %1368 = vmatpush1.msra.mxu0 0.0
    %1369 = vmatprep.subr.mxu0 0.0
    %1370 = vmatpush1.msra.mxu0 0.0
    %1371 = vmatprep.subr.mxu0 0.0
    %1372 = vmatpush1.msra.mxu0 0.0
    %1373 = vmatprep.subr.mxu0 0.0
    %1374 = vmatpush1.msra.mxu0 0.0
    %1375 = vmatprep.subr.mxu0 0.0
    %1376 = vmatpush1.msra.mxu0 0.0
    %1377 = vmatprep.subr.mxu0 0.0
    %1378 = vmatpush1.msra.mxu0 %v1342
    %1379 = vmatprep.subr.mxu0 0.0
    %1380 = vmatpush2.msra.mxu0 0.0
    %1381 = vmatprep.subr.mxu0 0.0
    %1382 = vmatpush2.msra.mxu0 0.0
    %1383 = vmatprep.subr.mxu0 0.0
    %1384 = vmatpush2.msra.mxu0 0.0
    %1385 = vmatprep.subr.mxu0 0.0
    %1386 = vmatpush2.msra.mxu0 0.0
    %1387 = vmatprep.subr.mxu0 0.0
    %1388 = vmatpush2.msra.mxu0 0.0
    %1389 = vmatprep.subr.mxu0 0.0
    %1390 = vmatpush2.msra.mxu0 0.0
    %1391 = vmatprep.subr.mxu0 0.0
    %1392 = vmatpush2.msra.mxu0 0.0
    %1393 = vmatprep.subr.mxu0 0.0
    %1394 = vmatpush2.msra.mxu0 0.0
    %1395 = vmatprep.subr.mxu0 0.0
    %1396 = vmatpush2.msra.mxu0 0.0
    %1397 = vmatprep.subr.mxu0 0.0
    %1398 = vmatpush2.msra.mxu0 0.0
    %1399 = vmatprep.subr.mxu0 0.0
    %1400 = vmatpush2.msra.mxu0 0.0
    %1401 = vmatprep.subr.mxu0 0.0
    %1402 = vmatpush2.msra.mxu0 0.0
    %1403 = vmatprep.subr.mxu0 0.0
    %1404 = vmatpush2.msra.mxu0 0.0
    %1405 = vmatprep.subr.mxu0 0.0
    %1406 = vmatpush2.msra.mxu0 0.0
    %1407 = vmatprep.subr.mxu0 0.0
    %1408 = vmatpush2.msra.mxu0 0.0
    %1409 = vmatprep.subr.mxu0 0.0
    %1410 = vmatpush2.msra.mxu0 0.0
    %1411 = vmatprep.mubr.f32.mxu0 0.0
    %1412 = vmatmul.mubr.f32.gmra.mxu0 %v1345
    %v1413 = vpop.f32.mrf.mxu0
    %v1414 = vadd.f32 0.0, %v1413
    %v1415 = vpop.f32.mrf.mxu0
    %1416 = vdwg.mxu0
    %1417 = vrot.lane.b32.xlu0 %v481, 64
    %v1418 = vpop.permute.xlu0 %1417
    %v1421 = vsel %vm486, %v1184, 0
    %1423 = vmatprep.subr.mxu0 0.0
    %1424 = vmatpush1.msra.mxu0 0.0
    %1425 = vmatprep.subr.mxu0 0.0
    %1426 = vmatpush1.msra.mxu0 0.0
    %1427 = vmatprep.subr.mxu0 0.0
    %1428 = vmatpush1.msra.mxu0 0.0
    %1429 = vmatprep.subr.mxu0 0.0
    %1430 = vmatpush1.msra.mxu0 0.0
    %1431 = vmatprep.subr.mxu0 0.0
    %1432 = vmatpush1.msra.mxu0 0.0
    %1433 = vmatprep.subr.mxu0 0.0
    %1434 = vmatpush1.msra.mxu0 0.0
    %1435 = vmatprep.subr.mxu0 0.0
    %1436 = vmatpush1.msra.mxu0 0.0
    %1437 = vmatprep.subr.mxu0 0.0
    %1438 = vmatpush1.msra.mxu0 0.0
    %1439 = vmatprep.subr.mxu0 0.0
    %1440 = vmatpush1.msra.mxu0 0.0
    %1441 = vmatprep.subr.mxu0 0.0
    %1442 = vmatpush1.msra.mxu0 0.0
    %1443 = vmatprep.subr.mxu0 0.0
    %1444 = vmatpush1.msra.mxu0 0.0
    %1445 = vmatprep.subr.mxu0 0.0
    %1446 = vmatpush1.msra.mxu0 0.0
    %1447 = vmatprep.subr.mxu0 0.0
    %1448 = vmatpush1.msra.mxu0 0.0
    %1449 = vmatprep.subr.mxu0 0.0
    %1450 = vmatpush1.msra.mxu0 0.0
    %1451 = vmatprep.subr.mxu0 0.0
    %1452 = vmatpush1.msra.mxu0 0.0
    %1453 = vmatprep.subr.mxu0 0.0
    %1454 = vmatpush1.msra.mxu0 %v1418
    %1455 = vmatprep.subr.mxu0 0.0
    %1456 = vmatpush2.msra.mxu0 0.0
    %1457 = vmatprep.subr.mxu0 0.0
    %1458 = vmatpush2.msra.mxu0 0.0
    %1459 = vmatprep.subr.mxu0 0.0
    %1460 = vmatpush2.msra.mxu0 0.0
    %1461 = vmatprep.subr.mxu0 0.0
    %1462 = vmatpush2.msra.mxu0 0.0
    %1463 = vmatprep.subr.mxu0 0.0
    %1464 = vmatpush2.msra.mxu0 0.0
    %1465 = vmatprep.subr.mxu0 0.0
    %1466 = vmatpush2.msra.mxu0 0.0
    %1467 = vmatprep.subr.mxu0 0.0
    %1468 = vmatpush2.msra.mxu0 0.0
    %1469 = vmatprep.subr.mxu0 0.0
    %1470 = vmatpush2.msra.mxu0 0.0
    %1471 = vmatprep.subr.mxu0 0.0
    %1472 = vmatpush2.msra.mxu0 0.0
    %1473 = vmatprep.subr.mxu0 0.0
    %1474 = vmatpush2.msra.mxu0 0.0
    %1475 = vmatprep.subr.mxu0 0.0
    %1476 = vmatpush2.msra.mxu0 0.0
    %1477 = vmatprep.subr.mxu0 0.0
    %1478 = vmatpush2.msra.mxu0 0.0
    %1479 = vmatprep.subr.mxu0 0.0
    %1480 = vmatpush2.msra.mxu0 0.0
    %1481 = vmatprep.subr.mxu0 0.0
    %1482 = vmatpush2.msra.mxu0 0.0
    %1483 = vmatprep.subr.mxu0 0.0
    %1484 = vmatpush2.msra.mxu0 0.0
    %1485 = vmatprep.subr.mxu0 0.0
    %1486 = vmatpush2.msra.mxu0 0.0
    %1487 = vmatprep.mubr.f32.mxu0 0.0
    %1488 = vmatmul.mubr.f32.gmra.mxu0 %v1421
    %v1489 = vpop.f32.mrf.mxu0
    %v1490 = vadd.f32 0.0, %v1489
    %v1491 = vpop.f32.mrf.mxu0
    %1492 = vdwg.mxu0
    %1493 = vrot.lane.b32.xlu0 %v467, 64
    %v1494 = vpop.permute.xlu0 %1493
    %v1497 = vsel %vm486, %v1185, 0
    %1499 = vmatprep.subr.mxu0 0.0
    %1500 = vmatpush1.msra.mxu0 0.0
    %1501 = vmatprep.subr.mxu0 0.0
    %1502 = vmatpush1.msra.mxu0 0.0
    %1503 = vmatprep.subr.mxu0 0.0
    %1504 = vmatpush1.msra.mxu0 0.0
    %1505 = vmatprep.subr.mxu0 0.0
    %1506 = vmatpush1.msra.mxu0 0.0
    %1507 = vmatprep.subr.mxu0 0.0
    %1508 = vmatpush1.msra.mxu0 0.0
    %1509 = vmatprep.subr.mxu0 0.0
    %1510 = vmatpush1.msra.mxu0 0.0
    %1511 = vmatprep.subr.mxu0 0.0
    %1512 = vmatpush1.msra.mxu0 0.0
    %1513 = vmatprep.subr.mxu0 0.0
    %1514 = vmatpush1.msra.mxu0 0.0
    %1515 = vmatprep.subr.mxu0 0.0
    %1516 = vmatpush1.msra.mxu0 0.0
    %1517 = vmatprep.subr.mxu0 0.0
    %1518 = vmatpush1.msra.mxu0 0.0
    %1519 = vmatprep.subr.mxu0 0.0
    %1520 = vmatpush1.msra.mxu0 0.0
    %1521 = vmatprep.subr.mxu0 0.0
    %1522 = vmatpush1.msra.mxu0 0.0
    %1523 = vmatprep.subr.mxu0 0.0
    %1524 = vmatpush1.msra.mxu0 0.0
    %1525 = vmatprep.subr.mxu0 0.0
    %1526 = vmatpush1.msra.mxu0 0.0
    %1527 = vmatprep.subr.mxu0 0.0
    %1528 = vmatpush1.msra.mxu0 0.0
    %1529 = vmatprep.subr.mxu0 0.0
    %1530 = vmatpush1.msra.mxu0 %v1494
    %1531 = vmatprep.subr.mxu0 0.0
    %1532 = vmatpush2.msra.mxu0 0.0
    %1533 = vmatprep.subr.mxu0 0.0
    %1534 = vmatpush2.msra.mxu0 0.0
    %1535 = vmatprep.subr.mxu0 0.0
    %1536 = vmatpush2.msra.mxu0 0.0
    %1537 = vmatprep.subr.mxu0 0.0
    %1538 = vmatpush2.msra.mxu0 0.0
    %1539 = vmatprep.subr.mxu0 0.0
    %1540 = vmatpush2.msra.mxu0 0.0
    %1541 = vmatprep.subr.mxu0 0.0
    %1542 = vmatpush2.msra.mxu0 0.0
    %1543 = vmatprep.subr.mxu0 0.0
    %1544 = vmatpush2.msra.mxu0 0.0
    %1545 = vmatprep.subr.mxu0 0.0
    %1546 = vmatpush2.msra.mxu0 0.0
    %1547 = vmatprep.subr.mxu0 0.0
    %1548 = vmatpush2.msra.mxu0 0.0
    %1549 = vmatprep.subr.mxu0 0.0
    %1550 = vmatpush2.msra.mxu0 0.0
    %1551 = vmatprep.subr.mxu0 0.0
    %1552 = vmatpush2.msra.mxu0 0.0
    %1553 = vmatprep.subr.mxu0 0.0
    %1554 = vmatpush2.msra.mxu0 0.0
    %1555 = vmatprep.subr.mxu0 0.0
    %1556 = vmatpush2.msra.mxu0 0.0
    %1557 = vmatprep.subr.mxu0 0.0
    %1558 = vmatpush2.msra.mxu0 0.0
    %1559 = vmatprep.subr.mxu0 0.0
    %1560 = vmatpush2.msra.mxu0 0.0
    %1561 = vmatprep.subr.mxu0 0.0
    %1562 = vmatpush2.msra.mxu0 0.0
    %1563 = vmatprep.mubr.f32.mxu0 0.0
    %1564 = vmatmul.mubr.f32.gmra.mxu0 %v1497
    %v1565 = vpop.f32.mrf.mxu0
    %v1566 = vadd.f32 0.0, %v1565
    %v1567 = vpop.f32.mrf.mxu0
    %1568 = vdwg.mxu0
    %1569 = vrot.lane.b32.xlu0 %v475, 64
    %v1570 = vpop.permute.xlu0 %1569
    %v1573 = vsel %vm486, %v1186, 0
    %1575 = vmatprep.subr.mxu0 0.0
    %1576 = vmatpush1.msra.mxu0 0.0
    %1577 = vmatprep.subr.mxu0 0.0
    %1578 = vmatpush1.msra.mxu0 0.0
    %1579 = vmatprep.subr.mxu0 0.0
    %1580 = vmatpush1.msra.mxu0 0.0
    %1581 = vmatprep.subr.mxu0 0.0
    %1582 = vmatpush1.msra.mxu0 0.0
    %1583 = vmatprep.subr.mxu0 0.0
    %1584 = vmatpush1.msra.mxu0 0.0
    %1585 = vmatprep.subr.mxu0 0.0
    %1586 = vmatpush1.msra.mxu0 0.0
    %1587 = vmatprep.subr.mxu0 0.0
    %1588 = vmatpush1.msra.mxu0 0.0
    %1589 = vmatprep.subr.mxu0 0.0
    %1590 = vmatpush1.msra.mxu0 0.0
    %1591 = vmatprep.subr.mxu0 0.0
    %1592 = vmatpush1.msra.mxu0 0.0
    %1593 = vmatprep.subr.mxu0 0.0
    %1594 = vmatpush1.msra.mxu0 0.0
    %1595 = vmatprep.subr.mxu0 0.0
    %1596 = vmatpush1.msra.mxu0 0.0
    %1597 = vmatprep.subr.mxu0 0.0
    %1598 = vmatpush1.msra.mxu0 0.0
    %1599 = vmatprep.subr.mxu0 0.0
    %1600 = vmatpush1.msra.mxu0 0.0
    %1601 = vmatprep.subr.mxu0 0.0
    %1602 = vmatpush1.msra.mxu0 0.0
    %1603 = vmatprep.subr.mxu0 0.0
    %1604 = vmatpush1.msra.mxu0 0.0
    %1605 = vmatprep.subr.mxu0 0.0
    %1606 = vmatpush1.msra.mxu0 %v1570
    %1607 = vmatprep.subr.mxu0 0.0
    %1608 = vmatpush2.msra.mxu0 0.0
    %1609 = vmatprep.subr.mxu0 0.0
    %1610 = vmatpush2.msra.mxu0 0.0
    %1611 = vmatprep.subr.mxu0 0.0
    %1612 = vmatpush2.msra.mxu0 0.0
    %1613 = vmatprep.subr.mxu0 0.0
    %1614 = vmatpush2.msra.mxu0 0.0
    %1615 = vmatprep.subr.mxu0 0.0
    %1616 = vmatpush2.msra.mxu0 0.0
    %1617 = vmatprep.subr.mxu0 0.0
    %1618 = vmatpush2.msra.mxu0 0.0
    %1619 = vmatprep.subr.mxu0 0.0
    %1620 = vmatpush2.msra.mxu0 0.0
    %1621 = vmatprep.subr.mxu0 0.0
    %1622 = vmatpush2.msra.mxu0 0.0
    %1623 = vmatprep.subr.mxu0 0.0
    %1624 = vmatpush2.msra.mxu0 0.0
    %1625 = vmatprep.subr.mxu0 0.0
    %1626 = vmatpush2.msra.mxu0 0.0
    %1627 = vmatprep.subr.mxu0 0.0
    %1628 = vmatpush2.msra.mxu0 0.0
    %1629 = vmatprep.subr.mxu0 0.0
    %1630 = vmatpush2.msra.mxu0 0.0
    %1631 = vmatprep.subr.mxu0 0.0
    %1632 = vmatpush2.msra.mxu0 0.0
    %1633 = vmatprep.subr.mxu0 0.0
    %1634 = vmatpush2.msra.mxu0 0.0
    %1635 = vmatprep.subr.mxu0 0.0
    %1636 = vmatpush2.msra.mxu0 0.0
    %1637 = vmatprep.subr.mxu0 0.0
    %1638 = vmatpush2.msra.mxu0 0.0
    %1639 = vmatprep.mubr.f32.mxu0 0.0
    %1640 = vmatmul.mubr.f32.gmra.mxu0 %v1573
    %v1641 = vpop.f32.mrf.mxu0
    %v1642 = vadd.f32 0.0, %v1641
    %v1643 = vpop.f32.mrf.mxu0
    %1644 = vdwg.mxu0
    %1645 = vrot.lane.b32.xlu0 %v479, 64
    %v1646 = vpop.permute.xlu0 %1645
    %v1649 = vsel %vm486, %v1187, 0
    %1651 = vmatprep.subr.mxu0 0.0
    %1652 = vmatpush1.msra.mxu0 0.0
    %1653 = vmatprep.subr.mxu0 0.0
    %1654 = vmatpush1.msra.mxu0 0.0
    %1655 = vmatprep.subr.mxu0 0.0
    %1656 = vmatpush1.msra.mxu0 0.0
    %1657 = vmatprep.subr.mxu0 0.0
    %1658 = vmatpush1.msra.mxu0 0.0
    %1659 = vmatprep.subr.mxu0 0.0
    %1660 = vmatpush1.msra.mxu0 0.0
    %1661 = vmatprep.subr.mxu0 0.0
    %1662 = vmatpush1.msra.mxu0 0.0
    %1663 = vmatprep.subr.mxu0 0.0
    %1664 = vmatpush1.msra.mxu0 0.0
    %1665 = vmatprep.subr.mxu0 0.0
    %1666 = vmatpush1.msra.mxu0 0.0
    %1667 = vmatprep.subr.mxu0 0.0
    %1668 = vmatpush1.msra.mxu0 0.0
    %1669 = vmatprep.subr.mxu0 0.0
    %1670 = vmatpush1.msra.mxu0 0.0
    %1671 = vmatprep.subr.mxu0 0.0
    %1672 = vmatpush1.msra.mxu0 0.0
    %1673 = vmatprep.subr.mxu0 0.0
    %1674 = vmatpush1.msra.mxu0 0.0
    %1675 = vmatprep.subr.mxu0 0.0
    %1676 = vmatpush1.msra.mxu0 0.0
    %1677 = vmatprep.subr.mxu0 0.0
    %1678 = vmatpush1.msra.mxu0 0.0
    %1679 = vmatprep.subr.mxu0 0.0
    %1680 = vmatpush1.msra.mxu0 0.0
    %1681 = vmatprep.subr.mxu0 0.0
    %1682 = vmatpush1.msra.mxu0 %v1646
    %1683 = vmatprep.subr.mxu0 0.0
    %1684 = vmatpush2.msra.mxu0 0.0
    %1685 = vmatprep.subr.mxu0 0.0
    %1686 = vmatpush2.msra.mxu0 0.0
    %1687 = vmatprep.subr.mxu0 0.0
    %1688 = vmatpush2.msra.mxu0 0.0
    %1689 = vmatprep.subr.mxu0 0.0
    %1690 = vmatpush2.msra.mxu0 0.0
    %1691 = vmatprep.subr.mxu0 0.0
    %1692 = vmatpush2.msra.mxu0 0.0
    %1693 = vmatprep.subr.mxu0 0.0
    %1694 = vmatpush2.msra.mxu0 0.0
    %1695 = vmatprep.subr.mxu0 0.0
    %1696 = vmatpush2.msra.mxu0 0.0
    %1697 = vmatprep.subr.mxu0 0.0
    %1698 = vmatpush2.msra.mxu0 0.0
    %1699 = vmatprep.subr.mxu0 0.0
    %1700 = vmatpush2.msra.mxu0 0.0
    %1701 = vmatprep.subr.mxu0 0.0
    %1702 = vmatpush2.msra.mxu0 0.0
    %1703 = vmatprep.subr.mxu0 0.0
    %1704 = vmatpush2.msra.mxu0 0.0
    %1705 = vmatprep.subr.mxu0 0.0
    %1706 = vmatpush2.msra.mxu0 0.0
    %1707 = vmatprep.subr.mxu0 0.0
    %1708 = vmatpush2.msra.mxu0 0.0
    %1709 = vmatprep.subr.mxu0 0.0
    %1710 = vmatpush2.msra.mxu0 0.0
    %1711 = vmatprep.subr.mxu0 0.0
    %1712 = vmatpush2.msra.mxu0 0.0
    %1713 = vmatprep.subr.mxu0 0.0
    %1714 = vmatpush2.msra.mxu0 0.0
    %1715 = vmatprep.mubr.f32.mxu0 0.0
    %1716 = vmatmul.mubr.f32.gmra.mxu0 %v1649
    %v1717 = vpop.f32.mrf.mxu0
    %v1718 = vadd.f32 0.0, %v1717
    %v1719 = vpop.f32.mrf.mxu0
    %1720 = vdwg.mxu0
    %1721 = vrot.lane.b32.xlu0 %v483, 64
    %v1722 = vpop.permute.xlu0 %1721
    %v1725 = vsel %vm486, %v1188, 0
    %1727 = vmatprep.subr.mxu0 0.0
    %1728 = vmatpush1.msra.mxu0 0.0
    %1729 = vmatprep.subr.mxu0 0.0
    %1730 = vmatpush1.msra.mxu0 0.0
    %1731 = vmatprep.subr.mxu0 0.0
    %1732 = vmatpush1.msra.mxu0 0.0
    %1733 = vmatprep.subr.mxu0 0.0
    %1734 = vmatpush1.msra.mxu0 0.0
    %1735 = vmatprep.subr.mxu0 0.0
    %1736 = vmatpush1.msra.mxu0 0.0
    %1737 = vmatprep.subr.mxu0 0.0
    %1738 = vmatpush1.msra.mxu0 0.0
    %1739 = vmatprep.subr.mxu0 0.0
    %1740 = vmatpush1.msra.mxu0 0.0
    %1741 = vmatprep.subr.mxu0 0.0
    %1742 = vmatpush1.msra.mxu0 0.0
    %1743 = vmatprep.subr.mxu0 0.0
    %1744 = vmatpush1.msra.mxu0 0.0
    %1745 = vmatprep.subr.mxu0 0.0
    %1746 = vmatpush1.msra.mxu0 0.0
    %1747 = vmatprep.subr.mxu0 0.0
    %1748 = vmatpush1.msra.mxu0 0.0
    %1749 = vmatprep.subr.mxu0 0.0
    %1750 = vmatpush1.msra.mxu0 0.0
    %1751 = vmatprep.subr.mxu0 0.0
    %1752 = vmatpush1.msra.mxu0 0.0
    %1753 = vmatprep.subr.mxu0 0.0
    %1754 = vmatpush1.msra.mxu0 0.0
    %1755 = vmatprep.subr.mxu0 0.0
    %1756 = vmatpush1.msra.mxu0 0.0
    %1757 = vmatprep.subr.mxu0 0.0
    %1758 = vmatpush1.msra.mxu0 %v1722
    %1759 = vmatprep.subr.mxu0 0.0
    %1760 = vmatpush2.msra.mxu0 0.0
    %1761 = vmatprep.subr.mxu0 0.0
    %1762 = vmatpush2.msra.mxu0 0.0
    %1763 = vmatprep.subr.mxu0 0.0
    %1764 = vmatpush2.msra.mxu0 0.0
    %1765 = vmatprep.subr.mxu0 0.0
    %1766 = vmatpush2.msra.mxu0 0.0
    %1767 = vmatprep.subr.mxu0 0.0
    %1768 = vmatpush2.msra.mxu0 0.0
    %1769 = vmatprep.subr.mxu0 0.0
    %1770 = vmatpush2.msra.mxu0 0.0
    %1771 = vmatprep.subr.mxu0 0.0
    %1772 = vmatpush2.msra.mxu0 0.0
    %1773 = vmatprep.subr.mxu0 0.0
    %1774 = vmatpush2.msra.mxu0 0.0
    %1775 = vmatprep.subr.mxu0 0.0
    %1776 = vmatpush2.msra.mxu0 0.0
    %1777 = vmatprep.subr.mxu0 0.0
    %1778 = vmatpush2.msra.mxu0 0.0
    %1779 = vmatprep.subr.mxu0 0.0
    %1780 = vmatpush2.msra.mxu0 0.0
    %1781 = vmatprep.subr.mxu0 0.0
    %1782 = vmatpush2.msra.mxu0 0.0
    %1783 = vmatprep.subr.mxu0 0.0
    %1784 = vmatpush2.msra.mxu0 0.0
    %1785 = vmatprep.subr.mxu0 0.0
    %1786 = vmatpush2.msra.mxu0 0.0
    %1787 = vmatprep.subr.mxu0 0.0
    %1788 = vmatpush2.msra.mxu0 0.0
    %1789 = vmatprep.subr.mxu0 0.0
    %1790 = vmatpush2.msra.mxu0 0.0
    %1791 = vmatprep.mubr.f32.mxu0 0.0
    %1792 = vmatmul.mubr.f32.gmra.mxu0 %v1725
    %v1793 = vpop.f32.mrf.mxu0
    %v1794 = vadd.f32 0.0, %v1793
    %v1795 = vpop.f32.mrf.mxu0
    %1796 = vdwg.mxu0
    %1799 = vrot.lane.b32.xlu0 %v1338, 8
    %v1800 = vpop.permute.xlu0 %1799
    %1801 = vrot.lane.b32.xlu0 %v1642, 8
    %v1802 = vpop.permute.xlu0 %1801
    %1807 = vrot.lane.b32.xlu0 %v1414, 16
    %v1808 = vpop.permute.xlu0 %1807
    %1809 = vrot.lane.b32.xlu0 %v1718, 16
    %v1810 = vpop.permute.xlu0 %1809
    %1815 = vrot.lane.b32.xlu0 %v1490, 24
    %v1816 = vpop.permute.xlu0 %1815
    %1817 = vrot.lane.b32.xlu0 %v1794, 24
    %v1818 = vpop.permute.xlu0 %1817
    %v1821 = vsel %vm486, %v1262, %v1800
    %v1822 = vsel %vm486, %v1566, %v1802
    %vm1823 = vcmask 130048
    %v1824 = vsel %vm1823, %v1821, %v1808
    %v1825 = vsel %vm1823, %v1822, %v1810
    %vm1826 = vcmask 195584
    %v1827 = vsel %vm1826, %v1824, %v1816
    %v1828 = vsel %vm1826, %v1825, %v1818
    %v1830 = vlaneseq
    %v1831 = vshrl.u32 %v1830, 7
    %v1832 = vsub.s32 0, %v1831
    %v1833 = vrot.slane %v365, %v1832
    %v1836 = vsel %vm388, %v1827, 0
    %v1839 = vsel %vm388, %v1828, 0
    %1841 = vmatprep.subr.mxu0 0.0
    %1842 = vmatpush1.msra.mxu0 0.0
    %1843 = vmatprep.subr.mxu0 0.0
    %1844 = vmatpush1.msra.mxu0 0.0
    %1845 = vmatprep.subr.mxu0 0.0
    %1846 = vmatpush1.msra.mxu0 0.0
    %1847 = vmatprep.subr.mxu0 0.0
    %1848 = vmatpush1.msra.mxu0 0.0
    %1849 = vmatprep.subr.mxu0 0.0
    %1850 = vmatpush1.msra.mxu0 0.0
    %1851 = vmatprep.subr.mxu0 0.0
    %1852 = vmatpush1.msra.mxu0 0.0
    %1853 = vmatprep.subr.mxu0 0.0
    %1854 = vmatpush1.msra.mxu0 0.0
    %1855 = vmatprep.subr.mxu0 0.0
    %1856 = vmatpush1.msra.mxu0 0.0
    %1857 = vmatprep.subr.mxu0 0.0
    %1858 = vmatpush1.msra.mxu0 0.0
    %1859 = vmatprep.subr.mxu0 0.0
    %1860 = vmatpush1.msra.mxu0 0.0
    %1861 = vmatprep.subr.mxu0 0.0
    %1862 = vmatpush1.msra.mxu0 0.0
    %1863 = vmatprep.subr.mxu0 0.0
    %1864 = vmatpush1.msra.mxu0 0.0
    %1865 = vmatprep.subr.mxu0 0.0
    %1866 = vmatpush1.msra.mxu0 %v364
    %1867 = vmatprep.subr.mxu0 0.0
    %1868 = vmatpush1.msra.mxu0 %v363
    %1869 = vmatprep.subr.mxu0 0.0
    %1870 = vmatpush1.msra.mxu0 %v362
    %1871 = vmatprep.subr.mxu0 0.0
    %1872 = vmatpush1.msra.mxu0 %v361
    %1873 = vmatprep.subr.mxu0 0.0
    %1874 = vmatpush2.msra.mxu0 0.0
    %1875 = vmatprep.subr.mxu0 0.0
    %1876 = vmatpush2.msra.mxu0 0.0
    %1877 = vmatprep.subr.mxu0 0.0
    %1878 = vmatpush2.msra.mxu0 0.0
    %1879 = vmatprep.subr.mxu0 0.0
    %1880 = vmatpush2.msra.mxu0 0.0
    %1881 = vmatprep.subr.mxu0 0.0
    %1882 = vmatpush2.msra.mxu0 0.0
    %1883 = vmatprep.subr.mxu0 0.0
    %1884 = vmatpush2.msra.mxu0 0.0
    %1885 = vmatprep.subr.mxu0 0.0
    %1886 = vmatpush2.msra.mxu0 0.0
    %1887 = vmatprep.subr.mxu0 0.0
    %1888 = vmatpush2.msra.mxu0 0.0
    %1889 = vmatprep.subr.mxu0 0.0
    %1890 = vmatpush2.msra.mxu0 0.0
    %1891 = vmatprep.subr.mxu0 0.0
    %1892 = vmatpush2.msra.mxu0 0.0
    %1893 = vmatprep.subr.mxu0 0.0
    %1894 = vmatpush2.msra.mxu0 0.0
    %1895 = vmatprep.subr.mxu0 0.0
    %1896 = vmatpush2.msra.mxu0 0.0
    %1897 = vmatprep.subr.mxu0 0.0
    %1898 = vmatpush2.msra.mxu0 0.0
    %1899 = vmatprep.subr.mxu0 0.0
    %1900 = vmatpush2.msra.mxu0 0.0
    %1901 = vmatprep.subr.mxu0 0.0
    %1902 = vmatpush2.msra.mxu0 0.0
    %1903 = vmatprep.subr.mxu0 0.0
    %1904 = vmatpush2.msra.mxu0 0.0
    %1905 = vmatprep.mubr.f32.mxu0 0.0
    %1906 = vmatmul.mubr.f32.gmra.mxu0 %v1836
    %v1907 = vpop.f32.mrf.mxu0
    %v1908 = vadd.f32 %v1833, %v1907
    %v1909 = vpop.f32.mrf.mxu0
    %1910 = vmatprep.mubr.f32.mxu0 0.0
    %1911 = vmatmul.mubr.f32.gmra.mxu0 %v1839
    %v1912 = vpop.f32.mrf.mxu0
    %v1913 = vadd.f32 %v1833, %v1912
    %v1914 = vpop.f32.mrf.mxu0
    %1915 = vdwg.mxu0
    %1916 = vst.msk [vmem:[#allocation32] sm:$0xff] %vm486, %v1181
    %1917 = vst.msk [vmem:[#allocation32 + $0x8] sm:$0xff] %vm486, %v1182
    %1918 = vst.msk [vmem:[#allocation32 + $0x10] sm:$0xff] %vm486, %v1183
    %1919 = vst.msk [vmem:[#allocation32 + $0x18] sm:$0xff] %vm486, %v1184
    %1920 = vst.msk [vmem:[#allocation32 + $0x20] sm:$0xff] %vm486, %v1185
    %1921 = vst.msk [vmem:[#allocation32 + $0x28] sm:$0xff] %vm486, %v1186
    %1922 = vst.msk [vmem:[#allocation32 + $0x30] sm:$0xff] %vm486, %v1187
    %1923 = vst.msk [vmem:[#allocation32 + $0x38] sm:$0xff] %vm486, %v1188
    %v1924 = vadd.f32 %v354, %v1908
    %v1925 = vadd.f32 %v355, %v1913
    %v1926 = vsel %vm388, %v1924, 0.0
    %1927 = vadd.xlane.f32.xlu0 %v1926
    %v1928 = vpop.xlane.xlu0 %1927
    %v1929 = vsel %vm388, %v1925, 0.0
    %1930 = vadd.xlane.f32.xlu0 %v1929
    %v1931 = vpop.xlane.xlu0 %1930
    %v1932 = vrcp.pop 32.0
    %v1933 = vmul.f32 %v1928, %v1932
    %v1934 = vmul.f32 %v1931, %v1932
    %v1935 = vsub.f32 %v1924, %v1933
    %v1936 = vsub.f32 %v1925, %v1934
    %v1937 = vmul.f32 %v1935, %v1935
    %v1938 = vmul.f32 %v1936, %v1936
    %v1939 = vsel %vm388, %v1937, 0.0
    %1940 = vadd.xlane.f32.xlu0 %v1939
    %v1941 = vpop.xlane.xlu0 %1940
    %v1942 = vsel %vm388, %v1938, 0.0
    %1943 = vadd.xlane.f32.xlu0 %v1942
    %v1944 = vpop.xlane.xlu0 %1943
    %v1945 = vmul.f32 %v1941, %v1932
    %v1946 = vmul.f32 %v1944, %v1932
    %v1947 = vadd.f32 %v1945, 1e-05
    %v1948 = vadd.f32 %v1946, 1e-05
    %v1949 = vrsqrt.pop %v1947
    %v1950 = vrsqrt.pop %v1948
    %v1951 = vmul.f32 %v1935, %v1949
    %v1952 = vmul.f32 %v1936, %v1950
    %v1954 = vlaneseq
    %v1955 = vshrl.u32 %v1954, 7
    %v1956 = vsub.s32 0, %v1955
    %v1957 = vrot.slane %v378, %v1956
    %v1959 = vmul.f32 %v1951, %v1957
    %v1960 = vmul.f32 %v1952, %v1957
    %v1962 = vlaneseq
    %v1963 = vshrl.u32 %v1962, 7
    %v1964 = vsub.s32 0, %v1963
    %v1965 = vrot.slane %v379, %v1964
    %v1967 = vadd.f32 %v1959, %v1965
    %v1968 = vadd.f32 %v1960, %v1965
    %v1970 = vsel %vm388, %v1967, 0
    %v1973 = vsel %vm388, %v1968, 0
    %1975 = vmatprep.subr.mxu0 0.0
    %1976 = vmatpush1.msra.mxu0 0.0
    %1977 = vmatprep.subr.mxu0 0.0
    %1978 = vmatpush1.msra.mxu0 0.0
    %1979 = vmatprep.subr.mxu0 0.0
    %1980 = vmatpush1.msra.mxu0 0.0
    %1981 = vmatprep.subr.mxu0 0.0
    %1982 = vmatpush1.msra.mxu0 0.0
    %1983 = vmatprep.subr.mxu0 0.0
    %1984 = vmatpush1.msra.mxu0 0.0
    %1985 = vmatprep.subr.mxu0 0.0
    %1986 = vmatpush1.msra.mxu0 0.0
    %1987 = vmatprep.subr.mxu0 0.0
    %1988 = vmatpush1.msra.mxu0 0.0
    %1989 = vmatprep.subr.mxu0 0.0
    %1990 = vmatpush1.msra.mxu0 0.0
    %1991 = vmatprep.subr.mxu0 0.0
    %1992 = vmatpush1.msra.mxu0 0.0
    %1993 = vmatprep.subr.mxu0 0.0
    %1994 = vmatpush1.msra.mxu0 0.0
    %1995 = vmatprep.subr.mxu0 0.0
    %1996 = vmatpush1.msra.mxu0 0.0
    %1997 = vmatprep.subr.mxu0 0.0
    %1998 = vmatpush1.msra.mxu0 0.0
    %1999 = vmatprep.subr.mxu0 0.0
    %2000 = vmatpush1.msra.mxu0 %v369
    %2001 = vmatprep.subr.mxu0 0.0
    %2002 = vmatpush1.msra.mxu0 %v368
    %2003 = vmatprep.subr.mxu0 0.0
    %2004 = vmatpush1.msra.mxu0 %v367
    %2005 = vmatprep.subr.mxu0 0.0
    %2006 = vmatpush1.msra.mxu0 %v366
    %2007 = vmatprep.subr.mxu0 0.0
    %2008 = vmatpush2.msra.mxu0 0.0
    %2009 = vmatprep.subr.mxu0 0.0
    %2010 = vmatpush2.msra.mxu0 0.0
    %2011 = vmatprep.subr.mxu0 0.0
    %2012 = vmatpush2.msra.mxu0 0.0
    %2013 = vmatprep.subr.mxu0 0.0
    %2014 = vmatpush2.msra.mxu0 0.0
    %2015 = vmatprep.subr.mxu0 0.0
    %2016 = vmatpush2.msra.mxu0 0.0
    %2017 = vmatprep.subr.mxu0 0.0
    %2018 = vmatpush2.msra.mxu0 0.0
    %2019 = vmatprep.subr.mxu0 0.0
    %2020 = vmatpush2.msra.mxu0 0.0
    %2021 = vmatprep.subr.mxu0 0.0
    %2022 = vmatpush2.msra.mxu0 0.0
    %2023 = vmatprep.subr.mxu0 0.0
    %2024 = vmatpush2.msra.mxu0 0.0
    %2025 = vmatprep.subr.mxu0 0.0
    %2026 = vmatpush2.msra.mxu0 0.0
    %2027 = vmatprep.subr.mxu0 0.0
    %2028 = vmatpush2.msra.mxu0 0.0
    %2029 = vmatprep.subr.mxu0 0.0
    %2030 = vmatpush2.msra.mxu0 0.0
    %2031 = vmatprep.subr.mxu0 0.0
    %2032 = vmatpush2.msra.mxu0 0.0
    %2033 = vmatprep.subr.mxu0 0.0
    %2034 = vmatpush2.msra.mxu0 0.0
    %2035 = vmatprep.subr.mxu0 0.0
    %2036 = vmatpush2.msra.mxu0 0.0
    %2037 = vmatprep.subr.mxu0 0.0
    %2038 = vmatpush2.msra.mxu0 0.0
    %2039 = vmatprep.mubr.f32.mxu0 0.0
    %2040 = vmatmul.mubr.f32.gmra.mxu0 %v1970
    %v2041 = vpop.f32.mrf.mxu0
    %v2042 = vadd.f32 0.0, %v2041
    %v2043 = vpop.f32.mrf.mxu0
    %2044 = vmatprep.mubr.f32.mxu0 0.0
    %2045 = vmatmul.mubr.f32.gmra.mxu0 %v1973
    %v2046 = vpop.f32.mrf.mxu0
    %v2047 = vadd.f32 0.0, %v2046
    %v2048 = vpop.f32.mrf.mxu0
    %2049 = vdwg.mxu0
    %v2050 = vmax.f32 %v2042, 0.0
    %v2051 = vmax.f32 %v2047, 0.0
    %vm2052 = vcmask 523264
    %v2054 = vsel %vm2052, %v2050, 0
    %v2057 = vsel %vm2052, %v2051, 0
    %2059 = vmatprep.subr.mxu0 0.0
    %2060 = vmatpush1.msra.mxu0 0.0
    %2061 = vmatprep.subr.mxu0 0.0
    %2062 = vmatpush1.msra.mxu0 0.0
    %2063 = vmatprep.subr.mxu0 0.0
    %2064 = vmatpush1.msra.mxu0 0.0
    %2065 = vmatprep.subr.mxu0 0.0
    %2066 = vmatpush1.msra.mxu0 0.0
    %2067 = vmatprep.subr.mxu0 0.0
    %2068 = vmatpush1.msra.mxu0 0.0
    %2069 = vmatprep.subr.mxu0 0.0
    %2070 = vmatpush1.msra.mxu0 0.0
    %2071 = vmatprep.subr.mxu0 0.0
    %2072 = vmatpush1.msra.mxu0 0.0
    %2073 = vmatprep.subr.mxu0 0.0
    %2074 = vmatpush1.msra.mxu0 0.0
    %2075 = vmatprep.subr.mxu0 0.0
    %2076 = vmatpush1.msra.mxu0 %v377
    %2077 = vmatprep.subr.mxu0 0.0
    %2078 = vmatpush1.msra.mxu0 %v376
    %2079 = vmatprep.subr.mxu0 0.0
    %2080 = vmatpush1.msra.mxu0 %v375
    %2081 = vmatprep.subr.mxu0 0.0
    %2082 = vmatpush1.msra.mxu0 %v374
    %2083 = vmatprep.subr.mxu0 0.0
    %2084 = vmatpush1.msra.mxu0 %v373
    %2085 = vmatprep.subr.mxu0 0.0
    %2086 = vmatpush1.msra.mxu0 %v372
    %2087 = vmatprep.subr.mxu0 0.0
    %2088 = vmatpush1.msra.mxu0 %v371
    %2089 = vmatprep.subr.mxu0 0.0
    %2090 = vmatpush1.msra.mxu0 %v370
    %2091 = vmatprep.subr.mxu0 0.0
    %2092 = vmatpush2.msra.mxu0 0.0
    %2093 = vmatprep.subr.mxu0 0.0
    %2094 = vmatpush2.msra.mxu0 0.0
    %2095 = vmatprep.subr.mxu0 0.0
    %2096 = vmatpush2.msra.mxu0 0.0
    %2097 = vmatprep.subr.mxu0 0.0
    %2098 = vmatpush2.msra.mxu0 0.0
    %2099 = vmatprep.subr.mxu0 0.0
    %2100 = vmatpush2.msra.mxu0 0.0
    %2101 = vmatprep.subr.mxu0 0.0
    %2102 = vmatpush2.msra.mxu0 0.0
    %2103 = vmatprep.subr.mxu0 0.0
    %2104 = vmatpush2.msra.mxu0 0.0
    %2105 = vmatprep.subr.mxu0 0.0
    %2106 = vmatpush2.msra.mxu0 0.0
    %2107 = vmatprep.subr.mxu0 0.0
    %2108 = vmatpush2.msra.mxu0 0.0
    %2109 = vmatprep.subr.mxu0 0.0
    %2110 = vmatpush2.msra.mxu0 0.0
    %2111 = vmatprep.subr.mxu0 0.0
    %2112 = vmatpush2.msra.mxu0 0.0
    %2113 = vmatprep.subr.mxu0 0.0
    %2114 = vmatpush2.msra.mxu0 0.0
    %2115 = vmatprep.subr.mxu0 0.0
    %2116 = vmatpush2.msra.mxu0 0.0
    %2117 = vmatprep.subr.mxu0 0.0
    %2118 = vmatpush2.msra.mxu0 0.0
    %2119 = vmatprep.subr.mxu0 0.0
    %2120 = vmatpush2.msra.mxu0 0.0
    %2121 = vmatprep.subr.mxu0 0.0
    %2122 = vmatpush2.msra.mxu0 0.0
    %2123 = vmatprep.mubr.f32.mxu0 0.0
    %2124 = vmatmul.mubr.f32.gmra.mxu0 %v2054
    %v2125 = vpop.f32.mrf.mxu0
    %v2126 = vadd.f32 0.0, %v2125
    %v2127 = vpop.f32.mrf.mxu0
    %2128 = vmatprep.mubr.f32.mxu0 0.0
    %2129 = vmatmul.mubr.f32.gmra.mxu0 %v2057
    %v2130 = vpop.f32.mrf.mxu0
    %v2131 = vadd.f32 0.0, %v2130
    %v2132 = vpop.f32.mrf.mxu0
    %2133 = vdwg.mxu0
    %v2134 = vadd.f32 %v354, %v2126
    %v2135 = vadd.f32 %v355, %v2131
    %v2136 = vsel %vm388, %v2134, 0.0
    %2137 = vadd.xlane.f32.xlu0 %v2136
    %v2138 = vpop.xlane.xlu0 %2137
    %v2139 = vsel %vm388, %v2135, 0.0
    %2140 = vadd.xlane.f32.xlu0 %v2139
    %v2141 = vpop.xlane.xlu0 %2140
    %v2142 = vmul.f32 %v2138, %v1932
    %v2143 = vmul.f32 %v2141, %v1932
    %v2144 = vsub.f32 %v2134, %v2142
    %v2145 = vsub.f32 %v2135, %v2143
    %v2146 = vmul.f32 %v2144, %v2144
    %v2147 = vmul.f32 %v2145, %v2145
    %v2148 = vsel %vm388, %v2146, 0.0
    %2149 = vadd.xlane.f32.xlu0 %v2148
    %v2150 = vpop.xlane.xlu0 %2149
    %v2151 = vsel %vm388, %v2147, 0.0
    %2152 = vadd.xlane.f32.xlu0 %v2151
    %v2153 = vpop.xlane.xlu0 %2152
    %v2154 = vmul.f32 %v2150, %v1932
    %v2155 = vmul.f32 %v2153, %v1932
    %v2156 = vadd.f32 %v2154, 1e-05
    %v2157 = vadd.f32 %v2155, 1e-05
    %v2158 = vrsqrt.pop %v2156
    %v2159 = vrsqrt.pop %v2157
    %v2160 = vmul.f32 %v2144, %v2158
    %v2161 = vmul.f32 %v2145, %v2159
    %v2163 = vlaneseq
    %v2164 = vshrl.u32 %v2163, 7
    %v2165 = vsub.s32 0, %v2164
    %v2166 = vrot.slane %v380, %v2165
    %v2168 = vmul.f32 %v2160, %v2166
    %v2169 = vmul.f32 %v2161, %v2166
    %v2171 = vlaneseq
    %v2172 = vshrl.u32 %v2171, 7
    %v2173 = vsub.s32 0, %v2172
    %v2174 = vrot.slane %v381, %v2173
    %v2176 = vadd.f32 %v2168, %v2174
    %v2177 = vadd.f32 %v2169, %v2174
    %v2179 = vsel %vm388, %v2176, 0
    %v2182 = vsel %vm388, %v2177, 0
    %2184 = vmatprep.subr.mxu0 0.0
    %2185 = vmatpush1.msra.mxu0 0.0
    %2186 = vmatprep.subr.mxu0 0.0
    %2187 = vmatpush1.msra.mxu0 0.0
    %2188 = vmatprep.subr.mxu0 0.0
    %2189 = vmatpush1.msra.mxu0 0.0
    %2190 = vmatprep.subr.mxu0 0.0
    %2191 = vmatpush1.msra.mxu0 0.0
    %2192 = vmatprep.subr.mxu0 0.0
    %2193 = vmatpush1.msra.mxu0 0.0
    %2194 = vmatprep.subr.mxu0 0.0
    %2195 = vmatpush1.msra.mxu0 0.0
    %2196 = vmatprep.subr.mxu0 0.0
    %2197 = vmatpush1.msra.mxu0 0.0
    %2198 = vmatprep.subr.mxu0 0.0
    %2199 = vmatpush1.msra.mxu0 0.0
    %2200 = vmatprep.subr.mxu0 0.0
    %2201 = vmatpush1.msra.mxu0 0.0
    %2202 = vmatprep.subr.mxu0 0.0
    %2203 = vmatpush1.msra.mxu0 0.0
    %2204 = vmatprep.subr.mxu0 0.0
    %2205 = vmatpush1.msra.mxu0 0.0
    %2206 = vmatprep.subr.mxu0 0.0
    %2207 = vmatpush1.msra.mxu0 0.0
    %2208 = vmatprep.subr.mxu0 0.0
    %2209 = vmatpush1.msra.mxu0 %v359
    %2210 = vmatprep.subr.mxu0 0.0
    %2211 = vmatpush1.msra.mxu0 %v358
    %2212 = vmatprep.subr.mxu0 0.0
    %2213 = vmatpush1.msra.mxu0 %v357
    %2214 = vmatprep.subr.mxu0 0.0
    %2215 = vmatpush1.msra.mxu0 %v356
    %2216 = vmatprep.subr.mxu0 0.0
    %2217 = vmatpush2.msra.mxu0 0.0
    %2218 = vmatprep.subr.mxu0 0.0
    %2219 = vmatpush2.msra.mxu0 0.0
    %2220 = vmatprep.subr.mxu0 0.0
    %2221 = vmatpush2.msra.mxu0 0.0
    %2222 = vmatprep.subr.mxu0 0.0
    %2223 = vmatpush2.msra.mxu0 0.0
    %2224 = vmatprep.subr.mxu0 0.0
    %2225 = vmatpush2.msra.mxu0 0.0
    %2226 = vmatprep.subr.mxu0 0.0
    %2227 = vmatpush2.msra.mxu0 0.0
    %2228 = vmatprep.subr.mxu0 0.0
    %2229 = vmatpush2.msra.mxu0 0.0
    %2230 = vmatprep.subr.mxu0 0.0
    %2231 = vmatpush2.msra.mxu0 0.0
    %2232 = vmatprep.subr.mxu0 0.0
    %2233 = vmatpush2.msra.mxu0 0.0
    %2234 = vmatprep.subr.mxu0 0.0
    %2235 = vmatpush2.msra.mxu0 0.0
    %2236 = vmatprep.subr.mxu0 0.0
    %2237 = vmatpush2.msra.mxu0 0.0
    %2238 = vmatprep.subr.mxu0 0.0
    %2239 = vmatpush2.msra.mxu0 0.0
    %2240 = vmatprep.subr.mxu0 0.0
    %2241 = vmatpush2.msra.mxu0 0.0
    %2242 = vmatprep.subr.mxu0 0.0
    %2243 = vmatpush2.msra.mxu0 0.0
    %2244 = vmatprep.subr.mxu0 0.0
    %2245 = vmatpush2.msra.mxu0 0.0
    %2246 = vmatprep.subr.mxu0 0.0
    %2247 = vmatpush2.msra.mxu0 0.0
    %2248 = vmatprep.mubr.f32.mxu0 0.0
    %2249 = vmatmul.mubr.f32.gmra.mxu0 %v2179
    %v2250 = vpop.f32.mrf.mxu0
    %v2251 = vadd.f32 %v386, %v2250
    %v2252 = vpop.f32.mrf.mxu0
    %2253 = vmatprep.mubr.f32.mxu0 0.0
    %2254 = vmatmul.mubr.f32.gmra.mxu0 %v2182
    %v2255 = vpop.f32.mrf.mxu0
    %v2256 = vadd.f32 %v386, %v2255
    %v2257 = vpop.f32.mrf.mxu0
    %2258 = vdwg.mxu0
    %2261 = vrot.lane.b32.xlu0 %v2251, 120
    %v2262 = vpop.permute.xlu0 %2261
    %2263 = vrot.lane.b32.xlu0 %v2256, 120
    %v2264 = vpop.permute.xlu0 %2263
    %2265 = vrot.lane.b32.xlu0 %v2251, 112
    %v2266 = vpop.permute.xlu0 %2265
    %2267 = vrot.lane.b32.xlu0 %v2256, 112
    %v2268 = vpop.permute.xlu0 %2267
    %2269 = vrot.lane.b32.xlu0 %v2251, 104
    %v2270 = vpop.permute.xlu0 %2269
    %2271 = vrot.lane.b32.xlu0 %v2256, 104
    %v2272 = vpop.permute.xlu0 %2271
    %2273 = vrot.lane.b32.xlu0 %v2251, 96
    %v2274 = vpop.permute.xlu0 %2273
    %v2275 = vsel %vm486, %v2251, 0
    %v2277 = vsel %vm486, %v2274, 0
    %2279 = vmatprep.subr.mxu0 0.0
    %2280 = vmatpush1.xpose.msra.mxu0 0.0
    %2281 = vmatprep.subr.mxu0 0.0
    %2282 = vmatpush1.xpose.msra.mxu0 0.0
    %2283 = vmatprep.subr.mxu0 0.0
    %2284 = vmatpush1.xpose.msra.mxu0 0.0
    %2285 = vmatprep.subr.mxu0 0.0
    %2286 = vmatpush1.xpose.msra.mxu0 0.0
    %2287 = vmatprep.subr.mxu0 0.0
    %2288 = vmatpush1.xpose.msra.mxu0 0.0
    %2289 = vmatprep.subr.mxu0 0.0
    %2290 = vmatpush1.xpose.msra.mxu0 0.0
    %2291 = vmatprep.subr.mxu0 0.0
    %2292 = vmatpush1.xpose.msra.mxu0 0.0
    %2293 = vmatprep.subr.mxu0 0.0
    %2294 = vmatpush1.xpose.msra.mxu0 0.0
    %2295 = vmatprep.subr.mxu0 0.0
    %2296 = vmatpush1.xpose.msra.mxu0 0.0
    %2297 = vmatprep.subr.mxu0 0.0
    %2298 = vmatpush1.xpose.msra.mxu0 0.0
    %2299 = vmatprep.subr.mxu0 0.0
    %2300 = vmatpush1.xpose.msra.mxu0 0.0
    %2301 = vmatprep.subr.mxu0 0.0
    %2302 = vmatpush1.xpose.msra.mxu0 0.0
    %2303 = vmatprep.subr.mxu0 0.0
    %2304 = vmatpush1.xpose.msra.mxu0 0.0
    %2305 = vmatprep.subr.mxu0 0.0
    %2306 = vmatpush1.xpose.msra.mxu0 0.0
    %2307 = vmatprep.subr.mxu0 0.0
    %2308 = vmatpush1.xpose.msra.mxu0 0.0
    %2309 = vmatprep.subr.mxu0 0.0
    %2310 = vmatpush1.xpose.msra.mxu0 %v2277
    %2311 = vmatprep.subr.mxu0 0.0
    %2312 = vmatpush2.xpose.msra.mxu0 0.0
    %2313 = vmatprep.subr.mxu0 0.0
    %2314 = vmatpush2.xpose.msra.mxu0 0.0
    %2315 = vmatprep.subr.mxu0 0.0
    %2316 = vmatpush2.xpose.msra.mxu0 0.0
    %2317 = vmatprep.subr.mxu0 0.0
    %2318 = vmatpush2.xpose.msra.mxu0 0.0
    %2319 = vmatprep.subr.mxu0 0.0
    %2320 = vmatpush2.xpose.msra.mxu0 0.0
    %2321 = vmatprep.subr.mxu0 0.0
    %2322 = vmatpush2.xpose.msra.mxu0 0.0
    %2323 = vmatprep.subr.mxu0 0.0
    %2324 = vmatpush2.xpose.msra.mxu0 0.0
    %2325 = vmatprep.subr.mxu0 0.0
    %2326 = vmatpush2.xpose.msra.mxu0 0.0
    %2327 = vmatprep.subr.mxu0 0.0
    %2328 = vmatpush2.xpose.msra.mxu0 0.0
    %2329 = vmatprep.subr.mxu0 0.0
    %2330 = vmatpush2.xpose.msra.mxu0 0.0
    %2331 = vmatprep.subr.mxu0 0.0
    %2332 = vmatpush2.xpose.msra.mxu0 0.0
    %2333 = vmatprep.subr.mxu0 0.0
    %2334 = vmatpush2.xpose.msra.mxu0 0.0
    %2335 = vmatprep.subr.mxu0 0.0
    %2336 = vmatpush2.xpose.msra.mxu0 0.0
    %2337 = vmatprep.subr.mxu0 0.0
    %2338 = vmatpush2.xpose.msra.mxu0 0.0
    %2339 = vmatprep.subr.mxu0 0.0
    %2340 = vmatpush2.xpose.msra.mxu0 0.0
    %2341 = vmatprep.subr.mxu0 0.0
    %2342 = vmatpush2.xpose.msra.mxu0 0.0
    %2343 = vmatprep.mubr.f32.mxu0 0.0
    %2344 = vmatmul.mubr.f32.gmra.mxu0 %v2275
    %v2345 = vpop.f32.mrf.mxu0
    %v2346 = vadd.f32 0.0, %v2345
    %v2347 = vpop.f32.mrf.mxu0
    %2348 = vdwg.mxu0
    %2349 = vrot.lane.b32.xlu0 %v2262, 96
    %v2350 = vpop.permute.xlu0 %2349
    %v2351 = vsel %vm486, %v2262, 0
    %v2353 = vsel %vm486, %v2350, 0
    %2355 = vmatprep.subr.mxu0 0.0
    %2356 = vmatpush1.xpose.msra.mxu0 0.0
    %2357 = vmatprep.subr.mxu0 0.0
    %2358 = vmatpush1.xpose.msra.mxu0 0.0
    %2359 = vmatprep.subr.mxu0 0.0
    %2360 = vmatpush1.xpose.msra.mxu0 0.0
    %2361 = vmatprep.subr.mxu0 0.0
    %2362 = vmatpush1.xpose.msra.mxu0 0.0
    %2363 = vmatprep.subr.mxu0 0.0
    %2364 = vmatpush1.xpose.msra.mxu0 0.0
    %2365 = vmatprep.subr.mxu0 0.0
    %2366 = vmatpush1.xpose.msra.mxu0 0.0
    %2367 = vmatprep.subr.mxu0 0.0
    %2368 = vmatpush1.xpose.msra.mxu0 0.0
    %2369 = vmatprep.subr.mxu0 0.0
    %2370 = vmatpush1.xpose.msra.mxu0 0.0
    %2371 = vmatprep.subr.mxu0 0.0
    %2372 = vmatpush1.xpose.msra.mxu0 0.0
    %2373 = vmatprep.subr.mxu0 0.0
    %2374 = vmatpush1.xpose.msra.mxu0 0.0
    %2375 = vmatprep.subr.mxu0 0.0
    %2376 = vmatpush1.xpose.msra.mxu0 0.0
    %2377 = vmatprep.subr.mxu0 0.0
    %2378 = vmatpush1.xpose.msra.mxu0 0.0
    %2379 = vmatprep.subr.mxu0 0.0
    %2380 = vmatpush1.xpose.msra.mxu0 0.0
    %2381 = vmatprep.subr.mxu0 0.0
    %2382 = vmatpush1.xpose.msra.mxu0 0.0
    %2383 = vmatprep.subr.mxu0 0.0
    %2384 = vmatpush1.xpose.msra.mxu0 0.0
    %2385 = vmatprep.subr.mxu0 0.0
    %2386 = vmatpush1.xpose.msra.mxu0 %v2353
    %2387 = vmatprep.subr.mxu0 0.0
    %2388 = vmatpush2.xpose.msra.mxu0 0.0
    %2389 = vmatprep.subr.mxu0 0.0
    %2390 = vmatpush2.xpose.msra.mxu0 0.0
    %2391 = vmatprep.subr.mxu0 0.0
    %2392 = vmatpush2.xpose.msra.mxu0 0.0
    %2393 = vmatprep.subr.mxu0 0.0
    %2394 = vmatpush2.xpose.msra.mxu0 0.0
    %2395 = vmatprep.subr.mxu0 0.0
    %2396 = vmatpush2.xpose.msra.mxu0 0.0
    %2397 = vmatprep.subr.mxu0 0.0
    %2398 = vmatpush2.xpose.msra.mxu0 0.0
    %2399 = vmatprep.subr.mxu0 0.0
    %2400 = vmatpush2.xpose.msra.mxu0 0.0
    %2401 = vmatprep.subr.mxu0 0.0
    %2402 = vmatpush2.xpose.msra.mxu0 0.0
    %2403 = vmatprep.subr.mxu0 0.0
    %2404 = vmatpush2.xpose.msra.mxu0 0.0
    %2405 = vmatprep.subr.mxu0 0.0
    %2406 = vmatpush2.xpose.msra.mxu0 0.0
    %2407 = vmatprep.subr.mxu0 0.0
    %2408 = vmatpush2.xpose.msra.mxu0 0.0
    %2409 = vmatprep.subr.mxu0 0.0
    %2410 = vmatpush2.xpose.msra.mxu0 0.0
    %2411 = vmatprep.subr.mxu0 0.0
    %2412 = vmatpush2.xpose.msra.mxu0 0.0
    %2413 = vmatprep.subr.mxu0 0.0
    %2414 = vmatpush2.xpose.msra.mxu0 0.0
    %2415 = vmatprep.subr.mxu0 0.0
    %2416 = vmatpush2.xpose.msra.mxu0 0.0
    %2417 = vmatprep.subr.mxu0 0.0
    %2418 = vmatpush2.xpose.msra.mxu0 0.0
    %2419 = vmatprep.mubr.f32.mxu0 0.0
    %2420 = vmatmul.mubr.f32.gmra.mxu0 %v2351
    %v2421 = vpop.f32.mrf.mxu0
    %v2422 = vadd.f32 0.0, %v2421
    %v2423 = vpop.f32.mrf.mxu0
    %2424 = vdwg.mxu0
    %2425 = vrot.lane.b32.xlu0 %v2266, 96
    %v2426 = vpop.permute.xlu0 %2425
    %v2427 = vsel %vm486, %v2266, 0
    %v2429 = vsel %vm486, %v2426, 0
    %2431 = vmatprep.subr.mxu0 0.0
    %2432 = vmatpush1.xpose.msra.mxu0 0.0
    %2433 = vmatprep.subr.mxu0 0.0
    %2434 = vmatpush1.xpose.msra.mxu0 0.0
    %2435 = vmatprep.subr.mxu0 0.0
    %2436 = vmatpush1.xpose.msra.mxu0 0.0
    %2437 = vmatprep.subr.mxu0 0.0
    %2438 = vmatpush1.xpose.msra.mxu0 0.0
    %2439 = vmatprep.subr.mxu0 0.0
    %2440 = vmatpush1.xpose.msra.mxu0 0.0
    %2441 = vmatprep.subr.mxu0 0.0
    %2442 = vmatpush1.xpose.msra.mxu0 0.0
    %2443 = vmatprep.subr.mxu0 0.0
    %2444 = vmatpush1.xpose.msra.mxu0 0.0
    %2445 = vmatprep.subr.mxu0 0.0
    %2446 = vmatpush1.xpose.msra.mxu0 0.0
    %2447 = vmatprep.subr.mxu0 0.0
    %2448 = vmatpush1.xpose.msra.mxu0 0.0
    %2449 = vmatprep.subr.mxu0 0.0
    %2450 = vmatpush1.xpose.msra.mxu0 0.0
    %2451 = vmatprep.subr.mxu0 0.0
    %2452 = vmatpush1.xpose.msra.mxu0 0.0
    %2453 = vmatprep.subr.mxu0 0.0
    %2454 = vmatpush1.xpose.msra.mxu0 0.0
    %2455 = vmatprep.subr.mxu0 0.0
    %2456 = vmatpush1.xpose.msra.mxu0 0.0
    %2457 = vmatprep.subr.mxu0 0.0
    %2458 = vmatpush1.xpose.msra.mxu0 0.0
    %2459 = vmatprep.subr.mxu0 0.0
    %2460 = vmatpush1.xpose.msra.mxu0 0.0
    %2461 = vmatprep.subr.mxu0 0.0
    %2462 = vmatpush1.xpose.msra.mxu0 %v2429
    %2463 = vmatprep.subr.mxu0 0.0
    %2464 = vmatpush2.xpose.msra.mxu0 0.0
    %2465 = vmatprep.subr.mxu0 0.0
    %2466 = vmatpush2.xpose.msra.mxu0 0.0
    %2467 = vmatprep.subr.mxu0 0.0
    %2468 = vmatpush2.xpose.msra.mxu0 0.0
    %2469 = vmatprep.subr.mxu0 0.0
    %2470 = vmatpush2.xpose.msra.mxu0 0.0
    %2471 = vmatprep.subr.mxu0 0.0
    %2472 = vmatpush2.xpose.msra.mxu0 0.0
    %2473 = vmatprep.subr.mxu0 0.0
    %2474 = vmatpush2.xpose.msra.mxu0 0.0
    %2475 = vmatprep.subr.mxu0 0.0
    %2476 = vmatpush2.xpose.msra.mxu0 0.0
    %2477 = vmatprep.subr.mxu0 0.0
    %2478 = vmatpush2.xpose.msra.mxu0 0.0
    %2479 = vmatprep.subr.mxu0 0.0
    %2480 = vmatpush2.xpose.msra.mxu0 0.0
    %2481 = vmatprep.subr.mxu0 0.0
    %2482 = vmatpush2.xpose.msra.mxu0 0.0
    %2483 = vmatprep.subr.mxu0 0.0
    %2484 = vmatpush2.xpose.msra.mxu0 0.0
    %2485 = vmatprep.subr.mxu0 0.0
    %2486 = vmatpush2.xpose.msra.mxu0 0.0
    %2487 = vmatprep.subr.mxu0 0.0
    %2488 = vmatpush2.xpose.msra.mxu0 0.0
    %2489 = vmatprep.subr.mxu0 0.0
    %2490 = vmatpush2.xpose.msra.mxu0 0.0
    %2491 = vmatprep.subr.mxu0 0.0
    %2492 = vmatpush2.xpose.msra.mxu0 0.0
    %2493 = vmatprep.subr.mxu0 0.0
    %2494 = vmatpush2.xpose.msra.mxu0 0.0
    %2495 = vmatprep.mubr.f32.mxu0 0.0
    %2496 = vmatmul.mubr.f32.gmra.mxu0 %v2427
    %v2497 = vpop.f32.mrf.mxu0
    %v2498 = vadd.f32 0.0, %v2497
    %v2499 = vpop.f32.mrf.mxu0
    %2500 = vdwg.mxu0
    %2501 = vrot.lane.b32.xlu0 %v2270, 96
    %v2502 = vpop.permute.xlu0 %2501
    %v2503 = vsel %vm486, %v2270, 0
    %v2505 = vsel %vm486, %v2502, 0
    %2507 = vmatprep.subr.mxu0 0.0
    %2508 = vmatpush1.xpose.msra.mxu0 0.0
    %2509 = vmatprep.subr.mxu0 0.0
    %2510 = vmatpush1.xpose.msra.mxu0 0.0
    %2511 = vmatprep.subr.mxu0 0.0
    %2512 = vmatpush1.xpose.msra.mxu0 0.0
    %2513 = vmatprep.subr.mxu0 0.0
    %2514 = vmatpush1.xpose.msra.mxu0 0.0
    %2515 = vmatprep.subr.mxu0 0.0
    %2516 = vmatpush1.xpose.msra.mxu0 0.0
    %2517 = vmatprep.subr.mxu0 0.0
    %2518 = vmatpush1.xpose.msra.mxu0 0.0
    %2519 = vmatprep.subr.mxu0 0.0
    %2520 = vmatpush1.xpose.msra.mxu0 0.0
    %2521 = vmatprep.subr.mxu0 0.0
    %2522 = vmatpush1.xpose.msra.mxu0 0.0
    %2523 = vmatprep.subr.mxu0 0.0
    %2524 = vmatpush1.xpose.msra.mxu0 0.0
    %2525 = vmatprep.subr.mxu0 0.0
    %2526 = vmatpush1.xpose.msra.mxu0 0.0
    %2527 = vmatprep.subr.mxu0 0.0
    %2528 = vmatpush1.xpose.msra.mxu0 0.0
    %2529 = vmatprep.subr.mxu0 0.0
    %2530 = vmatpush1.xpose.msra.mxu0 0.0
    %2531 = vmatprep.subr.mxu0 0.0
    %2532 = vmatpush1.xpose.msra.mxu0 0.0
    %2533 = vmatprep.subr.mxu0 0.0
    %2534 = vmatpush1.xpose.msra.mxu0 0.0
    %2535 = vmatprep.subr.mxu0 0.0
    %2536 = vmatpush1.xpose.msra.mxu0 0.0
    %2537 = vmatprep.subr.mxu0 0.0
    %2538 = vmatpush1.xpose.msra.mxu0 %v2505
    %2539 = vmatprep.subr.mxu0 0.0
    %2540 = vmatpush2.xpose.msra.mxu0 0.0
    %2541 = vmatprep.subr.mxu0 0.0
    %2542 = vmatpush2.xpose.msra.mxu0 0.0
    %2543 = vmatprep.subr.mxu0 0.0
    %2544 = vmatpush2.xpose.msra.mxu0 0.0
    %2545 = vmatprep.subr.mxu0 0.0
    %2546 = vmatpush2.xpose.msra.mxu0 0.0
    %2547 = vmatprep.subr.mxu0 0.0
    %2548 = vmatpush2.xpose.msra.mxu0 0.0
    %2549 = vmatprep.subr.mxu0 0.0
    %2550 = vmatpush2.xpose.msra.mxu0 0.0
    %2551 = vmatprep.subr.mxu0 0.0
    %2552 = vmatpush2.xpose.msra.mxu0 0.0
    %2553 = vmatprep.subr.mxu0 0.0
    %2554 = vmatpush2.xpose.msra.mxu0 0.0
    %2555 = vmatprep.subr.mxu0 0.0
    %2556 = vmatpush2.xpose.msra.mxu0 0.0
    %2557 = vmatprep.subr.mxu0 0.0
    %2558 = vmatpush2.xpose.msra.mxu0 0.0
    %2559 = vmatprep.subr.mxu0 0.0
    %2560 = vmatpush2.xpose.msra.mxu0 0.0
    %2561 = vmatprep.subr.mxu0 0.0
    %2562 = vmatpush2.xpose.msra.mxu0 0.0
    %2563 = vmatprep.subr.mxu0 0.0
    %2564 = vmatpush2.xpose.msra.mxu0 0.0
    %2565 = vmatprep.subr.mxu0 0.0
    %2566 = vmatpush2.xpose.msra.mxu0 0.0
    %2567 = vmatprep.subr.mxu0 0.0
    %2568 = vmatpush2.xpose.msra.mxu0 0.0
    %2569 = vmatprep.subr.mxu0 0.0
    %2570 = vmatpush2.xpose.msra.mxu0 0.0
    %2571 = vmatprep.mubr.f32.mxu0 0.0
    %2572 = vmatmul.mubr.f32.gmra.mxu0 %v2503
    %v2573 = vpop.f32.mrf.mxu0
    %v2574 = vadd.f32 0.0, %v2573
    %v2575 = vpop.f32.mrf.mxu0
    %2576 = vdwg.mxu0
    %2577 = vrot.lane.b32.xlu0 %v2256, 96
    %v2578 = vpop.permute.xlu0 %2577
    %v2579 = vsel %vm486, %v2256, 0
    %v2581 = vsel %vm486, %v2578, 0
    %2583 = vmatprep.subr.mxu0 0.0
    %2584 = vmatpush1.xpose.msra.mxu0 0.0
    %2585 = vmatprep.subr.mxu0 0.0
    %2586 = vmatpush1.xpose.msra.mxu0 0.0
    %2587 = vmatprep.subr.mxu0 0.0
    %2588 = vmatpush1.xpose.msra.mxu0 0.0
    %2589 = vmatprep.subr.mxu0 0.0
    %2590 = vmatpush1.xpose.msra.mxu0 0.0
    %2591 = vmatprep.subr.mxu0 0.0
    %2592 = vmatpush1.xpose.msra.mxu0 0.0
    %2593 = vmatprep.subr.mxu0 0.0
    %2594 = vmatpush1.xpose.msra.mxu0 0.0
    %2595 = vmatprep.subr.mxu0 0.0
    %2596 = vmatpush1.xpose.msra.mxu0 0.0
    %2597 = vmatprep.subr.mxu0 0.0
    %2598 = vmatpush1.xpose.msra.mxu0 0.0
    %2599 = vmatprep.subr.mxu0 0.0
    %2600 = vmatpush1.xpose.msra.mxu0 0.0
    %2601 = vmatprep.subr.mxu0 0.0
    %2602 = vmatpush1.xpose.msra.mxu0 0.0
    %2603 = vmatprep.subr.mxu0 0.0
    %2604 = vmatpush1.xpose.msra.mxu0 0.0
    %2605 = vmatprep.subr.mxu0 0.0
    %2606 = vmatpush1.xpose.msra.mxu0 0.0
    %2607 = vmatprep.subr.mxu0 0.0
    %2608 = vmatpush1.xpose.msra.mxu0 0.0
    %2609 = vmatprep.subr.mxu0 0.0
    %2610 = vmatpush1.xpose.msra.mxu0 0.0
    %2611 = vmatprep.subr.mxu0 0.0
    %2612 = vmatpush1.xpose.msra.mxu0 0.0
    %2613 = vmatprep.subr.mxu0 0.0
    %2614 = vmatpush1.xpose.msra.mxu0 %v2581
    %2615 = vmatprep.subr.mxu0 0.0
    %2616 = vmatpush2.xpose.msra.mxu0 0.0
    %2617 = vmatprep.subr.mxu0 0.0
    %2618 = vmatpush2.xpose.msra.mxu0 0.0
    %2619 = vmatprep.subr.mxu0 0.0
    %2620 = vmatpush2.xpose.msra.mxu0 0.0
    %2621 = vmatprep.subr.mxu0 0.0
    %2622 = vmatpush2.xpose.msra.mxu0 0.0
    %2623 = vmatprep.subr.mxu0 0.0
    %2624 = vmatpush2.xpose.msra.mxu0 0.0
    %2625 = vmatprep.subr.mxu0 0.0
    %2626 = vmatpush2.xpose.msra.mxu0 0.0
    %2627 = vmatprep.subr.mxu0 0.0
    %2628 = vmatpush2.xpose.msra.mxu0 0.0
    %2629 = vmatprep.subr.mxu0 0.0
    %2630 = vmatpush2.xpose.msra.mxu0 0.0
    %2631 = vmatprep.subr.mxu0 0.0
    %2632 = vmatpush2.xpose.msra.mxu0 0.0
    %2633 = vmatprep.subr.mxu0 0.0
    %2634 = vmatpush2.xpose.msra.mxu0 0.0
    %2635 = vmatprep.subr.mxu0 0.0
    %2636 = vmatpush2.xpose.msra.mxu0 0.0
    %2637 = vmatprep.subr.mxu0 0.0
    %2638 = vmatpush2.xpose.msra.mxu0 0.0
    %2639 = vmatprep.subr.mxu0 0.0
    %2640 = vmatpush2.xpose.msra.mxu0 0.0
    %2641 = vmatprep.subr.mxu0 0.0
    %2642 = vmatpush2.xpose.msra.mxu0 0.0
    %2643 = vmatprep.subr.mxu0 0.0
    %2644 = vmatpush2.xpose.msra.mxu0 0.0
    %2645 = vmatprep.subr.mxu0 0.0
    %2646 = vmatpush2.xpose.msra.mxu0 0.0
    %2647 = vmatprep.mubr.f32.mxu0 0.0
    %2648 = vmatmul.mubr.f32.gmra.mxu0 %v2579
    %v2649 = vpop.f32.mrf.mxu0
    %v2650 = vadd.f32 0.0, %v2649
    %v2651 = vpop.f32.mrf.mxu0
    %2652 = vdwg.mxu0
    %2653 = vrot.lane.b32.xlu0 %v2264, 96
    %v2654 = vpop.permute.xlu0 %2653
    %v2655 = vsel %vm486, %v2264, 0
    %v2657 = vsel %vm486, %v2654, 0
    %2659 = vmatprep.subr.mxu0 0.0
    %2660 = vmatpush1.xpose.msra.mxu0 0.0
    %2661 = vmatprep.subr.mxu0 0.0
    %2662 = vmatpush1.xpose.msra.mxu0 0.0
    %2663 = vmatprep.subr.mxu0 0.0
    %2664 = vmatpush1.xpose.msra.mxu0 0.0
    %2665 = vmatprep.subr.mxu0 0.0
    %2666 = vmatpush1.xpose.msra.mxu0 0.0
    %2667 = vmatprep.subr.mxu0 0.0
    %2668 = vmatpush1.xpose.msra.mxu0 0.0
    %2669 = vmatprep.subr.mxu0 0.0
    %2670 = vmatpush1.xpose.msra.mxu0 0.0
    %2671 = vmatprep.subr.mxu0 0.0
    %2672 = vmatpush1.xpose.msra.mxu0 0.0
    %2673 = vmatprep.subr.mxu0 0.0
    %2674 = vmatpush1.xpose.msra.mxu0 0.0
    %2675 = vmatprep.subr.mxu0 0.0
    %2676 = vmatpush1.xpose.msra.mxu0 0.0
    %2677 = vmatprep.subr.mxu0 0.0
    %2678 = vmatpush1.xpose.msra.mxu0 0.0
    %2679 = vmatprep.subr.mxu0 0.0
    %2680 = vmatpush1.xpose.msra.mxu0 0.0
    %2681 = vmatprep.subr.mxu0 0.0
    %2682 = vmatpush1.xpose.msra.mxu0 0.0
    %2683 = vmatprep.subr.mxu0 0.0
    %2684 = vmatpush1.xpose.msra.mxu0 0.0
    %2685 = vmatprep.subr.mxu0 0.0
    %2686 = vmatpush1.xpose.msra.mxu0 0.0
    %2687 = vmatprep.subr.mxu0 0.0
    %2688 = vmatpush1.xpose.msra.mxu0 0.0
    %2689 = vmatprep.subr.mxu0 0.0
    %2690 = vmatpush1.xpose.msra.mxu0 %v2657
    %2691 = vmatprep.subr.mxu0 0.0
    %2692 = vmatpush2.xpose.msra.mxu0 0.0
    %2693 = vmatprep.subr.mxu0 0.0
    %2694 = vmatpush2.xpose.msra.mxu0 0.0
    %2695 = vmatprep.subr.mxu0 0.0
    %2696 = vmatpush2.xpose.msra.mxu0 0.0
    %2697 = vmatprep.subr.mxu0 0.0
    %2698 = vmatpush2.xpose.msra.mxu0 0.0
    %2699 = vmatprep.subr.mxu0 0.0
    %2700 = vmatpush2.xpose.msra.mxu0 0.0
    %2701 = vmatprep.subr.mxu0 0.0
    %2702 = vmatpush2.xpose.msra.mxu0 0.0
    %2703 = vmatprep.subr.mxu0 0.0
    %2704 = vmatpush2.xpose.msra.mxu0 0.0
    %2705 = vmatprep.subr.mxu0 0.0
    %2706 = vmatpush2.xpose.msra.mxu0 0.0
    %2707 = vmatprep.subr.mxu0 0.0
    %2708 = vmatpush2.xpose.msra.mxu0 0.0
    %2709 = vmatprep.subr.mxu0 0.0
    %2710 = vmatpush2.xpose.msra.mxu0 0.0
    %2711 = vmatprep.subr.mxu0 0.0
    %2712 = vmatpush2.xpose.msra.mxu0 0.0
    %2713 = vmatprep.subr.mxu0 0.0
    %2714 = vmatpush2.xpose.msra.mxu0 0.0
    %2715 = vmatprep.subr.mxu0 0.0
    %2716 = vmatpush2.xpose.msra.mxu0 0.0
    %2717 = vmatprep.subr.mxu0 0.0
    %2718 = vmatpush2.xpose.msra.mxu0 0.0
    %2719 = vmatprep.subr.mxu0 0.0
    %2720 = vmatpush2.xpose.msra.mxu0 0.0
    %2721 = vmatprep.subr.mxu0 0.0
    %2722 = vmatpush2.xpose.msra.mxu0 0.0
    %2723 = vmatprep.mubr.f32.mxu0 0.0
    %2724 = vmatmul.mubr.f32.gmra.mxu0 %v2655
    %v2725 = vpop.f32.mrf.mxu0
    %v2726 = vadd.f32 0.0, %v2725
    %v2727 = vpop.f32.mrf.mxu0
    %2728 = vdwg.mxu0
    %2729 = vrot.lane.b32.xlu0 %v2268, 96
    %v2730 = vpop.permute.xlu0 %2729
    %v2731 = vsel %vm486, %v2268, 0
    %v2733 = vsel %vm486, %v2730, 0
    %2735 = vmatprep.subr.mxu0 0.0
    %2736 = vmatpush1.xpose.msra.mxu0 0.0
    %2737 = vmatprep.subr.mxu0 0.0
    %2738 = vmatpush1.xpose.msra.mxu0 0.0
    %2739 = vmatprep.subr.mxu0 0.0
    %2740 = vmatpush1.xpose.msra.mxu0 0.0
    %2741 = vmatprep.subr.mxu0 0.0
    %2742 = vmatpush1.xpose.msra.mxu0 0.0
    %2743 = vmatprep.subr.mxu0 0.0
    %2744 = vmatpush1.xpose.msra.mxu0 0.0
    %2745 = vmatprep.subr.mxu0 0.0
    %2746 = vmatpush1.xpose.msra.mxu0 0.0
    %2747 = vmatprep.subr.mxu0 0.0
    %2748 = vmatpush1.xpose.msra.mxu0 0.0
    %2749 = vmatprep.subr.mxu0 0.0
    %2750 = vmatpush1.xpose.msra.mxu0 0.0
    %2751 = vmatprep.subr.mxu0 0.0
    %2752 = vmatpush1.xpose.msra.mxu0 0.0
    %2753 = vmatprep.subr.mxu0 0.0
    %2754 = vmatpush1.xpose.msra.mxu0 0.0
    %2755 = vmatprep.subr.mxu0 0.0
    %2756 = vmatpush1.xpose.msra.mxu0 0.0
    %2757 = vmatprep.subr.mxu0 0.0
    %2758 = vmatpush1.xpose.msra.mxu0 0.0
    %2759 = vmatprep.subr.mxu0 0.0
    %2760 = vmatpush1.xpose.msra.mxu0 0.0
    %2761 = vmatprep.subr.mxu0 0.0
    %2762 = vmatpush1.xpose.msra.mxu0 0.0
    %2763 = vmatprep.subr.mxu0 0.0
    %2764 = vmatpush1.xpose.msra.mxu0 0.0
    %2765 = vmatprep.subr.mxu0 0.0
    %2766 = vmatpush1.xpose.msra.mxu0 %v2733
    %2767 = vmatprep.subr.mxu0 0.0
    %2768 = vmatpush2.xpose.msra.mxu0 0.0
    %2769 = vmatprep.subr.mxu0 0.0
    %2770 = vmatpush2.xpose.msra.mxu0 0.0
    %2771 = vmatprep.subr.mxu0 0.0
    %2772 = vmatpush2.xpose.msra.mxu0 0.0
    %2773 = vmatprep.subr.mxu0 0.0
    %2774 = vmatpush2.xpose.msra.mxu0 0.0
    %2775 = vmatprep.subr.mxu0 0.0
    %2776 = vmatpush2.xpose.msra.mxu0 0.0
    %2777 = vmatprep.subr.mxu0 0.0
    %2778 = vmatpush2.xpose.msra.mxu0 0.0
    %2779 = vmatprep.subr.mxu0 0.0
    %2780 = vmatpush2.xpose.msra.mxu0 0.0
    %2781 = vmatprep.subr.mxu0 0.0
    %2782 = vmatpush2.xpose.msra.mxu0 0.0
    %2783 = vmatprep.subr.mxu0 0.0
    %2784 = vmatpush2.xpose.msra.mxu0 0.0
    %2785 = vmatprep.subr.mxu0 0.0
    %2786 = vmatpush2.xpose.msra.mxu0 0.0
    %2787 = vmatprep.subr.mxu0 0.0
    %2788 = vmatpush2.xpose.msra.mxu0 0.0
    %2789 = vmatprep.subr.mxu0 0.0
    %2790 = vmatpush2.xpose.msra.mxu0 0.0
    %2791 = vmatprep.subr.mxu0 0.0
    %2792 = vmatpush2.xpose.msra.mxu0 0.0
    %2793 = vmatprep.subr.mxu0 0.0
    %2794 = vmatpush2.xpose.msra.mxu0 0.0
    %2795 = vmatprep.subr.mxu0 0.0
    %2796 = vmatpush2.xpose.msra.mxu0 0.0
    %2797 = vmatprep.subr.mxu0 0.0
    %2798 = vmatpush2.xpose.msra.mxu0 0.0
    %2799 = vmatprep.mubr.f32.mxu0 0.0
    %2800 = vmatmul.mubr.f32.gmra.mxu0 %v2731
    %v2801 = vpop.f32.mrf.mxu0
    %v2802 = vadd.f32 0.0, %v2801
    %v2803 = vpop.f32.mrf.mxu0
    %2804 = vdwg.mxu0
    %2805 = vrot.lane.b32.xlu0 %v2272, 96
    %v2806 = vpop.permute.xlu0 %2805
    %v2807 = vsel %vm486, %v2272, 0
    %v2809 = vsel %vm486, %v2806, 0
    %2811 = vmatprep.subr.mxu0 0.0
    %2812 = vmatpush1.xpose.msra.mxu0 0.0
    %2813 = vmatprep.subr.mxu0 0.0
    %2814 = vmatpush1.xpose.msra.mxu0 0.0
    %2815 = vmatprep.subr.mxu0 0.0
    %2816 = vmatpush1.xpose.msra.mxu0 0.0
    %2817 = vmatprep.subr.mxu0 0.0
    %2818 = vmatpush1.xpose.msra.mxu0 0.0
    %2819 = vmatprep.subr.mxu0 0.0
    %2820 = vmatpush1.xpose.msra.mxu0 0.0
    %2821 = vmatprep.subr.mxu0 0.0
    %2822 = vmatpush1.xpose.msra.mxu0 0.0
    %2823 = vmatprep.subr.mxu0 0.0
    %2824 = vmatpush1.xpose.msra.mxu0 0.0
    %2825 = vmatprep.subr.mxu0 0.0
    %2826 = vmatpush1.xpose.msra.mxu0 0.0
    %2827 = vmatprep.subr.mxu0 0.0
    %2828 = vmatpush1.xpose.msra.mxu0 0.0
    %2829 = vmatprep.subr.mxu0 0.0
    %2830 = vmatpush1.xpose.msra.mxu0 0.0
    %2831 = vmatprep.subr.mxu0 0.0
    %2832 = vmatpush1.xpose.msra.mxu0 0.0
    %2833 = vmatprep.subr.mxu0 0.0
    %2834 = vmatpush1.xpose.msra.mxu0 0.0
    %2835 = vmatprep.subr.mxu0 0.0
    %2836 = vmatpush1.xpose.msra.mxu0 0.0
    %2837 = vmatprep.subr.mxu0 0.0
    %2838 = vmatpush1.xpose.msra.mxu0 0.0
    %2839 = vmatprep.subr.mxu0 0.0
    %2840 = vmatpush1.xpose.msra.mxu0 0.0
    %2841 = vmatprep.subr.mxu0 0.0
    %2842 = vmatpush1.xpose.msra.mxu0 %v2809
    %2843 = vmatprep.subr.mxu0 0.0
    %2844 = vmatpush2.xpose.msra.mxu0 0.0
    %2845 = vmatprep.subr.mxu0 0.0
    %2846 = vmatpush2.xpose.msra.mxu0 0.0
    %2847 = vmatprep.subr.mxu0 0.0
    %2848 = vmatpush2.xpose.msra.mxu0 0.0
    %2849 = vmatprep.subr.mxu0 0.0
    %2850 = vmatpush2.xpose.msra.mxu0 0.0
    %2851 = vmatprep.subr.mxu0 0.0
    %2852 = vmatpush2.xpose.msra.mxu0 0.0
    %2853 = vmatprep.subr.mxu0 0.0
    %2854 = vmatpush2.xpose.msra.mxu0 0.0
    %2855 = vmatprep.subr.mxu0 0.0
    %2856 = vmatpush2.xpose.msra.mxu0 0.0
    %2857 = vmatprep.subr.mxu0 0.0
    %2858 = vmatpush2.xpose.msra.mxu0 0.0
    %2859 = vmatprep.subr.mxu0 0.0
    %2860 = vmatpush2.xpose.msra.mxu0 0.0
    %2861 = vmatprep.subr.mxu0 0.0
    %2862 = vmatpush2.xpose.msra.mxu0 0.0
    %2863 = vmatprep.subr.mxu0 0.0
    %2864 = vmatpush2.xpose.msra.mxu0 0.0
    %2865 = vmatprep.subr.mxu0 0.0
    %2866 = vmatpush2.xpose.msra.mxu0 0.0
    %2867 = vmatprep.subr.mxu0 0.0
    %2868 = vmatpush2.xpose.msra.mxu0 0.0
    %2869 = vmatprep.subr.mxu0 0.0
    %2870 = vmatpush2.xpose.msra.mxu0 0.0
    %2871 = vmatprep.subr.mxu0 0.0
    %2872 = vmatpush2.xpose.msra.mxu0 0.0
    %2873 = vmatprep.subr.mxu0 0.0
    %2874 = vmatpush2.xpose.msra.mxu0 0.0
    %2875 = vmatprep.mubr.f32.mxu0 0.0
    %2876 = vmatmul.mubr.f32.gmra.mxu0 %v2807
    %v2877 = vpop.f32.mrf.mxu0
    %v2878 = vadd.f32 0.0, %v2877
    %v2879 = vpop.f32.mrf.mxu0
    %2880 = vdwg.mxu0
    %v2881 = vmul.f32 %v2346, 0.35355338
    %v2882 = vmul.f32 %v2422, 0.35355338
    %v2883 = vmul.f32 %v2498, 0.35355338
    %v2884 = vmul.f32 %v2574, 0.35355338
    %v2885 = vmul.f32 %v2650, 0.35355338
    %v2886 = vmul.f32 %v2726, 0.35355338
    %v2887 = vmul.f32 %v2802, 0.35355338
    %v2888 = vmul.f32 %v2878, 0.35355338
    %v2889 = vsel %vm486, %v2881, -inf
    %2890 = vmax.xlane.f32.xlu0 %v2889
    %v2891 = vpop.xlane.xlu0 %2890
    %v2892 = vsel %vm486, %v2882, -inf
    %2893 = vmax.xlane.f32.xlu0 %v2892
    %v2894 = vpop.xlane.xlu0 %2893
    %v2895 = vsel %vm486, %v2883, -inf
    %2896 = vmax.xlane.f32.xlu0 %v2895
    %v2897 = vpop.xlane.xlu0 %2896
    %v2898 = vsel %vm486, %v2884, -inf
    %2899 = vmax.xlane.f32.xlu0 %v2898
    %v2900 = vpop.xlane.xlu0 %2899
    %v2901 = vsel %vm486, %v2885, -inf
    %2902 = vmax.xlane.f32.xlu0 %v2901
    %v2903 = vpop.xlane.xlu0 %2902
    %v2904 = vsel %vm486, %v2886, -inf
    %2905 = vmax.xlane.f32.xlu0 %v2904
    %v2906 = vpop.xlane.xlu0 %2905
    %v2907 = vsel %vm486, %v2887, -inf
    %2908 = vmax.xlane.f32.xlu0 %v2907
    %v2909 = vpop.xlane.xlu0 %2908
    %v2910 = vsel %vm486, %v2888, -inf
    %2911 = vmax.xlane.f32.xlu0 %v2910
    %v2912 = vpop.xlane.xlu0 %2911
    %v2913 = vsub.f32 %v2881, %v2891
    %v2914 = vsub.f32 %v2882, %v2894
    %v2915 = vsub.f32 %v2883, %v2897
    %v2916 = vsub.f32 %v2884, %v2900
    %v2917 = vsub.f32 %v2885, %v2903
    %v2918 = vsub.f32 %v2886, %v2906
    %v2919 = vsub.f32 %v2887, %v2909
    %v2920 = vsub.f32 %v2888, %v2912
    %v2921 = vmul.f32 %v2913, 1.442695
    %v2922 = vpow.pop %v2921
    %v2923 = vmul.f32 %v2914, 1.442695
    %v2924 = vpow.pop %v2923
    %v2925 = vmul.f32 %v2915, 1.442695
    %v2926 = vpow.pop %v2925
    %v2927 = vmul.f32 %v2916, 1.442695
    %v2928 = vpow.pop %v2927
    %v2929 = vmul.f32 %v2917, 1.442695
    %v2930 = vpow.pop %v2929
    %v2931 = vmul.f32 %v2918, 1.442695
    %v2932 = vpow.pop %v2931
    %v2933 = vmul.f32 %v2919, 1.442695
    %v2934 = vpow.pop %v2933
    %v2935 = vmul.f32 %v2920, 1.442695
    %v2936 = vpow.pop %v2935
    %v2937 = vsel %vm486, %v2922, 0.0
    %2938 = vadd.xlane.f32.xlu0 %v2937
    %v2939 = vpop.xlane.xlu0 %2938
    %v2940 = vsel %vm486, %v2924, 0.0
    %2941 = vadd.xlane.f32.xlu0 %v2940
    %v2942 = vpop.xlane.xlu0 %2941
    %v2943 = vsel %vm486, %v2926, 0.0
    %2944 = vadd.xlane.f32.xlu0 %v2943
    %v2945 = vpop.xlane.xlu0 %2944
    %v2946 = vsel %vm486, %v2928, 0.0
    %2947 = vadd.xlane.f32.xlu0 %v2946
    %v2948 = vpop.xlane.xlu0 %2947
    %v2949 = vsel %vm486, %v2930, 0.0
    %2950 = vadd.xlane.f32.xlu0 %v2949
    %v2951 = vpop.xlane.xlu0 %2950
    %v2952 = vsel %vm486, %v2932, 0.0
    %2953 = vadd.xlane.f32.xlu0 %v2952
    %v2954 = vpop.xlane.xlu0 %2953
    %v2955 = vsel %vm486, %v2934, 0.0
    %2956 = vadd.xlane.f32.xlu0 %v2955
    %v2957 = vpop.xlane.xlu0 %2956
    %v2958 = vsel %vm486, %v2936, 0.0
    %2959 = vadd.xlane.f32.xlu0 %v2958
    %v2960 = vpop.xlane.xlu0 %2959
    %v2961 = vrcp.pop %v2939
    %v2962 = vrcp.pop %v2942
    %v2963 = vrcp.pop %v2945
    %v2964 = vrcp.pop %v2948
    %v2965 = vrcp.pop %v2951
    %v2966 = vrcp.pop %v2954
    %v2967 = vrcp.pop %v2957
    %v2968 = vrcp.pop %v2960
    %v2969 = vmul.f32 %v2922, %v2961
    %v2970 = vmul.f32 %v2924, %v2962
    %v2971 = vmul.f32 %v2926, %v2963
    %v2972 = vmul.f32 %v2928, %v2964
    %v2973 = vmul.f32 %v2930, %v2965
    %v2974 = vmul.f32 %v2932, %v2966
    %v2975 = vmul.f32 %v2934, %v2967
    %v2976 = vmul.f32 %v2936, %v2968
    %2977 = vrot.lane.b32.xlu0 %v2251, 64
    %v2978 = vpop.permute.xlu0 %2977
    %v2981 = vsel %vm486, %v2969, 0
    %2983 = vmatprep.subr.mxu0 0.0
    %2984 = vmatpush1.msra.mxu0 0.0
    %2985 = vmatprep.subr.mxu0 0.0
    %2986 = vmatpush1.msra.mxu0 0.0
    %2987 = vmatprep.subr.mxu0 0.0
    %2988 = vmatpush1.msra.mxu0 0.0
    %2989 = vmatprep.subr.mxu0 0.0
    %2990 = vmatpush1.msra.mxu0 0.0
    %2991 = vmatprep.subr.mxu0 0.0
    %2992 = vmatpush1.msra.mxu0 0.0
    %2993 = vmatprep.subr.mxu0 0.0
    %2994 = vmatpush1.msra.mxu0 0.0
    %2995 = vmatprep.subr.mxu0 0.0
    %2996 = vmatpush1.msra.mxu0 0.0
    %2997 = vmatprep.subr.mxu0 0.0
    %2998 = vmatpush1.msra.mxu0 0.0
    %2999 = vmatprep.subr.mxu0 0.0
    %3000 = vmatpush1.msra.mxu0 0.0
    %3001 = vmatprep.subr.mxu0 0.0
    %3002 = vmatpush1.msra.mxu0 0.0
    %3003 = vmatprep.subr.mxu0 0.0
    %3004 = vmatpush1.msra.mxu0 0.0
    %3005 = vmatprep.subr.mxu0 0.0
    %3006 = vmatpush1.msra.mxu0 0.0
    %3007 = vmatprep.subr.mxu0 0.0
    %3008 = vmatpush1.msra.mxu0 0.0
    %3009 = vmatprep.subr.mxu0 0.0
    %3010 = vmatpush1.msra.mxu0 0.0
    %3011 = vmatprep.subr.mxu0 0.0
    %3012 = vmatpush1.msra.mxu0 0.0
    %3013 = vmatprep.subr.mxu0 0.0
    %3014 = vmatpush1.msra.mxu0 %v2978
    %3015 = vmatprep.subr.mxu0 0.0
    %3016 = vmatpush2.msra.mxu0 0.0
    %3017 = vmatprep.subr.mxu0 0.0
    %3018 = vmatpush2.msra.mxu0 0.0
    %3019 = vmatprep.subr.mxu0 0.0
    %3020 = vmatpush2.msra.mxu0 0.0
    %3021 = vmatprep.subr.mxu0 0.0
    %3022 = vmatpush2.msra.mxu0 0.0
    %3023 = vmatprep.subr.mxu0 0.0
    %3024 = vmatpush2.msra.mxu0 0.0
    %3025 = vmatprep.subr.mxu0 0.0
    %3026 = vmatpush2.msra.mxu0 0.0
    %3027 = vmatprep.subr.mxu0 0.0
    %3028 = vmatpush2.msra.mxu0 0.0
    %3029 = vmatprep.subr.mxu0 0.0
    %3030 = vmatpush2.msra.mxu0 0.0
    %3031 = vmatprep.subr.mxu0 0.0
    %3032 = vmatpush2.msra.mxu0 0.0
    %3033 = vmatprep.subr.mxu0 0.0
    %3034 = vmatpush2.msra.mxu0 0.0
    %3035 = vmatprep.subr.mxu0 0.0
    %3036 = vmatpush2.msra.mxu0 0.0
    %3037 = vmatprep.subr.mxu0 0.0
    %3038 = vmatpush2.msra.mxu0 0.0
    %3039 = vmatprep.subr.mxu0 0.0
    %3040 = vmatpush2.msra.mxu0 0.0
    %3041 = vmatprep.subr.mxu0 0.0
    %3042 = vmatpush2.msra.mxu0 0.0
    %3043 = vmatprep.subr.mxu0 0.0
    %3044 = vmatpush2.msra.mxu0 0.0
    %3045 = vmatprep.subr.mxu0 0.0
    %3046 = vmatpush2.msra.mxu0 0.0
    %3047 = vmatprep.mubr.f32.mxu0 0.0
    %3048 = vmatmul.mubr.f32.gmra.mxu0 %v2981
    %v3049 = vpop.f32.mrf.mxu0
    %v3050 = vadd.f32 0.0, %v3049
    %v3051 = vpop.f32.mrf.mxu0
    %3052 = vdwg.mxu0
    %3053 = vrot.lane.b32.xlu0 %v2262, 64
    %v3054 = vpop.permute.xlu0 %3053
    %v3057 = vsel %vm486, %v2970, 0
    %3059 = vmatprep.subr.mxu0 0.0
    %3060 = vmatpush1.msra.mxu0 0.0
    %3061 = vmatprep.subr.mxu0 0.0
    %3062 = vmatpush1.msra.mxu0 0.0
    %3063 = vmatprep.subr.mxu0 0.0
    %3064 = vmatpush1.msra.mxu0 0.0
    %3065 = vmatprep.subr.mxu0 0.0
    %3066 = vmatpush1.msra.mxu0 0.0
    %3067 = vmatprep.subr.mxu0 0.0
    %3068 = vmatpush1.msra.mxu0 0.0
    %3069 = vmatprep.subr.mxu0 0.0
    %3070 = vmatpush1.msra.mxu0 0.0
    %3071 = vmatprep.subr.mxu0 0.0
    %3072 = vmatpush1.msra.mxu0 0.0
    %3073 = vmatprep.subr.mxu0 0.0
    %3074 = vmatpush1.msra.mxu0 0.0
    %3075 = vmatprep.subr.mxu0 0.0
    %3076 = vmatpush1.msra.mxu0 0.0
    %3077 = vmatprep.subr.mxu0 0.0
    %3078 = vmatpush1.msra.mxu0 0.0
    %3079 = vmatprep.subr.mxu0 0.0
    %3080 = vmatpush1.msra.mxu0 0.0
    %3081 = vmatprep.subr.mxu0 0.0
    %3082 = vmatpush1.msra.mxu0 0.0
    %3083 = vmatprep.subr.mxu0 0.0
    %3084 = vmatpush1.msra.mxu0 0.0
    %3085 = vmatprep.subr.mxu0 0.0
    %3086 = vmatpush1.msra.mxu0 0.0
    %3087 = vmatprep.subr.mxu0 0.0
    %3088 = vmatpush1.msra.mxu0 0.0
    %3089 = vmatprep.subr.mxu0 0.0
    %3090 = vmatpush1.msra.mxu0 %v3054
    %3091 = vmatprep.subr.mxu0 0.0
    %3092 = vmatpush2.msra.mxu0 0.0
    %3093 = vmatprep.subr.mxu0 0.0
    %3094 = vmatpush2.msra.mxu0 0.0
    %3095 = vmatprep.subr.mxu0 0.0
    %3096 = vmatpush2.msra.mxu0 0.0
    %3097 = vmatprep.subr.mxu0 0.0
    %3098 = vmatpush2.msra.mxu0 0.0
    %3099 = vmatprep.subr.mxu0 0.0
    %3100 = vmatpush2.msra.mxu0 0.0
    %3101 = vmatprep.subr.mxu0 0.0
    %3102 = vmatpush2.msra.mxu0 0.0
    %3103 = vmatprep.subr.mxu0 0.0
    %3104 = vmatpush2.msra.mxu0 0.0
    %3105 = vmatprep.subr.mxu0 0.0
    %3106 = vmatpush2.msra.mxu0 0.0
    %3107 = vmatprep.subr.mxu0 0.0
    %3108 = vmatpush2.msra.mxu0 0.0
    %3109 = vmatprep.subr.mxu0 0.0
    %3110 = vmatpush2.msra.mxu0 0.0
    %3111 = vmatprep.subr.mxu0 0.0
    %3112 = vmatpush2.msra.mxu0 0.0
    %3113 = vmatprep.subr.mxu0 0.0
    %3114 = vmatpush2.msra.mxu0 0.0
    %3115 = vmatprep.subr.mxu0 0.0
    %3116 = vmatpush2.msra.mxu0 0.0
    %3117 = vmatprep.subr.mxu0 0.0
    %3118 = vmatpush2.msra.mxu0 0.0
    %3119 = vmatprep.subr.mxu0 0.0
    %3120 = vmatpush2.msra.mxu0 0.0
    %3121 = vmatprep.subr.mxu0 0.0
    %3122 = vmatpush2.msra.mxu0 0.0
    %3123 = vmatprep.mubr.f32.mxu0 0.0
    %3124 = vmatmul.mubr.f32.gmra.mxu0 %v3057
    %v3125 = vpop.f32.mrf.mxu0
    %v3126 = vadd.f32 0.0, %v3125
    %v3127 = vpop.f32.mrf.mxu0
    %3128 = vdwg.mxu0
    %3129 = vrot.lane.b32.xlu0 %v2266, 64
    %v3130 = vpop.permute.xlu0 %3129
    %v3133 = vsel %vm486, %v2971, 0
    %3135 = vmatprep.subr.mxu0 0.0
    %3136 = vmatpush1.msra.mxu0 0.0
    %3137 = vmatprep.subr.mxu0 0.0
    %3138 = vmatpush1.msra.mxu0 0.0
    %3139 = vmatprep.subr.mxu0 0.0
    %3140 = vmatpush1.msra.mxu0 0.0
    %3141 = vmatprep.subr.mxu0 0.0
    %3142 = vmatpush1.msra.mxu0 0.0
    %3143 = vmatprep.subr.mxu0 0.0
    %3144 = vmatpush1.msra.mxu0 0.0
    %3145 = vmatprep.subr.mxu0 0.0
    %3146 = vmatpush1.msra.mxu0 0.0
    %3147 = vmatprep.subr.mxu0 0.0
    %3148 = vmatpush1.msra.mxu0 0.0
    %3149 = vmatprep.subr.mxu0 0.0
    %3150 = vmatpush1.msra.mxu0 0.0
    %3151 = vmatprep.subr.mxu0 0.0
    %3152 = vmatpush1.msra.mxu0 0.0
    %3153 = vmatprep.subr.mxu0 0.0
    %3154 = vmatpush1.msra.mxu0 0.0
    %3155 = vmatprep.subr.mxu0 0.0
    %3156 = vmatpush1.msra.mxu0 0.0
    %3157 = vmatprep.subr.mxu0 0.0
    %3158 = vmatpush1.msra.mxu0 0.0
    %3159 = vmatprep.subr.mxu0 0.0
    %3160 = vmatpush1.msra.mxu0 0.0
    %3161 = vmatprep.subr.mxu0 0.0
    %3162 = vmatpush1.msra.mxu0 0.0
    %3163 = vmatprep.subr.mxu0 0.0
    %3164 = vmatpush1.msra.mxu0 0.0
    %3165 = vmatprep.subr.mxu0 0.0
    %3166 = vmatpush1.msra.mxu0 %v3130
    %3167 = vmatprep.subr.mxu0 0.0
    %3168 = vmatpush2.msra.mxu0 0.0
    %3169 = vmatprep.subr.mxu0 0.0
    %3170 = vmatpush2.msra.mxu0 0.0
    %3171 = vmatprep.subr.mxu0 0.0
    %3172 = vmatpush2.msra.mxu0 0.0
    %3173 = vmatprep.subr.mxu0 0.0
    %3174 = vmatpush2.msra.mxu0 0.0
    %3175 = vmatprep.subr.mxu0 0.0
    %3176 = vmatpush2.msra.mxu0 0.0
    %3177 = vmatprep.subr.mxu0 0.0
    %3178 = vmatpush2.msra.mxu0 0.0
    %3179 = vmatprep.subr.mxu0 0.0
    %3180 = vmatpush2.msra.mxu0 0.0
    %3181 = vmatprep.subr.mxu0 0.0
    %3182 = vmatpush2.msra.mxu0 0.0
    %3183 = vmatprep.subr.mxu0 0.0
    %3184 = vmatpush2.msra.mxu0 0.0
    %3185 = vmatprep.subr.mxu0 0.0
    %3186 = vmatpush2.msra.mxu0 0.0
    %3187 = vmatprep.subr.mxu0 0.0
    %3188 = vmatpush2.msra.mxu0 0.0
    %3189 = vmatprep.subr.mxu0 0.0
    %3190 = vmatpush2.msra.mxu0 0.0
    %3191 = vmatprep.subr.mxu0 0.0
    %3192 = vmatpush2.msra.mxu0 0.0
    %3193 = vmatprep.subr.mxu0 0.0
    %3194 = vmatpush2.msra.mxu0 0.0
    %3195 = vmatprep.subr.mxu0 0.0
    %3196 = vmatpush2.msra.mxu0 0.0
    %3197 = vmatprep.subr.mxu0 0.0
    %3198 = vmatpush2.msra.mxu0 0.0
    %3199 = vmatprep.mubr.f32.mxu0 0.0
    %3200 = vmatmul.mubr.f32.gmra.mxu0 %v3133
    %v3201 = vpop.f32.mrf.mxu0
    %v3202 = vadd.f32 0.0, %v3201
    %v3203 = vpop.f32.mrf.mxu0
    %3204 = vdwg.mxu0
    %3205 = vrot.lane.b32.xlu0 %v2270, 64
    %v3206 = vpop.permute.xlu0 %3205
    %v3209 = vsel %vm486, %v2972, 0
    %3211 = vmatprep.subr.mxu0 0.0
    %3212 = vmatpush1.msra.mxu0 0.0
    %3213 = vmatprep.subr.mxu0 0.0
    %3214 = vmatpush1.msra.mxu0 0.0
    %3215 = vmatprep.subr.mxu0 0.0
    %3216 = vmatpush1.msra.mxu0 0.0
    %3217 = vmatprep.subr.mxu0 0.0
    %3218 = vmatpush1.msra.mxu0 0.0
    %3219 = vmatprep.subr.mxu0 0.0
    %3220 = vmatpush1.msra.mxu0 0.0
    %3221 = vmatprep.subr.mxu0 0.0
    %3222 = vmatpush1.msra.mxu0 0.0
    %3223 = vmatprep.subr.mxu0 0.0
    %3224 = vmatpush1.msra.mxu0 0.0
    %3225 = vmatprep.subr.mxu0 0.0
    %3226 = vmatpush1.msra.mxu0 0.0
    %3227 = vmatprep.subr.mxu0 0.0
    %3228 = vmatpush1.msra.mxu0 0.0
    %3229 = vmatprep.subr.mxu0 0.0
    %3230 = vmatpush1.msra.mxu0 0.0
    %3231 = vmatprep.subr.mxu0 0.0
    %3232 = vmatpush1.msra.mxu0 0.0
    %3233 = vmatprep.subr.mxu0 0.0
    %3234 = vmatpush1.msra.mxu0 0.0
    %3235 = vmatprep.subr.mxu0 0.0
    %3236 = vmatpush1.msra.mxu0 0.0
    %3237 = vmatprep.subr.mxu0 0.0
    %3238 = vmatpush1.msra.mxu0 0.0
    %3239 = vmatprep.subr.mxu0 0.0
    %3240 = vmatpush1.msra.mxu0 0.0
    %3241 = vmatprep.subr.mxu0 0.0
    %3242 = vmatpush1.msra.mxu0 %v3206
    %3243 = vmatprep.subr.mxu0 0.0
    %3244 = vmatpush2.msra.mxu0 0.0
    %3245 = vmatprep.subr.mxu0 0.0
    %3246 = vmatpush2.msra.mxu0 0.0
    %3247 = vmatprep.subr.mxu0 0.0
    %3248 = vmatpush2.msra.mxu0 0.0
    %3249 = vmatprep.subr.mxu0 0.0
    %3250 = vmatpush2.msra.mxu0 0.0
    %3251 = vmatprep.subr.mxu0 0.0
    %3252 = vmatpush2.msra.mxu0 0.0
    %3253 = vmatprep.subr.mxu0 0.0
    %3254 = vmatpush2.msra.mxu0 0.0
    %3255 = vmatprep.subr.mxu0 0.0
    %3256 = vmatpush2.msra.mxu0 0.0
    %3257 = vmatprep.subr.mxu0 0.0
    %3258 = vmatpush2.msra.mxu0 0.0
    %3259 = vmatprep.subr.mxu0 0.0
    %3260 = vmatpush2.msra.mxu0 0.0
    %3261 = vmatprep.subr.mxu0 0.0
    %3262 = vmatpush2.msra.mxu0 0.0
    %3263 = vmatprep.subr.mxu0 0.0
    %3264 = vmatpush2.msra.mxu0 0.0
    %3265 = vmatprep.subr.mxu0 0.0
    %3266 = vmatpush2.msra.mxu0 0.0
    %3267 = vmatprep.subr.mxu0 0.0
    %3268 = vmatpush2.msra.mxu0 0.0
    %3269 = vmatprep.subr.mxu0 0.0
    %3270 = vmatpush2.msra.mxu0 0.0
    %3271 = vmatprep.subr.mxu0 0.0
    %3272 = vmatpush2.msra.mxu0 0.0
    %3273 = vmatprep.subr.mxu0 0.0
    %3274 = vmatpush2.msra.mxu0 0.0
    %3275 = vmatprep.mubr.f32.mxu0 0.0
    %3276 = vmatmul.mubr.f32.gmra.mxu0 %v3209
    %v3277 = vpop.f32.mrf.mxu0
    %v3278 = vadd.f32 0.0, %v3277
    %v3279 = vpop.f32.mrf.mxu0
    %3280 = vdwg.mxu0
    %3281 = vrot.lane.b32.xlu0 %v2256, 64
    %v3282 = vpop.permute.xlu0 %3281
    %v3285 = vsel %vm486, %v2973, 0
    %3287 = vmatprep.subr.mxu0 0.0
    %3288 = vmatpush1.msra.mxu0 0.0
    %3289 = vmatprep.subr.mxu0 0.0
    %3290 = vmatpush1.msra.mxu0 0.0
    %3291 = vmatprep.subr.mxu0 0.0
    %3292 = vmatpush1.msra.mxu0 0.0
    %3293 = vmatprep.subr.mxu0 0.0
    %3294 = vmatpush1.msra.mxu0 0.0
    %3295 = vmatprep.subr.mxu0 0.0
    %3296 = vmatpush1.msra.mxu0 0.0
    %3297 = vmatprep.subr.mxu0 0.0
    %3298 = vmatpush1.msra.mxu0 0.0
    %3299 = vmatprep.subr.mxu0 0.0
    %3300 = vmatpush1.msra.mxu0 0.0
    %3301 = vmatprep.subr.mxu0 0.0
    %3302 = vmatpush1.msra.mxu0 0.0
    %3303 = vmatprep.subr.mxu0 0.0
    %3304 = vmatpush1.msra.mxu0 0.0
    %3305 = vmatprep.subr.mxu0 0.0
    %3306 = vmatpush1.msra.mxu0 0.0
    %3307 = vmatprep.subr.mxu0 0.0
    %3308 = vmatpush1.msra.mxu0 0.0
    %3309 = vmatprep.subr.mxu0 0.0
    %3310 = vmatpush1.msra.mxu0 0.0
    %3311 = vmatprep.subr.mxu0 0.0
    %3312 = vmatpush1.msra.mxu0 0.0
    %3313 = vmatprep.subr.mxu0 0.0
    %3314 = vmatpush1.msra.mxu0 0.0
    %3315 = vmatprep.subr.mxu0 0.0
    %3316 = vmatpush1.msra.mxu0 0.0
    %3317 = vmatprep.subr.mxu0 0.0
    %3318 = vmatpush1.msra.mxu0 %v3282
    %3319 = vmatprep.subr.mxu0 0.0
    %3320 = vmatpush2.msra.mxu0 0.0
    %3321 = vmatprep.subr.mxu0 0.0
    %3322 = vmatpush2.msra.mxu0 0.0
    %3323 = vmatprep.subr.mxu0 0.0
    %3324 = vmatpush2.msra.mxu0 0.0
    %3325 = vmatprep.subr.mxu0 0.0
    %3326 = vmatpush2.msra.mxu0 0.0
    %3327 = vmatprep.subr.mxu0 0.0
    %3328 = vmatpush2.msra.mxu0 0.0
    %3329 = vmatprep.subr.mxu0 0.0
    %3330 = vmatpush2.msra.mxu0 0.0
    %3331 = vmatprep.subr.mxu0 0.0
    %3332 = vmatpush2.msra.mxu0 0.0
    %3333 = vmatprep.subr.mxu0 0.0
    %3334 = vmatpush2.msra.mxu0 0.0
    %3335 = vmatprep.subr.mxu0 0.0
    %3336 = vmatpush2.msra.mxu0 0.0
    %3337 = vmatprep.subr.mxu0 0.0
    %3338 = vmatpush2.msra.mxu0 0.0
    %3339 = vmatprep.subr.mxu0 0.0
    %3340 = vmatpush2.msra.mxu0 0.0
    %3341 = vmatprep.subr.mxu0 0.0
    %3342 = vmatpush2.msra.mxu0 0.0
    %3343 = vmatprep.subr.mxu0 0.0
    %3344 = vmatpush2.msra.mxu0 0.0
    %3345 = vmatprep.subr.mxu0 0.0
    %3346 = vmatpush2.msra.mxu0 0.0
    %3347 = vmatprep.subr.mxu0 0.0
    %3348 = vmatpush2.msra.mxu0 0.0
    %3349 = vmatprep.subr.mxu0 0.0
    %3350 = vmatpush2.msra.mxu0 0.0
    %3351 = vmatprep.mubr.f32.mxu0 0.0
    %3352 = vmatmul.mubr.f32.gmra.mxu0 %v3285
    %v3353 = vpop.f32.mrf.mxu0
    %v3354 = vadd.f32 0.0, %v3353
    %v3355 = vpop.f32.mrf.mxu0
    %3356 = vdwg.mxu0
    %3357 = vrot.lane.b32.xlu0 %v2264, 64
    %v3358 = vpop.permute.xlu0 %3357
    %v3361 = vsel %vm486, %v2974, 0
    %3363 = vmatprep.subr.mxu0 0.0
    %3364 = vmatpush1.msra.mxu0 0.0
    %3365 = vmatprep.subr.mxu0 0.0
    %3366 = vmatpush1.msra.mxu0 0.0
    %3367 = vmatprep.subr.mxu0 0.0
    %3368 = vmatpush1.msra.mxu0 0.0
    %3369 = vmatprep.subr.mxu0 0.0
    %3370 = vmatpush1.msra.mxu0 0.0
    %3371 = vmatprep.subr.mxu0 0.0
    %3372 = vmatpush1.msra.mxu0 0.0
    %3373 = vmatprep.subr.mxu0 0.0
    %3374 = vmatpush1.msra.mxu0 0.0
    %3375 = vmatprep.subr.mxu0 0.0
    %3376 = vmatpush1.msra.mxu0 0.0
    %3377 = vmatprep.subr.mxu0 0.0
    %3378 = vmatpush1.msra.mxu0 0.0
    %3379 = vmatprep.subr.mxu0 0.0
    %3380 = vmatpush1.msra.mxu0 0.0
    %3381 = vmatprep.subr.mxu0 0.0
    %3382 = vmatpush1.msra.mxu0 0.0
    %3383 = vmatprep.subr.mxu0 0.0
    %3384 = vmatpush1.msra.mxu0 0.0
    %3385 = vmatprep.subr.mxu0 0.0
    %3386 = vmatpush1.msra.mxu0 0.0
    %3387 = vmatprep.subr.mxu0 0.0
    %3388 = vmatpush1.msra.mxu0 0.0
    %3389 = vmatprep.subr.mxu0 0.0
    %3390 = vmatpush1.msra.mxu0 0.0
    %3391 = vmatprep.subr.mxu0 0.0
    %3392 = vmatpush1.msra.mxu0 0.0
    %3393 = vmatprep.subr.mxu0 0.0
    %3394 = vmatpush1.msra.mxu0 %v3358
    %3395 = vmatprep.subr.mxu0 0.0
    %3396 = vmatpush2.msra.mxu0 0.0
    %3397 = vmatprep.subr.mxu0 0.0
    %3398 = vmatpush2.msra.mxu0 0.0
    %3399 = vmatprep.subr.mxu0 0.0
    %3400 = vmatpush2.msra.mxu0 0.0
    %3401 = vmatprep.subr.mxu0 0.0
    %3402 = vmatpush2.msra.mxu0 0.0
    %3403 = vmatprep.subr.mxu0 0.0
    %3404 = vmatpush2.msra.mxu0 0.0
    %3405 = vmatprep.subr.mxu0 0.0
    %3406 = vmatpush2.msra.mxu0 0.0
    %3407 = vmatprep.subr.mxu0 0.0
    %3408 = vmatpush2.msra.mxu0 0.0
    %3409 = vmatprep.subr.mxu0 0.0
    %3410 = vmatpush2.msra.mxu0 0.0
    %3411 = vmatprep.subr.mxu0 0.0
    %3412 = vmatpush2.msra.mxu0 0.0
    %3413 = vmatprep.subr.mxu0 0.0
    %3414 = vmatpush2.msra.mxu0 0.0
    %3415 = vmatprep.subr.mxu0 0.0
    %3416 = vmatpush2.msra.mxu0 0.0
    %3417 = vmatprep.subr.mxu0 0.0
    %3418 = vmatpush2.msra.mxu0 0.0
    %3419 = vmatprep.subr.mxu0 0.0
    %3420 = vmatpush2.msra.mxu0 0.0
    %3421 = vmatprep.subr.mxu0 0.0
    %3422 = vmatpush2.msra.mxu0 0.0
    %3423 = vmatprep.subr.mxu0 0.0
    %3424 = vmatpush2.msra.mxu0 0.0
    %3425 = vmatprep.subr.mxu0 0.0
    %3426 = vmatpush2.msra.mxu0 0.0
    %3427 = vmatprep.mubr.f32.mxu0 0.0
    %3428 = vmatmul.mubr.f32.gmra.mxu0 %v3361
    %v3429 = vpop.f32.mrf.mxu0
    %v3430 = vadd.f32 0.0, %v3429
    %v3431 = vpop.f32.mrf.mxu0
    %3432 = vdwg.mxu0
    %3433 = vrot.lane.b32.xlu0 %v2268, 64
    %v3434 = vpop.permute.xlu0 %3433
    %v3437 = vsel %vm486, %v2975, 0
    %3439 = vmatprep.subr.mxu0 0.0
    %3440 = vmatpush1.msra.mxu0 0.0
    %3441 = vmatprep.subr.mxu0 0.0
    %3442 = vmatpush1.msra.mxu0 0.0
    %3443 = vmatprep.subr.mxu0 0.0
    %3444 = vmatpush1.msra.mxu0 0.0
    %3445 = vmatprep.subr.mxu0 0.0
    %3446 = vmatpush1.msra.mxu0 0.0
    %3447 = vmatprep.subr.mxu0 0.0
    %3448 = vmatpush1.msra.mxu0 0.0
    %3449 = vmatprep.subr.mxu0 0.0
    %3450 = vmatpush1.msra.mxu0 0.0
    %3451 = vmatprep.subr.mxu0 0.0
    %3452 = vmatpush1.msra.mxu0 0.0
    %3453 = vmatprep.subr.mxu0 0.0
    %3454 = vmatpush1.msra.mxu0 0.0
    %3455 = vmatprep.subr.mxu0 0.0
    %3456 = vmatpush1.msra.mxu0 0.0
    %3457 = vmatprep.subr.mxu0 0.0
    %3458 = vmatpush1.msra.mxu0 0.0
    %3459 = vmatprep.subr.mxu0 0.0
    %3460 = vmatpush1.msra.mxu0 0.0
    %3461 = vmatprep.subr.mxu0 0.0
    %3462 = vmatpush1.msra.mxu0 0.0
    %3463 = vmatprep.subr.mxu0 0.0
    %3464 = vmatpush1.msra.mxu0 0.0
    %3465 = vmatprep.subr.mxu0 0.0
    %3466 = vmatpush1.msra.mxu0 0.0
    %3467 = vmatprep.subr.mxu0 0.0
    %3468 = vmatpush1.msra.mxu0 0.0
    %3469 = vmatprep.subr.mxu0 0.0
    %3470 = vmatpush1.msra.mxu0 %v3434
    %3471 = vmatprep.subr.mxu0 0.0
    %3472 = vmatpush2.msra.mxu0 0.0
    %3473 = vmatprep.subr.mxu0 0.0
    %3474 = vmatpush2.msra.mxu0 0.0
    %3475 = vmatprep.subr.mxu0 0.0
    %3476 = vmatpush2.msra.mxu0 0.0
    %3477 = vmatprep.subr.mxu0 0.0
    %3478 = vmatpush2.msra.mxu0 0.0
    %3479 = vmatprep.subr.mxu0 0.0
    %3480 = vmatpush2.msra.mxu0 0.0
    %3481 = vmatprep.subr.mxu0 0.0
    %3482 = vmatpush2.msra.mxu0 0.0
    %3483 = vmatprep.subr.mxu0 0.0
    %3484 = vmatpush2.msra.mxu0 0.0
    %3485 = vmatprep.subr.mxu0 0.0
    %3486 = vmatpush2.msra.mxu0 0.0
    %3487 = vmatprep.subr.mxu0 0.0
    %3488 = vmatpush2.msra.mxu0 0.0
    %3489 = vmatprep.subr.mxu0 0.0
    %3490 = vmatpush2.msra.mxu0 0.0
    %3491 = vmatprep.subr.mxu0 0.0
    %3492 = vmatpush2.msra.mxu0 0.0
    %3493 = vmatprep.subr.mxu0 0.0
    %3494 = vmatpush2.msra.mxu0 0.0
    %3495 = vmatprep.subr.mxu0 0.0
    %3496 = vmatpush2.msra.mxu0 0.0
    %3497 = vmatprep.subr.mxu0 0.0
    %3498 = vmatpush2.msra.mxu0 0.0
    %3499 = vmatprep.subr.mxu0 0.0
    %3500 = vmatpush2.msra.mxu0 0.0
    %3501 = vmatprep.subr.mxu0 0.0
    %3502 = vmatpush2.msra.mxu0 0.0
    %3503 = vmatprep.mubr.f32.mxu0 0.0
    %3504 = vmatmul.mubr.f32.gmra.mxu0 %v3437
    %v3505 = vpop.f32.mrf.mxu0
    %v3506 = vadd.f32 0.0, %v3505
    %v3507 = vpop.f32.mrf.mxu0
    %3508 = vdwg.mxu0
    %3509 = vrot.lane.b32.xlu0 %v2272, 64
    %v3510 = vpop.permute.xlu0 %3509
    %v3513 = vsel %vm486, %v2976, 0
    %3515 = vmatprep.subr.mxu0 0.0
    %3516 = vmatpush1.msra.mxu0 0.0
    %3517 = vmatprep.subr.mxu0 0.0
    %3518 = vmatpush1.msra.mxu0 0.0
    %3519 = vmatprep.subr.mxu0 0.0
    %3520 = vmatpush1.msra.mxu0 0.0
    %3521 = vmatprep.subr.mxu0 0.0
    %3522 = vmatpush1.msra.mxu0 0.0
    %3523 = vmatprep.subr.mxu0 0.0
    %3524 = vmatpush1.msra.mxu0 0.0
    %3525 = vmatprep.subr.mxu0 0.0
    %3526 = vmatpush1.msra.mxu0 0.0
    %3527 = vmatprep.subr.mxu0 0.0
    %3528 = vmatpush1.msra.mxu0 0.0
    %3529 = vmatprep.subr.mxu0 0.0
    %3530 = vmatpush1.msra.mxu0 0.0
    %3531 = vmatprep.subr.mxu0 0.0
    %3532 = vmatpush1.msra.mxu0 0.0
    %3533 = vmatprep.subr.mxu0 0.0
    %3534 = vmatpush1.msra.mxu0 0.0
    %3535 = vmatprep.subr.mxu0 0.0
    %3536 = vmatpush1.msra.mxu0 0.0
    %3537 = vmatprep.subr.mxu0 0.0
    %3538 = vmatpush1.msra.mxu0 0.0
    %3539 = vmatprep.subr.mxu0 0.0
    %3540 = vmatpush1.msra.mxu0 0.0
    %3541 = vmatprep.subr.mxu0 0.0
    %3542 = vmatpush1.msra.mxu0 0.0
    %3543 = vmatprep.subr.mxu0 0.0
    %3544 = vmatpush1.msra.mxu0 0.0
    %3545 = vmatprep.subr.mxu0 0.0
    %3546 = vmatpush1.msra.mxu0 %v3510
    %3547 = vmatprep.subr.mxu0 0.0
    %3548 = vmatpush2.msra.mxu0 0.0
    %3549 = vmatprep.subr.mxu0 0.0
    %3550 = vmatpush2.msra.mxu0 0.0
    %3551 = vmatprep.subr.mxu0 0.0
    %3552 = vmatpush2.msra.mxu0 0.0
    %3553 = vmatprep.subr.mxu0 0.0
    %3554 = vmatpush2.msra.mxu0 0.0
    %3555 = vmatprep.subr.mxu0 0.0
    %3556 = vmatpush2.msra.mxu0 0.0
    %3557 = vmatprep.subr.mxu0 0.0
    %3558 = vmatpush2.msra.mxu0 0.0
    %3559 = vmatprep.subr.mxu0 0.0
    %3560 = vmatpush2.msra.mxu0 0.0
    %3561 = vmatprep.subr.mxu0 0.0
    %3562 = vmatpush2.msra.mxu0 0.0
    %3563 = vmatprep.subr.mxu0 0.0
    %3564 = vmatpush2.msra.mxu0 0.0
    %3565 = vmatprep.subr.mxu0 0.0
    %3566 = vmatpush2.msra.mxu0 0.0
    %3567 = vmatprep.subr.mxu0 0.0
    %3568 = vmatpush2.msra.mxu0 0.0
    %3569 = vmatprep.subr.mxu0 0.0
    %3570 = vmatpush2.msra.mxu0 0.0
    %3571 = vmatprep.subr.mxu0 0.0
    %3572 = vmatpush2.msra.mxu0 0.0
    %3573 = vmatprep.subr.mxu0 0.0
    %3574 = vmatpush2.msra.mxu0 0.0
    %3575 = vmatprep.subr.mxu0 0.0
    %3576 = vmatpush2.msra.mxu0 0.0
    %3577 = vmatprep.subr.mxu0 0.0
    %3578 = vmatpush2.msra.mxu0 0.0
    %3579 = vmatprep.mubr.f32.mxu0 0.0
    %3580 = vmatmul.mubr.f32.gmra.mxu0 %v3513
    %v3581 = vpop.f32.mrf.mxu0
    %v3582 = vadd.f32 0.0, %v3581
    %v3583 = vpop.f32.mrf.mxu0
    %3584 = vdwg.mxu0
    %3587 = vrot.lane.b32.xlu0 %v3126, 8
    %v3588 = vpop.permute.xlu0 %3587
    %3589 = vrot.lane.b32.xlu0 %v3430, 8
    %v3590 = vpop.permute.xlu0 %3589
    %3595 = vrot.lane.b32.xlu0 %v3202, 16
    %v3596 = vpop.permute.xlu0 %3595
    %3597 = vrot.lane.b32.xlu0 %v3506, 16
    %v3598 = vpop.permute.xlu0 %3597
    %3603 = vrot.lane.b32.xlu0 %v3278, 24
    %v3604 = vpop.permute.xlu0 %3603
    %3605 = vrot.lane.b32.xlu0 %v3582, 24
    %v3606 = vpop.permute.xlu0 %3605
    %v3609 = vsel %vm486, %v3050, %v3588
    %v3610 = vsel %vm486, %v3354, %v3590
    %v3611 = vsel %vm1823, %v3609, %v3596
    %v3612 = vsel %vm1823, %v3610, %v3598
    %v3613 = vsel %vm1826, %v3611, %v3604
    %v3614 = vsel %vm1826, %v3612, %v3606
    %v3616 = vsel %vm388, %v3613, 0
    %v3619 = vsel %vm388, %v3614, 0
    %3621 = vmatprep.subr.mxu0 0.0
    %3622 = vmatpush1.msra.mxu0 0.0
    %3623 = vmatprep.subr.mxu0 0.0
    %3624 = vmatpush1.msra.mxu0 0.0
    %3625 = vmatprep.subr.mxu0 0.0
    %3626 = vmatpush1.msra.mxu0 0.0
    %3627 = vmatprep.subr.mxu0 0.0
    %3628 = vmatpush1.msra.mxu0 0.0
    %3629 = vmatprep.subr.mxu0 0.0
    %3630 = vmatpush1.msra.mxu0 0.0
    %3631 = vmatprep.subr.mxu0 0.0
    %3632 = vmatpush1.msra.mxu0 0.0
    %3633 = vmatprep.subr.mxu0 0.0
    %3634 = vmatpush1.msra.mxu0 0.0
    %3635 = vmatprep.subr.mxu0 0.0
    %3636 = vmatpush1.msra.mxu0 0.0
    %3637 = vmatprep.subr.mxu0 0.0
    %3638 = vmatpush1.msra.mxu0 0.0
    %3639 = vmatprep.subr.mxu0 0.0
    %3640 = vmatpush1.msra.mxu0 0.0
    %3641 = vmatprep.subr.mxu0 0.0
    %3642 = vmatpush1.msra.mxu0 0.0
    %3643 = vmatprep.subr.mxu0 0.0
    %3644 = vmatpush1.msra.mxu0 0.0
    %3645 = vmatprep.subr.mxu0 0.0
    %3646 = vmatpush1.msra.mxu0 %v364
    %3647 = vmatprep.subr.mxu0 0.0
    %3648 = vmatpush1.msra.mxu0 %v363
    %3649 = vmatprep.subr.mxu0 0.0
    %3650 = vmatpush1.msra.mxu0 %v362
    %3651 = vmatprep.subr.mxu0 0.0
    %3652 = vmatpush1.msra.mxu0 %v361
    %3653 = vmatprep.subr.mxu0 0.0
    %3654 = vmatpush2.msra.mxu0 0.0
    %3655 = vmatprep.subr.mxu0 0.0
    %3656 = vmatpush2.msra.mxu0 0.0
    %3657 = vmatprep.subr.mxu0 0.0
    %3658 = vmatpush2.msra.mxu0 0.0
    %3659 = vmatprep.subr.mxu0 0.0
    %3660 = vmatpush2.msra.mxu0 0.0
    %3661 = vmatprep.subr.mxu0 0.0
    %3662 = vmatpush2.msra.mxu0 0.0
    %3663 = vmatprep.subr.mxu0 0.0
    %3664 = vmatpush2.msra.mxu0 0.0
    %3665 = vmatprep.subr.mxu0 0.0
    %3666 = vmatpush2.msra.mxu0 0.0
    %3667 = vmatprep.subr.mxu0 0.0
    %3668 = vmatpush2.msra.mxu0 0.0
    %3669 = vmatprep.subr.mxu0 0.0
    %3670 = vmatpush2.msra.mxu0 0.0
    %3671 = vmatprep.subr.mxu0 0.0
    %3672 = vmatpush2.msra.mxu0 0.0
    %3673 = vmatprep.subr.mxu0 0.0
    %3674 = vmatpush2.msra.mxu0 0.0
    %3675 = vmatprep.subr.mxu0 0.0
    %3676 = vmatpush2.msra.mxu0 0.0
    %3677 = vmatprep.subr.mxu0 0.0
    %3678 = vmatpush2.msra.mxu0 0.0
    %3679 = vmatprep.subr.mxu0 0.0
    %3680 = vmatpush2.msra.mxu0 0.0
    %3681 = vmatprep.subr.mxu0 0.0
    %3682 = vmatpush2.msra.mxu0 0.0
    %3683 = vmatprep.subr.mxu0 0.0
    %3684 = vmatpush2.msra.mxu0 0.0
    %3685 = vmatprep.mubr.f32.mxu0 0.0
    %3686 = vmatmul.mubr.f32.gmra.mxu0 %v3616
    %v3687 = vpop.f32.mrf.mxu0
    %v3688 = vadd.f32 %v1833, %v3687
    %v3689 = vpop.f32.mrf.mxu0
    %3690 = vmatprep.mubr.f32.mxu0 0.0
    %3691 = vmatmul.mubr.f32.gmra.mxu0 %v3619
    %v3692 = vpop.f32.mrf.mxu0
    %v3693 = vadd.f32 %v1833, %v3692
    %v3694 = vpop.f32.mrf.mxu0
    %3695 = vdwg.mxu0
    %3696 = vst.msk [vmem:[#allocation33] sm:$0xff] %vm486, %v2969
    %3697 = vst.msk [vmem:[#allocation33 + $0x8] sm:$0xff] %vm486, %v2970
    %3698 = vst.msk [vmem:[#allocation33 + $0x10] sm:$0xff] %vm486, %v2971
    %3699 = vst.msk [vmem:[#allocation33 + $0x18] sm:$0xff] %vm486, %v2972
    %3700 = vst.msk [vmem:[#allocation33 + $0x20] sm:$0xff] %vm486, %v2973
    %3701 = vst.msk [vmem:[#allocation33 + $0x28] sm:$0xff] %vm486, %v2974
    %3702 = vst.msk [vmem:[#allocation33 + $0x30] sm:$0xff] %vm486, %v2975
    %3703 = vst.msk [vmem:[#allocation33 + $0x38] sm:$0xff] %vm486, %v2976
    %v3704 = vadd.f32 %v2176, %v3688
    %v3705 = vadd.f32 %v2177, %v3693
    %v3706 = vsel %vm388, %v3704, 0.0
    %3707 = vadd.xlane.f32.xlu0 %v3706
    %v3708 = vpop.xlane.xlu0 %3707
    %v3709 = vsel %vm388, %v3705, 0.0
    %3710 = vadd.xlane.f32.xlu0 %v3709
    %v3711 = vpop.xlane.xlu0 %3710
    %v3712 = vmul.f32 %v3708, %v1932
    %v3713 = vmul.f32 %v3711, %v1932
    %v3714 = vsub.f32 %v3704, %v3712
    %v3715 = vsub.f32 %v3705, %v3713
    %v3716 = vmul.f32 %v3714, %v3714
    %v3717 = vmul.f32 %v3715, %v3715
    %v3718 = vsel %vm388, %v3716, 0.0
    %3719 = vadd.xlane.f32.xlu0 %v3718
    %v3720 = vpop.xlane.xlu0 %3719
    %v3721 = vsel %vm388, %v3717, 0.0
    %3722 = vadd.xlane.f32.xlu0 %v3721
    %v3723 = vpop.xlane.xlu0 %3722
    %v3724 = vmul.f32 %v3720, %v1932
    %v3725 = vmul.f32 %v3723, %v1932
    %v3726 = vadd.f32 %v3724, 1e-05
    %v3727 = vadd.f32 %v3725, 1e-05
    %v3728 = vrsqrt.pop %v3726
    %v3729 = vrsqrt.pop %v3727
    %v3730 = vmul.f32 %v3714, %v3728
    %v3731 = vmul.f32 %v3715, %v3729
    %v3732 = vmul.f32 %v3730, %v1957
    %v3733 = vmul.f32 %v3731, %v1957
    %v3734 = vadd.f32 %v3732, %v1965
    %v3735 = vadd.f32 %v3733, %v1965
    %v3737 = vsel %vm388, %v3734, 0
    %v3740 = vsel %vm388, %v3735, 0
    %3742 = vmatprep.subr.mxu0 0.0
    %3743 = vmatpush1.msra.mxu0 0.0
    %3744 = vmatprep.subr.mxu0 0.0
    %3745 = vmatpush1.msra.mxu0 0.0
    %3746 = vmatprep.subr.mxu0 0.0
    %3747 = vmatpush1.msra.mxu0 0.0
    %3748 = vmatprep.subr.mxu0 0.0
    %3749 = vmatpush1.msra.mxu0 0.0
    %3750 = vmatprep.subr.mxu0 0.0
    %3751 = vmatpush1.msra.mxu0 0.0
    %3752 = vmatprep.subr.mxu0 0.0
    %3753 = vmatpush1.msra.mxu0 0.0
    %3754 = vmatprep.subr.mxu0 0.0
    %3755 = vmatpush1.msra.mxu0 0.0
    %3756 = vmatprep.subr.mxu0 0.0
    %3757 = vmatpush1.msra.mxu0 0.0
    %3758 = vmatprep.subr.mxu0 0.0
    %3759 = vmatpush1.msra.mxu0 0.0
    %3760 = vmatprep.subr.mxu0 0.0
    %3761 = vmatpush1.msra.mxu0 0.0
    %3762 = vmatprep.subr.mxu0 0.0
    %3763 = vmatpush1.msra.mxu0 0.0
    %3764 = vmatprep.subr.mxu0 0.0
    %3765 = vmatpush1.msra.mxu0 0.0
    %3766 = vmatprep.subr.mxu0 0.0
    %3767 = vmatpush1.msra.mxu0 %v369
    %3768 = vmatprep.subr.mxu0 0.0
    %3769 = vmatpush1.msra.mxu0 %v368
    %3770 = vmatprep.subr.mxu0 0.0
    %3771 = vmatpush1.msra.mxu0 %v367
    %3772 = vmatprep.subr.mxu0 0.0
    %3773 = vmatpush1.msra.mxu0 %v366
    %3774 = vmatprep.subr.mxu0 0.0
    %3775 = vmatpush2.msra.mxu0 0.0
    %3776 = vmatprep.subr.mxu0 0.0
    %3777 = vmatpush2.msra.mxu0 0.0
    %3778 = vmatprep.subr.mxu0 0.0
    %3779 = vmatpush2.msra.mxu0 0.0
    %3780 = vmatprep.subr.mxu0 0.0
    %3781 = vmatpush2.msra.mxu0 0.0
    %3782 = vmatprep.subr.mxu0 0.0
    %3783 = vmatpush2.msra.mxu0 0.0
    %3784 = vmatprep.subr.mxu0 0.0
    %3785 = vmatpush2.msra.mxu0 0.0
    %3786 = vmatprep.subr.mxu0 0.0
    %3787 = vmatpush2.msra.mxu0 0.0
    %3788 = vmatprep.subr.mxu0 0.0
    %3789 = vmatpush2.msra.mxu0 0.0
    %3790 = vmatprep.subr.mxu0 0.0
    %3791 = vmatpush2.msra.mxu0 0.0
    %3792 = vmatprep.subr.mxu0 0.0
    %3793 = vmatpush2.msra.mxu0 0.0
    %3794 = vmatprep.subr.mxu0 0.0
    %3795 = vmatpush2.msra.mxu0 0.0
    %3796 = vmatprep.subr.mxu0 0.0
    %3797 = vmatpush2.msra.mxu0 0.0
    %3798 = vmatprep.subr.mxu0 0.0
    %3799 = vmatpush2.msra.mxu0 0.0
    %3800 = vmatprep.subr.mxu0 0.0
    %3801 = vmatpush2.msra.mxu0 0.0
    %3802 = vmatprep.subr.mxu0 0.0
    %3803 = vmatpush2.msra.mxu0 0.0
    %3804 = vmatprep.subr.mxu0 0.0
    %3805 = vmatpush2.msra.mxu0 0.0
    %3806 = vmatprep.mubr.f32.mxu0 0.0
    %3807 = vmatmul.mubr.f32.gmra.mxu0 %v3737
    %v3808 = vpop.f32.mrf.mxu0
    %v3809 = vadd.f32 0.0, %v3808
    %v3810 = vpop.f32.mrf.mxu0
    %3811 = vmatprep.mubr.f32.mxu0 0.0
    %3812 = vmatmul.mubr.f32.gmra.mxu0 %v3740
    %v3813 = vpop.f32.mrf.mxu0
    %v3814 = vadd.f32 0.0, %v3813
    %v3815 = vpop.f32.mrf.mxu0
    %3816 = vdwg.mxu0
    %v3817 = vmax.f32 %v3809, 0.0
    %v3818 = vmax.f32 %v3814, 0.0
    %v3820 = vsel %vm2052, %v3817, 0
    %v3823 = vsel %vm2052, %v3818, 0
    %3825 = vmatprep.subr.mxu0 0.0
    %3826 = vmatpush1.msra.mxu0 0.0
    %3827 = vmatprep.subr.mxu0 0.0
    %3828 = vmatpush1.msra.mxu0 0.0
    %3829 = vmatprep.subr.mxu0 0.0
    %3830 = vmatpush1.msra.mxu0 0.0
    %3831 = vmatprep.subr.mxu0 0.0
    %3832 = vmatpush1.msra.mxu0 0.0
    %3833 = vmatprep.subr.mxu0 0.0
    %3834 = vmatpush1.msra.mxu0 0.0
    %3835 = vmatprep.subr.mxu0 0.0
    %3836 = vmatpush1.msra.mxu0 0.0
    %3837 = vmatprep.subr.mxu0 0.0
    %3838 = vmatpush1.msra.mxu0 0.0
    %3839 = vmatprep.subr.mxu0 0.0
    %3840 = vmatpush1.msra.mxu0 0.0
    %3841 = vmatprep.subr.mxu0 0.0
    %3842 = vmatpush1.msra.mxu0 %v377
    %3843 = vmatprep.subr.mxu0 0.0
    %3844 = vmatpush1.msra.mxu0 %v376
    %3845 = vmatprep.subr.mxu0 0.0
    %3846 = vmatpush1.msra.mxu0 %v375
    %3847 = vmatprep.subr.mxu0 0.0
    %3848 = vmatpush1.msra.mxu0 %v374
    %3849 = vmatprep.subr.mxu0 0.0
    %3850 = vmatpush1.msra.mxu0 %v373
    %3851 = vmatprep.subr.mxu0 0.0
    %3852 = vmatpush1.msra.mxu0 %v372
    %3853 = vmatprep.subr.mxu0 0.0
    %3854 = vmatpush1.msra.mxu0 %v371
    %3855 = vmatprep.subr.mxu0 0.0
    %3856 = vmatpush1.msra.mxu0 %v370
    %3857 = vmatprep.subr.mxu0 0.0
    %3858 = vmatpush2.msra.mxu0 0.0
    %3859 = vmatprep.subr.mxu0 0.0
    %3860 = vmatpush2.msra.mxu0 0.0
    %3861 = vmatprep.subr.mxu0 0.0
    %3862 = vmatpush2.msra.mxu0 0.0
    %3863 = vmatprep.subr.mxu0 0.0
    %3864 = vmatpush2.msra.mxu0 0.0
    %3865 = vmatprep.subr.mxu0 0.0
    %3866 = vmatpush2.msra.mxu0 0.0
    %3867 = vmatprep.subr.mxu0 0.0
    %3868 = vmatpush2.msra.mxu0 0.0
    %3869 = vmatprep.subr.mxu0 0.0
    %3870 = vmatpush2.msra.mxu0 0.0
    %3871 = vmatprep.subr.mxu0 0.0
    %3872 = vmatpush2.msra.mxu0 0.0
    %3873 = vmatprep.subr.mxu0 0.0
    %3874 = vmatpush2.msra.mxu0 0.0
    %3875 = vmatprep.subr.mxu0 0.0
    %3876 = vmatpush2.msra.mxu0 0.0
    %3877 = vmatprep.subr.mxu0 0.0
    %3878 = vmatpush2.msra.mxu0 0.0
    %3879 = vmatprep.subr.mxu0 0.0
    %3880 = vmatpush2.msra.mxu0 0.0
    %3881 = vmatprep.subr.mxu0 0.0
    %3882 = vmatpush2.msra.mxu0 0.0
    %3883 = vmatprep.subr.mxu0 0.0
    %3884 = vmatpush2.msra.mxu0 0.0
    %3885 = vmatprep.subr.mxu0 0.0
    %3886 = vmatpush2.msra.mxu0 0.0
    %3887 = vmatprep.subr.mxu0 0.0
    %3888 = vmatpush2.msra.mxu0 0.0
    %3889 = vmatprep.mubr.f32.mxu0 0.0
    %3890 = vmatmul.mubr.f32.gmra.mxu0 %v3820
    %v3891 = vpop.f32.mrf.mxu0
    %v3892 = vadd.f32 0.0, %v3891
    %v3893 = vpop.f32.mrf.mxu0
    %3894 = vmatprep.mubr.f32.mxu0 0.0
    %3895 = vmatmul.mubr.f32.gmra.mxu0 %v3823
    %v3896 = vpop.f32.mrf.mxu0
    %v3897 = vadd.f32 0.0, %v3896
    %v3898 = vpop.f32.mrf.mxu0
    %3899 = vdwg.mxu0
    %v3900 = vadd.f32 %v2176, %v3892
    %v3901 = vadd.f32 %v2177, %v3897
    %v3902 = vsel %vm388, %v3900, 0.0
    %3903 = vadd.xlane.f32.xlu0 %v3902
    %v3904 = vpop.xlane.xlu0 %3903
    %v3905 = vsel %vm388, %v3901, 0.0
    %3906 = vadd.xlane.f32.xlu0 %v3905
    %v3907 = vpop.xlane.xlu0 %3906
    %v3908 = vmul.f32 %v3904, %v1932
    %v3909 = vmul.f32 %v3907, %v1932
    %v3910 = vsub.f32 %v3900, %v3908
    %v3911 = vsub.f32 %v3901, %v3909
    %v3912 = vmul.f32 %v3910, %v3910
    %v3913 = vmul.f32 %v3911, %v3911
    %v3914 = vsel %vm388, %v3912, 0.0
    %3915 = vadd.xlane.f32.xlu0 %v3914
    %v3916 = vpop.xlane.xlu0 %3915
    %v3917 = vsel %vm388, %v3913, 0.0
    %3918 = vadd.xlane.f32.xlu0 %v3917
    %v3919 = vpop.xlane.xlu0 %3918
    %v3920 = vmul.f32 %v3916, %v1932
    %v3921 = vmul.f32 %v3919, %v1932
    %v3922 = vadd.f32 %v3920, 1e-05
    %v3923 = vadd.f32 %v3921, 1e-05
    %v3924 = vrsqrt.pop %v3922
    %v3925 = vrsqrt.pop %v3923
    %v3926 = vmul.f32 %v3910, %v3924
    %v3927 = vmul.f32 %v3911, %v3925
    %v3928 = vmul.f32 %v3926, %v2166
    %v3929 = vmul.f32 %v3927, %v2166
    %v3930 = vadd.f32 %v3928, %v2174
    %v3931 = vadd.f32 %v3929, %v2174
    %3932 = vst.msk [vmem:[#allocation29] sm:$0xff] %vm388, %v3930
    %3933 = vst.msk [vmem:[#allocation29 + $0x8] sm:$0xff] %vm388, %v3931
    %v3934 = vld [vmem:[#allocation5] sm:$0xff]
    %v3935 = vld [vmem:[#allocation5 + $0x8] sm:$0xff]
    %v3936 = vld [vmem:[%s25] sm:$0xff]
    %v3937 = vld [vmem:[%s25 + $0x8] sm:$0xff]
    %v3938 = vld [vmem:[%s25 + $0x10] sm:$0xff]
    %v3939 = vld [vmem:[%s25 + $0x18] sm:$0xff]
    %v3940 = vld [vmem:[#allocation7] sm:$0x1]
    %v3941 = vld [vmem:[%s29] sm:$0xff]
    %v3942 = vld [vmem:[%s29 + $0x8] sm:$0xff]
    %v3943 = vld [vmem:[%s29 + $0x10] sm:$0xff]
    %v3944 = vld [vmem:[%s29 + $0x18] sm:$0xff]
    %v3945 = vld [vmem:[#allocation8] sm:$0x1]
    %v3946 = vld [vmem:[#allocation10] sm:$0xff]
    %v3947 = vld [vmem:[#allocation10 + $0x8] sm:$0xff]
    %v3948 = vld [vmem:[#allocation10 + $0x10] sm:$0xff]
    %v3949 = vld [vmem:[#allocation10 + $0x18] sm:$0xff]
    %v3950 = vld [vmem:[#allocation11] sm:$0x1]
    %v3951 = vld [vmem:[#allocation13] sm:$0xff]
    %v3952 = vld [vmem:[#allocation13 + $0x8] sm:$0xff]
    %v3953 = vld [vmem:[#allocation13 + $0x10] sm:$0xff]
    %v3954 = vld [vmem:[#allocation13 + $0x18] sm:$0xff]
    %v3955 = vld [vmem:[#allocation14] sm:$0x1]
    %v3956 = vld [vmem:[#allocation16] sm:$0xff]
    %v3957 = vld [vmem:[#allocation16 + $0x8] sm:$0xff]
    %v3958 = vld [vmem:[#allocation16 + $0x10] sm:$0xff]
    %v3959 = vld [vmem:[#allocation16 + $0x18] sm:$0xff]
    %v3960 = vld [vmem:[#allocation17] sm:$0x1]
    %v3961 = vld [vmem:[#allocation19] sm:$0xff]
    %v3962 = vld [vmem:[#allocation19 + $0x8] sm:$0xff]
    %v3963 = vld [vmem:[#allocation19 + $0x10] sm:$0xff]
    %v3964 = vld [vmem:[#allocation19 + $0x18] sm:$0xff]
    %v3965 = vld [vmem:[%s47] sm:$0xff]
    %v3966 = vld [vmem:[%s47 + $0x8] sm:$0xff]
    %v3967 = vld [vmem:[%s47 + $0x10] sm:$0xff]
    %v3968 = vld [vmem:[%s47 + $0x18] sm:$0xff]
    %v3969 = vld [vmem:[%s47 + $0x20] sm:$0xff]
    %v3970 = vld [vmem:[%s47 + $0x28] sm:$0xff]
    %v3971 = vld [vmem:[%s47 + $0x30] sm:$0xff]
    %v3972 = vld [vmem:[%s47 + $0x38] sm:$0xff]
    %v3973 = vld [vmem:[#allocation20] sm:$0x1]
    %v3974 = vld [vmem:[#allocation22] sm:$0x1]
    %v3975 = vld [vmem:[#allocation23] sm:$0x1]
    %v3976 = vld [vmem:[#allocation25] sm:$0x1]
    %v3977 = vld [vmem:[#allocation26] sm:$0x1]
    %v3978 = vld [vmem:[#allocation28] sm:$0x1]
    %v3980 = vlaneseq
    %v3981 = vshrl.u32 %v3980, 7
    %v3982 = vsub.s32 0, %v3981
    %v3983 = vrot.slane %v3955, %v3982
    %v3986 = vsel %vm388, %v3930, 0
    %v3989 = vsel %vm388, %v3931, 0
    %3991 = vmatprep.subr.mxu0 0.0
    %3992 = vmatpush1.msra.mxu0 0.0
    %3993 = vmatprep.subr.mxu0 0.0
    %3994 = vmatpush1.msra.mxu0 0.0
    %3995 = vmatprep.subr.mxu0 0.0
    %3996 = vmatpush1.msra.mxu0 0.0
    %3997 = vmatprep.subr.mxu0 0.0
    %3998 = vmatpush1.msra.mxu0 0.0
    %3999 = vmatprep.subr.mxu0 0.0
    %4000 = vmatpush1.msra.mxu0 0.0
    %4001 = vmatprep.subr.mxu0 0.0
    %4002 = vmatpush1.msra.mxu0 0.0
    %4003 = vmatprep.subr.mxu0 0.0
    %4004 = vmatpush1.msra.mxu0 0.0
    %4005 = vmatprep.subr.mxu0 0.0
    %4006 = vmatpush1.msra.mxu0 0.0
    %4007 = vmatprep.subr.mxu0 0.0
    %4008 = vmatpush1.msra.mxu0 0.0
    %4009 = vmatprep.subr.mxu0 0.0
    %4010 = vmatpush1.msra.mxu0 0.0
    %4011 = vmatprep.subr.mxu0 0.0
    %4012 = vmatpush1.msra.mxu0 0.0
    %4013 = vmatprep.subr.mxu0 0.0
    %4014 = vmatpush1.msra.mxu0 0.0
    %4015 = vmatprep.subr.mxu0 0.0
    %4016 = vmatpush1.msra.mxu0 %v3954
    %4017 = vmatprep.subr.mxu0 0.0
    %4018 = vmatpush1.msra.mxu0 %v3953
    %4019 = vmatprep.subr.mxu0 0.0
    %4020 = vmatpush1.msra.mxu0 %v3952
    %4021 = vmatprep.subr.mxu0 0.0
    %4022 = vmatpush1.msra.mxu0 %v3951
    %4023 = vmatprep.subr.mxu0 0.0
    %4024 = vmatpush2.msra.mxu0 0.0
    %4025 = vmatprep.subr.mxu0 0.0
    %4026 = vmatpush2.msra.mxu0 0.0
    %4027 = vmatprep.subr.mxu0 0.0
    %4028 = vmatpush2.msra.mxu0 0.0
    %4029 = vmatprep.subr.mxu0 0.0
    %4030 = vmatpush2.msra.mxu0 0.0
    %4031 = vmatprep.subr.mxu0 0.0
    %4032 = vmatpush2.msra.mxu0 0.0
    %4033 = vmatprep.subr.mxu0 0.0
    %4034 = vmatpush2.msra.mxu0 0.0
    %4035 = vmatprep.subr.mxu0 0.0
    %4036 = vmatpush2.msra.mxu0 0.0
    %4037 = vmatprep.subr.mxu0 0.0
    %4038 = vmatpush2.msra.mxu0 0.0
    %4039 = vmatprep.subr.mxu0 0.0
    %4040 = vmatpush2.msra.mxu0 0.0
    %4041 = vmatprep.subr.mxu0 0.0
    %4042 = vmatpush2.msra.mxu0 0.0
    %4043 = vmatprep.subr.mxu0 0.0
    %4044 = vmatpush2.msra.mxu0 0.0
    %4045 = vmatprep.subr.mxu0 0.0
    %4046 = vmatpush2.msra.mxu0 0.0
    %4047 = vmatprep.subr.mxu0 0.0
    %4048 = vmatpush2.msra.mxu0 0.0
    %4049 = vmatprep.subr.mxu0 0.0
    %4050 = vmatpush2.msra.mxu0 0.0
    %4051 = vmatprep.subr.mxu0 0.0
    %4052 = vmatpush2.msra.mxu0 0.0
    %4053 = vmatprep.subr.mxu0 0.0
    %4054 = vmatpush2.msra.mxu0 0.0
    %4055 = vmatprep.mubr.f32.mxu0 0.0
    %4056 = vmatmul.mubr.f32.gmra.mxu0 %v3986
    %v4057 = vpop.f32.mrf.mxu0
    %v4058 = vadd.f32 %v3983, %v4057
    %v4059 = vpop.f32.mrf.mxu0
    %4060 = vmatprep.mubr.f32.mxu0 0.0
    %4061 = vmatmul.mubr.f32.gmra.mxu0 %v3989
    %v4062 = vpop.f32.mrf.mxu0
    %v4063 = vadd.f32 %v3983, %v4062
    %v4064 = vpop.f32.mrf.mxu0
    %4065 = vdwg.mxu0
    %4068 = vrot.lane.b32.xlu0 %v4058, 120
    %v4069 = vpop.permute.xlu0 %4068
    %4070 = vrot.lane.b32.xlu0 %v4063, 120
    %v4071 = vpop.permute.xlu0 %4070
    %4072 = vrot.lane.b32.xlu0 %v4058, 112
    %v4073 = vpop.permute.xlu0 %4072
    %4074 = vrot.lane.b32.xlu0 %v4063, 112
    %v4075 = vpop.permute.xlu0 %4074
    %4076 = vrot.lane.b32.xlu0 %v4058, 104
    %v4077 = vpop.permute.xlu0 %4076
    %4078 = vrot.lane.b32.xlu0 %v4063, 104
    %v4079 = vpop.permute.xlu0 %4078
    %v4081 = vlaneseq
    %v4082 = vshrl.u32 %v4081, 7
    %v4083 = vsub.s32 0, %v4082
    %v4084 = vrot.slane %v3940, %v4083
    %v4087 = vsel %vm388, %v3934, 0
    %v4090 = vsel %vm388, %v3935, 0
    %4092 = vmatprep.subr.mxu0 0.0
    %4093 = vmatpush1.msra.mxu0 0.0
    %4094 = vmatprep.subr.mxu0 0.0
    %4095 = vmatpush1.msra.mxu0 0.0
    %4096 = vmatprep.subr.mxu0 0.0
    %4097 = vmatpush1.msra.mxu0 0.0
    %4098 = vmatprep.subr.mxu0 0.0
    %4099 = vmatpush1.msra.mxu0 0.0
    %4100 = vmatprep.subr.mxu0 0.0
    %4101 = vmatpush1.msra.mxu0 0.0
    %4102 = vmatprep.subr.mxu0 0.0
    %4103 = vmatpush1.msra.mxu0 0.0
    %4104 = vmatprep.subr.mxu0 0.0
    %4105 = vmatpush1.msra.mxu0 0.0
    %4106 = vmatprep.subr.mxu0 0.0
    %4107 = vmatpush1.msra.mxu0 0.0
    %4108 = vmatprep.subr.mxu0 0.0
    %4109 = vmatpush1.msra.mxu0 0.0
    %4110 = vmatprep.subr.mxu0 0.0
    %4111 = vmatpush1.msra.mxu0 0.0
    %4112 = vmatprep.subr.mxu0 0.0
    %4113 = vmatpush1.msra.mxu0 0.0
    %4114 = vmatprep.subr.mxu0 0.0
    %4115 = vmatpush1.msra.mxu0 0.0
    %4116 = vmatprep.subr.mxu0 0.0
    %4117 = vmatpush1.msra.mxu0 %v3939
    %4118 = vmatprep.subr.mxu0 0.0
    %4119 = vmatpush1.msra.mxu0 %v3938
    %4120 = vmatprep.subr.mxu0 0.0
    %4121 = vmatpush1.msra.mxu0 %v3937
    %4122 = vmatprep.subr.mxu0 0.0
    %4123 = vmatpush1.msra.mxu0 %v3936
    %4124 = vmatprep.subr.mxu0 0.0
    %4125 = vmatpush2.msra.mxu0 0.0
    %4126 = vmatprep.subr.mxu0 0.0
    %4127 = vmatpush2.msra.mxu0 0.0
    %4128 = vmatprep.subr.mxu0 0.0
    %4129 = vmatpush2.msra.mxu0 0.0
    %4130 = vmatprep.subr.mxu0 0.0
    %4131 = vmatpush2.msra.mxu0 0.0
    %4132 = vmatprep.subr.mxu0 0.0
    %4133 = vmatpush2.msra.mxu0 0.0
    %4134 = vmatprep.subr.mxu0 0.0
    %4135 = vmatpush2.msra.mxu0 0.0
    %4136 = vmatprep.subr.mxu0 0.0
    %4137 = vmatpush2.msra.mxu0 0.0
    %4138 = vmatprep.subr.mxu0 0.0
    %4139 = vmatpush2.msra.mxu0 0.0
    %4140 = vmatprep.subr.mxu0 0.0
    %4141 = vmatpush2.msra.mxu0 0.0
    %4142 = vmatprep.subr.mxu0 0.0
    %4143 = vmatpush2.msra.mxu0 0.0
    %4144 = vmatprep.subr.mxu0 0.0
    %4145 = vmatpush2.msra.mxu0 0.0
    %4146 = vmatprep.subr.mxu0 0.0
    %4147 = vmatpush2.msra.mxu0 0.0
    %4148 = vmatprep.subr.mxu0 0.0
    %4149 = vmatpush2.msra.mxu0 0.0
    %4150 = vmatprep.subr.mxu0 0.0
    %4151 = vmatpush2.msra.mxu0 0.0
    %4152 = vmatprep.subr.mxu0 0.0
    %4153 = vmatpush2.msra.mxu0 0.0
    %4154 = vmatprep.subr.mxu0 0.0
    %4155 = vmatpush2.msra.mxu0 0.0
    %4156 = vmatprep.mubr.f32.mxu0 0.0
    %4157 = vmatmul.mubr.f32.gmra.mxu0 %v4087
    %v4158 = vpop.f32.mrf.mxu0
    %v4159 = vadd.f32 %v4084, %v4158
    %v4160 = vpop.f32.mrf.mxu0
    %4161 = vmatprep.mubr.f32.mxu0 0.0
    %4162 = vmatmul.mubr.f32.gmra.mxu0 %v4090
    %v4163 = vpop.f32.mrf.mxu0
    %v4164 = vadd.f32 %v4084, %v4163
    %v4165 = vpop.f32.mrf.mxu0
    %4166 = vdwg.mxu0
    %4169 = vrot.lane.b32.xlu0 %v4159, 120
    %v4170 = vpop.permute.xlu0 %4169
    %4171 = vrot.lane.b32.xlu0 %v4164, 120
    %v4172 = vpop.permute.xlu0 %4171
    %4173 = vrot.lane.b32.xlu0 %v4159, 112
    %v4174 = vpop.permute.xlu0 %4173
    %4175 = vrot.lane.b32.xlu0 %v4164, 112
    %v4176 = vpop.permute.xlu0 %4175
    %4177 = vrot.lane.b32.xlu0 %v4159, 104
    %v4178 = vpop.permute.xlu0 %4177
    %4179 = vrot.lane.b32.xlu0 %v4164, 104
    %v4180 = vpop.permute.xlu0 %4179
    %4181 = vrot.lane.b32.xlu0 %v4159, 96
    %v4182 = vpop.permute.xlu0 %4181
    %v4183 = vsel %vm486, %v4159, 0
    %v4185 = vsel %vm486, %v4182, 0
    %4187 = vmatprep.subr.mxu0 0.0
    %4188 = vmatpush1.xpose.msra.mxu0 0.0
    %4189 = vmatprep.subr.mxu0 0.0
    %4190 = vmatpush1.xpose.msra.mxu0 0.0
    %4191 = vmatprep.subr.mxu0 0.0
    %4192 = vmatpush1.xpose.msra.mxu0 0.0
    %4193 = vmatprep.subr.mxu0 0.0
    %4194 = vmatpush1.xpose.msra.mxu0 0.0
    %4195 = vmatprep.subr.mxu0 0.0
    %4196 = vmatpush1.xpose.msra.mxu0 0.0
    %4197 = vmatprep.subr.mxu0 0.0
    %4198 = vmatpush1.xpose.msra.mxu0 0.0
    %4199 = vmatprep.subr.mxu0 0.0
    %4200 = vmatpush1.xpose.msra.mxu0 0.0
    %4201 = vmatprep.subr.mxu0 0.0
    %4202 = vmatpush1.xpose.msra.mxu0 0.0
    %4203 = vmatprep.subr.mxu0 0.0
    %4204 = vmatpush1.xpose.msra.mxu0 0.0
    %4205 = vmatprep.subr.mxu0 0.0
    %4206 = vmatpush1.xpose.msra.mxu0 0.0
    %4207 = vmatprep.subr.mxu0 0.0
    %4208 = vmatpush1.xpose.msra.mxu0 0.0
    %4209 = vmatprep.subr.mxu0 0.0
    %4210 = vmatpush1.xpose.msra.mxu0 0.0
    %4211 = vmatprep.subr.mxu0 0.0
    %4212 = vmatpush1.xpose.msra.mxu0 0.0
    %4213 = vmatprep.subr.mxu0 0.0
    %4214 = vmatpush1.xpose.msra.mxu0 0.0
    %4215 = vmatprep.subr.mxu0 0.0
    %4216 = vmatpush1.xpose.msra.mxu0 0.0
    %4217 = vmatprep.subr.mxu0 0.0
    %4218 = vmatpush1.xpose.msra.mxu0 %v4185
    %4219 = vmatprep.subr.mxu0 0.0
    %4220 = vmatpush2.xpose.msra.mxu0 0.0
    %4221 = vmatprep.subr.mxu0 0.0
    %4222 = vmatpush2.xpose.msra.mxu0 0.0
    %4223 = vmatprep.subr.mxu0 0.0
    %4224 = vmatpush2.xpose.msra.mxu0 0.0
    %4225 = vmatprep.subr.mxu0 0.0
    %4226 = vmatpush2.xpose.msra.mxu0 0.0
    %4227 = vmatprep.subr.mxu0 0.0
    %4228 = vmatpush2.xpose.msra.mxu0 0.0
    %4229 = vmatprep.subr.mxu0 0.0
    %4230 = vmatpush2.xpose.msra.mxu0 0.0
    %4231 = vmatprep.subr.mxu0 0.0
    %4232 = vmatpush2.xpose.msra.mxu0 0.0
    %4233 = vmatprep.subr.mxu0 0.0
    %4234 = vmatpush2.xpose.msra.mxu0 0.0
    %4235 = vmatprep.subr.mxu0 0.0
    %4236 = vmatpush2.xpose.msra.mxu0 0.0
    %4237 = vmatprep.subr.mxu0 0.0
    %4238 = vmatpush2.xpose.msra.mxu0 0.0
    %4239 = vmatprep.subr.mxu0 0.0
    %4240 = vmatpush2.xpose.msra.mxu0 0.0
    %4241 = vmatprep.subr.mxu0 0.0
    %4242 = vmatpush2.xpose.msra.mxu0 0.0
    %4243 = vmatprep.subr.mxu0 0.0
    %4244 = vmatpush2.xpose.msra.mxu0 0.0
    %4245 = vmatprep.subr.mxu0 0.0
    %4246 = vmatpush2.xpose.msra.mxu0 0.0
    %4247 = vmatprep.subr.mxu0 0.0
    %4248 = vmatpush2.xpose.msra.mxu0 0.0
    %4249 = vmatprep.subr.mxu0 0.0
    %4250 = vmatpush2.xpose.msra.mxu0 0.0
    %4251 = vmatprep.mubr.f32.mxu0 0.0
    %4252 = vmatmul.mubr.f32.gmra.mxu0 %v4183
    %v4253 = vpop.f32.mrf.mxu0
    %v4254 = vadd.f32 0.0, %v4253
    %v4255 = vpop.f32.mrf.mxu0
    %4256 = vdwg.mxu0
    %4257 = vrot.lane.b32.xlu0 %v4170, 96
    %v4258 = vpop.permute.xlu0 %4257
    %v4259 = vsel %vm486, %v4170, 0
    %v4261 = vsel %vm486, %v4258, 0
    %4263 = vmatprep.subr.mxu0 0.0
    %4264 = vmatpush1.xpose.msra.mxu0 0.0
    %4265 = vmatprep.subr.mxu0 0.0
    %4266 = vmatpush1.xpose.msra.mxu0 0.0
    %4267 = vmatprep.subr.mxu0 0.0
    %4268 = vmatpush1.xpose.msra.mxu0 0.0
    %4269 = vmatprep.subr.mxu0 0.0
    %4270 = vmatpush1.xpose.msra.mxu0 0.0
    %4271 = vmatprep.subr.mxu0 0.0
    %4272 = vmatpush1.xpose.msra.mxu0 0.0
    %4273 = vmatprep.subr.mxu0 0.0
    %4274 = vmatpush1.xpose.msra.mxu0 0.0
    %4275 = vmatprep.subr.mxu0 0.0
    %4276 = vmatpush1.xpose.msra.mxu0 0.0
    %4277 = vmatprep.subr.mxu0 0.0
    %4278 = vmatpush1.xpose.msra.mxu0 0.0
    %4279 = vmatprep.subr.mxu0 0.0
    %4280 = vmatpush1.xpose.msra.mxu0 0.0
    %4281 = vmatprep.subr.mxu0 0.0
    %4282 = vmatpush1.xpose.msra.mxu0 0.0
    %4283 = vmatprep.subr.mxu0 0.0
    %4284 = vmatpush1.xpose.msra.mxu0 0.0
    %4285 = vmatprep.subr.mxu0 0.0
    %4286 = vmatpush1.xpose.msra.mxu0 0.0
    %4287 = vmatprep.subr.mxu0 0.0
    %4288 = vmatpush1.xpose.msra.mxu0 0.0
    %4289 = vmatprep.subr.mxu0 0.0
    %4290 = vmatpush1.xpose.msra.mxu0 0.0
    %4291 = vmatprep.subr.mxu0 0.0
    %4292 = vmatpush1.xpose.msra.mxu0 0.0
    %4293 = vmatprep.subr.mxu0 0.0
    %4294 = vmatpush1.xpose.msra.mxu0 %v4261
    %4295 = vmatprep.subr.mxu0 0.0
    %4296 = vmatpush2.xpose.msra.mxu0 0.0
    %4297 = vmatprep.subr.mxu0 0.0
    %4298 = vmatpush2.xpose.msra.mxu0 0.0
    %4299 = vmatprep.subr.mxu0 0.0
    %4300 = vmatpush2.xpose.msra.mxu0 0.0
    %4301 = vmatprep.subr.mxu0 0.0
    %4302 = vmatpush2.xpose.msra.mxu0 0.0
    %4303 = vmatprep.subr.mxu0 0.0
    %4304 = vmatpush2.xpose.msra.mxu0 0.0
    %4305 = vmatprep.subr.mxu0 0.0
    %4306 = vmatpush2.xpose.msra.mxu0 0.0
    %4307 = vmatprep.subr.mxu0 0.0
    %4308 = vmatpush2.xpose.msra.mxu0 0.0
    %4309 = vmatprep.subr.mxu0 0.0
    %4310 = vmatpush2.xpose.msra.mxu0 0.0
    %4311 = vmatprep.subr.mxu0 0.0
    %4312 = vmatpush2.xpose.msra.mxu0 0.0
    %4313 = vmatprep.subr.mxu0 0.0
    %4314 = vmatpush2.xpose.msra.mxu0 0.0
    %4315 = vmatprep.subr.mxu0 0.0
    %4316 = vmatpush2.xpose.msra.mxu0 0.0
    %4317 = vmatprep.subr.mxu0 0.0
    %4318 = vmatpush2.xpose.msra.mxu0 0.0
    %4319 = vmatprep.subr.mxu0 0.0
    %4320 = vmatpush2.xpose.msra.mxu0 0.0
    %4321 = vmatprep.subr.mxu0 0.0
    %4322 = vmatpush2.xpose.msra.mxu0 0.0
    %4323 = vmatprep.subr.mxu0 0.0
    %4324 = vmatpush2.xpose.msra.mxu0 0.0
    %4325 = vmatprep.subr.mxu0 0.0
    %4326 = vmatpush2.xpose.msra.mxu0 0.0
    %4327 = vmatprep.mubr.f32.mxu0 0.0
    %4328 = vmatmul.mubr.f32.gmra.mxu0 %v4259
    %v4329 = vpop.f32.mrf.mxu0
    %v4330 = vadd.f32 0.0, %v4329
    %v4331 = vpop.f32.mrf.mxu0
    %4332 = vdwg.mxu0
    %4333 = vrot.lane.b32.xlu0 %v4174, 96
    %v4334 = vpop.permute.xlu0 %4333
    %v4335 = vsel %vm486, %v4174, 0
    %v4337 = vsel %vm486, %v4334, 0
    %4339 = vmatprep.subr.mxu0 0.0
    %4340 = vmatpush1.xpose.msra.mxu0 0.0
    %4341 = vmatprep.subr.mxu0 0.0
    %4342 = vmatpush1.xpose.msra.mxu0 0.0
    %4343 = vmatprep.subr.mxu0 0.0
    %4344 = vmatpush1.xpose.msra.mxu0 0.0
    %4345 = vmatprep.subr.mxu0 0.0
    %4346 = vmatpush1.xpose.msra.mxu0 0.0
    %4347 = vmatprep.subr.mxu0 0.0
    %4348 = vmatpush1.xpose.msra.mxu0 0.0
    %4349 = vmatprep.subr.mxu0 0.0
    %4350 = vmatpush1.xpose.msra.mxu0 0.0
    %4351 = vmatprep.subr.mxu0 0.0
    %4352 = vmatpush1.xpose.msra.mxu0 0.0
    %4353 = vmatprep.subr.mxu0 0.0
    %4354 = vmatpush1.xpose.msra.mxu0 0.0
    %4355 = vmatprep.subr.mxu0 0.0
    %4356 = vmatpush1.xpose.msra.mxu0 0.0
    %4357 = vmatprep.subr.mxu0 0.0
    %4358 = vmatpush1.xpose.msra.mxu0 0.0
    %4359 = vmatprep.subr.mxu0 0.0
    %4360 = vmatpush1.xpose.msra.mxu0 0.0
    %4361 = vmatprep.subr.mxu0 0.0
    %4362 = vmatpush1.xpose.msra.mxu0 0.0
    %4363 = vmatprep.subr.mxu0 0.0
    %4364 = vmatpush1.xpose.msra.mxu0 0.0
    %4365 = vmatprep.subr.mxu0 0.0
    %4366 = vmatpush1.xpose.msra.mxu0 0.0
    %4367 = vmatprep.subr.mxu0 0.0
    %4368 = vmatpush1.xpose.msra.mxu0 0.0
    %4369 = vmatprep.subr.mxu0 0.0
    %4370 = vmatpush1.xpose.msra.mxu0 %v4337
    %4371 = vmatprep.subr.mxu0 0.0
    %4372 = vmatpush2.xpose.msra.mxu0 0.0
    %4373 = vmatprep.subr.mxu0 0.0
    %4374 = vmatpush2.xpose.msra.mxu0 0.0
    %4375 = vmatprep.subr.mxu0 0.0
    %4376 = vmatpush2.xpose.msra.mxu0 0.0
    %4377 = vmatprep.subr.mxu0 0.0
    %4378 = vmatpush2.xpose.msra.mxu0 0.0
    %4379 = vmatprep.subr.mxu0 0.0
    %4380 = vmatpush2.xpose.msra.mxu0 0.0
    %4381 = vmatprep.subr.mxu0 0.0
    %4382 = vmatpush2.xpose.msra.mxu0 0.0
    %4383 = vmatprep.subr.mxu0 0.0
    %4384 = vmatpush2.xpose.msra.mxu0 0.0
    %4385 = vmatprep.subr.mxu0 0.0
    %4386 = vmatpush2.xpose.msra.mxu0 0.0
    %4387 = vmatprep.subr.mxu0 0.0
    %4388 = vmatpush2.xpose.msra.mxu0 0.0
    %4389 = vmatprep.subr.mxu0 0.0
    %4390 = vmatpush2.xpose.msra.mxu0 0.0
    %4391 = vmatprep.subr.mxu0 0.0
    %4392 = vmatpush2.xpose.msra.mxu0 0.0
    %4393 = vmatprep.subr.mxu0 0.0
    %4394 = vmatpush2.xpose.msra.mxu0 0.0
    %4395 = vmatprep.subr.mxu0 0.0
    %4396 = vmatpush2.xpose.msra.mxu0 0.0
    %4397 = vmatprep.subr.mxu0 0.0
    %4398 = vmatpush2.xpose.msra.mxu0 0.0
    %4399 = vmatprep.subr.mxu0 0.0
    %4400 = vmatpush2.xpose.msra.mxu0 0.0
    %4401 = vmatprep.subr.mxu0 0.0
    %4402 = vmatpush2.xpose.msra.mxu0 0.0
    %4403 = vmatprep.mubr.f32.mxu0 0.0
    %4404 = vmatmul.mubr.f32.gmra.mxu0 %v4335
    %v4405 = vpop.f32.mrf.mxu0
    %v4406 = vadd.f32 0.0, %v4405
    %v4407 = vpop.f32.mrf.mxu0
    %4408 = vdwg.mxu0
    %4409 = vrot.lane.b32.xlu0 %v4178, 96
    %v4410 = vpop.permute.xlu0 %4409
    %v4411 = vsel %vm486, %v4178, 0
    %v4413 = vsel %vm486, %v4410, 0
    %4415 = vmatprep.subr.mxu0 0.0
    %4416 = vmatpush1.xpose.msra.mxu0 0.0
    %4417 = vmatprep.subr.mxu0 0.0
    %4418 = vmatpush1.xpose.msra.mxu0 0.0
    %4419 = vmatprep.subr.mxu0 0.0
    %4420 = vmatpush1.xpose.msra.mxu0 0.0
    %4421 = vmatprep.subr.mxu0 0.0
    %4422 = vmatpush1.xpose.msra.mxu0 0.0
    %4423 = vmatprep.subr.mxu0 0.0
    %4424 = vmatpush1.xpose.msra.mxu0 0.0
    %4425 = vmatprep.subr.mxu0 0.0
    %4426 = vmatpush1.xpose.msra.mxu0 0.0
    %4427 = vmatprep.subr.mxu0 0.0
    %4428 = vmatpush1.xpose.msra.mxu0 0.0
    %4429 = vmatprep.subr.mxu0 0.0
    %4430 = vmatpush1.xpose.msra.mxu0 0.0
    %4431 = vmatprep.subr.mxu0 0.0
    %4432 = vmatpush1.xpose.msra.mxu0 0.0
    %4433 = vmatprep.subr.mxu0 0.0
    %4434 = vmatpush1.xpose.msra.mxu0 0.0
    %4435 = vmatprep.subr.mxu0 0.0
    %4436 = vmatpush1.xpose.msra.mxu0 0.0
    %4437 = vmatprep.subr.mxu0 0.0
    %4438 = vmatpush1.xpose.msra.mxu0 0.0
    %4439 = vmatprep.subr.mxu0 0.0
    %4440 = vmatpush1.xpose.msra.mxu0 0.0
    %4441 = vmatprep.subr.mxu0 0.0
    %4442 = vmatpush1.xpose.msra.mxu0 0.0
    %4443 = vmatprep.subr.mxu0 0.0
    %4444 = vmatpush1.xpose.msra.mxu0 0.0
    %4445 = vmatprep.subr.mxu0 0.0
    %4446 = vmatpush1.xpose.msra.mxu0 %v4413
    %4447 = vmatprep.subr.mxu0 0.0
    %4448 = vmatpush2.xpose.msra.mxu0 0.0
    %4449 = vmatprep.subr.mxu0 0.0
    %4450 = vmatpush2.xpose.msra.mxu0 0.0
    %4451 = vmatprep.subr.mxu0 0.0
    %4452 = vmatpush2.xpose.msra.mxu0 0.0
    %4453 = vmatprep.subr.mxu0 0.0
    %4454 = vmatpush2.xpose.msra.mxu0 0.0
    %4455 = vmatprep.subr.mxu0 0.0
    %4456 = vmatpush2.xpose.msra.mxu0 0.0
    %4457 = vmatprep.subr.mxu0 0.0
    %4458 = vmatpush2.xpose.msra.mxu0 0.0
    %4459 = vmatprep.subr.mxu0 0.0
    %4460 = vmatpush2.xpose.msra.mxu0 0.0
    %4461 = vmatprep.subr.mxu0 0.0
    %4462 = vmatpush2.xpose.msra.mxu0 0.0
    %4463 = vmatprep.subr.mxu0 0.0
    %4464 = vmatpush2.xpose.msra.mxu0 0.0
    %4465 = vmatprep.subr.mxu0 0.0
    %4466 = vmatpush2.xpose.msra.mxu0 0.0
    %4467 = vmatprep.subr.mxu0 0.0
    %4468 = vmatpush2.xpose.msra.mxu0 0.0
    %4469 = vmatprep.subr.mxu0 0.0
    %4470 = vmatpush2.xpose.msra.mxu0 0.0
    %4471 = vmatprep.subr.mxu0 0.0
    %4472 = vmatpush2.xpose.msra.mxu0 0.0
    %4473 = vmatprep.subr.mxu0 0.0
    %4474 = vmatpush2.xpose.msra.mxu0 0.0
    %4475 = vmatprep.subr.mxu0 0.0
    %4476 = vmatpush2.xpose.msra.mxu0 0.0
    %4477 = vmatprep.subr.mxu0 0.0
    %4478 = vmatpush2.xpose.msra.mxu0 0.0
    %4479 = vmatprep.mubr.f32.mxu0 0.0
    %4480 = vmatmul.mubr.f32.gmra.mxu0 %v4411
    %v4481 = vpop.f32.mrf.mxu0
    %v4482 = vadd.f32 0.0, %v4481
    %v4483 = vpop.f32.mrf.mxu0
    %4484 = vdwg.mxu0
    %4485 = vrot.lane.b32.xlu0 %v4164, 96
    %v4486 = vpop.permute.xlu0 %4485
    %v4487 = vsel %vm486, %v4164, 0
    %v4489 = vsel %vm486, %v4486, 0
    %4491 = vmatprep.subr.mxu0 0.0
    %4492 = vmatpush1.xpose.msra.mxu0 0.0
    %4493 = vmatprep.subr.mxu0 0.0
    %4494 = vmatpush1.xpose.msra.mxu0 0.0
    %4495 = vmatprep.subr.mxu0 0.0
    %4496 = vmatpush1.xpose.msra.mxu0 0.0
    %4497 = vmatprep.subr.mxu0 0.0
    %4498 = vmatpush1.xpose.msra.mxu0 0.0
    %4499 = vmatprep.subr.mxu0 0.0
    %4500 = vmatpush1.xpose.msra.mxu0 0.0
    %4501 = vmatprep.subr.mxu0 0.0
    %4502 = vmatpush1.xpose.msra.mxu0 0.0
    %4503 = vmatprep.subr.mxu0 0.0
    %4504 = vmatpush1.xpose.msra.mxu0 0.0
    %4505 = vmatprep.subr.mxu0 0.0
    %4506 = vmatpush1.xpose.msra.mxu0 0.0
    %4507 = vmatprep.subr.mxu0 0.0
    %4508 = vmatpush1.xpose.msra.mxu0 0.0
    %4509 = vmatprep.subr.mxu0 0.0
    %4510 = vmatpush1.xpose.msra.mxu0 0.0
    %4511 = vmatprep.subr.mxu0 0.0
    %4512 = vmatpush1.xpose.msra.mxu0 0.0
    %4513 = vmatprep.subr.mxu0 0.0
    %4514 = vmatpush1.xpose.msra.mxu0 0.0
    %4515 = vmatprep.subr.mxu0 0.0
    %4516 = vmatpush1.xpose.msra.mxu0 0.0
    %4517 = vmatprep.subr.mxu0 0.0
    %4518 = vmatpush1.xpose.msra.mxu0 0.0
    %4519 = vmatprep.subr.mxu0 0.0
    %4520 = vmatpush1.xpose.msra.mxu0 0.0
    %4521 = vmatprep.subr.mxu0 0.0
    %4522 = vmatpush1.xpose.msra.mxu0 %v4489
    %4523 = vmatprep.subr.mxu0 0.0
    %4524 = vmatpush2.xpose.msra.mxu0 0.0
    %4525 = vmatprep.subr.mxu0 0.0
    %4526 = vmatpush2.xpose.msra.mxu0 0.0
    %4527 = vmatprep.subr.mxu0 0.0
    %4528 = vmatpush2.xpose.msra.mxu0 0.0
    %4529 = vmatprep.subr.mxu0 0.0
    %4530 = vmatpush2.xpose.msra.mxu0 0.0
    %4531 = vmatprep.subr.mxu0 0.0
    %4532 = vmatpush2.xpose.msra.mxu0 0.0
    %4533 = vmatprep.subr.mxu0 0.0
    %4534 = vmatpush2.xpose.msra.mxu0 0.0
    %4535 = vmatprep.subr.mxu0 0.0
    %4536 = vmatpush2.xpose.msra.mxu0 0.0
    %4537 = vmatprep.subr.mxu0 0.0
    %4538 = vmatpush2.xpose.msra.mxu0 0.0
    %4539 = vmatprep.subr.mxu0 0.0
    %4540 = vmatpush2.xpose.msra.mxu0 0.0
    %4541 = vmatprep.subr.mxu0 0.0
    %4542 = vmatpush2.xpose.msra.mxu0 0.0
    %4543 = vmatprep.subr.mxu0 0.0
    %4544 = vmatpush2.xpose.msra.mxu0 0.0
    %4545 = vmatprep.subr.mxu0 0.0
    %4546 = vmatpush2.xpose.msra.mxu0 0.0
    %4547 = vmatprep.subr.mxu0 0.0
    %4548 = vmatpush2.xpose.msra.mxu0 0.0
    %4549 = vmatprep.subr.mxu0 0.0
    %4550 = vmatpush2.xpose.msra.mxu0 0.0
    %4551 = vmatprep.subr.mxu0 0.0
    %4552 = vmatpush2.xpose.msra.mxu0 0.0
    %4553 = vmatprep.subr.mxu0 0.0
    %4554 = vmatpush2.xpose.msra.mxu0 0.0
    %4555 = vmatprep.mubr.f32.mxu0 0.0
    %4556 = vmatmul.mubr.f32.gmra.mxu0 %v4487
    %v4557 = vpop.f32.mrf.mxu0
    %v4558 = vadd.f32 0.0, %v4557
    %v4559 = vpop.f32.mrf.mxu0
    %4560 = vdwg.mxu0
    %4561 = vrot.lane.b32.xlu0 %v4172, 96
    %v4562 = vpop.permute.xlu0 %4561
    %v4563 = vsel %vm486, %v4172, 0
    %v4565 = vsel %vm486, %v4562, 0
    %4567 = vmatprep.subr.mxu0 0.0
    %4568 = vmatpush1.xpose.msra.mxu0 0.0
    %4569 = vmatprep.subr.mxu0 0.0
    %4570 = vmatpush1.xpose.msra.mxu0 0.0
    %4571 = vmatprep.subr.mxu0 0.0
    %4572 = vmatpush1.xpose.msra.mxu0 0.0
    %4573 = vmatprep.subr.mxu0 0.0
    %4574 = vmatpush1.xpose.msra.mxu0 0.0
    %4575 = vmatprep.subr.mxu0 0.0
    %4576 = vmatpush1.xpose.msra.mxu0 0.0
    %4577 = vmatprep.subr.mxu0 0.0
    %4578 = vmatpush1.xpose.msra.mxu0 0.0
    %4579 = vmatprep.subr.mxu0 0.0
    %4580 = vmatpush1.xpose.msra.mxu0 0.0
    %4581 = vmatprep.subr.mxu0 0.0
    %4582 = vmatpush1.xpose.msra.mxu0 0.0
    %4583 = vmatprep.subr.mxu0 0.0
    %4584 = vmatpush1.xpose.msra.mxu0 0.0
    %4585 = vmatprep.subr.mxu0 0.0
    %4586 = vmatpush1.xpose.msra.mxu0 0.0
    %4587 = vmatprep.subr.mxu0 0.0
    %4588 = vmatpush1.xpose.msra.mxu0 0.0
    %4589 = vmatprep.subr.mxu0 0.0
    %4590 = vmatpush1.xpose.msra.mxu0 0.0
    %4591 = vmatprep.subr.mxu0 0.0
    %4592 = vmatpush1.xpose.msra.mxu0 0.0
    %4593 = vmatprep.subr.mxu0 0.0
    %4594 = vmatpush1.xpose.msra.mxu0 0.0
    %4595 = vmatprep.subr.mxu0 0.0
    %4596 = vmatpush1.xpose.msra.mxu0 0.0
    %4597 = vmatprep.subr.mxu0 0.0
    %4598 = vmatpush1.xpose.msra.mxu0 %v4565
    %4599 = vmatprep.subr.mxu0 0.0
    %4600 = vmatpush2.xpose.msra.mxu0 0.0
    %4601 = vmatprep.subr.mxu0 0.0
    %4602 = vmatpush2.xpose.msra.mxu0 0.0
    %4603 = vmatprep.subr.mxu0 0.0
    %4604 = vmatpush2.xpose.msra.mxu0 0.0
    %4605 = vmatprep.subr.mxu0 0.0
    %4606 = vmatpush2.xpose.msra.mxu0 0.0
    %4607 = vmatprep.subr.mxu0 0.0
    %4608 = vmatpush2.xpose.msra.mxu0 0.0
    %4609 = vmatprep.subr.mxu0 0.0
    %4610 = vmatpush2.xpose.msra.mxu0 0.0
    %4611 = vmatprep.subr.mxu0 0.0
    %4612 = vmatpush2.xpose.msra.mxu0 0.0
    %4613 = vmatprep.subr.mxu0 0.0
    %4614 = vmatpush2.xpose.msra.mxu0 0.0
    %4615 = vmatprep.subr.mxu0 0.0
    %4616 = vmatpush2.xpose.msra.mxu0 0.0
    %4617 = vmatprep.subr.mxu0 0.0
    %4618 = vmatpush2.xpose.msra.mxu0 0.0
    %4619 = vmatprep.subr.mxu0 0.0
    %4620 = vmatpush2.xpose.msra.mxu0 0.0
    %4621 = vmatprep.subr.mxu0 0.0
    %4622 = vmatpush2.xpose.msra.mxu0 0.0
    %4623 = vmatprep.subr.mxu0 0.0
    %4624 = vmatpush2.xpose.msra.mxu0 0.0
    %4625 = vmatprep.subr.mxu0 0.0
    %4626 = vmatpush2.xpose.msra.mxu0 0.0
    %4627 = vmatprep.subr.mxu0 0.0
    %4628 = vmatpush2.xpose.msra.mxu0 0.0
    %4629 = vmatprep.subr.mxu0 0.0
    %4630 = vmatpush2.xpose.msra.mxu0 0.0
    %4631 = vmatprep.mubr.f32.mxu0 0.0
    %4632 = vmatmul.mubr.f32.gmra.mxu0 %v4563
    %v4633 = vpop.f32.mrf.mxu0
    %v4634 = vadd.f32 0.0, %v4633
    %v4635 = vpop.f32.mrf.mxu0
    %4636 = vdwg.mxu0
    %4637 = vrot.lane.b32.xlu0 %v4176, 96
    %v4638 = vpop.permute.xlu0 %4637
    %v4639 = vsel %vm486, %v4176, 0
    %v4641 = vsel %vm486, %v4638, 0
    %4643 = vmatprep.subr.mxu0 0.0
    %4644 = vmatpush1.xpose.msra.mxu0 0.0
    %4645 = vmatprep.subr.mxu0 0.0
    %4646 = vmatpush1.xpose.msra.mxu0 0.0
    %4647 = vmatprep.subr.mxu0 0.0
    %4648 = vmatpush1.xpose.msra.mxu0 0.0
    %4649 = vmatprep.subr.mxu0 0.0
    %4650 = vmatpush1.xpose.msra.mxu0 0.0
    %4651 = vmatprep.subr.mxu0 0.0
    %4652 = vmatpush1.xpose.msra.mxu0 0.0
    %4653 = vmatprep.subr.mxu0 0.0
    %4654 = vmatpush1.xpose.msra.mxu0 0.0
    %4655 = vmatprep.subr.mxu0 0.0
    %4656 = vmatpush1.xpose.msra.mxu0 0.0
    %4657 = vmatprep.subr.mxu0 0.0
    %4658 = vmatpush1.xpose.msra.mxu0 0.0
    %4659 = vmatprep.subr.mxu0 0.0
    %4660 = vmatpush1.xpose.msra.mxu0 0.0
    %4661 = vmatprep.subr.mxu0 0.0
    %4662 = vmatpush1.xpose.msra.mxu0 0.0
    %4663 = vmatprep.subr.mxu0 0.0
    %4664 = vmatpush1.xpose.msra.mxu0 0.0
    %4665 = vmatprep.subr.mxu0 0.0
    %4666 = vmatpush1.xpose.msra.mxu0 0.0
    %4667 = vmatprep.subr.mxu0 0.0
    %4668 = vmatpush1.xpose.msra.mxu0 0.0
    %4669 = vmatprep.subr.mxu0 0.0
    %4670 = vmatpush1.xpose.msra.mxu0 0.0
    %4671 = vmatprep.subr.mxu0 0.0
    %4672 = vmatpush1.xpose.msra.mxu0 0.0
    %4673 = vmatprep.subr.mxu0 0.0
    %4674 = vmatpush1.xpose.msra.mxu0 %v4641
    %4675 = vmatprep.subr.mxu0 0.0
    %4676 = vmatpush2.xpose.msra.mxu0 0.0
    %4677 = vmatprep.subr.mxu0 0.0
    %4678 = vmatpush2.xpose.msra.mxu0 0.0
    %4679 = vmatprep.subr.mxu0 0.0
    %4680 = vmatpush2.xpose.msra.mxu0 0.0
    %4681 = vmatprep.subr.mxu0 0.0
    %4682 = vmatpush2.xpose.msra.mxu0 0.0
    %4683 = vmatprep.subr.mxu0 0.0
    %4684 = vmatpush2.xpose.msra.mxu0 0.0
    %4685 = vmatprep.subr.mxu0 0.0
    %4686 = vmatpush2.xpose.msra.mxu0 0.0
    %4687 = vmatprep.subr.mxu0 0.0
    %4688 = vmatpush2.xpose.msra.mxu0 0.0
    %4689 = vmatprep.subr.mxu0 0.0
    %4690 = vmatpush2.xpose.msra.mxu0 0.0
    %4691 = vmatprep.subr.mxu0 0.0
    %4692 = vmatpush2.xpose.msra.mxu0 0.0
    %4693 = vmatprep.subr.mxu0 0.0
    %4694 = vmatpush2.xpose.msra.mxu0 0.0
    %4695 = vmatprep.subr.mxu0 0.0
    %4696 = vmatpush2.xpose.msra.mxu0 0.0
    %4697 = vmatprep.subr.mxu0 0.0
    %4698 = vmatpush2.xpose.msra.mxu0 0.0
    %4699 = vmatprep.subr.mxu0 0.0
    %4700 = vmatpush2.xpose.msra.mxu0 0.0
    %4701 = vmatprep.subr.mxu0 0.0
    %4702 = vmatpush2.xpose.msra.mxu0 0.0
    %4703 = vmatprep.subr.mxu0 0.0
    %4704 = vmatpush2.xpose.msra.mxu0 0.0
    %4705 = vmatprep.subr.mxu0 0.0
    %4706 = vmatpush2.xpose.msra.mxu0 0.0
    %4707 = vmatprep.mubr.f32.mxu0 0.0
    %4708 = vmatmul.mubr.f32.gmra.mxu0 %v4639
    %v4709 = vpop.f32.mrf.mxu0
    %v4710 = vadd.f32 0.0, %v4709
    %v4711 = vpop.f32.mrf.mxu0
    %4712 = vdwg.mxu0
    %4713 = vrot.lane.b32.xlu0 %v4180, 96
    %v4714 = vpop.permute.xlu0 %4713
    %v4715 = vsel %vm486, %v4180, 0
    %v4717 = vsel %vm486, %v4714, 0
    %4719 = vmatprep.subr.mxu0 0.0
    %4720 = vmatpush1.xpose.msra.mxu0 0.0
    %4721 = vmatprep.subr.mxu0 0.0
    %4722 = vmatpush1.xpose.msra.mxu0 0.0
    %4723 = vmatprep.subr.mxu0 0.0
    %4724 = vmatpush1.xpose.msra.mxu0 0.0
    %4725 = vmatprep.subr.mxu0 0.0
    %4726 = vmatpush1.xpose.msra.mxu0 0.0
    %4727 = vmatprep.subr.mxu0 0.0
    %4728 = vmatpush1.xpose.msra.mxu0 0.0
    %4729 = vmatprep.subr.mxu0 0.0
    %4730 = vmatpush1.xpose.msra.mxu0 0.0
    %4731 = vmatprep.subr.mxu0 0.0
    %4732 = vmatpush1.xpose.msra.mxu0 0.0
    %4733 = vmatprep.subr.mxu0 0.0
    %4734 = vmatpush1.xpose.msra.mxu0 0.0
    %4735 = vmatprep.subr.mxu0 0.0
    %4736 = vmatpush1.xpose.msra.mxu0 0.0
    %4737 = vmatprep.subr.mxu0 0.0
    %4738 = vmatpush1.xpose.msra.mxu0 0.0
    %4739 = vmatprep.subr.mxu0 0.0
    %4740 = vmatpush1.xpose.msra.mxu0 0.0
    %4741 = vmatprep.subr.mxu0 0.0
    %4742 = vmatpush1.xpose.msra.mxu0 0.0
    %4743 = vmatprep.subr.mxu0 0.0
    %4744 = vmatpush1.xpose.msra.mxu0 0.0
    %4745 = vmatprep.subr.mxu0 0.0
    %4746 = vmatpush1.xpose.msra.mxu0 0.0
    %4747 = vmatprep.subr.mxu0 0.0
    %4748 = vmatpush1.xpose.msra.mxu0 0.0
    %4749 = vmatprep.subr.mxu0 0.0
    %4750 = vmatpush1.xpose.msra.mxu0 %v4717
    %4751 = vmatprep.subr.mxu0 0.0
    %4752 = vmatpush2.xpose.msra.mxu0 0.0
    %4753 = vmatprep.subr.mxu0 0.0
    %4754 = vmatpush2.xpose.msra.mxu0 0.0
    %4755 = vmatprep.subr.mxu0 0.0
    %4756 = vmatpush2.xpose.msra.mxu0 0.0
    %4757 = vmatprep.subr.mxu0 0.0
    %4758 = vmatpush2.xpose.msra.mxu0 0.0
    %4759 = vmatprep.subr.mxu0 0.0
    %4760 = vmatpush2.xpose.msra.mxu0 0.0
    %4761 = vmatprep.subr.mxu0 0.0
    %4762 = vmatpush2.xpose.msra.mxu0 0.0
    %4763 = vmatprep.subr.mxu0 0.0
    %4764 = vmatpush2.xpose.msra.mxu0 0.0
    %4765 = vmatprep.subr.mxu0 0.0
    %4766 = vmatpush2.xpose.msra.mxu0 0.0
    %4767 = vmatprep.subr.mxu0 0.0
    %4768 = vmatpush2.xpose.msra.mxu0 0.0
    %4769 = vmatprep.subr.mxu0 0.0
    %4770 = vmatpush2.xpose.msra.mxu0 0.0
    %4771 = vmatprep.subr.mxu0 0.0
    %4772 = vmatpush2.xpose.msra.mxu0 0.0
    %4773 = vmatprep.subr.mxu0 0.0
    %4774 = vmatpush2.xpose.msra.mxu0 0.0
    %4775 = vmatprep.subr.mxu0 0.0
    %4776 = vmatpush2.xpose.msra.mxu0 0.0
    %4777 = vmatprep.subr.mxu0 0.0
    %4778 = vmatpush2.xpose.msra.mxu0 0.0
    %4779 = vmatprep.subr.mxu0 0.0
    %4780 = vmatpush2.xpose.msra.mxu0 0.0
    %4781 = vmatprep.subr.mxu0 0.0
    %4782 = vmatpush2.xpose.msra.mxu0 0.0
    %4783 = vmatprep.mubr.f32.mxu0 0.0
    %4784 = vmatmul.mubr.f32.gmra.mxu0 %v4715
    %v4785 = vpop.f32.mrf.mxu0
    %v4786 = vadd.f32 0.0, %v4785
    %v4787 = vpop.f32.mrf.mxu0
    %4788 = vdwg.mxu0
    %v4789 = vmul.f32 %v4254, 0.35355338
    %v4790 = vmul.f32 %v4330, 0.35355338
    %v4791 = vmul.f32 %v4406, 0.35355338
    %v4792 = vmul.f32 %v4482, 0.35355338
    %v4793 = vmul.f32 %v4558, 0.35355338
    %v4794 = vmul.f32 %v4634, 0.35355338
    %v4795 = vmul.f32 %v4710, 0.35355338
    %v4796 = vmul.f32 %v4786, 0.35355338
    %v4797 = vsel %vm486, %v4789, -inf
    %4798 = vmax.xlane.f32.xlu0 %v4797
    %v4799 = vpop.xlane.xlu0 %4798
    %v4800 = vsel %vm486, %v4790, -inf
    %4801 = vmax.xlane.f32.xlu0 %v4800
    %v4802 = vpop.xlane.xlu0 %4801
    %v4803 = vsel %vm486, %v4791, -inf
    %4804 = vmax.xlane.f32.xlu0 %v4803
    %v4805 = vpop.xlane.xlu0 %4804
    %v4806 = vsel %vm486, %v4792, -inf
    %4807 = vmax.xlane.f32.xlu0 %v4806
    %v4808 = vpop.xlane.xlu0 %4807
    %v4809 = vsel %vm486, %v4793, -inf
    %4810 = vmax.xlane.f32.xlu0 %v4809
    %v4811 = vpop.xlane.xlu0 %4810
    %v4812 = vsel %vm486, %v4794, -inf
    %4813 = vmax.xlane.f32.xlu0 %v4812
    %v4814 = vpop.xlane.xlu0 %4813
    %v4815 = vsel %vm486, %v4795, -inf
    %4816 = vmax.xlane.f32.xlu0 %v4815
    %v4817 = vpop.xlane.xlu0 %4816
    %v4818 = vsel %vm486, %v4796, -inf
    %4819 = vmax.xlane.f32.xlu0 %v4818
    %v4820 = vpop.xlane.xlu0 %4819
    %v4821 = vsub.f32 %v4789, %v4799
    %v4822 = vsub.f32 %v4790, %v4802
    %v4823 = vsub.f32 %v4791, %v4805
    %v4824 = vsub.f32 %v4792, %v4808
    %v4825 = vsub.f32 %v4793, %v4811
    %v4826 = vsub.f32 %v4794, %v4814
    %v4827 = vsub.f32 %v4795, %v4817
    %v4828 = vsub.f32 %v4796, %v4820
    %v4829 = vmul.f32 %v4821, 1.442695
    %v4830 = vpow.pop %v4829
    %v4831 = vmul.f32 %v4822, 1.442695
    %v4832 = vpow.pop %v4831
    %v4833 = vmul.f32 %v4823, 1.442695
    %v4834 = vpow.pop %v4833
    %v4835 = vmul.f32 %v4824, 1.442695
    %v4836 = vpow.pop %v4835
    %v4837 = vmul.f32 %v4825, 1.442695
    %v4838 = vpow.pop %v4837
    %v4839 = vmul.f32 %v4826, 1.442695
    %v4840 = vpow.pop %v4839
    %v4841 = vmul.f32 %v4827, 1.442695
    %v4842 = vpow.pop %v4841
    %v4843 = vmul.f32 %v4828, 1.442695
    %v4844 = vpow.pop %v4843
    %v4845 = vsel %vm486, %v4830, 0.0
    %4846 = vadd.xlane.f32.xlu0 %v4845
    %v4847 = vpop.xlane.xlu0 %4846
    %v4848 = vsel %vm486, %v4832, 0.0
    %4849 = vadd.xlane.f32.xlu0 %v4848
    %v4850 = vpop.xlane.xlu0 %4849
    %v4851 = vsel %vm486, %v4834, 0.0
    %4852 = vadd.xlane.f32.xlu0 %v4851
    %v4853 = vpop.xlane.xlu0 %4852
    %v4854 = vsel %vm486, %v4836, 0.0
    %4855 = vadd.xlane.f32.xlu0 %v4854
    %v4856 = vpop.xlane.xlu0 %4855
    %v4857 = vsel %vm486, %v4838, 0.0
    %4858 = vadd.xlane.f32.xlu0 %v4857
    %v4859 = vpop.xlane.xlu0 %4858
    %v4860 = vsel %vm486, %v4840, 0.0
    %4861 = vadd.xlane.f32.xlu0 %v4860
    %v4862 = vpop.xlane.xlu0 %4861
    %v4863 = vsel %vm486, %v4842, 0.0
    %4864 = vadd.xlane.f32.xlu0 %v4863
    %v4865 = vpop.xlane.xlu0 %4864
    %v4866 = vsel %vm486, %v4844, 0.0
    %4867 = vadd.xlane.f32.xlu0 %v4866
    %v4868 = vpop.xlane.xlu0 %4867
    %v4869 = vrcp.pop %v4847
    %v4870 = vrcp.pop %v4850
    %v4871 = vrcp.pop %v4853
    %v4872 = vrcp.pop %v4856
    %v4873 = vrcp.pop %v4859
    %v4874 = vrcp.pop %v4862
    %v4875 = vrcp.pop %v4865
    %v4876 = vrcp.pop %v4868
    %v4877 = vmul.f32 %v4830, %v4869
    %v4878 = vmul.f32 %v4832, %v4870
    %v4879 = vmul.f32 %v4834, %v4871
    %v4880 = vmul.f32 %v4836, %v4872
    %v4881 = vmul.f32 %v4838, %v4873
    %v4882 = vmul.f32 %v4840, %v4874
    %v4883 = vmul.f32 %v4842, %v4875
    %v4884 = vmul.f32 %v4844, %v4876
    %4885 = vrot.lane.b32.xlu0 %v4159, 64
    %v4886 = vpop.permute.xlu0 %4885
    %v4889 = vsel %vm486, %v4877, 0
    %4891 = vmatprep.subr.mxu0 0.0
    %4892 = vmatpush1.msra.mxu0 0.0
    %4893 = vmatprep.subr.mxu0 0.0
    %4894 = vmatpush1.msra.mxu0 0.0
    %4895 = vmatprep.subr.mxu0 0.0
    %4896 = vmatpush1.msra.mxu0 0.0
    %4897 = vmatprep.subr.mxu0 0.0
    %4898 = vmatpush1.msra.mxu0 0.0
    %4899 = vmatprep.subr.mxu0 0.0
    %4900 = vmatpush1.msra.mxu0 0.0
    %4901 = vmatprep.subr.mxu0 0.0
    %4902 = vmatpush1.msra.mxu0 0.0
    %4903 = vmatprep.subr.mxu0 0.0
    %4904 = vmatpush1.msra.mxu0 0.0
    %4905 = vmatprep.subr.mxu0 0.0
    %4906 = vmatpush1.msra.mxu0 0.0
    %4907 = vmatprep.subr.mxu0 0.0
    %4908 = vmatpush1.msra.mxu0 0.0
    %4909 = vmatprep.subr.mxu0 0.0
    %4910 = vmatpush1.msra.mxu0 0.0
    %4911 = vmatprep.subr.mxu0 0.0
    %4912 = vmatpush1.msra.mxu0 0.0
    %4913 = vmatprep.subr.mxu0 0.0
    %4914 = vmatpush1.msra.mxu0 0.0
    %4915 = vmatprep.subr.mxu0 0.0
    %4916 = vmatpush1.msra.mxu0 0.0
    %4917 = vmatprep.subr.mxu0 0.0
    %4918 = vmatpush1.msra.mxu0 0.0
    %4919 = vmatprep.subr.mxu0 0.0
    %4920 = vmatpush1.msra.mxu0 0.0
    %4921 = vmatprep.subr.mxu0 0.0
    %4922 = vmatpush1.msra.mxu0 %v4886
    %4923 = vmatprep.subr.mxu0 0.0
    %4924 = vmatpush2.msra.mxu0 0.0
    %4925 = vmatprep.subr.mxu0 0.0
    %4926 = vmatpush2.msra.mxu0 0.0
    %4927 = vmatprep.subr.mxu0 0.0
    %4928 = vmatpush2.msra.mxu0 0.0
    %4929 = vmatprep.subr.mxu0 0.0
    %4930 = vmatpush2.msra.mxu0 0.0
    %4931 = vmatprep.subr.mxu0 0.0
    %4932 = vmatpush2.msra.mxu0 0.0
    %4933 = vmatprep.subr.mxu0 0.0
    %4934 = vmatpush2.msra.mxu0 0.0
    %4935 = vmatprep.subr.mxu0 0.0
    %4936 = vmatpush2.msra.mxu0 0.0
    %4937 = vmatprep.subr.mxu0 0.0
    %4938 = vmatpush2.msra.mxu0 0.0
    %4939 = vmatprep.subr.mxu0 0.0
    %4940 = vmatpush2.msra.mxu0 0.0
    %4941 = vmatprep.subr.mxu0 0.0
    %4942 = vmatpush2.msra.mxu0 0.0
    %4943 = vmatprep.subr.mxu0 0.0
    %4944 = vmatpush2.msra.mxu0 0.0
    %4945 = vmatprep.subr.mxu0 0.0
    %4946 = vmatpush2.msra.mxu0 0.0
    %4947 = vmatprep.subr.mxu0 0.0
    %4948 = vmatpush2.msra.mxu0 0.0
    %4949 = vmatprep.subr.mxu0 0.0
    %4950 = vmatpush2.msra.mxu0 0.0
    %4951 = vmatprep.subr.mxu0 0.0
    %4952 = vmatpush2.msra.mxu0 0.0
    %4953 = vmatprep.subr.mxu0 0.0
    %4954 = vmatpush2.msra.mxu0 0.0
    %4955 = vmatprep.mubr.f32.mxu0 0.0
    %4956 = vmatmul.mubr.f32.gmra.mxu0 %v4889
    %v4957 = vpop.f32.mrf.mxu0
    %v4958 = vadd.f32 0.0, %v4957
    %v4959 = vpop.f32.mrf.mxu0
    %4960 = vdwg.mxu0
    %4961 = vrot.lane.b32.xlu0 %v4170, 64
    %v4962 = vpop.permute.xlu0 %4961
    %v4965 = vsel %vm486, %v4878, 0
    %4967 = vmatprep.subr.mxu0 0.0
    %4968 = vmatpush1.msra.mxu0 0.0
    %4969 = vmatprep.subr.mxu0 0.0
    %4970 = vmatpush1.msra.mxu0 0.0
    %4971 = vmatprep.subr.mxu0 0.0
    %4972 = vmatpush1.msra.mxu0 0.0
    %4973 = vmatprep.subr.mxu0 0.0
    %4974 = vmatpush1.msra.mxu0 0.0
    %4975 = vmatprep.subr.mxu0 0.0
    %4976 = vmatpush1.msra.mxu0 0.0
    %4977 = vmatprep.subr.mxu0 0.0
    %4978 = vmatpush1.msra.mxu0 0.0
    %4979 = vmatprep.subr.mxu0 0.0
    %4980 = vmatpush1.msra.mxu0 0.0
    %4981 = vmatprep.subr.mxu0 0.0
    %4982 = vmatpush1.msra.mxu0 0.0
    %4983 = vmatprep.subr.mxu0 0.0
    %4984 = vmatpush1.msra.mxu0 0.0
    %4985 = vmatprep.subr.mxu0 0.0
    %4986 = vmatpush1.msra.mxu0 0.0
    %4987 = vmatprep.subr.mxu0 0.0
    %4988 = vmatpush1.msra.mxu0 0.0
    %4989 = vmatprep.subr.mxu0 0.0
    %4990 = vmatpush1.msra.mxu0 0.0
    %4991 = vmatprep.subr.mxu0 0.0
    %4992 = vmatpush1.msra.mxu0 0.0
    %4993 = vmatprep.subr.mxu0 0.0
    %4994 = vmatpush1.msra.mxu0 0.0
    %4995 = vmatprep.subr.mxu0 0.0
    %4996 = vmatpush1.msra.mxu0 0.0
    %4997 = vmatprep.subr.mxu0 0.0
    %4998 = vmatpush1.msra.mxu0 %v4962
    %4999 = vmatprep.subr.mxu0 0.0
    %5000 = vmatpush2.msra.mxu0 0.0
    %5001 = vmatprep.subr.mxu0 0.0
    %5002 = vmatpush2.msra.mxu0 0.0
    %5003 = vmatprep.subr.mxu0 0.0
    %5004 = vmatpush2.msra.mxu0 0.0
    %5005 = vmatprep.subr.mxu0 0.0
    %5006 = vmatpush2.msra.mxu0 0.0
    %5007 = vmatprep.subr.mxu0 0.0
    %5008 = vmatpush2.msra.mxu0 0.0
    %5009 = vmatprep.subr.mxu0 0.0
    %5010 = vmatpush2.msra.mxu0 0.0
    %5011 = vmatprep.subr.mxu0 0.0
    %5012 = vmatpush2.msra.mxu0 0.0
    %5013 = vmatprep.subr.mxu0 0.0
    %5014 = vmatpush2.msra.mxu0 0.0
    %5015 = vmatprep.subr.mxu0 0.0
    %5016 = vmatpush2.msra.mxu0 0.0
    %5017 = vmatprep.subr.mxu0 0.0
    %5018 = vmatpush2.msra.mxu0 0.0
    %5019 = vmatprep.subr.mxu0 0.0
    %5020 = vmatpush2.msra.mxu0 0.0
    %5021 = vmatprep.subr.mxu0 0.0
    %5022 = vmatpush2.msra.mxu0 0.0
    %5023 = vmatprep.subr.mxu0 0.0
    %5024 = vmatpush2.msra.mxu0 0.0
    %5025 = vmatprep.subr.mxu0 0.0
    %5026 = vmatpush2.msra.mxu0 0.0
    %5027 = vmatprep.subr.mxu0 0.0
    %5028 = vmatpush2.msra.mxu0 0.0
    %5029 = vmatprep.subr.mxu0 0.0
    %5030 = vmatpush2.msra.mxu0 0.0
    %5031 = vmatprep.mubr.f32.mxu0 0.0
    %5032 = vmatmul.mubr.f32.gmra.mxu0 %v4965
    %v5033 = vpop.f32.mrf.mxu0
    %v5034 = vadd.f32 0.0, %v5033
    %v5035 = vpop.f32.mrf.mxu0
    %5036 = vdwg.mxu0
    %5037 = vrot.lane.b32.xlu0 %v4174, 64
    %v5038 = vpop.permute.xlu0 %5037
    %v5041 = vsel %vm486, %v4879, 0
    %5043 = vmatprep.subr.mxu0 0.0
    %5044 = vmatpush1.msra.mxu0 0.0
    %5045 = vmatprep.subr.mxu0 0.0
    %5046 = vmatpush1.msra.mxu0 0.0
    %5047 = vmatprep.subr.mxu0 0.0
    %5048 = vmatpush1.msra.mxu0 0.0
    %5049 = vmatprep.subr.mxu0 0.0
    %5050 = vmatpush1.msra.mxu0 0.0
    %5051 = vmatprep.subr.mxu0 0.0
    %5052 = vmatpush1.msra.mxu0 0.0
    %5053 = vmatprep.subr.mxu0 0.0
    %5054 = vmatpush1.msra.mxu0 0.0
    %5055 = vmatprep.subr.mxu0 0.0
    %5056 = vmatpush1.msra.mxu0 0.0
    %5057 = vmatprep.subr.mxu0 0.0
    %5058 = vmatpush1.msra.mxu0 0.0
    %5059 = vmatprep.subr.mxu0 0.0
    %5060 = vmatpush1.msra.mxu0 0.0
    %5061 = vmatprep.subr.mxu0 0.0
    %5062 = vmatpush1.msra.mxu0 0.0
    %5063 = vmatprep.subr.mxu0 0.0
    %5064 = vmatpush1.msra.mxu0 0.0
    %5065 = vmatprep.subr.mxu0 0.0
    %5066 = vmatpush1.msra.mxu0 0.0
    %5067 = vmatprep.subr.mxu0 0.0
    %5068 = vmatpush1.msra.mxu0 0.0
    %5069 = vmatprep.subr.mxu0 0.0
    %5070 = vmatpush1.msra.mxu0 0.0
    %5071 = vmatprep.subr.mxu0 0.0
    %5072 = vmatpush1.msra.mxu0 0.0
    %5073 = vmatprep.subr.mxu0 0.0
    %5074 = vmatpush1.msra.mxu0 %v5038
    %5075 = vmatprep.subr.mxu0 0.0
    %5076 = vmatpush2.msra.mxu0 0.0
    %5077 = vmatprep.subr.mxu0 0.0
    %5078 = vmatpush2.msra.mxu0 0.0
    %5079 = vmatprep.subr.mxu0 0.0
    %5080 = vmatpush2.msra.mxu0 0.0
    %5081 = vmatprep.subr.mxu0 0.0
    %5082 = vmatpush2.msra.mxu0 0.0
    %5083 = vmatprep.subr.mxu0 0.0
    %5084 = vmatpush2.msra.mxu0 0.0
    %5085 = vmatprep.subr.mxu0 0.0
    %5086 = vmatpush2.msra.mxu0 0.0
    %5087 = vmatprep.subr.mxu0 0.0
    %5088 = vmatpush2.msra.mxu0 0.0
    %5089 = vmatprep.subr.mxu0 0.0
    %5090 = vmatpush2.msra.mxu0 0.0
    %5091 = vmatprep.subr.mxu0 0.0
    %5092 = vmatpush2.msra.mxu0 0.0
    %5093 = vmatprep.subr.mxu0 0.0
    %5094 = vmatpush2.msra.mxu0 0.0
    %5095 = vmatprep.subr.mxu0 0.0
    %5096 = vmatpush2.msra.mxu0 0.0
    %5097 = vmatprep.subr.mxu0 0.0
    %5098 = vmatpush2.msra.mxu0 0.0
    %5099 = vmatprep.subr.mxu0 0.0
    %5100 = vmatpush2.msra.mxu0 0.0
    %5101 = vmatprep.subr.mxu0 0.0
    %5102 = vmatpush2.msra.mxu0 0.0
    %5103 = vmatprep.subr.mxu0 0.0
    %5104 = vmatpush2.msra.mxu0 0.0
    %5105 = vmatprep.subr.mxu0 0.0
    %5106 = vmatpush2.msra.mxu0 0.0
    %5107 = vmatprep.mubr.f32.mxu0 0.0
    %5108 = vmatmul.mubr.f32.gmra.mxu0 %v5041
    %v5109 = vpop.f32.mrf.mxu0
    %v5110 = vadd.f32 0.0, %v5109
    %v5111 = vpop.f32.mrf.mxu0
    %5112 = vdwg.mxu0
    %5113 = vrot.lane.b32.xlu0 %v4178, 64
    %v5114 = vpop.permute.xlu0 %5113
    %v5117 = vsel %vm486, %v4880, 0
    %5119 = vmatprep.subr.mxu0 0.0
    %5120 = vmatpush1.msra.mxu0 0.0
    %5121 = vmatprep.subr.mxu0 0.0
    %5122 = vmatpush1.msra.mxu0 0.0
    %5123 = vmatprep.subr.mxu0 0.0
    %5124 = vmatpush1.msra.mxu0 0.0
    %5125 = vmatprep.subr.mxu0 0.0
    %5126 = vmatpush1.msra.mxu0 0.0
    %5127 = vmatprep.subr.mxu0 0.0
    %5128 = vmatpush1.msra.mxu0 0.0
    %5129 = vmatprep.subr.mxu0 0.0
    %5130 = vmatpush1.msra.mxu0 0.0
    %5131 = vmatprep.subr.mxu0 0.0
    %5132 = vmatpush1.msra.mxu0 0.0
    %5133 = vmatprep.subr.mxu0 0.0
    %5134 = vmatpush1.msra.mxu0 0.0
    %5135 = vmatprep.subr.mxu0 0.0
    %5136 = vmatpush1.msra.mxu0 0.0
    %5137 = vmatprep.subr.mxu0 0.0
    %5138 = vmatpush1.msra.mxu0 0.0
    %5139 = vmatprep.subr.mxu0 0.0
    %5140 = vmatpush1.msra.mxu0 0.0
    %5141 = vmatprep.subr.mxu0 0.0
    %5142 = vmatpush1.msra.mxu0 0.0
    %5143 = vmatprep.subr.mxu0 0.0
    %5144 = vmatpush1.msra.mxu0 0.0
    %5145 = vmatprep.subr.mxu0 0.0
    %5146 = vmatpush1.msra.mxu0 0.0
    %5147 = vmatprep.subr.mxu0 0.0
    %5148 = vmatpush1.msra.mxu0 0.0
    %5149 = vmatprep.subr.mxu0 0.0
    %5150 = vmatpush1.msra.mxu0 %v5114
    %5151 = vmatprep.subr.mxu0 0.0
    %5152 = vmatpush2.msra.mxu0 0.0
    %5153 = vmatprep.subr.mxu0 0.0
    %5154 = vmatpush2.msra.mxu0 0.0
    %5155 = vmatprep.subr.mxu0 0.0
    %5156 = vmatpush2.msra.mxu0 0.0
    %5157 = vmatprep.subr.mxu0 0.0
    %5158 = vmatpush2.msra.mxu0 0.0
    %5159 = vmatprep.subr.mxu0 0.0
    %5160 = vmatpush2.msra.mxu0 0.0
    %5161 = vmatprep.subr.mxu0 0.0
    %5162 = vmatpush2.msra.mxu0 0.0
    %5163 = vmatprep.subr.mxu0 0.0
    %5164 = vmatpush2.msra.mxu0 0.0
    %5165 = vmatprep.subr.mxu0 0.0
    %5166 = vmatpush2.msra.mxu0 0.0
    %5167 = vmatprep.subr.mxu0 0.0
    %5168 = vmatpush2.msra.mxu0 0.0
    %5169 = vmatprep.subr.mxu0 0.0
    %5170 = vmatpush2.msra.mxu0 0.0
    %5171 = vmatprep.subr.mxu0 0.0
    %5172 = vmatpush2.msra.mxu0 0.0
    %5173 = vmatprep.subr.mxu0 0.0
    %5174 = vmatpush2.msra.mxu0 0.0
    %5175 = vmatprep.subr.mxu0 0.0
    %5176 = vmatpush2.msra.mxu0 0.0
    %5177 = vmatprep.subr.mxu0 0.0
    %5178 = vmatpush2.msra.mxu0 0.0
    %5179 = vmatprep.subr.mxu0 0.0
    %5180 = vmatpush2.msra.mxu0 0.0
    %5181 = vmatprep.subr.mxu0 0.0
    %5182 = vmatpush2.msra.mxu0 0.0
    %5183 = vmatprep.mubr.f32.mxu0 0.0
    %5184 = vmatmul.mubr.f32.gmra.mxu0 %v5117
    %v5185 = vpop.f32.mrf.mxu0
    %v5186 = vadd.f32 0.0, %v5185
    %v5187 = vpop.f32.mrf.mxu0
    %5188 = vdwg.mxu0
    %5189 = vrot.lane.b32.xlu0 %v4164, 64
    %v5190 = vpop.permute.xlu0 %5189
    %v5193 = vsel %vm486, %v4881, 0
    %5195 = vmatprep.subr.mxu0 0.0
    %5196 = vmatpush1.msra.mxu0 0.0
    %5197 = vmatprep.subr.mxu0 0.0
    %5198 = vmatpush1.msra.mxu0 0.0
    %5199 = vmatprep.subr.mxu0 0.0
    %5200 = vmatpush1.msra.mxu0 0.0
    %5201 = vmatprep.subr.mxu0 0.0
    %5202 = vmatpush1.msra.mxu0 0.0
    %5203 = vmatprep.subr.mxu0 0.0
    %5204 = vmatpush1.msra.mxu0 0.0
    %5205 = vmatprep.subr.mxu0 0.0
    %5206 = vmatpush1.msra.mxu0 0.0
    %5207 = vmatprep.subr.mxu0 0.0
    %5208 = vmatpush1.msra.mxu0 0.0
    %5209 = vmatprep.subr.mxu0 0.0
    %5210 = vmatpush1.msra.mxu0 0.0
    %5211 = vmatprep.subr.mxu0 0.0
    %5212 = vmatpush1.msra.mxu0 0.0
    %5213 = vmatprep.subr.mxu0 0.0
    %5214 = vmatpush1.msra.mxu0 0.0
    %5215 = vmatprep.subr.mxu0 0.0
    %5216 = vmatpush1.msra.mxu0 0.0
    %5217 = vmatprep.subr.mxu0 0.0
    %5218 = vmatpush1.msra.mxu0 0.0
    %5219 = vmatprep.subr.mxu0 0.0
    %5220 = vmatpush1.msra.mxu0 0.0
    %5221 = vmatprep.subr.mxu0 0.0
    %5222 = vmatpush1.msra.mxu0 0.0
    %5223 = vmatprep.subr.mxu0 0.0
    %5224 = vmatpush1.msra.mxu0 0.0
    %5225 = vmatprep.subr.mxu0 0.0
    %5226 = vmatpush1.msra.mxu0 %v5190
    %5227 = vmatprep.subr.mxu0 0.0
    %5228 = vmatpush2.msra.mxu0 0.0
    %5229 = vmatprep.subr.mxu0 0.0
    %5230 = vmatpush2.msra.mxu0 0.0
    %5231 = vmatprep.subr.mxu0 0.0
    %5232 = vmatpush2.msra.mxu0 0.0
    %5233 = vmatprep.subr.mxu0 0.0
    %5234 = vmatpush2.msra.mxu0 0.0
    %5235 = vmatprep.subr.mxu0 0.0
    %5236 = vmatpush2.msra.mxu0 0.0
    %5237 = vmatprep.subr.mxu0 0.0
    %5238 = vmatpush2.msra.mxu0 0.0
    %5239 = vmatprep.subr.mxu0 0.0
    %5240 = vmatpush2.msra.mxu0 0.0
    %5241 = vmatprep.subr.mxu0 0.0
    %5242 = vmatpush2.msra.mxu0 0.0
    %5243 = vmatprep.subr.mxu0 0.0
    %5244 = vmatpush2.msra.mxu0 0.0
    %5245 = vmatprep.subr.mxu0 0.0
    %5246 = vmatpush2.msra.mxu0 0.0
    %5247 = vmatprep.subr.mxu0 0.0
    %5248 = vmatpush2.msra.mxu0 0.0
    %5249 = vmatprep.subr.mxu0 0.0
    %5250 = vmatpush2.msra.mxu0 0.0
    %5251 = vmatprep.subr.mxu0 0.0
    %5252 = vmatpush2.msra.mxu0 0.0
    %5253 = vmatprep.subr.mxu0 0.0
    %5254 = vmatpush2.msra.mxu0 0.0
    %5255 = vmatprep.subr.mxu0 0.0
    %5256 = vmatpush2.msra.mxu0 0.0
    %5257 = vmatprep.subr.mxu0 0.0
    %5258 = vmatpush2.msra.mxu0 0.0
    %5259 = vmatprep.mubr.f32.mxu0 0.0
    %5260 = vmatmul.mubr.f32.gmra.mxu0 %v5193
    %v5261 = vpop.f32.mrf.mxu0
    %v5262 = vadd.f32 0.0, %v5261
    %v5263 = vpop.f32.mrf.mxu0
    %5264 = vdwg.mxu0
    %5265 = vrot.lane.b32.xlu0 %v4172, 64
    %v5266 = vpop.permute.xlu0 %5265
    %v5269 = vsel %vm486, %v4882, 0
    %5271 = vmatprep.subr.mxu0 0.0
    %5272 = vmatpush1.msra.mxu0 0.0
    %5273 = vmatprep.subr.mxu0 0.0
    %5274 = vmatpush1.msra.mxu0 0.0
    %5275 = vmatprep.subr.mxu0 0.0
    %5276 = vmatpush1.msra.mxu0 0.0
    %5277 = vmatprep.subr.mxu0 0.0
    %5278 = vmatpush1.msra.mxu0 0.0
    %5279 = vmatprep.subr.mxu0 0.0
    %5280 = vmatpush1.msra.mxu0 0.0
    %5281 = vmatprep.subr.mxu0 0.0
    %5282 = vmatpush1.msra.mxu0 0.0
    %5283 = vmatprep.subr.mxu0 0.0
    %5284 = vmatpush1.msra.mxu0 0.0
    %5285 = vmatprep.subr.mxu0 0.0
    %5286 = vmatpush1.msra.mxu0 0.0
    %5287 = vmatprep.subr.mxu0 0.0
    %5288 = vmatpush1.msra.mxu0 0.0
    %5289 = vmatprep.subr.mxu0 0.0
    %5290 = vmatpush1.msra.mxu0 0.0
    %5291 = vmatprep.subr.mxu0 0.0
    %5292 = vmatpush1.msra.mxu0 0.0
    %5293 = vmatprep.subr.mxu0 0.0
    %5294 = vmatpush1.msra.mxu0 0.0
    %5295 = vmatprep.subr.mxu0 0.0
    %5296 = vmatpush1.msra.mxu0 0.0
    %5297 = vmatprep.subr.mxu0 0.0
    %5298 = vmatpush1.msra.mxu0 0.0
    %5299 = vmatprep.subr.mxu0 0.0
    %5300 = vmatpush1.msra.mxu0 0.0
    %5301 = vmatprep.subr.mxu0 0.0
    %5302 = vmatpush1.msra.mxu0 %v5266
    %5303 = vmatprep.subr.mxu0 0.0
    %5304 = vmatpush2.msra.mxu0 0.0
    %5305 = vmatprep.subr.mxu0 0.0
    %5306 = vmatpush2.msra.mxu0 0.0
    %5307 = vmatprep.subr.mxu0 0.0
    %5308 = vmatpush2.msra.mxu0 0.0
    %5309 = vmatprep.subr.mxu0 0.0
    %5310 = vmatpush2.msra.mxu0 0.0
    %5311 = vmatprep.subr.mxu0 0.0
    %5312 = vmatpush2.msra.mxu0 0.0
    %5313 = vmatprep.subr.mxu0 0.0
    %5314 = vmatpush2.msra.mxu0 0.0
    %5315 = vmatprep.subr.mxu0 0.0
    %5316 = vmatpush2.msra.mxu0 0.0
    %5317 = vmatprep.subr.mxu0 0.0
    %5318 = vmatpush2.msra.mxu0 0.0
    %5319 = vmatprep.subr.mxu0 0.0
    %5320 = vmatpush2.msra.mxu0 0.0
    %5321 = vmatprep.subr.mxu0 0.0
    %5322 = vmatpush2.msra.mxu0 0.0
    %5323 = vmatprep.subr.mxu0 0.0
    %5324 = vmatpush2.msra.mxu0 0.0
    %5325 = vmatprep.subr.mxu0 0.0
    %5326 = vmatpush2.msra.mxu0 0.0
    %5327 = vmatprep.subr.mxu0 0.0
    %5328 = vmatpush2.msra.mxu0 0.0
    %5329 = vmatprep.subr.mxu0 0.0
    %5330 = vmatpush2.msra.mxu0 0.0
    %5331 = vmatprep.subr.mxu0 0.0
    %5332 = vmatpush2.msra.mxu0 0.0
    %5333 = vmatprep.subr.mxu0 0.0
    %5334 = vmatpush2.msra.mxu0 0.0
    %5335 = vmatprep.mubr.f32.mxu0 0.0
    %5336 = vmatmul.mubr.f32.gmra.mxu0 %v5269
    %v5337 = vpop.f32.mrf.mxu0
    %v5338 = vadd.f32 0.0, %v5337
    %v5339 = vpop.f32.mrf.mxu0
    %5340 = vdwg.mxu0
    %5341 = vrot.lane.b32.xlu0 %v4176, 64
    %v5342 = vpop.permute.xlu0 %5341
    %v5345 = vsel %vm486, %v4883, 0
    %5347 = vmatprep.subr.mxu0 0.0
    %5348 = vmatpush1.msra.mxu0 0.0
    %5349 = vmatprep.subr.mxu0 0.0
    %5350 = vmatpush1.msra.mxu0 0.0
    %5351 = vmatprep.subr.mxu0 0.0
    %5352 = vmatpush1.msra.mxu0 0.0
    %5353 = vmatprep.subr.mxu0 0.0
    %5354 = vmatpush1.msra.mxu0 0.0
    %5355 = vmatprep.subr.mxu0 0.0
    %5356 = vmatpush1.msra.mxu0 0.0
    %5357 = vmatprep.subr.mxu0 0.0
    %5358 = vmatpush1.msra.mxu0 0.0
    %5359 = vmatprep.subr.mxu0 0.0
    %5360 = vmatpush1.msra.mxu0 0.0
    %5361 = vmatprep.subr.mxu0 0.0
    %5362 = vmatpush1.msra.mxu0 0.0
    %5363 = vmatprep.subr.mxu0 0.0
    %5364 = vmatpush1.msra.mxu0 0.0
    %5365 = vmatprep.subr.mxu0 0.0
    %5366 = vmatpush1.msra.mxu0 0.0
    %5367 = vmatprep.subr.mxu0 0.0
    %5368 = vmatpush1.msra.mxu0 0.0
    %5369 = vmatprep.subr.mxu0 0.0
    %5370 = vmatpush1.msra.mxu0 0.0
    %5371 = vmatprep.subr.mxu0 0.0
    %5372 = vmatpush1.msra.mxu0 0.0
    %5373 = vmatprep.subr.mxu0 0.0
    %5374 = vmatpush1.msra.mxu0 0.0
    %5375 = vmatprep.subr.mxu0 0.0
    %5376 = vmatpush1.msra.mxu0 0.0
    %5377 = vmatprep.subr.mxu0 0.0
    %5378 = vmatpush1.msra.mxu0 %v5342
    %5379 = vmatprep.subr.mxu0 0.0
    %5380 = vmatpush2.msra.mxu0 0.0
    %5381 = vmatprep.subr.mxu0 0.0
    %5382 = vmatpush2.msra.mxu0 0.0
    %5383 = vmatprep.subr.mxu0 0.0
    %5384 = vmatpush2.msra.mxu0 0.0
    %5385 = vmatprep.subr.mxu0 0.0
    %5386 = vmatpush2.msra.mxu0 0.0
    %5387 = vmatprep.subr.mxu0 0.0
    %5388 = vmatpush2.msra.mxu0 0.0
    %5389 = vmatprep.subr.mxu0 0.0
    %5390 = vmatpush2.msra.mxu0 0.0
    %5391 = vmatprep.subr.mxu0 0.0
    %5392 = vmatpush2.msra.mxu0 0.0
    %5393 = vmatprep.subr.mxu0 0.0
    %5394 = vmatpush2.msra.mxu0 0.0
    %5395 = vmatprep.subr.mxu0 0.0
    %5396 = vmatpush2.msra.mxu0 0.0
    %5397 = vmatprep.subr.mxu0 0.0
    %5398 = vmatpush2.msra.mxu0 0.0
    %5399 = vmatprep.subr.mxu0 0.0
    %5400 = vmatpush2.msra.mxu0 0.0
    %5401 = vmatprep.subr.mxu0 0.0
    %5402 = vmatpush2.msra.mxu0 0.0
    %5403 = vmatprep.subr.mxu0 0.0
    %5404 = vmatpush2.msra.mxu0 0.0
    %5405 = vmatprep.subr.mxu0 0.0
    %5406 = vmatpush2.msra.mxu0 0.0
    %5407 = vmatprep.subr.mxu0 0.0
    %5408 = vmatpush2.msra.mxu0 0.0
    %5409 = vmatprep.subr.mxu0 0.0
    %5410 = vmatpush2.msra.mxu0 0.0
    %5411 = vmatprep.mubr.f32.mxu0 0.0
    %5412 = vmatmul.mubr.f32.gmra.mxu0 %v5345
    %v5413 = vpop.f32.mrf.mxu0
    %v5414 = vadd.f32 0.0, %v5413
    %v5415 = vpop.f32.mrf.mxu0
    %5416 = vdwg.mxu0
    %5417 = vrot.lane.b32.xlu0 %v4180, 64
    %v5418 = vpop.permute.xlu0 %5417
    %v5421 = vsel %vm486, %v4884, 0
    %5423 = vmatprep.subr.mxu0 0.0
    %5424 = vmatpush1.msra.mxu0 0.0
    %5425 = vmatprep.subr.mxu0 0.0
    %5426 = vmatpush1.msra.mxu0 0.0
    %5427 = vmatprep.subr.mxu0 0.0
    %5428 = vmatpush1.msra.mxu0 0.0
    %5429 = vmatprep.subr.mxu0 0.0
    %5430 = vmatpush1.msra.mxu0 0.0
    %5431 = vmatprep.subr.mxu0 0.0
    %5432 = vmatpush1.msra.mxu0 0.0
    %5433 = vmatprep.subr.mxu0 0.0
    %5434 = vmatpush1.msra.mxu0 0.0
    %5435 = vmatprep.subr.mxu0 0.0
    %5436 = vmatpush1.msra.mxu0 0.0
    %5437 = vmatprep.subr.mxu0 0.0
    %5438 = vmatpush1.msra.mxu0 0.0
    %5439 = vmatprep.subr.mxu0 0.0
    %5440 = vmatpush1.msra.mxu0 0.0
    %5441 = vmatprep.subr.mxu0 0.0
    %5442 = vmatpush1.msra.mxu0 0.0
    %5443 = vmatprep.subr.mxu0 0.0
    %5444 = vmatpush1.msra.mxu0 0.0
    %5445 = vmatprep.subr.mxu0 0.0
    %5446 = vmatpush1.msra.mxu0 0.0
    %5447 = vmatprep.subr.mxu0 0.0
    %5448 = vmatpush1.msra.mxu0 0.0
    %5449 = vmatprep.subr.mxu0 0.0
    %5450 = vmatpush1.msra.mxu0 0.0
    %5451 = vmatprep.subr.mxu0 0.0
    %5452 = vmatpush1.msra.mxu0 0.0
    %5453 = vmatprep.subr.mxu0 0.0
    %5454 = vmatpush1.msra.mxu0 %v5418
    %5455 = vmatprep.subr.mxu0 0.0
    %5456 = vmatpush2.msra.mxu0 0.0
    %5457 = vmatprep.subr.mxu0 0.0
    %5458 = vmatpush2.msra.mxu0 0.0
    %5459 = vmatprep.subr.mxu0 0.0
    %5460 = vmatpush2.msra.mxu0 0.0
    %5461 = vmatprep.subr.mxu0 0.0
    %5462 = vmatpush2.msra.mxu0 0.0
    %5463 = vmatprep.subr.mxu0 0.0
    %5464 = vmatpush2.msra.mxu0 0.0
    %5465 = vmatprep.subr.mxu0 0.0
    %5466 = vmatpush2.msra.mxu0 0.0
    %5467 = vmatprep.subr.mxu0 0.0
    %5468 = vmatpush2.msra.mxu0 0.0
    %5469 = vmatprep.subr.mxu0 0.0
    %5470 = vmatpush2.msra.mxu0 0.0
    %5471 = vmatprep.subr.mxu0 0.0
    %5472 = vmatpush2.msra.mxu0 0.0
    %5473 = vmatprep.subr.mxu0 0.0
    %5474 = vmatpush2.msra.mxu0 0.0
    %5475 = vmatprep.subr.mxu0 0.0
    %5476 = vmatpush2.msra.mxu0 0.0
    %5477 = vmatprep.subr.mxu0 0.0
    %5478 = vmatpush2.msra.mxu0 0.0
    %5479 = vmatprep.subr.mxu0 0.0
    %5480 = vmatpush2.msra.mxu0 0.0
    %5481 = vmatprep.subr.mxu0 0.0
    %5482 = vmatpush2.msra.mxu0 0.0
    %5483 = vmatprep.subr.mxu0 0.0
    %5484 = vmatpush2.msra.mxu0 0.0
    %5485 = vmatprep.subr.mxu0 0.0
    %5486 = vmatpush2.msra.mxu0 0.0
    %5487 = vmatprep.mubr.f32.mxu0 0.0
    %5488 = vmatmul.mubr.f32.gmra.mxu0 %v5421
    %v5489 = vpop.f32.mrf.mxu0
    %v5490 = vadd.f32 0.0, %v5489
    %v5491 = vpop.f32.mrf.mxu0
    %5492 = vdwg.mxu0
    %5495 = vrot.lane.b32.xlu0 %v5034, 8
    %v5496 = vpop.permute.xlu0 %5495
    %5497 = vrot.lane.b32.xlu0 %v5338, 8
    %v5498 = vpop.permute.xlu0 %5497
    %5503 = vrot.lane.b32.xlu0 %v5110, 16
    %v5504 = vpop.permute.xlu0 %5503
    %5505 = vrot.lane.b32.xlu0 %v5414, 16
    %v5506 = vpop.permute.xlu0 %5505
    %5511 = vrot.lane.b32.xlu0 %v5186, 24
    %v5512 = vpop.permute.xlu0 %5511
    %5513 = vrot.lane.b32.xlu0 %v5490, 24
    %v5514 = vpop.permute.xlu0 %5513
    %v5517 = vsel %vm486, %v4958, %v5496
    %v5518 = vsel %vm486, %v5262, %v5498
    %v5519 = vsel %vm1823, %v5517, %v5504
    %v5520 = vsel %vm1823, %v5518, %v5506
    %v5521 = vsel %vm1826, %v5519, %v5512
    %v5522 = vsel %vm1826, %v5520, %v5514
    %v5524 = vlaneseq
    %v5525 = vshrl.u32 %v5524, 7
    %v5526 = vsub.s32 0, %v5525
    %v5527 = vrot.slane %v3945, %v5526
    %v5530 = vsel %vm388, %v5521, 0
    %v5533 = vsel %vm388, %v5522, 0
    %5535 = vmatprep.subr.mxu0 0.0
    %5536 = vmatpush1.msra.mxu0 0.0
    %5537 = vmatprep.subr.mxu0 0.0
    %5538 = vmatpush1.msra.mxu0 0.0
    %5539 = vmatprep.subr.mxu0 0.0
    %5540 = vmatpush1.msra.mxu0 0.0
    %5541 = vmatprep.subr.mxu0 0.0
    %5542 = vmatpush1.msra.mxu0 0.0
    %5543 = vmatprep.subr.mxu0 0.0
    %5544 = vmatpush1.msra.mxu0 0.0
    %5545 = vmatprep.subr.mxu0 0.0
    %5546 = vmatpush1.msra.mxu0 0.0
    %5547 = vmatprep.subr.mxu0 0.0
    %5548 = vmatpush1.msra.mxu0 0.0
    %5549 = vmatprep.subr.mxu0 0.0
    %5550 = vmatpush1.msra.mxu0 0.0
    %5551 = vmatprep.subr.mxu0 0.0
    %5552 = vmatpush1.msra.mxu0 0.0
    %5553 = vmatprep.subr.mxu0 0.0
    %5554 = vmatpush1.msra.mxu0 0.0
    %5555 = vmatprep.subr.mxu0 0.0
    %5556 = vmatpush1.msra.mxu0 0.0
    %5557 = vmatprep.subr.mxu0 0.0
    %5558 = vmatpush1.msra.mxu0 0.0
    %5559 = vmatprep.subr.mxu0 0.0
    %5560 = vmatpush1.msra.mxu0 %v3944
    %5561 = vmatprep.subr.mxu0 0.0
    %5562 = vmatpush1.msra.mxu0 %v3943
    %5563 = vmatprep.subr.mxu0 0.0
    %5564 = vmatpush1.msra.mxu0 %v3942
    %5565 = vmatprep.subr.mxu0 0.0
    %5566 = vmatpush1.msra.mxu0 %v3941
    %5567 = vmatprep.subr.mxu0 0.0
    %5568 = vmatpush2.msra.mxu0 0.0
    %5569 = vmatprep.subr.mxu0 0.0
    %5570 = vmatpush2.msra.mxu0 0.0
    %5571 = vmatprep.subr.mxu0 0.0
    %5572 = vmatpush2.msra.mxu0 0.0
    %5573 = vmatprep.subr.mxu0 0.0
    %5574 = vmatpush2.msra.mxu0 0.0
    %5575 = vmatprep.subr.mxu0 0.0
    %5576 = vmatpush2.msra.mxu0 0.0
    %5577 = vmatprep.subr.mxu0 0.0
    %5578 = vmatpush2.msra.mxu0 0.0
    %5579 = vmatprep.subr.mxu0 0.0
    %5580 = vmatpush2.msra.mxu0 0.0
    %5581 = vmatprep.subr.mxu0 0.0
    %5582 = vmatpush2.msra.mxu0 0.0
    %5583 = vmatprep.subr.mxu0 0.0
    %5584 = vmatpush2.msra.mxu0 0.0
    %5585 = vmatprep.subr.mxu0 0.0
    %5586 = vmatpush2.msra.mxu0 0.0
    %5587 = vmatprep.subr.mxu0 0.0
    %5588 = vmatpush2.msra.mxu0 0.0
    %5589 = vmatprep.subr.mxu0 0.0
    %5590 = vmatpush2.msra.mxu0 0.0
    %5591 = vmatprep.subr.mxu0 0.0
    %5592 = vmatpush2.msra.mxu0 0.0
    %5593 = vmatprep.subr.mxu0 0.0
    %5594 = vmatpush2.msra.mxu0 0.0
    %5595 = vmatprep.subr.mxu0 0.0
    %5596 = vmatpush2.msra.mxu0 0.0
    %5597 = vmatprep.subr.mxu0 0.0
    %5598 = vmatpush2.msra.mxu0 0.0
    %5599 = vmatprep.mubr.f32.mxu0 0.0
    %5600 = vmatmul.mubr.f32.gmra.mxu0 %v5530
    %v5601 = vpop.f32.mrf.mxu0
    %v5602 = vadd.f32 %v5527, %v5601
    %v5603 = vpop.f32.mrf.mxu0
    %5604 = vmatprep.mubr.f32.mxu0 0.0
    %5605 = vmatmul.mubr.f32.gmra.mxu0 %v5533
    %v5606 = vpop.f32.mrf.mxu0
    %v5607 = vadd.f32 %v5527, %v5606
    %v5608 = vpop.f32.mrf.mxu0
    %5609 = vdwg.mxu0
    %5610 = vst.msk [vmem:[#allocation35] sm:$0xff] %vm486, %v4877
    %5611 = vst.msk [vmem:[#allocation35 + $0x8] sm:$0xff] %vm486, %v4878
    %5612 = vst.msk [vmem:[#allocation35 + $0x10] sm:$0xff] %vm486, %v4879
    %5613 = vst.msk [vmem:[#allocation35 + $0x18] sm:$0xff] %vm486, %v4880
    %5614 = vst.msk [vmem:[#allocation35 + $0x20] sm:$0xff] %vm486, %v4881
    %5615 = vst.msk [vmem:[#allocation35 + $0x28] sm:$0xff] %vm486, %v4882
    %5616 = vst.msk [vmem:[#allocation35 + $0x30] sm:$0xff] %vm486, %v4883
    %5617 = vst.msk [vmem:[#allocation35 + $0x38] sm:$0xff] %vm486, %v4884
    %v5618 = vadd.f32 %v3934, %v5602
    %v5619 = vadd.f32 %v3935, %v5607
    %v5620 = vsel %vm388, %v5618, 0.0
    %5621 = vadd.xlane.f32.xlu0 %v5620
    %v5622 = vpop.xlane.xlu0 %5621
    %v5623 = vsel %vm388, %v5619, 0.0
    %5624 = vadd.xlane.f32.xlu0 %v5623
    %v5625 = vpop.xlane.xlu0 %5624
    %v5626 = vmul.f32 %v5622, %v1932
    %v5627 = vmul.f32 %v5625, %v1932
    %v5628 = vsub.f32 %v5618, %v5626
    %v5629 = vsub.f32 %v5619, %v5627
    %v5630 = vmul.f32 %v5628, %v5628
    %v5631 = vmul.f32 %v5629, %v5629
    %v5632 = vsel %vm388, %v5630, 0.0
    %5633 = vadd.xlane.f32.xlu0 %v5632
    %v5634 = vpop.xlane.xlu0 %5633
    %v5635 = vsel %vm388, %v5631, 0.0
    %5636 = vadd.xlane.f32.xlu0 %v5635
    %v5637 = vpop.xlane.xlu0 %5636
    %v5638 = vmul.f32 %v5634, %v1932
    %v5639 = vmul.f32 %v5637, %v1932
    %v5640 = vadd.f32 %v5638, 1e-05
    %v5641 = vadd.f32 %v5639, 1e-05
    %v5642 = vrsqrt.pop %v5640
    %v5643 = vrsqrt.pop %v5641
    %v5644 = vmul.f32 %v5628, %v5642
    %v5645 = vmul.f32 %v5629, %v5643
    %v5647 = vlaneseq
    %v5648 = vshrl.u32 %v5647, 7
    %v5649 = vsub.s32 0, %v5648
    %v5650 = vrot.slane %v3973, %v5649
    %v5652 = vmul.f32 %v5644, %v5650
    %v5653 = vmul.f32 %v5645, %v5650
    %v5655 = vlaneseq
    %v5656 = vshrl.u32 %v5655, 7
    %v5657 = vsub.s32 0, %v5656
    %v5658 = vrot.slane %v3974, %v5657
    %v5660 = vadd.f32 %v5652, %v5658
    %v5661 = vadd.f32 %v5653, %v5658
    %v5663 = vlaneseq
    %v5664 = vshrl.u32 %v5663, 7
    %v5665 = vsub.s32 0, %v5664
    %v5666 = vrot.slane %v3950, %v5665
    %v5669 = vsel %vm388, %v5660, 0
    %v5672 = vsel %vm388, %v5661, 0
    %5674 = vmatprep.subr.mxu0 0.0
    %5675 = vmatpush1.msra.mxu0 0.0
    %5676 = vmatprep.subr.mxu0 0.0
    %5677 = vmatpush1.msra.mxu0 0.0
    %5678 = vmatprep.subr.mxu0 0.0
    %5679 = vmatpush1.msra.mxu0 0.0
    %5680 = vmatprep.subr.mxu0 0.0
    %5681 = vmatpush1.msra.mxu0 0.0
    %5682 = vmatprep.subr.mxu0 0.0
    %5683 = vmatpush1.msra.mxu0 0.0
    %5684 = vmatprep.subr.mxu0 0.0
    %5685 = vmatpush1.msra.mxu0 0.0
    %5686 = vmatprep.subr.mxu0 0.0
    %5687 = vmatpush1.msra.mxu0 0.0
    %5688 = vmatprep.subr.mxu0 0.0
    %5689 = vmatpush1.msra.mxu0 0.0
    %5690 = vmatprep.subr.mxu0 0.0
    %5691 = vmatpush1.msra.mxu0 0.0
    %5692 = vmatprep.subr.mxu0 0.0
    %5693 = vmatpush1.msra.mxu0 0.0
    %5694 = vmatprep.subr.mxu0 0.0
    %5695 = vmatpush1.msra.mxu0 0.0
    %5696 = vmatprep.subr.mxu0 0.0
    %5697 = vmatpush1.msra.mxu0 0.0
    %5698 = vmatprep.subr.mxu0 0.0
    %5699 = vmatpush1.msra.mxu0 %v3949
    %5700 = vmatprep.subr.mxu0 0.0
    %5701 = vmatpush1.msra.mxu0 %v3948
    %5702 = vmatprep.subr.mxu0 0.0
    %5703 = vmatpush1.msra.mxu0 %v3947
    %5704 = vmatprep.subr.mxu0 0.0
    %5705 = vmatpush1.msra.mxu0 %v3946
    %5706 = vmatprep.subr.mxu0 0.0
    %5707 = vmatpush2.msra.mxu0 0.0
    %5708 = vmatprep.subr.mxu0 0.0
    %5709 = vmatpush2.msra.mxu0 0.0
    %5710 = vmatprep.subr.mxu0 0.0
    %5711 = vmatpush2.msra.mxu0 0.0
    %5712 = vmatprep.subr.mxu0 0.0
    %5713 = vmatpush2.msra.mxu0 0.0
    %5714 = vmatprep.subr.mxu0 0.0
    %5715 = vmatpush2.msra.mxu0 0.0
    %5716 = vmatprep.subr.mxu0 0.0
    %5717 = vmatpush2.msra.mxu0 0.0
    %5718 = vmatprep.subr.mxu0 0.0
    %5719 = vmatpush2.msra.mxu0 0.0
    %5720 = vmatprep.subr.mxu0 0.0
    %5721 = vmatpush2.msra.mxu0 0.0
    %5722 = vmatprep.subr.mxu0 0.0
    %5723 = vmatpush2.msra.mxu0 0.0
    %5724 = vmatprep.subr.mxu0 0.0
    %5725 = vmatpush2.msra.mxu0 0.0
    %5726 = vmatprep.subr.mxu0 0.0
    %5727 = vmatpush2.msra.mxu0 0.0
    %5728 = vmatprep.subr.mxu0 0.0
    %5729 = vmatpush2.msra.mxu0 0.0
    %5730 = vmatprep.subr.mxu0 0.0
    %5731 = vmatpush2.msra.mxu0 0.0
    %5732 = vmatprep.subr.mxu0 0.0
    %5733 = vmatpush2.msra.mxu0 0.0
    %5734 = vmatprep.subr.mxu0 0.0
    %5735 = vmatpush2.msra.mxu0 0.0
    %5736 = vmatprep.subr.mxu0 0.0
    %5737 = vmatpush2.msra.mxu0 0.0
    %5738 = vmatprep.mubr.f32.mxu0 0.0
    %5739 = vmatmul.mubr.f32.gmra.mxu0 %v5669
    %v5740 = vpop.f32.mrf.mxu0
    %v5741 = vadd.f32 %v5666, %v5740
    %v5742 = vpop.f32.mrf.mxu0
    %5743 = vmatprep.mubr.f32.mxu0 0.0
    %5744 = vmatmul.mubr.f32.gmra.mxu0 %v5672
    %v5745 = vpop.f32.mrf.mxu0
    %v5746 = vadd.f32 %v5666, %v5745
    %v5747 = vpop.f32.mrf.mxu0
    %5748 = vdwg.mxu0
    %5751 = vrot.lane.b32.xlu0 %v5741, 120
    %v5752 = vpop.permute.xlu0 %5751
    %5753 = vrot.lane.b32.xlu0 %v5746, 120
    %v5754 = vpop.permute.xlu0 %5753
    %5755 = vrot.lane.b32.xlu0 %v5741, 112
    %v5756 = vpop.permute.xlu0 %5755
    %5757 = vrot.lane.b32.xlu0 %v5746, 112
    %v5758 = vpop.permute.xlu0 %5757
    %5759 = vrot.lane.b32.xlu0 %v5741, 104
    %v5760 = vpop.permute.xlu0 %5759
    %5761 = vrot.lane.b32.xlu0 %v5746, 104
    %v5762 = vpop.permute.xlu0 %5761
    %v5763 = vsel %vm486, %v5741, 0
    %v5765 = vsel %vm486, %v4058, 0
    %5767 = vmatprep.subr.mxu0 0.0
    %5768 = vmatpush1.xpose.msra.mxu0 0.0
    %5769 = vmatprep.subr.mxu0 0.0
    %5770 = vmatpush1.xpose.msra.mxu0 0.0
    %5771 = vmatprep.subr.mxu0 0.0
    %5772 = vmatpush1.xpose.msra.mxu0 0.0
    %5773 = vmatprep.subr.mxu0 0.0
    %5774 = vmatpush1.xpose.msra.mxu0 0.0
    %5775 = vmatprep.subr.mxu0 0.0
    %5776 = vmatpush1.xpose.msra.mxu0 0.0
    %5777 = vmatprep.subr.mxu0 0.0
    %5778 = vmatpush1.xpose.msra.mxu0 0.0
    %5779 = vmatprep.subr.mxu0 0.0
    %5780 = vmatpush1.xpose.msra.mxu0 0.0
    %5781 = vmatprep.subr.mxu0 0.0
    %5782 = vmatpush1.xpose.msra.mxu0 0.0
    %5783 = vmatprep.subr.mxu0 0.0
    %5784 = vmatpush1.xpose.msra.mxu0 0.0
    %5785 = vmatprep.subr.mxu0 0.0
    %5786 = vmatpush1.xpose.msra.mxu0 0.0
    %5787 = vmatprep.subr.mxu0 0.0
    %5788 = vmatpush1.xpose.msra.mxu0 0.0
    %5789 = vmatprep.subr.mxu0 0.0
    %5790 = vmatpush1.xpose.msra.mxu0 0.0
    %5791 = vmatprep.subr.mxu0 0.0
    %5792 = vmatpush1.xpose.msra.mxu0 0.0
    %5793 = vmatprep.subr.mxu0 0.0
    %5794 = vmatpush1.xpose.msra.mxu0 0.0
    %5795 = vmatprep.subr.mxu0 0.0
    %5796 = vmatpush1.xpose.msra.mxu0 0.0
    %5797 = vmatprep.subr.mxu0 0.0
    %5798 = vmatpush1.xpose.msra.mxu0 %v5765
    %5799 = vmatprep.subr.mxu0 0.0
    %5800 = vmatpush2.xpose.msra.mxu0 0.0
    %5801 = vmatprep.subr.mxu0 0.0
    %5802 = vmatpush2.xpose.msra.mxu0 0.0
    %5803 = vmatprep.subr.mxu0 0.0
    %5804 = vmatpush2.xpose.msra.mxu0 0.0
    %5805 = vmatprep.subr.mxu0 0.0
    %5806 = vmatpush2.xpose.msra.mxu0 0.0
    %5807 = vmatprep.subr.mxu0 0.0
    %5808 = vmatpush2.xpose.msra.mxu0 0.0
    %5809 = vmatprep.subr.mxu0 0.0
    %5810 = vmatpush2.xpose.msra.mxu0 0.0
    %5811 = vmatprep.subr.mxu0 0.0
    %5812 = vmatpush2.xpose.msra.mxu0 0.0
    %5813 = vmatprep.subr.mxu0 0.0
    %5814 = vmatpush2.xpose.msra.mxu0 0.0
    %5815 = vmatprep.subr.mxu0 0.0
    %5816 = vmatpush2.xpose.msra.mxu0 0.0
    %5817 = vmatprep.subr.mxu0 0.0
    %5818 = vmatpush2.xpose.msra.mxu0 0.0
    %5819 = vmatprep.subr.mxu0 0.0
    %5820 = vmatpush2.xpose.msra.mxu0 0.0
    %5821 = vmatprep.subr.mxu0 0.0
    %5822 = vmatpush2.xpose.msra.mxu0 0.0
    %5823 = vmatprep.subr.mxu0 0.0
    %5824 = vmatpush2.xpose.msra.mxu0 0.0
    %5825 = vmatprep.subr.mxu0 0.0
    %5826 = vmatpush2.xpose.msra.mxu0 0.0
    %5827 = vmatprep.subr.mxu0 0.0
    %5828 = vmatpush2.xpose.msra.mxu0 0.0
    %5829 = vmatprep.subr.mxu0 0.0
    %5830 = vmatpush2.xpose.msra.mxu0 0.0
    %5831 = vmatprep.mubr.f32.mxu0 0.0
    %5832 = vmatmul.mubr.f32.gmra.mxu0 %v5763
    %v5833 = vpop.f32.mrf.mxu0
    %v5834 = vadd.f32 0.0, %v5833
    %v5835 = vpop.f32.mrf.mxu0
    %5836 = vdwg.mxu0
    %v5837 = vsel %vm486, %v5752, 0
    %v5839 = vsel %vm486, %v4069, 0
    %5841 = vmatprep.subr.mxu0 0.0
    %5842 = vmatpush1.xpose.msra.mxu0 0.0
    %5843 = vmatprep.subr.mxu0 0.0
    %5844 = vmatpush1.xpose.msra.mxu0 0.0
    %5845 = vmatprep.subr.mxu0 0.0
    %5846 = vmatpush1.xpose.msra.mxu0 0.0
    %5847 = vmatprep.subr.mxu0 0.0
    %5848 = vmatpush1.xpose.msra.mxu0 0.0
    %5849 = vmatprep.subr.mxu0 0.0
    %5850 = vmatpush1.xpose.msra.mxu0 0.0
    %5851 = vmatprep.subr.mxu0 0.0
    %5852 = vmatpush1.xpose.msra.mxu0 0.0
    %5853 = vmatprep.subr.mxu0 0.0
    %5854 = vmatpush1.xpose.msra.mxu0 0.0
    %5855 = vmatprep.subr.mxu0 0.0
    %5856 = vmatpush1.xpose.msra.mxu0 0.0
    %5857 = vmatprep.subr.mxu0 0.0
    %5858 = vmatpush1.xpose.msra.mxu0 0.0
    %5859 = vmatprep.subr.mxu0 0.0
    %5860 = vmatpush1.xpose.msra.mxu0 0.0
    %5861 = vmatprep.subr.mxu0 0.0
    %5862 = vmatpush1.xpose.msra.mxu0 0.0
    %5863 = vmatprep.subr.mxu0 0.0
    %5864 = vmatpush1.xpose.msra.mxu0 0.0
    %5865 = vmatprep.subr.mxu0 0.0
    %5866 = vmatpush1.xpose.msra.mxu0 0.0
    %5867 = vmatprep.subr.mxu0 0.0
    %5868 = vmatpush1.xpose.msra.mxu0 0.0
    %5869 = vmatprep.subr.mxu0 0.0
    %5870 = vmatpush1.xpose.msra.mxu0 0.0
    %5871 = vmatprep.subr.mxu0 0.0
    %5872 = vmatpush1.xpose.msra.mxu0 %v5839
    %5873 = vmatprep.subr.mxu0 0.0
    %5874 = vmatpush2.xpose.msra.mxu0 0.0
    %5875 = vmatprep.subr.mxu0 0.0
    %5876 = vmatpush2.xpose.msra.mxu0 0.0
    %5877 = vmatprep.subr.mxu0 0.0
    %5878 = vmatpush2.xpose.msra.mxu0 0.0
    %5879 = vmatprep.subr.mxu0 0.0
    %5880 = vmatpush2.xpose.msra.mxu0 0.0
    %5881 = vmatprep.subr.mxu0 0.0
    %5882 = vmatpush2.xpose.msra.mxu0 0.0
    %5883 = vmatprep.subr.mxu0 0.0
    %5884 = vmatpush2.xpose.msra.mxu0 0.0
    %5885 = vmatprep.subr.mxu0 0.0
    %5886 = vmatpush2.xpose.msra.mxu0 0.0
    %5887 = vmatprep.subr.mxu0 0.0
    %5888 = vmatpush2.xpose.msra.mxu0 0.0
    %5889 = vmatprep.subr.mxu0 0.0
    %5890 = vmatpush2.xpose.msra.mxu0 0.0
    %5891 = vmatprep.subr.mxu0 0.0
    %5892 = vmatpush2.xpose.msra.mxu0 0.0
    %5893 = vmatprep.subr.mxu0 0.0
    %5894 = vmatpush2.xpose.msra.mxu0 0.0
    %5895 = vmatprep.subr.mxu0 0.0
    %5896 = vmatpush2.xpose.msra.mxu0 0.0
    %5897 = vmatprep.subr.mxu0 0.0
    %5898 = vmatpush2.xpose.msra.mxu0 0.0
    %5899 = vmatprep.subr.mxu0 0.0
    %5900 = vmatpush2.xpose.msra.mxu0 0.0
    %5901 = vmatprep.subr.mxu0 0.0
    %5902 = vmatpush2.xpose.msra.mxu0 0.0
    %5903 = vmatprep.subr.mxu0 0.0
    %5904 = vmatpush2.xpose.msra.mxu0 0.0
    %5905 = vmatprep.mubr.f32.mxu0 0.0
    %5906 = vmatmul.mubr.f32.gmra.mxu0 %v5837
    %v5907 = vpop.f32.mrf.mxu0
    %v5908 = vadd.f32 0.0, %v5907
    %v5909 = vpop.f32.mrf.mxu0
    %5910 = vdwg.mxu0
    %v5911 = vsel %vm486, %v5756, 0
    %v5913 = vsel %vm486, %v4073, 0
    %5915 = vmatprep.subr.mxu0 0.0
    %5916 = vmatpush1.xpose.msra.mxu0 0.0
    %5917 = vmatprep.subr.mxu0 0.0
    %5918 = vmatpush1.xpose.msra.mxu0 0.0
    %5919 = vmatprep.subr.mxu0 0.0
    %5920 = vmatpush1.xpose.msra.mxu0 0.0
    %5921 = vmatprep.subr.mxu0 0.0
    %5922 = vmatpush1.xpose.msra.mxu0 0.0
    %5923 = vmatprep.subr.mxu0 0.0
    %5924 = vmatpush1.xpose.msra.mxu0 0.0
    %5925 = vmatprep.subr.mxu0 0.0
    %5926 = vmatpush1.xpose.msra.mxu0 0.0
    %5927 = vmatprep.subr.mxu0 0.0
    %5928 = vmatpush1.xpose.msra.mxu0 0.0
    %5929 = vmatprep.subr.mxu0 0.0
    %5930 = vmatpush1.xpose.msra.mxu0 0.0
    %5931 = vmatprep.subr.mxu0 0.0
    %5932 = vmatpush1.xpose.msra.mxu0 0.0
    %5933 = vmatprep.subr.mxu0 0.0
    %5934 = vmatpush1.xpose.msra.mxu0 0.0
    %5935 = vmatprep.subr.mxu0 0.0
    %5936 = vmatpush1.xpose.msra.mxu0 0.0
    %5937 = vmatprep.subr.mxu0 0.0
    %5938 = vmatpush1.xpose.msra.mxu0 0.0
    %5939 = vmatprep.subr.mxu0 0.0
    %5940 = vmatpush1.xpose.msra.mxu0 0.0
    %5941 = vmatprep.subr.mxu0 0.0
    %5942 = vmatpush1.xpose.msra.mxu0 0.0
    %5943 = vmatprep.subr.mxu0 0.0
    %5944 = vmatpush1.xpose.msra.mxu0 0.0
    %5945 = vmatprep.subr.mxu0 0.0
    %5946 = vmatpush1.xpose.msra.mxu0 %v5913
    %5947 = vmatprep.subr.mxu0 0.0
    %5948 = vmatpush2.xpose.msra.mxu0 0.0
    %5949 = vmatprep.subr.mxu0 0.0
    %5950 = vmatpush2.xpose.msra.mxu0 0.0
    %5951 = vmatprep.subr.mxu0 0.0
    %5952 = vmatpush2.xpose.msra.mxu0 0.0
    %5953 = vmatprep.subr.mxu0 0.0
    %5954 = vmatpush2.xpose.msra.mxu0 0.0
    %5955 = vmatprep.subr.mxu0 0.0
    %5956 = vmatpush2.xpose.msra.mxu0 0.0
    %5957 = vmatprep.subr.mxu0 0.0
    %5958 = vmatpush2.xpose.msra.mxu0 0.0
    %5959 = vmatprep.subr.mxu0 0.0
    %5960 = vmatpush2.xpose.msra.mxu0 0.0
    %5961 = vmatprep.subr.mxu0 0.0
    %5962 = vmatpush2.xpose.msra.mxu0 0.0
    %5963 = vmatprep.subr.mxu0 0.0
    %5964 = vmatpush2.xpose.msra.mxu0 0.0
    %5965 = vmatprep.subr.mxu0 0.0
    %5966 = vmatpush2.xpose.msra.mxu0 0.0
    %5967 = vmatprep.subr.mxu0 0.0
    %5968 = vmatpush2.xpose.msra.mxu0 0.0
    %5969 = vmatprep.subr.mxu0 0.0
    %5970 = vmatpush2.xpose.msra.mxu0 0.0
    %5971 = vmatprep.subr.mxu0 0.0
    %5972 = vmatpush2.xpose.msra.mxu0 0.0
    %5973 = vmatprep.subr.mxu0 0.0
    %5974 = vmatpush2.xpose.msra.mxu0 0.0
    %5975 = vmatprep.subr.mxu0 0.0
    %5976 = vmatpush2.xpose.msra.mxu0 0.0
    %5977 = vmatprep.subr.mxu0 0.0
    %5978 = vmatpush2.xpose.msra.mxu0 0.0
    %5979 = vmatprep.mubr.f32.mxu0 0.0
    %5980 = vmatmul.mubr.f32.gmra.mxu0 %v5911
    %v5981 = vpop.f32.mrf.mxu0
    %v5982 = vadd.f32 0.0, %v5981
    %v5983 = vpop.f32.mrf.mxu0
    %5984 = vdwg.mxu0
    %v5985 = vsel %vm486, %v5760, 0
    %v5987 = vsel %vm486, %v4077, 0
    %5989 = vmatprep.subr.mxu0 0.0
    %5990 = vmatpush1.xpose.msra.mxu0 0.0
    %5991 = vmatprep.subr.mxu0 0.0
    %5992 = vmatpush1.xpose.msra.mxu0 0.0
    %5993 = vmatprep.subr.mxu0 0.0
    %5994 = vmatpush1.xpose.msra.mxu0 0.0
    %5995 = vmatprep.subr.mxu0 0.0
    %5996 = vmatpush1.xpose.msra.mxu0 0.0
    %5997 = vmatprep.subr.mxu0 0.0
    %5998 = vmatpush1.xpose.msra.mxu0 0.0
    %5999 = vmatprep.subr.mxu0 0.0
    %6000 = vmatpush1.xpose.msra.mxu0 0.0
    %6001 = vmatprep.subr.mxu0 0.0
    %6002 = vmatpush1.xpose.msra.mxu0 0.0
    %6003 = vmatprep.subr.mxu0 0.0
    %6004 = vmatpush1.xpose.msra.mxu0 0.0
    %6005 = vmatprep.subr.mxu0 0.0
    %6006 = vmatpush1.xpose.msra.mxu0 0.0
    %6007 = vmatprep.subr.mxu0 0.0
    %6008 = vmatpush1.xpose.msra.mxu0 0.0
    %6009 = vmatprep.subr.mxu0 0.0
    %6010 = vmatpush1.xpose.msra.mxu0 0.0
    %6011 = vmatprep.subr.mxu0 0.0
    %6012 = vmatpush1.xpose.msra.mxu0 0.0
    %6013 = vmatprep.subr.mxu0 0.0
    %6014 = vmatpush1.xpose.msra.mxu0 0.0
    %6015 = vmatprep.subr.mxu0 0.0
    %6016 = vmatpush1.xpose.msra.mxu0 0.0
    %6017 = vmatprep.subr.mxu0 0.0
    %6018 = vmatpush1.xpose.msra.mxu0 0.0
    %6019 = vmatprep.subr.mxu0 0.0
    %6020 = vmatpush1.xpose.msra.mxu0 %v5987
    %6021 = vmatprep.subr.mxu0 0.0
    %6022 = vmatpush2.xpose.msra.mxu0 0.0
    %6023 = vmatprep.subr.mxu0 0.0
    %6024 = vmatpush2.xpose.msra.mxu0 0.0
    %6025 = vmatprep.subr.mxu0 0.0
    %6026 = vmatpush2.xpose.msra.mxu0 0.0
    %6027 = vmatprep.subr.mxu0 0.0
    %6028 = vmatpush2.xpose.msra.mxu0 0.0
    %6029 = vmatprep.subr.mxu0 0.0
    %6030 = vmatpush2.xpose.msra.mxu0 0.0
    %6031 = vmatprep.subr.mxu0 0.0
    %6032 = vmatpush2.xpose.msra.mxu0 0.0
    %6033 = vmatprep.subr.mxu0 0.0
    %6034 = vmatpush2.xpose.msra.mxu0 0.0
    %6035 = vmatprep.subr.mxu0 0.0
    %6036 = vmatpush2.xpose.msra.mxu0 0.0
    %6037 = vmatprep.subr.mxu0 0.0
    %6038 = vmatpush2.xpose.msra.mxu0 0.0
    %6039 = vmatprep.subr.mxu0 0.0
    %6040 = vmatpush2.xpose.msra.mxu0 0.0
    %6041 = vmatprep.subr.mxu0 0.0
    %6042 = vmatpush2.xpose.msra.mxu0 0.0
    %6043 = vmatprep.subr.mxu0 0.0
    %6044 = vmatpush2.xpose.msra.mxu0 0.0
    %6045 = vmatprep.subr.mxu0 0.0
    %6046 = vmatpush2.xpose.msra.mxu0 0.0
    %6047 = vmatprep.subr.mxu0 0.0
    %6048 = vmatpush2.xpose.msra.mxu0 0.0
    %6049 = vmatprep.subr.mxu0 0.0
    %6050 = vmatpush2.xpose.msra.mxu0 0.0
    %6051 = vmatprep.subr.mxu0 0.0
    %6052 = vmatpush2.xpose.msra.mxu0 0.0
    %6053 = vmatprep.mubr.f32.mxu0 0.0
    %6054 = vmatmul.mubr.f32.gmra.mxu0 %v5985
    %v6055 = vpop.f32.mrf.mxu0
    %v6056 = vadd.f32 0.0, %v6055
    %v6057 = vpop.f32.mrf.mxu0
    %6058 = vdwg.mxu0
    %v6059 = vsel %vm486, %v5746, 0
    %v6061 = vsel %vm486, %v4063, 0
    %6063 = vmatprep.subr.mxu0 0.0
    %6064 = vmatpush1.xpose.msra.mxu0 0.0
    %6065 = vmatprep.subr.mxu0 0.0
    %6066 = vmatpush1.xpose.msra.mxu0 0.0
    %6067 = vmatprep.subr.mxu0 0.0
    %6068 = vmatpush1.xpose.msra.mxu0 0.0
    %6069 = vmatprep.subr.mxu0 0.0
    %6070 = vmatpush1.xpose.msra.mxu0 0.0
    %6071 = vmatprep.subr.mxu0 0.0
    %6072 = vmatpush1.xpose.msra.mxu0 0.0
    %6073 = vmatprep.subr.mxu0 0.0
    %6074 = vmatpush1.xpose.msra.mxu0 0.0
    %6075 = vmatprep.subr.mxu0 0.0
    %6076 = vmatpush1.xpose.msra.mxu0 0.0
    %6077 = vmatprep.subr.mxu0 0.0
    %6078 = vmatpush1.xpose.msra.mxu0 0.0
    %6079 = vmatprep.subr.mxu0 0.0
    %6080 = vmatpush1.xpose.msra.mxu0 0.0
    %6081 = vmatprep.subr.mxu0 0.0
    %6082 = vmatpush1.xpose.msra.mxu0 0.0
    %6083 = vmatprep.subr.mxu0 0.0
    %6084 = vmatpush1.xpose.msra.mxu0 0.0
    %6085 = vmatprep.subr.mxu0 0.0
    %6086 = vmatpush1.xpose.msra.mxu0 0.0
    %6087 = vmatprep.subr.mxu0 0.0
    %6088 = vmatpush1.xpose.msra.mxu0 0.0
    %6089 = vmatprep.subr.mxu0 0.0
    %6090 = vmatpush1.xpose.msra.mxu0 0.0
    %6091 = vmatprep.subr.mxu0 0.0
    %6092 = vmatpush1.xpose.msra.mxu0 0.0
    %6093 = vmatprep.subr.mxu0 0.0
    %6094 = vmatpush1.xpose.msra.mxu0 %v6061
    %6095 = vmatprep.subr.mxu0 0.0
    %6096 = vmatpush2.xpose.msra.mxu0 0.0
    %6097 = vmatprep.subr.mxu0 0.0
    %6098 = vmatpush2.xpose.msra.mxu0 0.0
    %6099 = vmatprep.subr.mxu0 0.0
    %6100 = vmatpush2.xpose.msra.mxu0 0.0
    %6101 = vmatprep.subr.mxu0 0.0
    %6102 = vmatpush2.xpose.msra.mxu0 0.0
    %6103 = vmatprep.subr.mxu0 0.0
    %6104 = vmatpush2.xpose.msra.mxu0 0.0
    %6105 = vmatprep.subr.mxu0 0.0
    %6106 = vmatpush2.xpose.msra.mxu0 0.0
    %6107 = vmatprep.subr.mxu0 0.0
    %6108 = vmatpush2.xpose.msra.mxu0 0.0
    %6109 = vmatprep.subr.mxu0 0.0
    %6110 = vmatpush2.xpose.msra.mxu0 0.0
    %6111 = vmatprep.subr.mxu0 0.0
    %6112 = vmatpush2.xpose.msra.mxu0 0.0
    %6113 = vmatprep.subr.mxu0 0.0
    %6114 = vmatpush2.xpose.msra.mxu0 0.0
    %6115 = vmatprep.subr.mxu0 0.0
    %6116 = vmatpush2.xpose.msra.mxu0 0.0
    %6117 = vmatprep.subr.mxu0 0.0
    %6118 = vmatpush2.xpose.msra.mxu0 0.0
    %6119 = vmatprep.subr.mxu0 0.0
    %6120 = vmatpush2.xpose.msra.mxu0 0.0
    %6121 = vmatprep.subr.mxu0 0.0
    %6122 = vmatpush2.xpose.msra.mxu0 0.0
    %6123 = vmatprep.subr.mxu0 0.0
    %6124 = vmatpush2.xpose.msra.mxu0 0.0
    %6125 = vmatprep.subr.mxu0 0.0
    %6126 = vmatpush2.xpose.msra.mxu0 0.0
    %6127 = vmatprep.mubr.f32.mxu0 0.0
    %6128 = vmatmul.mubr.f32.gmra.mxu0 %v6059
    %v6129 = vpop.f32.mrf.mxu0
    %v6130 = vadd.f32 0.0, %v6129
    %v6131 = vpop.f32.mrf.mxu0
    %6132 = vdwg.mxu0
    %v6133 = vsel %vm486, %v5754, 0
    %v6135 = vsel %vm486, %v4071, 0
    %6137 = vmatprep.subr.mxu0 0.0
    %6138 = vmatpush1.xpose.msra.mxu0 0.0
    %6139 = vmatprep.subr.mxu0 0.0
    %6140 = vmatpush1.xpose.msra.mxu0 0.0
    %6141 = vmatprep.subr.mxu0 0.0
    %6142 = vmatpush1.xpose.msra.mxu0 0.0
    %6143 = vmatprep.subr.mxu0 0.0
    %6144 = vmatpush1.xpose.msra.mxu0 0.0
    %6145 = vmatprep.subr.mxu0 0.0
    %6146 = vmatpush1.xpose.msra.mxu0 0.0
    %6147 = vmatprep.subr.mxu0 0.0
    %6148 = vmatpush1.xpose.msra.mxu0 0.0
    %6149 = vmatprep.subr.mxu0 0.0
    %6150 = vmatpush1.xpose.msra.mxu0 0.0
    %6151 = vmatprep.subr.mxu0 0.0
    %6152 = vmatpush1.xpose.msra.mxu0 0.0
    %6153 = vmatprep.subr.mxu0 0.0
    %6154 = vmatpush1.xpose.msra.mxu0 0.0
    %6155 = vmatprep.subr.mxu0 0.0
    %6156 = vmatpush1.xpose.msra.mxu0 0.0
    %6157 = vmatprep.subr.mxu0 0.0
    %6158 = vmatpush1.xpose.msra.mxu0 0.0
    %6159 = vmatprep.subr.mxu0 0.0
    %6160 = vmatpush1.xpose.msra.mxu0 0.0
    %6161 = vmatprep.subr.mxu0 0.0
    %6162 = vmatpush1.xpose.msra.mxu0 0.0
    %6163 = vmatprep.subr.mxu0 0.0
    %6164 = vmatpush1.xpose.msra.mxu0 0.0
    %6165 = vmatprep.subr.mxu0 0.0
    %6166 = vmatpush1.xpose.msra.mxu0 0.0
    %6167 = vmatprep.subr.mxu0 0.0
    %6168 = vmatpush1.xpose.msra.mxu0 %v6135
    %6169 = vmatprep.subr.mxu0 0.0
    %6170 = vmatpush2.xpose.msra.mxu0 0.0
    %6171 = vmatprep.subr.mxu0 0.0
    %6172 = vmatpush2.xpose.msra.mxu0 0.0
    %6173 = vmatprep.subr.mxu0 0.0
    %6174 = vmatpush2.xpose.msra.mxu0 0.0
    %6175 = vmatprep.subr.mxu0 0.0
    %6176 = vmatpush2.xpose.msra.mxu0 0.0
    %6177 = vmatprep.subr.mxu0 0.0
    %6178 = vmatpush2.xpose.msra.mxu0 0.0
    %6179 = vmatprep.subr.mxu0 0.0
    %6180 = vmatpush2.xpose.msra.mxu0 0.0
    %6181 = vmatprep.subr.mxu0 0.0
    %6182 = vmatpush2.xpose.msra.mxu0 0.0
    %6183 = vmatprep.subr.mxu0 0.0
    %6184 = vmatpush2.xpose.msra.mxu0 0.0
    %6185 = vmatprep.subr.mxu0 0.0
    %6186 = vmatpush2.xpose.msra.mxu0 0.0
    %6187 = vmatprep.subr.mxu0 0.0
    %6188 = vmatpush2.xpose.msra.mxu0 0.0
    %6189 = vmatprep.subr.mxu0 0.0
    %6190 = vmatpush2.xpose.msra.mxu0 0.0
    %6191 = vmatprep.subr.mxu0 0.0
    %6192 = vmatpush2.xpose.msra.mxu0 0.0
    %6193 = vmatprep.subr.mxu0 0.0
    %6194 = vmatpush2.xpose.msra.mxu0 0.0
    %6195 = vmatprep.subr.mxu0 0.0
    %6196 = vmatpush2.xpose.msra.mxu0 0.0
    %6197 = vmatprep.subr.mxu0 0.0
    %6198 = vmatpush2.xpose.msra.mxu0 0.0
    %6199 = vmatprep.subr.mxu0 0.0
    %6200 = vmatpush2.xpose.msra.mxu0 0.0
    %6201 = vmatprep.mubr.f32.mxu0 0.0
    %6202 = vmatmul.mubr.f32.gmra.mxu0 %v6133
    %v6203 = vpop.f32.mrf.mxu0
    %v6204 = vadd.f32 0.0, %v6203
    %v6205 = vpop.f32.mrf.mxu0
    %6206 = vdwg.mxu0
    %v6207 = vsel %vm486, %v5758, 0
    %v6209 = vsel %vm486, %v4075, 0
    %6211 = vmatprep.subr.mxu0 0.0
    %6212 = vmatpush1.xpose.msra.mxu0 0.0
    %6213 = vmatprep.subr.mxu0 0.0
    %6214 = vmatpush1.xpose.msra.mxu0 0.0
    %6215 = vmatprep.subr.mxu0 0.0
    %6216 = vmatpush1.xpose.msra.mxu0 0.0
    %6217 = vmatprep.subr.mxu0 0.0
    %6218 = vmatpush1.xpose.msra.mxu0 0.0
    %6219 = vmatprep.subr.mxu0 0.0
    %6220 = vmatpush1.xpose.msra.mxu0 0.0
    %6221 = vmatprep.subr.mxu0 0.0
    %6222 = vmatpush1.xpose.msra.mxu0 0.0
    %6223 = vmatprep.subr.mxu0 0.0
    %6224 = vmatpush1.xpose.msra.mxu0 0.0
    %6225 = vmatprep.subr.mxu0 0.0
    %6226 = vmatpush1.xpose.msra.mxu0 0.0
    %6227 = vmatprep.subr.mxu0 0.0
    %6228 = vmatpush1.xpose.msra.mxu0 0.0
    %6229 = vmatprep.subr.mxu0 0.0
    %6230 = vmatpush1.xpose.msra.mxu0 0.0
    %6231 = vmatprep.subr.mxu0 0.0
    %6232 = vmatpush1.xpose.msra.mxu0 0.0
    %6233 = vmatprep.subr.mxu0 0.0
    %6234 = vmatpush1.xpose.msra.mxu0 0.0
    %6235 = vmatprep.subr.mxu0 0.0
    %6236 = vmatpush1.xpose.msra.mxu0 0.0
    %6237 = vmatprep.subr.mxu0 0.0
    %6238 = vmatpush1.xpose.msra.mxu0 0.0
    %6239 = vmatprep.subr.mxu0 0.0
    %6240 = vmatpush1.xpose.msra.mxu0 0.0
    %6241 = vmatprep.subr.mxu0 0.0
    %6242 = vmatpush1.xpose.msra.mxu0 %v6209
    %6243 = vmatprep.subr.mxu0 0.0
    %6244 = vmatpush2.xpose.msra.mxu0 0.0
    %6245 = vmatprep.subr.mxu0 0.0
    %6246 = vmatpush2.xpose.msra.mxu0 0.0
    %6247 = vmatprep.subr.mxu0 0.0
    %6248 = vmatpush2.xpose.msra.mxu0 0.0
    %6249 = vmatprep.subr.mxu0 0.0
    %6250 = vmatpush2.xpose.msra.mxu0 0.0
    %6251 = vmatprep.subr.mxu0 0.0
    %6252 = vmatpush2.xpose.msra.mxu0 0.0
    %6253 = vmatprep.subr.mxu0 0.0
    %6254 = vmatpush2.xpose.msra.mxu0 0.0
    %6255 = vmatprep.subr.mxu0 0.0
    %6256 = vmatpush2.xpose.msra.mxu0 0.0
    %6257 = vmatprep.subr.mxu0 0.0
    %6258 = vmatpush2.xpose.msra.mxu0 0.0
    %6259 = vmatprep.subr.mxu0 0.0
    %6260 = vmatpush2.xpose.msra.mxu0 0.0
    %6261 = vmatprep.subr.mxu0 0.0
    %6262 = vmatpush2.xpose.msra.mxu0 0.0
    %6263 = vmatprep.subr.mxu0 0.0
    %6264 = vmatpush2.xpose.msra.mxu0 0.0
    %6265 = vmatprep.subr.mxu0 0.0
    %6266 = vmatpush2.xpose.msra.mxu0 0.0
    %6267 = vmatprep.subr.mxu0 0.0
    %6268 = vmatpush2.xpose.msra.mxu0 0.0
    %6269 = vmatprep.subr.mxu0 0.0
    %6270 = vmatpush2.xpose.msra.mxu0 0.0
    %6271 = vmatprep.subr.mxu0 0.0
    %6272 = vmatpush2.xpose.msra.mxu0 0.0
    %6273 = vmatprep.subr.mxu0 0.0
    %6274 = vmatpush2.xpose.msra.mxu0 0.0
    %6275 = vmatprep.mubr.f32.mxu0 0.0
    %6276 = vmatmul.mubr.f32.gmra.mxu0 %v6207
    %v6277 = vpop.f32.mrf.mxu0
    %v6278 = vadd.f32 0.0, %v6277
    %v6279 = vpop.f32.mrf.mxu0
    %6280 = vdwg.mxu0
    %v6281 = vsel %vm486, %v5762, 0
    %v6283 = vsel %vm486, %v4079, 0
    %6285 = vmatprep.subr.mxu0 0.0
    %6286 = vmatpush1.xpose.msra.mxu0 0.0
    %6287 = vmatprep.subr.mxu0 0.0
    %6288 = vmatpush1.xpose.msra.mxu0 0.0
    %6289 = vmatprep.subr.mxu0 0.0
    %6290 = vmatpush1.xpose.msra.mxu0 0.0
    %6291 = vmatprep.subr.mxu0 0.0
    %6292 = vmatpush1.xpose.msra.mxu0 0.0
    %6293 = vmatprep.subr.mxu0 0.0
    %6294 = vmatpush1.xpose.msra.mxu0 0.0
    %6295 = vmatprep.subr.mxu0 0.0
    %6296 = vmatpush1.xpose.msra.mxu0 0.0
    %6297 = vmatprep.subr.mxu0 0.0
    %6298 = vmatpush1.xpose.msra.mxu0 0.0
    %6299 = vmatprep.subr.mxu0 0.0
    %6300 = vmatpush1.xpose.msra.mxu0 0.0
    %6301 = vmatprep.subr.mxu0 0.0
    %6302 = vmatpush1.xpose.msra.mxu0 0.0
    %6303 = vmatprep.subr.mxu0 0.0
    %6304 = vmatpush1.xpose.msra.mxu0 0.0
    %6305 = vmatprep.subr.mxu0 0.0
    %6306 = vmatpush1.xpose.msra.mxu0 0.0
    %6307 = vmatprep.subr.mxu0 0.0
    %6308 = vmatpush1.xpose.msra.mxu0 0.0
    %6309 = vmatprep.subr.mxu0 0.0
    %6310 = vmatpush1.xpose.msra.mxu0 0.0
    %6311 = vmatprep.subr.mxu0 0.0
    %6312 = vmatpush1.xpose.msra.mxu0 0.0
    %6313 = vmatprep.subr.mxu0 0.0
    %6314 = vmatpush1.xpose.msra.mxu0 0.0
    %6315 = vmatprep.subr.mxu0 0.0
    %6316 = vmatpush1.xpose.msra.mxu0 %v6283
    %6317 = vmatprep.subr.mxu0 0.0
    %6318 = vmatpush2.xpose.msra.mxu0 0.0
    %6319 = vmatprep.subr.mxu0 0.0
    %6320 = vmatpush2.xpose.msra.mxu0 0.0
    %6321 = vmatprep.subr.mxu0 0.0
    %6322 = vmatpush2.xpose.msra.mxu0 0.0
    %6323 = vmatprep.subr.mxu0 0.0
    %6324 = vmatpush2.xpose.msra.mxu0 0.0
    %6325 = vmatprep.subr.mxu0 0.0
    %6326 = vmatpush2.xpose.msra.mxu0 0.0
    %6327 = vmatprep.subr.mxu0 0.0
    %6328 = vmatpush2.xpose.msra.mxu0 0.0
    %6329 = vmatprep.subr.mxu0 0.0
    %6330 = vmatpush2.xpose.msra.mxu0 0.0
    %6331 = vmatprep.subr.mxu0 0.0
    %6332 = vmatpush2.xpose.msra.mxu0 0.0
    %6333 = vmatprep.subr.mxu0 0.0
    %6334 = vmatpush2.xpose.msra.mxu0 0.0
    %6335 = vmatprep.subr.mxu0 0.0
    %6336 = vmatpush2.xpose.msra.mxu0 0.0
    %6337 = vmatprep.subr.mxu0 0.0
    %6338 = vmatpush2.xpose.msra.mxu0 0.0
    %6339 = vmatprep.subr.mxu0 0.0
    %6340 = vmatpush2.xpose.msra.mxu0 0.0
    %6341 = vmatprep.subr.mxu0 0.0
    %6342 = vmatpush2.xpose.msra.mxu0 0.0
    %6343 = vmatprep.subr.mxu0 0.0
    %6344 = vmatpush2.xpose.msra.mxu0 0.0
    %6345 = vmatprep.subr.mxu0 0.0
    %6346 = vmatpush2.xpose.msra.mxu0 0.0
    %6347 = vmatprep.subr.mxu0 0.0
    %6348 = vmatpush2.xpose.msra.mxu0 0.0
    %6349 = vmatprep.mubr.f32.mxu0 0.0
    %6350 = vmatmul.mubr.f32.gmra.mxu0 %v6281
    %v6351 = vpop.f32.mrf.mxu0
    %v6352 = vadd.f32 0.0, %v6351
    %v6353 = vpop.f32.mrf.mxu0
    %6354 = vdwg.mxu0
    %v6355 = vmul.f32 %v5834, 0.35355338
    %v6356 = vmul.f32 %v5908, 0.35355338
    %v6357 = vmul.f32 %v5982, 0.35355338
    %v6358 = vmul.f32 %v6056, 0.35355338
    %v6359 = vmul.f32 %v6130, 0.35355338
    %v6360 = vmul.f32 %v6204, 0.35355338
    %v6361 = vmul.f32 %v6278, 0.35355338
    %v6362 = vmul.f32 %v6352, 0.35355338
    %v6363 = vsel %vm486, %v6355, -inf
    %6364 = vmax.xlane.f32.xlu0 %v6363
    %v6365 = vpop.xlane.xlu0 %6364
    %v6366 = vsel %vm486, %v6356, -inf
    %6367 = vmax.xlane.f32.xlu0 %v6366
    %v6368 = vpop.xlane.xlu0 %6367
    %v6369 = vsel %vm486, %v6357, -inf
    %6370 = vmax.xlane.f32.xlu0 %v6369
    %v6371 = vpop.xlane.xlu0 %6370
    %v6372 = vsel %vm486, %v6358, -inf
    %6373 = vmax.xlane.f32.xlu0 %v6372
    %v6374 = vpop.xlane.xlu0 %6373
    %v6375 = vsel %vm486, %v6359, -inf
    %6376 = vmax.xlane.f32.xlu0 %v6375
    %v6377 = vpop.xlane.xlu0 %6376
    %v6378 = vsel %vm486, %v6360, -inf
    %6379 = vmax.xlane.f32.xlu0 %v6378
    %v6380 = vpop.xlane.xlu0 %6379
    %v6381 = vsel %vm486, %v6361, -inf
    %6382 = vmax.xlane.f32.xlu0 %v6381
    %v6383 = vpop.xlane.xlu0 %6382
    %v6384 = vsel %vm486, %v6362, -inf
    %6385 = vmax.xlane.f32.xlu0 %v6384
    %v6386 = vpop.xlane.xlu0 %6385
    %v6387 = vsub.f32 %v6355, %v6365
    %v6388 = vsub.f32 %v6356, %v6368
    %v6389 = vsub.f32 %v6357, %v6371
    %v6390 = vsub.f32 %v6358, %v6374
    %v6391 = vsub.f32 %v6359, %v6377
    %v6392 = vsub.f32 %v6360, %v6380
    %v6393 = vsub.f32 %v6361, %v6383
    %v6394 = vsub.f32 %v6362, %v6386
    %v6395 = vmul.f32 %v6387, 1.442695
    %v6396 = vpow.pop %v6395
    %v6397 = vmul.f32 %v6388, 1.442695
    %v6398 = vpow.pop %v6397
    %v6399 = vmul.f32 %v6389, 1.442695
    %v6400 = vpow.pop %v6399
    %v6401 = vmul.f32 %v6390, 1.442695
    %v6402 = vpow.pop %v6401
    %v6403 = vmul.f32 %v6391, 1.442695
    %v6404 = vpow.pop %v6403
    %v6405 = vmul.f32 %v6392, 1.442695
    %v6406 = vpow.pop %v6405
    %v6407 = vmul.f32 %v6393, 1.442695
    %v6408 = vpow.pop %v6407
    %v6409 = vmul.f32 %v6394, 1.442695
    %v6410 = vpow.pop %v6409
    %v6411 = vsel %vm486, %v6396, 0.0
    %6412 = vadd.xlane.f32.xlu0 %v6411
    %v6413 = vpop.xlane.xlu0 %6412
    %v6414 = vsel %vm486, %v6398, 0.0
    %6415 = vadd.xlane.f32.xlu0 %v6414
    %v6416 = vpop.xlane.xlu0 %6415
    %v6417 = vsel %vm486, %v6400, 0.0
    %6418 = vadd.xlane.f32.xlu0 %v6417
    %v6419 = vpop.xlane.xlu0 %6418
    %v6420 = vsel %vm486, %v6402, 0.0
    %6421 = vadd.xlane.f32.xlu0 %v6420
    %v6422 = vpop.xlane.xlu0 %6421
    %v6423 = vsel %vm486, %v6404, 0.0
    %6424 = vadd.xlane.f32.xlu0 %v6423
    %v6425 = vpop.xlane.xlu0 %6424
    %v6426 = vsel %vm486, %v6406, 0.0
    %6427 = vadd.xlane.f32.xlu0 %v6426
    %v6428 = vpop.xlane.xlu0 %6427
    %v6429 = vsel %vm486, %v6408, 0.0
    %6430 = vadd.xlane.f32.xlu0 %v6429
    %v6431 = vpop.xlane.xlu0 %6430
    %v6432 = vsel %vm486, %v6410, 0.0
    %6433 = vadd.xlane.f32.xlu0 %v6432
    %v6434 = vpop.xlane.xlu0 %6433
    %v6435 = vrcp.pop %v6413
    %v6436 = vrcp.pop %v6416
    %v6437 = vrcp.pop %v6419
    %v6438 = vrcp.pop %v6422
    %v6439 = vrcp.pop %v6425
    %v6440 = vrcp.pop %v6428
    %v6441 = vrcp.pop %v6431
    %v6442 = vrcp.pop %v6434
    %v6443 = vmul.f32 %v6396, %v6435
    %v6444 = vmul.f32 %v6398, %v6436
    %v6445 = vmul.f32 %v6400, %v6437
    %v6446 = vmul.f32 %v6402, %v6438
    %v6447 = vmul.f32 %v6404, %v6439
    %v6448 = vmul.f32 %v6406, %v6440
    %v6449 = vmul.f32 %v6408, %v6441
    %v6450 = vmul.f32 %v6410, %v6442
    %6451 = vrot.lane.b32.xlu0 %v4058, 96
    %v6452 = vpop.permute.xlu0 %6451
    %v6455 = vsel %vm486, %v6443, 0
    %6457 = vmatprep.subr.mxu0 0.0
    %6458 = vmatpush1.msra.mxu0 0.0
    %6459 = vmatprep.subr.mxu0 0.0
    %6460 = vmatpush1.msra.mxu0 0.0
    %6461 = vmatprep.subr.mxu0 0.0
    %6462 = vmatpush1.msra.mxu0 0.0
    %6463 = vmatprep.subr.mxu0 0.0
    %6464 = vmatpush1.msra.mxu0 0.0
    %6465 = vmatprep.subr.mxu0 0.0
    %6466 = vmatpush1.msra.mxu0 0.0
    %6467 = vmatprep.subr.mxu0 0.0
    %6468 = vmatpush1.msra.mxu0 0.0
    %6469 = vmatprep.subr.mxu0 0.0
    %6470 = vmatpush1.msra.mxu0 0.0
    %6471 = vmatprep.subr.mxu0 0.0
    %6472 = vmatpush1.msra.mxu0 0.0
    %6473 = vmatprep.subr.mxu0 0.0
    %6474 = vmatpush1.msra.mxu0 0.0
    %6475 = vmatprep.subr.mxu0 0.0
    %6476 = vmatpush1.msra.mxu0 0.0
    %6477 = vmatprep.subr.mxu0 0.0
    %6478 = vmatpush1.msra.mxu0 0.0
    %6479 = vmatprep.subr.mxu0 0.0
    %6480 = vmatpush1.msra.mxu0 0.0
    %6481 = vmatprep.subr.mxu0 0.0
    %6482 = vmatpush1.msra.mxu0 0.0
    %6483 = vmatprep.subr.mxu0 0.0
    %6484 = vmatpush1.msra.mxu0 0.0
    %6485 = vmatprep.subr.mxu0 0.0
    %6486 = vmatpush1.msra.mxu0 0.0
    %6487 = vmatprep.subr.mxu0 0.0
    %6488 = vmatpush1.msra.mxu0 %v6452
    %6489 = vmatprep.subr.mxu0 0.0
    %6490 = vmatpush2.msra.mxu0 0.0
    %6491 = vmatprep.subr.mxu0 0.0
    %6492 = vmatpush2.msra.mxu0 0.0
    %6493 = vmatprep.subr.mxu0 0.0
    %6494 = vmatpush2.msra.mxu0 0.0
    %6495 = vmatprep.subr.mxu0 0.0
    %6496 = vmatpush2.msra.mxu0 0.0
    %6497 = vmatprep.subr.mxu0 0.0
    %6498 = vmatpush2.msra.mxu0 0.0
    %6499 = vmatprep.subr.mxu0 0.0
    %6500 = vmatpush2.msra.mxu0 0.0
    %6501 = vmatprep.subr.mxu0 0.0
    %6502 = vmatpush2.msra.mxu0 0.0
    %6503 = vmatprep.subr.mxu0 0.0
    %6504 = vmatpush2.msra.mxu0 0.0
    %6505 = vmatprep.subr.mxu0 0.0
    %6506 = vmatpush2.msra.mxu0 0.0
    %6507 = vmatprep.subr.mxu0 0.0
    %6508 = vmatpush2.msra.mxu0 0.0
    %6509 = vmatprep.subr.mxu0 0.0
    %6510 = vmatpush2.msra.mxu0 0.0
    %6511 = vmatprep.subr.mxu0 0.0
    %6512 = vmatpush2.msra.mxu0 0.0
    %6513 = vmatprep.subr.mxu0 0.0
    %6514 = vmatpush2.msra.mxu0 0.0
    %6515 = vmatprep.subr.mxu0 0.0
    %6516 = vmatpush2.msra.mxu0 0.0
    %6517 = vmatprep.subr.mxu0 0.0
    %6518 = vmatpush2.msra.mxu0 0.0
    %6519 = vmatprep.subr.mxu0 0.0
    %6520 = vmatpush2.msra.mxu0 0.0
    %6521 = vmatprep.mubr.f32.mxu0 0.0
    %6522 = vmatmul.mubr.f32.gmra.mxu0 %v6455
    %v6523 = vpop.f32.mrf.mxu0
    %v6524 = vadd.f32 0.0, %v6523
    %v6525 = vpop.f32.mrf.mxu0
    %6526 = vdwg.mxu0
    %6527 = vrot.lane.b32.xlu0 %v4069, 96
    %v6528 = vpop.permute.xlu0 %6527
    %v6531 = vsel %vm486, %v6444, 0
    %6533 = vmatprep.subr.mxu0 0.0
    %6534 = vmatpush1.msra.mxu0 0.0
    %6535 = vmatprep.subr.mxu0 0.0
    %6536 = vmatpush1.msra.mxu0 0.0
    %6537 = vmatprep.subr.mxu0 0.0
    %6538 = vmatpush1.msra.mxu0 0.0
    %6539 = vmatprep.subr.mxu0 0.0
    %6540 = vmatpush1.msra.mxu0 0.0
    %6541 = vmatprep.subr.mxu0 0.0
    %6542 = vmatpush1.msra.mxu0 0.0
    %6543 = vmatprep.subr.mxu0 0.0
    %6544 = vmatpush1.msra.mxu0 0.0
    %6545 = vmatprep.subr.mxu0 0.0
    %6546 = vmatpush1.msra.mxu0 0.0
    %6547 = vmatprep.subr.mxu0 0.0
    %6548 = vmatpush1.msra.mxu0 0.0
    %6549 = vmatprep.subr.mxu0 0.0
    %6550 = vmatpush1.msra.mxu0 0.0
    %6551 = vmatprep.subr.mxu0 0.0
    %6552 = vmatpush1.msra.mxu0 0.0
    %6553 = vmatprep.subr.mxu0 0.0
    %6554 = vmatpush1.msra.mxu0 0.0
    %6555 = vmatprep.subr.mxu0 0.0
    %6556 = vmatpush1.msra.mxu0 0.0
    %6557 = vmatprep.subr.mxu0 0.0
    %6558 = vmatpush1.msra.mxu0 0.0
    %6559 = vmatprep.subr.mxu0 0.0
    %6560 = vmatpush1.msra.mxu0 0.0
    %6561 = vmatprep.subr.mxu0 0.0
    %6562 = vmatpush1.msra.mxu0 0.0
    %6563 = vmatprep.subr.mxu0 0.0
    %6564 = vmatpush1.msra.mxu0 %v6528
    %6565 = vmatprep.subr.mxu0 0.0
    %6566 = vmatpush2.msra.mxu0 0.0
    %6567 = vmatprep.subr.mxu0 0.0
    %6568 = vmatpush2.msra.mxu0 0.0
    %6569 = vmatprep.subr.mxu0 0.0
    %6570 = vmatpush2.msra.mxu0 0.0
    %6571 = vmatprep.subr.mxu0 0.0
    %6572 = vmatpush2.msra.mxu0 0.0
    %6573 = vmatprep.subr.mxu0 0.0
    %6574 = vmatpush2.msra.mxu0 0.0
    %6575 = vmatprep.subr.mxu0 0.0
    %6576 = vmatpush2.msra.mxu0 0.0
    %6577 = vmatprep.subr.mxu0 0.0
    %6578 = vmatpush2.msra.mxu0 0.0
    %6579 = vmatprep.subr.mxu0 0.0
    %6580 = vmatpush2.msra.mxu0 0.0
    %6581 = vmatprep.subr.mxu0 0.0
    %6582 = vmatpush2.msra.mxu0 0.0
    %6583 = vmatprep.subr.mxu0 0.0
    %6584 = vmatpush2.msra.mxu0 0.0
    %6585 = vmatprep.subr.mxu0 0.0
    %6586 = vmatpush2.msra.mxu0 0.0
    %6587 = vmatprep.subr.mxu0 0.0
    %6588 = vmatpush2.msra.mxu0 0.0
    %6589 = vmatprep.subr.mxu0 0.0
    %6590 = vmatpush2.msra.mxu0 0.0
    %6591 = vmatprep.subr.mxu0 0.0
    %6592 = vmatpush2.msra.mxu0 0.0
    %6593 = vmatprep.subr.mxu0 0.0
    %6594 = vmatpush2.msra.mxu0 0.0
    %6595 = vmatprep.subr.mxu0 0.0
    %6596 = vmatpush2.msra.mxu0 0.0
    %6597 = vmatprep.mubr.f32.mxu0 0.0
    %6598 = vmatmul.mubr.f32.gmra.mxu0 %v6531
    %v6599 = vpop.f32.mrf.mxu0
    %v6600 = vadd.f32 0.0, %v6599
    %v6601 = vpop.f32.mrf.mxu0
    %6602 = vdwg.mxu0
    %6603 = vrot.lane.b32.xlu0 %v4073, 96
    %v6604 = vpop.permute.xlu0 %6603
    %v6607 = vsel %vm486, %v6445, 0
    %6609 = vmatprep.subr.mxu0 0.0
    %6610 = vmatpush1.msra.mxu0 0.0
    %6611 = vmatprep.subr.mxu0 0.0
    %6612 = vmatpush1.msra.mxu0 0.0
    %6613 = vmatprep.subr.mxu0 0.0
    %6614 = vmatpush1.msra.mxu0 0.0
    %6615 = vmatprep.subr.mxu0 0.0
    %6616 = vmatpush1.msra.mxu0 0.0
    %6617 = vmatprep.subr.mxu0 0.0
    %6618 = vmatpush1.msra.mxu0 0.0
    %6619 = vmatprep.subr.mxu0 0.0
    %6620 = vmatpush1.msra.mxu0 0.0
    %6621 = vmatprep.subr.mxu0 0.0
    %6622 = vmatpush1.msra.mxu0 0.0
    %6623 = vmatprep.subr.mxu0 0.0
    %6624 = vmatpush1.msra.mxu0 0.0
    %6625 = vmatprep.subr.mxu0 0.0
    %6626 = vmatpush1.msra.mxu0 0.0
    %6627 = vmatprep.subr.mxu0 0.0
    %6628 = vmatpush1.msra.mxu0 0.0
    %6629 = vmatprep.subr.mxu0 0.0
    %6630 = vmatpush1.msra.mxu0 0.0
    %6631 = vmatprep.subr.mxu0 0.0
    %6632 = vmatpush1.msra.mxu0 0.0
    %6633 = vmatprep.subr.mxu0 0.0
    %6634 = vmatpush1.msra.mxu0 0.0
    %6635 = vmatprep.subr.mxu0 0.0
    %6636 = vmatpush1.msra.mxu0 0.0
    %6637 = vmatprep.subr.mxu0 0.0
    %6638 = vmatpush1.msra.mxu0 0.0
    %6639 = vmatprep.subr.mxu0 0.0
    %6640 = vmatpush1.msra.mxu0 %v6604
    %6641 = vmatprep.subr.mxu0 0.0
    %6642 = vmatpush2.msra.mxu0 0.0
    %6643 = vmatprep.subr.mxu0 0.0
    %6644 = vmatpush2.msra.mxu0 0.0
    %6645 = vmatprep.subr.mxu0 0.0
    %6646 = vmatpush2.msra.mxu0 0.0
    %6647 = vmatprep.subr.mxu0 0.0
    %6648 = vmatpush2.msra.mxu0 0.0
    %6649 = vmatprep.subr.mxu0 0.0
    %6650 = vmatpush2.msra.mxu0 0.0
    %6651 = vmatprep.subr.mxu0 0.0
    %6652 = vmatpush2.msra.mxu0 0.0
    %6653 = vmatprep.subr.mxu0 0.0
    %6654 = vmatpush2.msra.mxu0 0.0
    %6655 = vmatprep.subr.mxu0 0.0
    %6656 = vmatpush2.msra.mxu0 0.0
    %6657 = vmatprep.subr.mxu0 0.0
    %6658 = vmatpush2.msra.mxu0 0.0
    %6659 = vmatprep.subr.mxu0 0.0
    %6660 = vmatpush2.msra.mxu0 0.0
    %6661 = vmatprep.subr.mxu0 0.0
    %6662 = vmatpush2.msra.mxu0 0.0
    %6663 = vmatprep.subr.mxu0 0.0
    %6664 = vmatpush2.msra.mxu0 0.0
    %6665 = vmatprep.subr.mxu0 0.0
    %6666 = vmatpush2.msra.mxu0 0.0
    %6667 = vmatprep.subr.mxu0 0.0
    %6668 = vmatpush2.msra.mxu0 0.0
    %6669 = vmatprep.subr.mxu0 0.0
    %6670 = vmatpush2.msra.mxu0 0.0
    %6671 = vmatprep.subr.mxu0 0.0
    %6672 = vmatpush2.msra.mxu0 0.0
    %6673 = vmatprep.mubr.f32.mxu0 0.0
    %6674 = vmatmul.mubr.f32.gmra.mxu0 %v6607
    %v6675 = vpop.f32.mrf.mxu0
    %v6676 = vadd.f32 0.0, %v6675
    %v6677 = vpop.f32.mrf.mxu0
    %6678 = vdwg.mxu0
    %6679 = vrot.lane.b32.xlu0 %v4077, 96
    %v6680 = vpop.permute.xlu0 %6679
    %v6683 = vsel %vm486, %v6446, 0
    %6685 = vmatprep.subr.mxu0 0.0
    %6686 = vmatpush1.msra.mxu0 0.0
    %6687 = vmatprep.subr.mxu0 0.0
    %6688 = vmatpush1.msra.mxu0 0.0
    %6689 = vmatprep.subr.mxu0 0.0
    %6690 = vmatpush1.msra.mxu0 0.0
    %6691 = vmatprep.subr.mxu0 0.0
    %6692 = vmatpush1.msra.mxu0 0.0
    %6693 = vmatprep.subr.mxu0 0.0
    %6694 = vmatpush1.msra.mxu0 0.0
    %6695 = vmatprep.subr.mxu0 0.0
    %6696 = vmatpush1.msra.mxu0 0.0
    %6697 = vmatprep.subr.mxu0 0.0
    %6698 = vmatpush1.msra.mxu0 0.0
    %6699 = vmatprep.subr.mxu0 0.0
    %6700 = vmatpush1.msra.mxu0 0.0
    %6701 = vmatprep.subr.mxu0 0.0
    %6702 = vmatpush1.msra.mxu0 0.0
    %6703 = vmatprep.subr.mxu0 0.0
    %6704 = vmatpush1.msra.mxu0 0.0
    %6705 = vmatprep.subr.mxu0 0.0
    %6706 = vmatpush1.msra.mxu0 0.0
    %6707 = vmatprep.subr.mxu0 0.0
    %6708 = vmatpush1.msra.mxu0 0.0
    %6709 = vmatprep.subr.mxu0 0.0
    %6710 = vmatpush1.msra.mxu0 0.0
    %6711 = vmatprep.subr.mxu0 0.0
    %6712 = vmatpush1.msra.mxu0 0.0
    %6713 = vmatprep.subr.mxu0 0.0
    %6714 = vmatpush1.msra.mxu0 0.0
    %6715 = vmatprep.subr.mxu0 0.0
    %6716 = vmatpush1.msra.mxu0 %v6680
    %6717 = vmatprep.subr.mxu0 0.0
    %6718 = vmatpush2.msra.mxu0 0.0
    %6719 = vmatprep.subr.mxu0 0.0
    %6720 = vmatpush2.msra.mxu0 0.0
    %6721 = vmatprep.subr.mxu0 0.0
    %6722 = vmatpush2.msra.mxu0 0.0
    %6723 = vmatprep.subr.mxu0 0.0
    %6724 = vmatpush2.msra.mxu0 0.0
    %6725 = vmatprep.subr.mxu0 0.0
    %6726 = vmatpush2.msra.mxu0 0.0
    %6727 = vmatprep.subr.mxu0 0.0
    %6728 = vmatpush2.msra.mxu0 0.0
    %6729 = vmatprep.subr.mxu0 0.0
    %6730 = vmatpush2.msra.mxu0 0.0
    %6731 = vmatprep.subr.mxu0 0.0
    %6732 = vmatpush2.msra.mxu0 0.0
    %6733 = vmatprep.subr.mxu0 0.0
    %6734 = vmatpush2.msra.mxu0 0.0
    %6735 = vmatprep.subr.mxu0 0.0
    %6736 = vmatpush2.msra.mxu0 0.0
    %6737 = vmatprep.subr.mxu0 0.0
    %6738 = vmatpush2.msra.mxu0 0.0
    %6739 = vmatprep.subr.mxu0 0.0
    %6740 = vmatpush2.msra.mxu0 0.0
    %6741 = vmatprep.subr.mxu0 0.0
    %6742 = vmatpush2.msra.mxu0 0.0
    %6743 = vmatprep.subr.mxu0 0.0
    %6744 = vmatpush2.msra.mxu0 0.0
    %6745 = vmatprep.subr.mxu0 0.0
    %6746 = vmatpush2.msra.mxu0 0.0
    %6747 = vmatprep.subr.mxu0 0.0
    %6748 = vmatpush2.msra.mxu0 0.0
    %6749 = vmatprep.mubr.f32.mxu0 0.0
    %6750 = vmatmul.mubr.f32.gmra.mxu0 %v6683
    %v6751 = vpop.f32.mrf.mxu0
    %v6752 = vadd.f32 0.0, %v6751
    %v6753 = vpop.f32.mrf.mxu0
    %6754 = vdwg.mxu0
    %6755 = vrot.lane.b32.xlu0 %v4063, 96
    %v6756 = vpop.permute.xlu0 %6755
    %v6759 = vsel %vm486, %v6447, 0
    %6761 = vmatprep.subr.mxu0 0.0
    %6762 = vmatpush1.msra.mxu0 0.0
    %6763 = vmatprep.subr.mxu0 0.0
    %6764 = vmatpush1.msra.mxu0 0.0
    %6765 = vmatprep.subr.mxu0 0.0
    %6766 = vmatpush1.msra.mxu0 0.0
    %6767 = vmatprep.subr.mxu0 0.0
    %6768 = vmatpush1.msra.mxu0 0.0
    %6769 = vmatprep.subr.mxu0 0.0
    %6770 = vmatpush1.msra.mxu0 0.0
    %6771 = vmatprep.subr.mxu0 0.0
    %6772 = vmatpush1.msra.mxu0 0.0
    %6773 = vmatprep.subr.mxu0 0.0
    %6774 = vmatpush1.msra.mxu0 0.0
    %6775 = vmatprep.subr.mxu0 0.0
    %6776 = vmatpush1.msra.mxu0 0.0
    %6777 = vmatprep.subr.mxu0 0.0
    %6778 = vmatpush1.msra.mxu0 0.0
    %6779 = vmatprep.subr.mxu0 0.0
    %6780 = vmatpush1.msra.mxu0 0.0
    %6781 = vmatprep.subr.mxu0 0.0
    %6782 = vmatpush1.msra.mxu0 0.0
    %6783 = vmatprep.subr.mxu0 0.0
    %6784 = vmatpush1.msra.mxu0 0.0
    %6785 = vmatprep.subr.mxu0 0.0
    %6786 = vmatpush1.msra.mxu0 0.0
    %6787 = vmatprep.subr.mxu0 0.0
    %6788 = vmatpush1.msra.mxu0 0.0
    %6789 = vmatprep.subr.mxu0 0.0
    %6790 = vmatpush1.msra.mxu0 0.0
    %6791 = vmatprep.subr.mxu0 0.0
    %6792 = vmatpush1.msra.mxu0 %v6756
    %6793 = vmatprep.subr.mxu0 0.0
    %6794 = vmatpush2.msra.mxu0 0.0
    %6795 = vmatprep.subr.mxu0 0.0
    %6796 = vmatpush2.msra.mxu0 0.0
    %6797 = vmatprep.subr.mxu0 0.0
    %6798 = vmatpush2.msra.mxu0 0.0
    %6799 = vmatprep.subr.mxu0 0.0
    %6800 = vmatpush2.msra.mxu0 0.0
    %6801 = vmatprep.subr.mxu0 0.0
    %6802 = vmatpush2.msra.mxu0 0.0
    %6803 = vmatprep.subr.mxu0 0.0
    %6804 = vmatpush2.msra.mxu0 0.0
    %6805 = vmatprep.subr.mxu0 0.0
    %6806 = vmatpush2.msra.mxu0 0.0
    %6807 = vmatprep.subr.mxu0 0.0
    %6808 = vmatpush2.msra.mxu0 0.0
    %6809 = vmatprep.subr.mxu0 0.0
    %6810 = vmatpush2.msra.mxu0 0.0
    %6811 = vmatprep.subr.mxu0 0.0
    %6812 = vmatpush2.msra.mxu0 0.0
    %6813 = vmatprep.subr.mxu0 0.0
    %6814 = vmatpush2.msra.mxu0 0.0
    %6815 = vmatprep.subr.mxu0 0.0
    %6816 = vmatpush2.msra.mxu0 0.0
    %6817 = vmatprep.subr.mxu0 0.0
    %6818 = vmatpush2.msra.mxu0 0.0
    %6819 = vmatprep.subr.mxu0 0.0
    %6820 = vmatpush2.msra.mxu0 0.0
    %6821 = vmatprep.subr.mxu0 0.0
    %6822 = vmatpush2.msra.mxu0 0.0
    %6823 = vmatprep.subr.mxu0 0.0
    %6824 = vmatpush2.msra.mxu0 0.0
    %6825 = vmatprep.mubr.f32.mxu0 0.0
    %6826 = vmatmul.mubr.f32.gmra.mxu0 %v6759
    %v6827 = vpop.f32.mrf.mxu0
    %v6828 = vadd.f32 0.0, %v6827
    %v6829 = vpop.f32.mrf.mxu0
    %6830 = vdwg.mxu0
    %6831 = vrot.lane.b32.xlu0 %v4071, 96
    %v6832 = vpop.permute.xlu0 %6831
    %v6835 = vsel %vm486, %v6448, 0
    %6837 = vmatprep.subr.mxu0 0.0
    %6838 = vmatpush1.msra.mxu0 0.0
    %6839 = vmatprep.subr.mxu0 0.0
    %6840 = vmatpush1.msra.mxu0 0.0
    %6841 = vmatprep.subr.mxu0 0.0
    %6842 = vmatpush1.msra.mxu0 0.0
    %6843 = vmatprep.subr.mxu0 0.0
    %6844 = vmatpush1.msra.mxu0 0.0
    %6845 = vmatprep.subr.mxu0 0.0
    %6846 = vmatpush1.msra.mxu0 0.0
    %6847 = vmatprep.subr.mxu0 0.0
    %6848 = vmatpush1.msra.mxu0 0.0
    %6849 = vmatprep.subr.mxu0 0.0
    %6850 = vmatpush1.msra.mxu0 0.0
    %6851 = vmatprep.subr.mxu0 0.0
    %6852 = vmatpush1.msra.mxu0 0.0
    %6853 = vmatprep.subr.mxu0 0.0
    %6854 = vmatpush1.msra.mxu0 0.0
    %6855 = vmatprep.subr.mxu0 0.0
    %6856 = vmatpush1.msra.mxu0 0.0
    %6857 = vmatprep.subr.mxu0 0.0
    %6858 = vmatpush1.msra.mxu0 0.0
    %6859 = vmatprep.subr.mxu0 0.0
    %6860 = vmatpush1.msra.mxu0 0.0
    %6861 = vmatprep.subr.mxu0 0.0
    %6862 = vmatpush1.msra.mxu0 0.0
    %6863 = vmatprep.subr.mxu0 0.0
    %6864 = vmatpush1.msra.mxu0 0.0
    %6865 = vmatprep.subr.mxu0 0.0
    %6866 = vmatpush1.msra.mxu0 0.0
    %6867 = vmatprep.subr.mxu0 0.0
    %6868 = vmatpush1.msra.mxu0 %v6832
    %6869 = vmatprep.subr.mxu0 0.0
    %6870 = vmatpush2.msra.mxu0 0.0
    %6871 = vmatprep.subr.mxu0 0.0
    %6872 = vmatpush2.msra.mxu0 0.0
    %6873 = vmatprep.subr.mxu0 0.0
    %6874 = vmatpush2.msra.mxu0 0.0
    %6875 = vmatprep.subr.mxu0 0.0
    %6876 = vmatpush2.msra.mxu0 0.0
    %6877 = vmatprep.subr.mxu0 0.0
    %6878 = vmatpush2.msra.mxu0 0.0
    %6879 = vmatprep.subr.mxu0 0.0
    %6880 = vmatpush2.msra.mxu0 0.0
    %6881 = vmatprep.subr.mxu0 0.0
    %6882 = vmatpush2.msra.mxu0 0.0
    %6883 = vmatprep.subr.mxu0 0.0
    %6884 = vmatpush2.msra.mxu0 0.0
    %6885 = vmatprep.subr.mxu0 0.0
    %6886 = vmatpush2.msra.mxu0 0.0
    %6887 = vmatprep.subr.mxu0 0.0
    %6888 = vmatpush2.msra.mxu0 0.0
    %6889 = vmatprep.subr.mxu0 0.0
    %6890 = vmatpush2.msra.mxu0 0.0
    %6891 = vmatprep.subr.mxu0 0.0
    %6892 = vmatpush2.msra.mxu0 0.0
    %6893 = vmatprep.subr.mxu0 0.0
    %6894 = vmatpush2.msra.mxu0 0.0
    %6895 = vmatprep.subr.mxu0 0.0
    %6896 = vmatpush2.msra.mxu0 0.0
    %6897 = vmatprep.subr.mxu0 0.0
    %6898 = vmatpush2.msra.mxu0 0.0
    %6899 = vmatprep.subr.mxu0 0.0
    %6900 = vmatpush2.msra.mxu0 0.0
    %6901 = vmatprep.mubr.f32.mxu0 0.0
    %6902 = vmatmul.mubr.f32.gmra.mxu0 %v6835
    %v6903 = vpop.f32.mrf.mxu0
    %v6904 = vadd.f32 0.0, %v6903
    %v6905 = vpop.f32.mrf.mxu0
    %6906 = vdwg.mxu0
    %6907 = vrot.lane.b32.xlu0 %v4075, 96
    %v6908 = vpop.permute.xlu0 %6907
    %v6911 = vsel %vm486, %v6449, 0
    %6913 = vmatprep.subr.mxu0 0.0
    %6914 = vmatpush1.msra.mxu0 0.0
    %6915 = vmatprep.subr.mxu0 0.0
    %6916 = vmatpush1.msra.mxu0 0.0
    %6917 = vmatprep.subr.mxu0 0.0
    %6918 = vmatpush1.msra.mxu0 0.0
    %6919 = vmatprep.subr.mxu0 0.0
    %6920 = vmatpush1.msra.mxu0 0.0
    %6921 = vmatprep.subr.mxu0 0.0
    %6922 = vmatpush1.msra.mxu0 0.0
    %6923 = vmatprep.subr.mxu0 0.0
    %6924 = vmatpush1.msra.mxu0 0.0
    %6925 = vmatprep.subr.mxu0 0.0
    %6926 = vmatpush1.msra.mxu0 0.0
    %6927 = vmatprep.subr.mxu0 0.0
    %6928 = vmatpush1.msra.mxu0 0.0
    %6929 = vmatprep.subr.mxu0 0.0
    %6930 = vmatpush1.msra.mxu0 0.0
    %6931 = vmatprep.subr.mxu0 0.0
    %6932 = vmatpush1.msra.mxu0 0.0
    %6933 = vmatprep.subr.mxu0 0.0
    %6934 = vmatpush1.msra.mxu0 0.0
    %6935 = vmatprep.subr.mxu0 0.0
    %6936 = vmatpush1.msra.mxu0 0.0
    %6937 = vmatprep.subr.mxu0 0.0
    %6938 = vmatpush1.msra.mxu0 0.0
    %6939 = vmatprep.subr.mxu0 0.0
    %6940 = vmatpush1.msra.mxu0 0.0
    %6941 = vmatprep.subr.mxu0 0.0
    %6942 = vmatpush1.msra.mxu0 0.0
    %6943 = vmatprep.subr.mxu0 0.0
    %6944 = vmatpush1.msra.mxu0 %v6908
    %6945 = vmatprep.subr.mxu0 0.0
    %6946 = vmatpush2.msra.mxu0 0.0
    %6947 = vmatprep.subr.mxu0 0.0
    %6948 = vmatpush2.msra.mxu0 0.0
    %6949 = vmatprep.subr.mxu0 0.0
    %6950 = vmatpush2.msra.mxu0 0.0
    %6951 = vmatprep.subr.mxu0 0.0
    %6952 = vmatpush2.msra.mxu0 0.0
    %6953 = vmatprep.subr.mxu0 0.0
    %6954 = vmatpush2.msra.mxu0 0.0
    %6955 = vmatprep.subr.mxu0 0.0
    %6956 = vmatpush2.msra.mxu0 0.0
    %6957 = vmatprep.subr.mxu0 0.0
    %6958 = vmatpush2.msra.mxu0 0.0
    %6959 = vmatprep.subr.mxu0 0.0
    %6960 = vmatpush2.msra.mxu0 0.0
    %6961 = vmatprep.subr.mxu0 0.0
    %6962 = vmatpush2.msra.mxu0 0.0
    %6963 = vmatprep.subr.mxu0 0.0
    %6964 = vmatpush2.msra.mxu0 0.0
    %6965 = vmatprep.subr.mxu0 0.0
    %6966 = vmatpush2.msra.mxu0 0.0
    %6967 = vmatprep.subr.mxu0 0.0
    %6968 = vmatpush2.msra.mxu0 0.0
    %6969 = vmatprep.subr.mxu0 0.0
    %6970 = vmatpush2.msra.mxu0 0.0
    %6971 = vmatprep.subr.mxu0 0.0
    %6972 = vmatpush2.msra.mxu0 0.0
    %6973 = vmatprep.subr.mxu0 0.0
    %6974 = vmatpush2.msra.mxu0 0.0
    %6975 = vmatprep.subr.mxu0 0.0
    %6976 = vmatpush2.msra.mxu0 0.0
    %6977 = vmatprep.mubr.f32.mxu0 0.0
    %6978 = vmatmul.mubr.f32.gmra.mxu0 %v6911
    %v6979 = vpop.f32.mrf.mxu0
    %v6980 = vadd.f32 0.0, %v6979
    %v6981 = vpop.f32.mrf.mxu0
    %6982 = vdwg.mxu0
    %6983 = vrot.lane.b32.xlu0 %v4079, 96
    %v6984 = vpop.permute.xlu0 %6983
    %v6987 = vsel %vm486, %v6450, 0
    %6989 = vmatprep.subr.mxu0 0.0
    %6990 = vmatpush1.msra.mxu0 0.0
    %6991 = vmatprep.subr.mxu0 0.0
    %6992 = vmatpush1.msra.mxu0 0.0
    %6993 = vmatprep.subr.mxu0 0.0
    %6994 = vmatpush1.msra.mxu0 0.0
    %6995 = vmatprep.subr.mxu0 0.0
    %6996 = vmatpush1.msra.mxu0 0.0
    %6997 = vmatprep.subr.mxu0 0.0
    %6998 = vmatpush1.msra.mxu0 0.0
    %6999 = vmatprep.subr.mxu0 0.0
    %7000 = vmatpush1.msra.mxu0 0.0
    %7001 = vmatprep.subr.mxu0 0.0
    %7002 = vmatpush1.msra.mxu0 0.0
    %7003 = vmatprep.subr.mxu0 0.0
    %7004 = vmatpush1.msra.mxu0 0.0
    %7005 = vmatprep.subr.mxu0 0.0
    %7006 = vmatpush1.msra.mxu0 0.0
    %7007 = vmatprep.subr.mxu0 0.0
    %7008 = vmatpush1.msra.mxu0 0.0
    %7009 = vmatprep.subr.mxu0 0.0
    %7010 = vmatpush1.msra.mxu0 0.0
    %7011 = vmatprep.subr.mxu0 0.0
    %7012 = vmatpush1.msra.mxu0 0.0
    %7013 = vmatprep.subr.mxu0 0.0
    %7014 = vmatpush1.msra.mxu0 0.0
    %7015 = vmatprep.subr.mxu0 0.0
    %7016 = vmatpush1.msra.mxu0 0.0
    %7017 = vmatprep.subr.mxu0 0.0
    %7018 = vmatpush1.msra.mxu0 0.0
    %7019 = vmatprep.subr.mxu0 0.0
    %7020 = vmatpush1.msra.mxu0 %v6984
    %7021 = vmatprep.subr.mxu0 0.0
    %7022 = vmatpush2.msra.mxu0 0.0
    %7023 = vmatprep.subr.mxu0 0.0
    %7024 = vmatpush2.msra.mxu0 0.0
    %7025 = vmatprep.subr.mxu0 0.0
    %7026 = vmatpush2.msra.mxu0 0.0
    %7027 = vmatprep.subr.mxu0 0.0
    %7028 = vmatpush2.msra.mxu0 0.0
    %7029 = vmatprep.subr.mxu0 0.0
    %7030 = vmatpush2.msra.mxu0 0.0
    %7031 = vmatprep.subr.mxu0 0.0
    %7032 = vmatpush2.msra.mxu0 0.0
    %7033 = vmatprep.subr.mxu0 0.0
    %7034 = vmatpush2.msra.mxu0 0.0
    %7035 = vmatprep.subr.mxu0 0.0
    %7036 = vmatpush2.msra.mxu0 0.0
    %7037 = vmatprep.subr.mxu0 0.0
    %7038 = vmatpush2.msra.mxu0 0.0
    %7039 = vmatprep.subr.mxu0 0.0
    %7040 = vmatpush2.msra.mxu0 0.0
    %7041 = vmatprep.subr.mxu0 0.0
    %7042 = vmatpush2.msra.mxu0 0.0
    %7043 = vmatprep.subr.mxu0 0.0
    %7044 = vmatpush2.msra.mxu0 0.0
    %7045 = vmatprep.subr.mxu0 0.0
    %7046 = vmatpush2.msra.mxu0 0.0
    %7047 = vmatprep.subr.mxu0 0.0
    %7048 = vmatpush2.msra.mxu0 0.0
    %7049 = vmatprep.subr.mxu0 0.0
    %7050 = vmatpush2.msra.mxu0 0.0
    %7051 = vmatprep.subr.mxu0 0.0
    %7052 = vmatpush2.msra.mxu0 0.0
    %7053 = vmatprep.mubr.f32.mxu0 0.0
    %7054 = vmatmul.mubr.f32.gmra.mxu0 %v6987
    %v7055 = vpop.f32.mrf.mxu0
    %v7056 = vadd.f32 0.0, %v7055
    %v7057 = vpop.f32.mrf.mxu0
    %7058 = vdwg.mxu0
    %7061 = vrot.lane.b32.xlu0 %v6600, 8
    %v7062 = vpop.permute.xlu0 %7061
    %7063 = vrot.lane.b32.xlu0 %v6904, 8
    %v7064 = vpop.permute.xlu0 %7063
    %7069 = vrot.lane.b32.xlu0 %v6676, 16
    %v7070 = vpop.permute.xlu0 %7069
    %7071 = vrot.lane.b32.xlu0 %v6980, 16
    %v7072 = vpop.permute.xlu0 %7071
    %7077 = vrot.lane.b32.xlu0 %v6752, 24
    %v7078 = vpop.permute.xlu0 %7077
    %7079 = vrot.lane.b32.xlu0 %v7056, 24
    %v7080 = vpop.permute.xlu0 %7079
    %v7083 = vsel %vm486, %v6524, %v7062
    %v7084 = vsel %vm486, %v6828, %v7064
    %v7085 = vsel %vm1823, %v7083, %v7070
    %v7086 = vsel %vm1823, %v7084, %v7072
    %v7087 = vsel %vm1826, %v7085, %v7078
    %v7088 = vsel %vm1826, %v7086, %v7080
    %v7090 = vlaneseq
    %v7091 = vshrl.u32 %v7090, 7
    %v7092 = vsub.s32 0, %v7091
    %v7093 = vrot.slane %v3960, %v7092
    %v7096 = vsel %vm388, %v7087, 0
    %v7099 = vsel %vm388, %v7088, 0
    %7101 = vmatprep.subr.mxu0 0.0
    %7102 = vmatpush1.msra.mxu0 0.0
    %7103 = vmatprep.subr.mxu0 0.0
    %7104 = vmatpush1.msra.mxu0 0.0
    %7105 = vmatprep.subr.mxu0 0.0
    %7106 = vmatpush1.msra.mxu0 0.0
    %7107 = vmatprep.subr.mxu0 0.0
    %7108 = vmatpush1.msra.mxu0 0.0
    %7109 = vmatprep.subr.mxu0 0.0
    %7110 = vmatpush1.msra.mxu0 0.0
    %7111 = vmatprep.subr.mxu0 0.0
    %7112 = vmatpush1.msra.mxu0 0.0
    %7113 = vmatprep.subr.mxu0 0.0
    %7114 = vmatpush1.msra.mxu0 0.0
    %7115 = vmatprep.subr.mxu0 0.0
    %7116 = vmatpush1.msra.mxu0 0.0
    %7117 = vmatprep.subr.mxu0 0.0
    %7118 = vmatpush1.msra.mxu0 0.0
    %7119 = vmatprep.subr.mxu0 0.0
    %7120 = vmatpush1.msra.mxu0 0.0
    %7121 = vmatprep.subr.mxu0 0.0
    %7122 = vmatpush1.msra.mxu0 0.0
    %7123 = vmatprep.subr.mxu0 0.0
    %7124 = vmatpush1.msra.mxu0 0.0
    %7125 = vmatprep.subr.mxu0 0.0
    %7126 = vmatpush1.msra.mxu0 %v3959
    %7127 = vmatprep.subr.mxu0 0.0
    %7128 = vmatpush1.msra.mxu0 %v3958
    %7129 = vmatprep.subr.mxu0 0.0
    %7130 = vmatpush1.msra.mxu0 %v3957
    %7131 = vmatprep.subr.mxu0 0.0
    %7132 = vmatpush1.msra.mxu0 %v3956
    %7133 = vmatprep.subr.mxu0 0.0
    %7134 = vmatpush2.msra.mxu0 0.0
    %7135 = vmatprep.subr.mxu0 0.0
    %7136 = vmatpush2.msra.mxu0 0.0
    %7137 = vmatprep.subr.mxu0 0.0
    %7138 = vmatpush2.msra.mxu0 0.0
    %7139 = vmatprep.subr.mxu0 0.0
    %7140 = vmatpush2.msra.mxu0 0.0
    %7141 = vmatprep.subr.mxu0 0.0
    %7142 = vmatpush2.msra.mxu0 0.0
    %7143 = vmatprep.subr.mxu0 0.0
    %7144 = vmatpush2.msra.mxu0 0.0
    %7145 = vmatprep.subr.mxu0 0.0
    %7146 = vmatpush2.msra.mxu0 0.0
    %7147 = vmatprep.subr.mxu0 0.0
    %7148 = vmatpush2.msra.mxu0 0.0
    %7149 = vmatprep.subr.mxu0 0.0
    %7150 = vmatpush2.msra.mxu0 0.0
    %7151 = vmatprep.subr.mxu0 0.0
    %7152 = vmatpush2.msra.mxu0 0.0
    %7153 = vmatprep.subr.mxu0 0.0
    %7154 = vmatpush2.msra.mxu0 0.0
    %7155 = vmatprep.subr.mxu0 0.0
    %7156 = vmatpush2.msra.mxu0 0.0
    %7157 = vmatprep.subr.mxu0 0.0
    %7158 = vmatpush2.msra.mxu0 0.0
    %7159 = vmatprep.subr.mxu0 0.0
    %7160 = vmatpush2.msra.mxu0 0.0
    %7161 = vmatprep.subr.mxu0 0.0
    %7162 = vmatpush2.msra.mxu0 0.0
    %7163 = vmatprep.subr.mxu0 0.0
    %7164 = vmatpush2.msra.mxu0 0.0
    %7165 = vmatprep.mubr.f32.mxu0 0.0
    %7166 = vmatmul.mubr.f32.gmra.mxu0 %v7096
    %v7167 = vpop.f32.mrf.mxu0
    %v7168 = vadd.f32 %v7093, %v7167
    %v7169 = vpop.f32.mrf.mxu0
    %7170 = vmatprep.mubr.f32.mxu0 0.0
    %7171 = vmatmul.mubr.f32.gmra.mxu0 %v7099
    %v7172 = vpop.f32.mrf.mxu0
    %v7173 = vadd.f32 %v7093, %v7172
    %v7174 = vpop.f32.mrf.mxu0
    %7175 = vdwg.mxu0
    %7176 = vst.msk [vmem:[#allocation38] sm:$0xff] %vm486, %v6443
    %7177 = vst.msk [vmem:[#allocation38 + $0x8] sm:$0xff] %vm486, %v6444
    %7178 = vst.msk [vmem:[#allocation38 + $0x10] sm:$0xff] %vm486, %v6445
    %7179 = vst.msk [vmem:[#allocation38 + $0x18] sm:$0xff] %vm486, %v6446
    %7180 = vst.msk [vmem:[#allocation38 + $0x20] sm:$0xff] %vm486, %v6447
    %7181 = vst.msk [vmem:[#allocation38 + $0x28] sm:$0xff] %vm486, %v6448
    %7182 = vst.msk [vmem:[#allocation38 + $0x30] sm:$0xff] %vm486, %v6449
    %7183 = vst.msk [vmem:[#allocation38 + $0x38] sm:$0xff] %vm486, %v6450
    %v7184 = vadd.f32 %v5660, %v7168
    %v7185 = vadd.f32 %v5661, %v7173
    %v7186 = vsel %vm388, %v7184, 0.0
    %7187 = vadd.xlane.f32.xlu0 %v7186
    %v7188 = vpop.xlane.xlu0 %7187
    %v7189 = vsel %vm388, %v7185, 0.0
    %7190 = vadd.xlane.f32.xlu0 %v7189
    %v7191 = vpop.xlane.xlu0 %7190
    %v7192 = vmul.f32 %v7188, %v1932
    %v7193 = vmul.f32 %v7191, %v1932
    %v7194 = vsub.f32 %v7184, %v7192
    %v7195 = vsub.f32 %v7185, %v7193
    %v7196 = vmul.f32 %v7194, %v7194
    %v7197 = vmul.f32 %v7195, %v7195
    %v7198 = vsel %vm388, %v7196, 0.0
    %7199 = vadd.xlane.f32.xlu0 %v7198
    %v7200 = vpop.xlane.xlu0 %7199
    %v7201 = vsel %vm388, %v7197, 0.0
    %7202 = vadd.xlane.f32.xlu0 %v7201
    %v7203 = vpop.xlane.xlu0 %7202
    %v7204 = vmul.f32 %v7200, %v1932
    %v7205 = vmul.f32 %v7203, %v1932
    %v7206 = vadd.f32 %v7204, 1e-05
    %v7207 = vadd.f32 %v7205, 1e-05
    %v7208 = vrsqrt.pop %v7206
    %v7209 = vrsqrt.pop %v7207
    %v7210 = vmul.f32 %v7194, %v7208
    %v7211 = vmul.f32 %v7195, %v7209
    %v7213 = vlaneseq
    %v7214 = vshrl.u32 %v7213, 7
    %v7215 = vsub.s32 0, %v7214
    %v7216 = vrot.slane %v3975, %v7215
    %v7218 = vmul.f32 %v7210, %v7216
    %v7219 = vmul.f32 %v7211, %v7216
    %v7221 = vlaneseq
    %v7222 = vshrl.u32 %v7221, 7
    %v7223 = vsub.s32 0, %v7222
    %v7224 = vrot.slane %v3976, %v7223
    %v7226 = vadd.f32 %v7218, %v7224
    %v7227 = vadd.f32 %v7219, %v7224
    %v7229 = vsel %vm388, %v7226, 0
    %v7232 = vsel %vm388, %v7227, 0
    %7234 = vmatprep.subr.mxu0 0.0
    %7235 = vmatpush1.msra.mxu0 0.0
    %7236 = vmatprep.subr.mxu0 0.0
    %7237 = vmatpush1.msra.mxu0 0.0
    %7238 = vmatprep.subr.mxu0 0.0
    %7239 = vmatpush1.msra.mxu0 0.0
    %7240 = vmatprep.subr.mxu0 0.0
    %7241 = vmatpush1.msra.mxu0 0.0
    %7242 = vmatprep.subr.mxu0 0.0
    %7243 = vmatpush1.msra.mxu0 0.0
    %7244 = vmatprep.subr.mxu0 0.0
    %7245 = vmatpush1.msra.mxu0 0.0
    %7246 = vmatprep.subr.mxu0 0.0
    %7247 = vmatpush1.msra.mxu0 0.0
    %7248 = vmatprep.subr.mxu0 0.0
    %7249 = vmatpush1.msra.mxu0 0.0
    %7250 = vmatprep.subr.mxu0 0.0
    %7251 = vmatpush1.msra.mxu0 0.0
    %7252 = vmatprep.subr.mxu0 0.0
    %7253 = vmatpush1.msra.mxu0 0.0
    %7254 = vmatprep.subr.mxu0 0.0
    %7255 = vmatpush1.msra.mxu0 0.0
    %7256 = vmatprep.subr.mxu0 0.0
    %7257 = vmatpush1.msra.mxu0 0.0
    %7258 = vmatprep.subr.mxu0 0.0
    %7259 = vmatpush1.msra.mxu0 %v3964
    %7260 = vmatprep.subr.mxu0 0.0
    %7261 = vmatpush1.msra.mxu0 %v3963
    %7262 = vmatprep.subr.mxu0 0.0
    %7263 = vmatpush1.msra.mxu0 %v3962
    %7264 = vmatprep.subr.mxu0 0.0
    %7265 = vmatpush1.msra.mxu0 %v3961
    %7266 = vmatprep.subr.mxu0 0.0
    %7267 = vmatpush2.msra.mxu0 0.0
    %7268 = vmatprep.subr.mxu0 0.0
    %7269 = vmatpush2.msra.mxu0 0.0
    %7270 = vmatprep.subr.mxu0 0.0
    %7271 = vmatpush2.msra.mxu0 0.0
    %7272 = vmatprep.subr.mxu0 0.0
    %7273 = vmatpush2.msra.mxu0 0.0
    %7274 = vmatprep.subr.mxu0 0.0
    %7275 = vmatpush2.msra.mxu0 0.0
    %7276 = vmatprep.subr.mxu0 0.0
    %7277 = vmatpush2.msra.mxu0 0.0
    %7278 = vmatprep.subr.mxu0 0.0
    %7279 = vmatpush2.msra.mxu0 0.0
    %7280 = vmatprep.subr.mxu0 0.0
    %7281 = vmatpush2.msra.mxu0 0.0
    %7282 = vmatprep.subr.mxu0 0.0
    %7283 = vmatpush2.msra.mxu0 0.0
    %7284 = vmatprep.subr.mxu0 0.0
    %7285 = vmatpush2.msra.mxu0 0.0
    %7286 = vmatprep.subr.mxu0 0.0
    %7287 = vmatpush2.msra.mxu0 0.0
    %7288 = vmatprep.subr.mxu0 0.0
    %7289 = vmatpush2.msra.mxu0 0.0
    %7290 = vmatprep.subr.mxu0 0.0
    %7291 = vmatpush2.msra.mxu0 0.0
    %7292 = vmatprep.subr.mxu0 0.0
    %7293 = vmatpush2.msra.mxu0 0.0
    %7294 = vmatprep.subr.mxu0 0.0
    %7295 = vmatpush2.msra.mxu0 0.0
    %7296 = vmatprep.subr.mxu0 0.0
    %7297 = vmatpush2.msra.mxu0 0.0
    %7298 = vmatprep.mubr.f32.mxu0 0.0
    %7299 = vmatmul.mubr.f32.gmra.mxu0 %v7229
    %v7300 = vpop.f32.mrf.mxu0
    %v7301 = vadd.f32 0.0, %v7300
    %v7302 = vpop.f32.mrf.mxu0
    %7303 = vmatprep.mubr.f32.mxu0 0.0
    %7304 = vmatmul.mubr.f32.gmra.mxu0 %v7232
    %v7305 = vpop.f32.mrf.mxu0
    %v7306 = vadd.f32 0.0, %v7305
    %v7307 = vpop.f32.mrf.mxu0
    %7308 = vdwg.mxu0
    %v7309 = vmax.f32 %v7301, 0.0
    %v7310 = vmax.f32 %v7306, 0.0
    %v7312 = vsel %vm2052, %v7309, 0
    %v7315 = vsel %vm2052, %v7310, 0
    %7317 = vmatprep.subr.mxu0 0.0
    %7318 = vmatpush1.msra.mxu0 0.0
    %7319 = vmatprep.subr.mxu0 0.0
    %7320 = vmatpush1.msra.mxu0 0.0
    %7321 = vmatprep.subr.mxu0 0.0
    %7322 = vmatpush1.msra.mxu0 0.0
    %7323 = vmatprep.subr.mxu0 0.0
    %7324 = vmatpush1.msra.mxu0 0.0
    %7325 = vmatprep.subr.mxu0 0.0
    %7326 = vmatpush1.msra.mxu0 0.0
    %7327 = vmatprep.subr.mxu0 0.0
    %7328 = vmatpush1.msra.mxu0 0.0
    %7329 = vmatprep.subr.mxu0 0.0
    %7330 = vmatpush1.msra.mxu0 0.0
    %7331 = vmatprep.subr.mxu0 0.0
    %7332 = vmatpush1.msra.mxu0 0.0
    %7333 = vmatprep.subr.mxu0 0.0
    %7334 = vmatpush1.msra.mxu0 %v3972
    %7335 = vmatprep.subr.mxu0 0.0
    %7336 = vmatpush1.msra.mxu0 %v3971
    %7337 = vmatprep.subr.mxu0 0.0
    %7338 = vmatpush1.msra.mxu0 %v3970
    %7339 = vmatprep.subr.mxu0 0.0
    %7340 = vmatpush1.msra.mxu0 %v3969
    %7341 = vmatprep.subr.mxu0 0.0
    %7342 = vmatpush1.msra.mxu0 %v3968
    %7343 = vmatprep.subr.mxu0 0.0
    %7344 = vmatpush1.msra.mxu0 %v3967
    %7345 = vmatprep.subr.mxu0 0.0
    %7346 = vmatpush1.msra.mxu0 %v3966
    %7347 = vmatprep.subr.mxu0 0.0
    %7348 = vmatpush1.msra.mxu0 %v3965
    %7349 = vmatprep.subr.mxu0 0.0
    %7350 = vmatpush2.msra.mxu0 0.0
    %7351 = vmatprep.subr.mxu0 0.0
    %7352 = vmatpush2.msra.mxu0 0.0
    %7353 = vmatprep.subr.mxu0 0.0
    %7354 = vmatpush2.msra.mxu0 0.0
    %7355 = vmatprep.subr.mxu0 0.0
    %7356 = vmatpush2.msra.mxu0 0.0
    %7357 = vmatprep.subr.mxu0 0.0
    %7358 = vmatpush2.msra.mxu0 0.0
    %7359 = vmatprep.subr.mxu0 0.0
    %7360 = vmatpush2.msra.mxu0 0.0
    %7361 = vmatprep.subr.mxu0 0.0
    %7362 = vmatpush2.msra.mxu0 0.0
    %7363 = vmatprep.subr.mxu0 0.0
    %7364 = vmatpush2.msra.mxu0 0.0
    %7365 = vmatprep.subr.mxu0 0.0
    %7366 = vmatpush2.msra.mxu0 0.0
    %7367 = vmatprep.subr.mxu0 0.0
    %7368 = vmatpush2.msra.mxu0 0.0
    %7369 = vmatprep.subr.mxu0 0.0
    %7370 = vmatpush2.msra.mxu0 0.0
    %7371 = vmatprep.subr.mxu0 0.0
    %7372 = vmatpush2.msra.mxu0 0.0
    %7373 = vmatprep.subr.mxu0 0.0
    %7374 = vmatpush2.msra.mxu0 0.0
    %7375 = vmatprep.subr.mxu0 0.0
    %7376 = vmatpush2.msra.mxu0 0.0
    %7377 = vmatprep.subr.mxu0 0.0
    %7378 = vmatpush2.msra.mxu0 0.0
    %7379 = vmatprep.subr.mxu0 0.0
    %7380 = vmatpush2.msra.mxu0 0.0
    %7381 = vmatprep.mubr.f32.mxu0 0.0
    %7382 = vmatmul.mubr.f32.gmra.mxu0 %v7312
    %v7383 = vpop.f32.mrf.mxu0
    %v7384 = vadd.f32 0.0, %v7383
    %v7385 = vpop.f32.mrf.mxu0
    %7386 = vmatprep.mubr.f32.mxu0 0.0
    %7387 = vmatmul.mubr.f32.gmra.mxu0 %v7315
    %v7388 = vpop.f32.mrf.mxu0
    %v7389 = vadd.f32 0.0, %v7388
    %v7390 = vpop.f32.mrf.mxu0
    %7391 = vdwg.mxu0
    %v7392 = vadd.f32 %v7226, %v7384
    %v7393 = vadd.f32 %v7227, %v7389
    %v7394 = vsel %vm388, %v7392, 0.0
    %7395 = vadd.xlane.f32.xlu0 %v7394
    %v7396 = vpop.xlane.xlu0 %7395
    %v7397 = vsel %vm388, %v7393, 0.0
    %7398 = vadd.xlane.f32.xlu0 %v7397
    %v7399 = vpop.xlane.xlu0 %7398
    %v7400 = vmul.f32 %v7396, %v1932
    %v7401 = vmul.f32 %v7399, %v1932
    %v7402 = vsub.f32 %v7392, %v7400
    %v7403 = vsub.f32 %v7393, %v7401
    %v7404 = vmul.f32 %v7402, %v7402
    %v7405 = vmul.f32 %v7403, %v7403
    %v7406 = vsel %vm388, %v7404, 0.0
    %7407 = vadd.xlane.f32.xlu0 %v7406
    %v7408 = vpop.xlane.xlu0 %7407
    %v7409 = vsel %vm388, %v7405, 0.0
    %7410 = vadd.xlane.f32.xlu0 %v7409
    %v7411 = vpop.xlane.xlu0 %7410
    %v7412 = vmul.f32 %v7408, %v1932
    %v7413 = vmul.f32 %v7411, %v1932
    %v7414 = vadd.f32 %v7412, 1e-05
    %v7415 = vadd.f32 %v7413, 1e-05
    %v7416 = vrsqrt.pop %v7414
    %v7417 = vrsqrt.pop %v7415
    %v7418 = vmul.f32 %v7402, %v7416
    %v7419 = vmul.f32 %v7403, %v7417
    %v7421 = vlaneseq
    %v7422 = vshrl.u32 %v7421, 7
    %v7423 = vsub.s32 0, %v7422
    %v7424 = vrot.slane %v3977, %v7423
    %v7426 = vmul.f32 %v7418, %v7424
    %v7427 = vmul.f32 %v7419, %v7424
    %v7429 = vlaneseq
    %v7430 = vshrl.u32 %v7429, 7
    %v7431 = vsub.s32 0, %v7430
    %v7432 = vrot.slane %v3978, %v7431
    %v7434 = vadd.f32 %v7426, %v7432
    %v7435 = vadd.f32 %v7427, %v7432
    %v7437 = vsel %vm388, %v7434, 0
    %v7440 = vsel %vm388, %v7435, 0
    %7442 = vmatprep.subr.mxu0 0.0
    %7443 = vmatpush1.msra.mxu0 0.0
    %7444 = vmatprep.subr.mxu0 0.0
    %7445 = vmatpush1.msra.mxu0 0.0
    %7446 = vmatprep.subr.mxu0 0.0
    %7447 = vmatpush1.msra.mxu0 0.0
    %7448 = vmatprep.subr.mxu0 0.0
    %7449 = vmatpush1.msra.mxu0 0.0
    %7450 = vmatprep.subr.mxu0 0.0
    %7451 = vmatpush1.msra.mxu0 0.0
    %7452 = vmatprep.subr.mxu0 0.0
    %7453 = vmatpush1.msra.mxu0 0.0
    %7454 = vmatprep.subr.mxu0 0.0
    %7455 = vmatpush1.msra.mxu0 0.0
    %7456 = vmatprep.subr.mxu0 0.0
    %7457 = vmatpush1.msra.mxu0 0.0
    %7458 = vmatprep.subr.mxu0 0.0
    %7459 = vmatpush1.msra.mxu0 0.0
    %7460 = vmatprep.subr.mxu0 0.0
    %7461 = vmatpush1.msra.mxu0 0.0
    %7462 = vmatprep.subr.mxu0 0.0
    %7463 = vmatpush1.msra.mxu0 0.0
    %7464 = vmatprep.subr.mxu0 0.0
    %7465 = vmatpush1.msra.mxu0 0.0
    %7466 = vmatprep.subr.mxu0 0.0
    %7467 = vmatpush1.msra.mxu0 %v3939
    %7468 = vmatprep.subr.mxu0 0.0
    %7469 = vmatpush1.msra.mxu0 %v3938
    %7470 = vmatprep.subr.mxu0 0.0
    %7471 = vmatpush1.msra.mxu0 %v3937
    %7472 = vmatprep.subr.mxu0 0.0
    %7473 = vmatpush1.msra.mxu0 %v3936
    %7474 = vmatprep.subr.mxu0 0.0
    %7475 = vmatpush2.msra.mxu0 0.0
    %7476 = vmatprep.subr.mxu0 0.0
    %7477 = vmatpush2.msra.mxu0 0.0
    %7478 = vmatprep.subr.mxu0 0.0
    %7479 = vmatpush2.msra.mxu0 0.0
    %7480 = vmatprep.subr.mxu0 0.0
    %7481 = vmatpush2.msra.mxu0 0.0
    %7482 = vmatprep.subr.mxu0 0.0
    %7483 = vmatpush2.msra.mxu0 0.0
    %7484 = vmatprep.subr.mxu0 0.0
    %7485 = vmatpush2.msra.mxu0 0.0
    %7486 = vmatprep.subr.mxu0 0.0
    %7487 = vmatpush2.msra.mxu0 0.0
    %7488 = vmatprep.subr.mxu0 0.0
    %7489 = vmatpush2.msra.mxu0 0.0
    %7490 = vmatprep.subr.mxu0 0.0
    %7491 = vmatpush2.msra.mxu0 0.0
    %7492 = vmatprep.subr.mxu0 0.0
    %7493 = vmatpush2.msra.mxu0 0.0
    %7494 = vmatprep.subr.mxu0 0.0
    %7495 = vmatpush2.msra.mxu0 0.0
    %7496 = vmatprep.subr.mxu0 0.0
    %7497 = vmatpush2.msra.mxu0 0.0
    %7498 = vmatprep.subr.mxu0 0.0
    %7499 = vmatpush2.msra.mxu0 0.0
    %7500 = vmatprep.subr.mxu0 0.0
    %7501 = vmatpush2.msra.mxu0 0.0
    %7502 = vmatprep.subr.mxu0 0.0
    %7503 = vmatpush2.msra.mxu0 0.0
    %7504 = vmatprep.subr.mxu0 0.0
    %7505 = vmatpush2.msra.mxu0 0.0
    %7506 = vmatprep.mubr.f32.mxu0 0.0
    %7507 = vmatmul.mubr.f32.gmra.mxu0 %v7437
    %v7508 = vpop.f32.mrf.mxu0
    %v7509 = vadd.f32 %v4084, %v7508
    %v7510 = vpop.f32.mrf.mxu0
    %7511 = vmatprep.mubr.f32.mxu0 0.0
    %7512 = vmatmul.mubr.f32.gmra.mxu0 %v7440
    %v7513 = vpop.f32.mrf.mxu0
    %v7514 = vadd.f32 %v4084, %v7513
    %v7515 = vpop.f32.mrf.mxu0
    %7516 = vdwg.mxu0
    %7519 = vrot.lane.b32.xlu0 %v7509, 120
    %v7520 = vpop.permute.xlu0 %7519
    %7521 = vrot.lane.b32.xlu0 %v7514, 120
    %v7522 = vpop.permute.xlu0 %7521
    %7523 = vrot.lane.b32.xlu0 %v7509, 112
    %v7524 = vpop.permute.xlu0 %7523
    %7525 = vrot.lane.b32.xlu0 %v7514, 112
    %v7526 = vpop.permute.xlu0 %7525
    %7527 = vrot.lane.b32.xlu0 %v7509, 104
    %v7528 = vpop.permute.xlu0 %7527
    %7529 = vrot.lane.b32.xlu0 %v7514, 104
    %v7530 = vpop.permute.xlu0 %7529
    %7531 = vrot.lane.b32.xlu0 %v7509, 96
    %v7532 = vpop.permute.xlu0 %7531
    %v7533 = vsel %vm486, %v7509, 0
    %v7535 = vsel %vm486, %v7532, 0
    %7537 = vmatprep.subr.mxu0 0.0
    %7538 = vmatpush1.xpose.msra.mxu0 0.0
    %7539 = vmatprep.subr.mxu0 0.0
    %7540 = vmatpush1.xpose.msra.mxu0 0.0
    %7541 = vmatprep.subr.mxu0 0.0
    %7542 = vmatpush1.xpose.msra.mxu0 0.0
    %7543 = vmatprep.subr.mxu0 0.0
    %7544 = vmatpush1.xpose.msra.mxu0 0.0
    %7545 = vmatprep.subr.mxu0 0.0
    %7546 = vmatpush1.xpose.msra.mxu0 0.0
    %7547 = vmatprep.subr.mxu0 0.0
    %7548 = vmatpush1.xpose.msra.mxu0 0.0
    %7549 = vmatprep.subr.mxu0 0.0
    %7550 = vmatpush1.xpose.msra.mxu0 0.0
    %7551 = vmatprep.subr.mxu0 0.0
    %7552 = vmatpush1.xpose.msra.mxu0 0.0
    %7553 = vmatprep.subr.mxu0 0.0
    %7554 = vmatpush1.xpose.msra.mxu0 0.0
    %7555 = vmatprep.subr.mxu0 0.0
    %7556 = vmatpush1.xpose.msra.mxu0 0.0
    %7557 = vmatprep.subr.mxu0 0.0
    %7558 = vmatpush1.xpose.msra.mxu0 0.0
    %7559 = vmatprep.subr.mxu0 0.0
    %7560 = vmatpush1.xpose.msra.mxu0 0.0
    %7561 = vmatprep.subr.mxu0 0.0
    %7562 = vmatpush1.xpose.msra.mxu0 0.0
    %7563 = vmatprep.subr.mxu0 0.0
    %7564 = vmatpush1.xpose.msra.mxu0 0.0
    %7565 = vmatprep.subr.mxu0 0.0
    %7566 = vmatpush1.xpose.msra.mxu0 0.0
    %7567 = vmatprep.subr.mxu0 0.0
    %7568 = vmatpush1.xpose.msra.mxu0 %v7535
    %7569 = vmatprep.subr.mxu0 0.0
    %7570 = vmatpush2.xpose.msra.mxu0 0.0
    %7571 = vmatprep.subr.mxu0 0.0
    %7572 = vmatpush2.xpose.msra.mxu0 0.0
    %7573 = vmatprep.subr.mxu0 0.0
    %7574 = vmatpush2.xpose.msra.mxu0 0.0
    %7575 = vmatprep.subr.mxu0 0.0
    %7576 = vmatpush2.xpose.msra.mxu0 0.0
    %7577 = vmatprep.subr.mxu0 0.0
    %7578 = vmatpush2.xpose.msra.mxu0 0.0
    %7579 = vmatprep.subr.mxu0 0.0
    %7580 = vmatpush2.xpose.msra.mxu0 0.0
    %7581 = vmatprep.subr.mxu0 0.0
    %7582 = vmatpush2.xpose.msra.mxu0 0.0
    %7583 = vmatprep.subr.mxu0 0.0
    %7584 = vmatpush2.xpose.msra.mxu0 0.0
    %7585 = vmatprep.subr.mxu0 0.0
    %7586 = vmatpush2.xpose.msra.mxu0 0.0
    %7587 = vmatprep.subr.mxu0 0.0
    %7588 = vmatpush2.xpose.msra.mxu0 0.0
    %7589 = vmatprep.subr.mxu0 0.0
    %7590 = vmatpush2.xpose.msra.mxu0 0.0
    %7591 = vmatprep.subr.mxu0 0.0
    %7592 = vmatpush2.xpose.msra.mxu0 0.0
    %7593 = vmatprep.subr.mxu0 0.0
    %7594 = vmatpush2.xpose.msra.mxu0 0.0
    %7595 = vmatprep.subr.mxu0 0.0
    %7596 = vmatpush2.xpose.msra.mxu0 0.0
    %7597 = vmatprep.subr.mxu0 0.0
    %7598 = vmatpush2.xpose.msra.mxu0 0.0
    %7599 = vmatprep.subr.mxu0 0.0
    %7600 = vmatpush2.xpose.msra.mxu0 0.0
    %7601 = vmatprep.mubr.f32.mxu0 0.0
    %7602 = vmatmul.mubr.f32.gmra.mxu0 %v7533
    %v7603 = vpop.f32.mrf.mxu0
    %v7604 = vadd.f32 0.0, %v7603
    %v7605 = vpop.f32.mrf.mxu0
    %7606 = vdwg.mxu0
    %7607 = vrot.lane.b32.xlu0 %v7520, 96
    %v7608 = vpop.permute.xlu0 %7607
    %v7609 = vsel %vm486, %v7520, 0
    %v7611 = vsel %vm486, %v7608, 0
    %7613 = vmatprep.subr.mxu0 0.0
    %7614 = vmatpush1.xpose.msra.mxu0 0.0
    %7615 = vmatprep.subr.mxu0 0.0
    %7616 = vmatpush1.xpose.msra.mxu0 0.0
    %7617 = vmatprep.subr.mxu0 0.0
    %7618 = vmatpush1.xpose.msra.mxu0 0.0
    %7619 = vmatprep.subr.mxu0 0.0
    %7620 = vmatpush1.xpose.msra.mxu0 0.0
    %7621 = vmatprep.subr.mxu0 0.0
    %7622 = vmatpush1.xpose.msra.mxu0 0.0
    %7623 = vmatprep.subr.mxu0 0.0
    %7624 = vmatpush1.xpose.msra.mxu0 0.0
    %7625 = vmatprep.subr.mxu0 0.0
    %7626 = vmatpush1.xpose.msra.mxu0 0.0
    %7627 = vmatprep.subr.mxu0 0.0
    %7628 = vmatpush1.xpose.msra.mxu0 0.0
    %7629 = vmatprep.subr.mxu0 0.0
    %7630 = vmatpush1.xpose.msra.mxu0 0.0
    %7631 = vmatprep.subr.mxu0 0.0
    %7632 = vmatpush1.xpose.msra.mxu0 0.0
    %7633 = vmatprep.subr.mxu0 0.0
    %7634 = vmatpush1.xpose.msra.mxu0 0.0
    %7635 = vmatprep.subr.mxu0 0.0
    %7636 = vmatpush1.xpose.msra.mxu0 0.0
    %7637 = vmatprep.subr.mxu0 0.0
    %7638 = vmatpush1.xpose.msra.mxu0 0.0
    %7639 = vmatprep.subr.mxu0 0.0
    %7640 = vmatpush1.xpose.msra.mxu0 0.0
    %7641 = vmatprep.subr.mxu0 0.0
    %7642 = vmatpush1.xpose.msra.mxu0 0.0
    %7643 = vmatprep.subr.mxu0 0.0
    %7644 = vmatpush1.xpose.msra.mxu0 %v7611
    %7645 = vmatprep.subr.mxu0 0.0
    %7646 = vmatpush2.xpose.msra.mxu0 0.0
    %7647 = vmatprep.subr.mxu0 0.0
    %7648 = vmatpush2.xpose.msra.mxu0 0.0
    %7649 = vmatprep.subr.mxu0 0.0
    %7650 = vmatpush2.xpose.msra.mxu0 0.0
    %7651 = vmatprep.subr.mxu0 0.0
    %7652 = vmatpush2.xpose.msra.mxu0 0.0
    %7653 = vmatprep.subr.mxu0 0.0
    %7654 = vmatpush2.xpose.msra.mxu0 0.0
    %7655 = vmatprep.subr.mxu0 0.0
    %7656 = vmatpush2.xpose.msra.mxu0 0.0
    %7657 = vmatprep.subr.mxu0 0.0
    %7658 = vmatpush2.xpose.msra.mxu0 0.0
    %7659 = vmatprep.subr.mxu0 0.0
    %7660 = vmatpush2.xpose.msra.mxu0 0.0
    %7661 = vmatprep.subr.mxu0 0.0
    %7662 = vmatpush2.xpose.msra.mxu0 0.0
    %7663 = vmatprep.subr.mxu0 0.0
    %7664 = vmatpush2.xpose.msra.mxu0 0.0
    %7665 = vmatprep.subr.mxu0 0.0
    %7666 = vmatpush2.xpose.msra.mxu0 0.0
    %7667 = vmatprep.subr.mxu0 0.0
    %7668 = vmatpush2.xpose.msra.mxu0 0.0
    %7669 = vmatprep.subr.mxu0 0.0
    %7670 = vmatpush2.xpose.msra.mxu0 0.0
    %7671 = vmatprep.subr.mxu0 0.0
    %7672 = vmatpush2.xpose.msra.mxu0 0.0
    %7673 = vmatprep.subr.mxu0 0.0
    %7674 = vmatpush2.xpose.msra.mxu0 0.0
    %7675 = vmatprep.subr.mxu0 0.0
    %7676 = vmatpush2.xpose.msra.mxu0 0.0
    %7677 = vmatprep.mubr.f32.mxu0 0.0
    %7678 = vmatmul.mubr.f32.gmra.mxu0 %v7609
    %v7679 = vpop.f32.mrf.mxu0
    %v7680 = vadd.f32 0.0, %v7679
    %v7681 = vpop.f32.mrf.mxu0
    %7682 = vdwg.mxu0
    %7683 = vrot.lane.b32.xlu0 %v7524, 96
    %v7684 = vpop.permute.xlu0 %7683
    %v7685 = vsel %vm486, %v7524, 0
    %v7687 = vsel %vm486, %v7684, 0
    %7689 = vmatprep.subr.mxu0 0.0
    %7690 = vmatpush1.xpose.msra.mxu0 0.0
    %7691 = vmatprep.subr.mxu0 0.0
    %7692 = vmatpush1.xpose.msra.mxu0 0.0
    %7693 = vmatprep.subr.mxu0 0.0
    %7694 = vmatpush1.xpose.msra.mxu0 0.0
    %7695 = vmatprep.subr.mxu0 0.0
    %7696 = vmatpush1.xpose.msra.mxu0 0.0
    %7697 = vmatprep.subr.mxu0 0.0
    %7698 = vmatpush1.xpose.msra.mxu0 0.0
    %7699 = vmatprep.subr.mxu0 0.0
    %7700 = vmatpush1.xpose.msra.mxu0 0.0
    %7701 = vmatprep.subr.mxu0 0.0
    %7702 = vmatpush1.xpose.msra.mxu0 0.0
    %7703 = vmatprep.subr.mxu0 0.0
    %7704 = vmatpush1.xpose.msra.mxu0 0.0
    %7705 = vmatprep.subr.mxu0 0.0
    %7706 = vmatpush1.xpose.msra.mxu0 0.0
    %7707 = vmatprep.subr.mxu0 0.0
    %7708 = vmatpush1.xpose.msra.mxu0 0.0
    %7709 = vmatprep.subr.mxu0 0.0
    %7710 = vmatpush1.xpose.msra.mxu0 0.0
    %7711 = vmatprep.subr.mxu0 0.0
    %7712 = vmatpush1.xpose.msra.mxu0 0.0
    %7713 = vmatprep.subr.mxu0 0.0
    %7714 = vmatpush1.xpose.msra.mxu0 0.0
    %7715 = vmatprep.subr.mxu0 0.0
    %7716 = vmatpush1.xpose.msra.mxu0 0.0
    %7717 = vmatprep.subr.mxu0 0.0
    %7718 = vmatpush1.xpose.msra.mxu0 0.0
    %7719 = vmatprep.subr.mxu0 0.0
    %7720 = vmatpush1.xpose.msra.mxu0 %v7687
    %7721 = vmatprep.subr.mxu0 0.0
    %7722 = vmatpush2.xpose.msra.mxu0 0.0
    %7723 = vmatprep.subr.mxu0 0.0
    %7724 = vmatpush2.xpose.msra.mxu0 0.0
    %7725 = vmatprep.subr.mxu0 0.0
    %7726 = vmatpush2.xpose.msra.mxu0 0.0
    %7727 = vmatprep.subr.mxu0 0.0
    %7728 = vmatpush2.xpose.msra.mxu0 0.0
    %7729 = vmatprep.subr.mxu0 0.0
    %7730 = vmatpush2.xpose.msra.mxu0 0.0
    %7731 = vmatprep.subr.mxu0 0.0
    %7732 = vmatpush2.xpose.msra.mxu0 0.0
    %7733 = vmatprep.subr.mxu0 0.0
    %7734 = vmatpush2.xpose.msra.mxu0 0.0
    %7735 = vmatprep.subr.mxu0 0.0
    %7736 = vmatpush2.xpose.msra.mxu0 0.0
    %7737 = vmatprep.subr.mxu0 0.0
    %7738 = vmatpush2.xpose.msra.mxu0 0.0
    %7739 = vmatprep.subr.mxu0 0.0
    %7740 = vmatpush2.xpose.msra.mxu0 0.0
    %7741 = vmatprep.subr.mxu0 0.0
    %7742 = vmatpush2.xpose.msra.mxu0 0.0
    %7743 = vmatprep.subr.mxu0 0.0
    %7744 = vmatpush2.xpose.msra.mxu0 0.0
    %7745 = vmatprep.subr.mxu0 0.0
    %7746 = vmatpush2.xpose.msra.mxu0 0.0
    %7747 = vmatprep.subr.mxu0 0.0
    %7748 = vmatpush2.xpose.msra.mxu0 0.0
    %7749 = vmatprep.subr.mxu0 0.0
    %7750 = vmatpush2.xpose.msra.mxu0 0.0
    %7751 = vmatprep.subr.mxu0 0.0
    %7752 = vmatpush2.xpose.msra.mxu0 0.0
    %7753 = vmatprep.mubr.f32.mxu0 0.0
    %7754 = vmatmul.mubr.f32.gmra.mxu0 %v7685
    %v7755 = vpop.f32.mrf.mxu0
    %v7756 = vadd.f32 0.0, %v7755
    %v7757 = vpop.f32.mrf.mxu0
    %7758 = vdwg.mxu0
    %7759 = vrot.lane.b32.xlu0 %v7528, 96
    %v7760 = vpop.permute.xlu0 %7759
    %v7761 = vsel %vm486, %v7528, 0
    %v7763 = vsel %vm486, %v7760, 0
    %7765 = vmatprep.subr.mxu0 0.0
    %7766 = vmatpush1.xpose.msra.mxu0 0.0
    %7767 = vmatprep.subr.mxu0 0.0
    %7768 = vmatpush1.xpose.msra.mxu0 0.0
    %7769 = vmatprep.subr.mxu0 0.0
    %7770 = vmatpush1.xpose.msra.mxu0 0.0
    %7771 = vmatprep.subr.mxu0 0.0
    %7772 = vmatpush1.xpose.msra.mxu0 0.0
    %7773 = vmatprep.subr.mxu0 0.0
    %7774 = vmatpush1.xpose.msra.mxu0 0.0
    %7775 = vmatprep.subr.mxu0 0.0
    %7776 = vmatpush1.xpose.msra.mxu0 0.0
    %7777 = vmatprep.subr.mxu0 0.0
    %7778 = vmatpush1.xpose.msra.mxu0 0.0
    %7779 = vmatprep.subr.mxu0 0.0
    %7780 = vmatpush1.xpose.msra.mxu0 0.0
    %7781 = vmatprep.subr.mxu0 0.0
    %7782 = vmatpush1.xpose.msra.mxu0 0.0
    %7783 = vmatprep.subr.mxu0 0.0
    %7784 = vmatpush1.xpose.msra.mxu0 0.0
    %7785 = vmatprep.subr.mxu0 0.0
    %7786 = vmatpush1.xpose.msra.mxu0 0.0
    %7787 = vmatprep.subr.mxu0 0.0
    %7788 = vmatpush1.xpose.msra.mxu0 0.0
    %7789 = vmatprep.subr.mxu0 0.0
    %7790 = vmatpush1.xpose.msra.mxu0 0.0
    %7791 = vmatprep.subr.mxu0 0.0
    %7792 = vmatpush1.xpose.msra.mxu0 0.0
    %7793 = vmatprep.subr.mxu0 0.0
    %7794 = vmatpush1.xpose.msra.mxu0 0.0
    %7795 = vmatprep.subr.mxu0 0.0
    %7796 = vmatpush1.xpose.msra.mxu0 %v7763
    %7797 = vmatprep.subr.mxu0 0.0
    %7798 = vmatpush2.xpose.msra.mxu0 0.0
    %7799 = vmatprep.subr.mxu0 0.0
    %7800 = vmatpush2.xpose.msra.mxu0 0.0
    %7801 = vmatprep.subr.mxu0 0.0
    %7802 = vmatpush2.xpose.msra.mxu0 0.0
    %7803 = vmatprep.subr.mxu0 0.0
    %7804 = vmatpush2.xpose.msra.mxu0 0.0
    %7805 = vmatprep.subr.mxu0 0.0
    %7806 = vmatpush2.xpose.msra.mxu0 0.0
    %7807 = vmatprep.subr.mxu0 0.0
    %7808 = vmatpush2.xpose.msra.mxu0 0.0
    %7809 = vmatprep.subr.mxu0 0.0
    %7810 = vmatpush2.xpose.msra.mxu0 0.0
    %7811 = vmatprep.subr.mxu0 0.0
    %7812 = vmatpush2.xpose.msra.mxu0 0.0
    %7813 = vmatprep.subr.mxu0 0.0
    %7814 = vmatpush2.xpose.msra.mxu0 0.0
    %7815 = vmatprep.subr.mxu0 0.0
    %7816 = vmatpush2.xpose.msra.mxu0 0.0
    %7817 = vmatprep.subr.mxu0 0.0
    %7818 = vmatpush2.xpose.msra.mxu0 0.0
    %7819 = vmatprep.subr.mxu0 0.0
    %7820 = vmatpush2.xpose.msra.mxu0 0.0
    %7821 = vmatprep.subr.mxu0 0.0
    %7822 = vmatpush2.xpose.msra.mxu0 0.0
    %7823 = vmatprep.subr.mxu0 0.0
    %7824 = vmatpush2.xpose.msra.mxu0 0.0
    %7825 = vmatprep.subr.mxu0 0.0
    %7826 = vmatpush2.xpose.msra.mxu0 0.0
    %7827 = vmatprep.subr.mxu0 0.0
    %7828 = vmatpush2.xpose.msra.mxu0 0.0
    %7829 = vmatprep.mubr.f32.mxu0 0.0
    %7830 = vmatmul.mubr.f32.gmra.mxu0 %v7761
    %v7831 = vpop.f32.mrf.mxu0
    %v7832 = vadd.f32 0.0, %v7831
    %v7833 = vpop.f32.mrf.mxu0
    %7834 = vdwg.mxu0
    %7835 = vrot.lane.b32.xlu0 %v7514, 96
    %v7836 = vpop.permute.xlu0 %7835
    %v7837 = vsel %vm486, %v7514, 0
    %v7839 = vsel %vm486, %v7836, 0
    %7841 = vmatprep.subr.mxu0 0.0
    %7842 = vmatpush1.xpose.msra.mxu0 0.0
    %7843 = vmatprep.subr.mxu0 0.0
    %7844 = vmatpush1.xpose.msra.mxu0 0.0
    %7845 = vmatprep.subr.mxu0 0.0
    %7846 = vmatpush1.xpose.msra.mxu0 0.0
    %7847 = vmatprep.subr.mxu0 0.0
    %7848 = vmatpush1.xpose.msra.mxu0 0.0
    %7849 = vmatprep.subr.mxu0 0.0
    %7850 = vmatpush1.xpose.msra.mxu0 0.0
    %7851 = vmatprep.subr.mxu0 0.0
    %7852 = vmatpush1.xpose.msra.mxu0 0.0
    %7853 = vmatprep.subr.mxu0 0.0
    %7854 = vmatpush1.xpose.msra.mxu0 0.0
    %7855 = vmatprep.subr.mxu0 0.0
    %7856 = vmatpush1.xpose.msra.mxu0 0.0
    %7857 = vmatprep.subr.mxu0 0.0
    %7858 = vmatpush1.xpose.msra.mxu0 0.0
    %7859 = vmatprep.subr.mxu0 0.0
    %7860 = vmatpush1.xpose.msra.mxu0 0.0
    %7861 = vmatprep.subr.mxu0 0.0
    %7862 = vmatpush1.xpose.msra.mxu0 0.0
    %7863 = vmatprep.subr.mxu0 0.0
    %7864 = vmatpush1.xpose.msra.mxu0 0.0
    %7865 = vmatprep.subr.mxu0 0.0
    %7866 = vmatpush1.xpose.msra.mxu0 0.0
    %7867 = vmatprep.subr.mxu0 0.0
    %7868 = vmatpush1.xpose.msra.mxu0 0.0
    %7869 = vmatprep.subr.mxu0 0.0
    %7870 = vmatpush1.xpose.msra.mxu0 0.0
    %7871 = vmatprep.subr.mxu0 0.0
    %7872 = vmatpush1.xpose.msra.mxu0 %v7839
    %7873 = vmatprep.subr.mxu0 0.0
    %7874 = vmatpush2.xpose.msra.mxu0 0.0
    %7875 = vmatprep.subr.mxu0 0.0
    %7876 = vmatpush2.xpose.msra.mxu0 0.0
    %7877 = vmatprep.subr.mxu0 0.0
    %7878 = vmatpush2.xpose.msra.mxu0 0.0
    %7879 = vmatprep.subr.mxu0 0.0
    %7880 = vmatpush2.xpose.msra.mxu0 0.0
    %7881 = vmatprep.subr.mxu0 0.0
    %7882 = vmatpush2.xpose.msra.mxu0 0.0
    %7883 = vmatprep.subr.mxu0 0.0
    %7884 = vmatpush2.xpose.msra.mxu0 0.0
    %7885 = vmatprep.subr.mxu0 0.0
    %7886 = vmatpush2.xpose.msra.mxu0 0.0
    %7887 = vmatprep.subr.mxu0 0.0
    %7888 = vmatpush2.xpose.msra.mxu0 0.0
    %7889 = vmatprep.subr.mxu0 0.0
    %7890 = vmatpush2.xpose.msra.mxu0 0.0
    %7891 = vmatprep.subr.mxu0 0.0
    %7892 = vmatpush2.xpose.msra.mxu0 0.0
    %7893 = vmatprep.subr.mxu0 0.0
    %7894 = vmatpush2.xpose.msra.mxu0 0.0
    %7895 = vmatprep.subr.mxu0 0.0
    %7896 = vmatpush2.xpose.msra.mxu0 0.0
    %7897 = vmatprep.subr.mxu0 0.0
    %7898 = vmatpush2.xpose.msra.mxu0 0.0
    %7899 = vmatprep.subr.mxu0 0.0
    %7900 = vmatpush2.xpose.msra.mxu0 0.0
    %7901 = vmatprep.subr.mxu0 0.0
    %7902 = vmatpush2.xpose.msra.mxu0 0.0
    %7903 = vmatprep.subr.mxu0 0.0
    %7904 = vmatpush2.xpose.msra.mxu0 0.0
    %7905 = vmatprep.mubr.f32.mxu0 0.0
    %7906 = vmatmul.mubr.f32.gmra.mxu0 %v7837
    %v7907 = vpop.f32.mrf.mxu0
    %v7908 = vadd.f32 0.0, %v7907
    %v7909 = vpop.f32.mrf.mxu0
    %7910 = vdwg.mxu0
    %7911 = vrot.lane.b32.xlu0 %v7522, 96
    %v7912 = vpop.permute.xlu0 %7911
    %v7913 = vsel %vm486, %v7522, 0
    %v7915 = vsel %vm486, %v7912, 0
    %7917 = vmatprep.subr.mxu0 0.0
    %7918 = vmatpush1.xpose.msra.mxu0 0.0
    %7919 = vmatprep.subr.mxu0 0.0
    %7920 = vmatpush1.xpose.msra.mxu0 0.0
    %7921 = vmatprep.subr.mxu0 0.0
    %7922 = vmatpush1.xpose.msra.mxu0 0.0
    %7923 = vmatprep.subr.mxu0 0.0
    %7924 = vmatpush1.xpose.msra.mxu0 0.0
    %7925 = vmatprep.subr.mxu0 0.0
    %7926 = vmatpush1.xpose.msra.mxu0 0.0
    %7927 = vmatprep.subr.mxu0 0.0
    %7928 = vmatpush1.xpose.msra.mxu0 0.0
    %7929 = vmatprep.subr.mxu0 0.0
    %7930 = vmatpush1.xpose.msra.mxu0 0.0
    %7931 = vmatprep.subr.mxu0 0.0
    %7932 = vmatpush1.xpose.msra.mxu0 0.0
    %7933 = vmatprep.subr.mxu0 0.0
    %7934 = vmatpush1.xpose.msra.mxu0 0.0
    %7935 = vmatprep.subr.mxu0 0.0
    %7936 = vmatpush1.xpose.msra.mxu0 0.0
    %7937 = vmatprep.subr.mxu0 0.0
    %7938 = vmatpush1.xpose.msra.mxu0 0.0
    %7939 = vmatprep.subr.mxu0 0.0
    %7940 = vmatpush1.xpose.msra.mxu0 0.0
    %7941 = vmatprep.subr.mxu0 0.0
    %7942 = vmatpush1.xpose.msra.mxu0 0.0
    %7943 = vmatprep.subr.mxu0 0.0
    %7944 = vmatpush1.xpose.msra.mxu0 0.0
    %7945 = vmatprep.subr.mxu0 0.0
    %7946 = vmatpush1.xpose.msra.mxu0 0.0
    %7947 = vmatprep.subr.mxu0 0.0
    %7948 = vmatpush1.xpose.msra.mxu0 %v7915
    %7949 = vmatprep.subr.mxu0 0.0
    %7950 = vmatpush2.xpose.msra.mxu0 0.0
    %7951 = vmatprep.subr.mxu0 0.0
    %7952 = vmatpush2.xpose.msra.mxu0 0.0
    %7953 = vmatprep.subr.mxu0 0.0
    %7954 = vmatpush2.xpose.msra.mxu0 0.0
    %7955 = vmatprep.subr.mxu0 0.0
    %7956 = vmatpush2.xpose.msra.mxu0 0.0
    %7957 = vmatprep.subr.mxu0 0.0
    %7958 = vmatpush2.xpose.msra.mxu0 0.0
    %7959 = vmatprep.subr.mxu0 0.0
    %7960 = vmatpush2.xpose.msra.mxu0 0.0
    %7961 = vmatprep.subr.mxu0 0.0
    %7962 = vmatpush2.xpose.msra.mxu0 0.0
    %7963 = vmatprep.subr.mxu0 0.0
    %7964 = vmatpush2.xpose.msra.mxu0 0.0
    %7965 = vmatprep.subr.mxu0 0.0
    %7966 = vmatpush2.xpose.msra.mxu0 0.0
    %7967 = vmatprep.subr.mxu0 0.0
    %7968 = vmatpush2.xpose.msra.mxu0 0.0
    %7969 = vmatprep.subr.mxu0 0.0
    %7970 = vmatpush2.xpose.msra.mxu0 0.0
    %7971 = vmatprep.subr.mxu0 0.0
    %7972 = vmatpush2.xpose.msra.mxu0 0.0
    %7973 = vmatprep.subr.mxu0 0.0
    %7974 = vmatpush2.xpose.msra.mxu0 0.0
    %7975 = vmatprep.subr.mxu0 0.0
    %7976 = vmatpush2.xpose.msra.mxu0 0.0
    %7977 = vmatprep.subr.mxu0 0.0
    %7978 = vmatpush2.xpose.msra.mxu0 0.0
    %7979 = vmatprep.subr.mxu0 0.0
    %7980 = vmatpush2.xpose.msra.mxu0 0.0
    %7981 = vmatprep.mubr.f32.mxu0 0.0
    %7982 = vmatmul.mubr.f32.gmra.mxu0 %v7913
    %v7983 = vpop.f32.mrf.mxu0
    %v7984 = vadd.f32 0.0, %v7983
    %v7985 = vpop.f32.mrf.mxu0
    %7986 = vdwg.mxu0
    %7987 = vrot.lane.b32.xlu0 %v7526, 96
    %v7988 = vpop.permute.xlu0 %7987
    %v7989 = vsel %vm486, %v7526, 0
    %v7991 = vsel %vm486, %v7988, 0
    %7993 = vmatprep.subr.mxu0 0.0
    %7994 = vmatpush1.xpose.msra.mxu0 0.0
    %7995 = vmatprep.subr.mxu0 0.0
    %7996 = vmatpush1.xpose.msra.mxu0 0.0
    %7997 = vmatprep.subr.mxu0 0.0
    %7998 = vmatpush1.xpose.msra.mxu0 0.0
    %7999 = vmatprep.subr.mxu0 0.0
    %8000 = vmatpush1.xpose.msra.mxu0 0.0
    %8001 = vmatprep.subr.mxu0 0.0
    %8002 = vmatpush1.xpose.msra.mxu0 0.0
    %8003 = vmatprep.subr.mxu0 0.0
    %8004 = vmatpush1.xpose.msra.mxu0 0.0
    %8005 = vmatprep.subr.mxu0 0.0
    %8006 = vmatpush1.xpose.msra.mxu0 0.0
    %8007 = vmatprep.subr.mxu0 0.0
    %8008 = vmatpush1.xpose.msra.mxu0 0.0
    %8009 = vmatprep.subr.mxu0 0.0
    %8010 = vmatpush1.xpose.msra.mxu0 0.0
    %8011 = vmatprep.subr.mxu0 0.0
    %8012 = vmatpush1.xpose.msra.mxu0 0.0
    %8013 = vmatprep.subr.mxu0 0.0
    %8014 = vmatpush1.xpose.msra.mxu0 0.0
    %8015 = vmatprep.subr.mxu0 0.0
    %8016 = vmatpush1.xpose.msra.mxu0 0.0
    %8017 = vmatprep.subr.mxu0 0.0
    %8018 = vmatpush1.xpose.msra.mxu0 0.0
    %8019 = vmatprep.subr.mxu0 0.0
    %8020 = vmatpush1.xpose.msra.mxu0 0.0
    %8021 = vmatprep.subr.mxu0 0.0
    %8022 = vmatpush1.xpose.msra.mxu0 0.0
    %8023 = vmatprep.subr.mxu0 0.0
    %8024 = vmatpush1.xpose.msra.mxu0 %v7991
    %8025 = vmatprep.subr.mxu0 0.0
    %8026 = vmatpush2.xpose.msra.mxu0 0.0
    %8027 = vmatprep.subr.mxu0 0.0
    %8028 = vmatpush2.xpose.msra.mxu0 0.0
    %8029 = vmatprep.subr.mxu0 0.0
    %8030 = vmatpush2.xpose.msra.mxu0 0.0
    %8031 = vmatprep.subr.mxu0 0.0
    %8032 = vmatpush2.xpose.msra.mxu0 0.0
    %8033 = vmatprep.subr.mxu0 0.0
    %8034 = vmatpush2.xpose.msra.mxu0 0.0
    %8035 = vmatprep.subr.mxu0 0.0
    %8036 = vmatpush2.xpose.msra.mxu0 0.0
    %8037 = vmatprep.subr.mxu0 0.0
    %8038 = vmatpush2.xpose.msra.mxu0 0.0
    %8039 = vmatprep.subr.mxu0 0.0
    %8040 = vmatpush2.xpose.msra.mxu0 0.0
    %8041 = vmatprep.subr.mxu0 0.0
    %8042 = vmatpush2.xpose.msra.mxu0 0.0
    %8043 = vmatprep.subr.mxu0 0.0
    %8044 = vmatpush2.xpose.msra.mxu0 0.0
    %8045 = vmatprep.subr.mxu0 0.0
    %8046 = vmatpush2.xpose.msra.mxu0 0.0
    %8047 = vmatprep.subr.mxu0 0.0
    %8048 = vmatpush2.xpose.msra.mxu0 0.0
    %8049 = vmatprep.subr.mxu0 0.0
    %8050 = vmatpush2.xpose.msra.mxu0 0.0
    %8051 = vmatprep.subr.mxu0 0.0
    %8052 = vmatpush2.xpose.msra.mxu0 0.0
    %8053 = vmatprep.subr.mxu0 0.0
    %8054 = vmatpush2.xpose.msra.mxu0 0.0
    %8055 = vmatprep.subr.mxu0 0.0
    %8056 = vmatpush2.xpose.msra.mxu0 0.0
    %8057 = vmatprep.mubr.f32.mxu0 0.0
    %8058 = vmatmul.mubr.f32.gmra.mxu0 %v7989
    %v8059 = vpop.f32.mrf.mxu0
    %v8060 = vadd.f32 0.0, %v8059
    %v8061 = vpop.f32.mrf.mxu0
    %8062 = vdwg.mxu0
    %8063 = vrot.lane.b32.xlu0 %v7530, 96
    %v8064 = vpop.permute.xlu0 %8063
    %v8065 = vsel %vm486, %v7530, 0
    %v8067 = vsel %vm486, %v8064, 0
    %8069 = vmatprep.subr.mxu0 0.0
    %8070 = vmatpush1.xpose.msra.mxu0 0.0
    %8071 = vmatprep.subr.mxu0 0.0
    %8072 = vmatpush1.xpose.msra.mxu0 0.0
    %8073 = vmatprep.subr.mxu0 0.0
    %8074 = vmatpush1.xpose.msra.mxu0 0.0
    %8075 = vmatprep.subr.mxu0 0.0
    %8076 = vmatpush1.xpose.msra.mxu0 0.0
    %8077 = vmatprep.subr.mxu0 0.0
    %8078 = vmatpush1.xpose.msra.mxu0 0.0
    %8079 = vmatprep.subr.mxu0 0.0
    %8080 = vmatpush1.xpose.msra.mxu0 0.0
    %8081 = vmatprep.subr.mxu0 0.0
    %8082 = vmatpush1.xpose.msra.mxu0 0.0
    %8083 = vmatprep.subr.mxu0 0.0
    %8084 = vmatpush1.xpose.msra.mxu0 0.0
    %8085 = vmatprep.subr.mxu0 0.0
    %8086 = vmatpush1.xpose.msra.mxu0 0.0
    %8087 = vmatprep.subr.mxu0 0.0
    %8088 = vmatpush1.xpose.msra.mxu0 0.0
    %8089 = vmatprep.subr.mxu0 0.0
    %8090 = vmatpush1.xpose.msra.mxu0 0.0
    %8091 = vmatprep.subr.mxu0 0.0
    %8092 = vmatpush1.xpose.msra.mxu0 0.0
    %8093 = vmatprep.subr.mxu0 0.0
    %8094 = vmatpush1.xpose.msra.mxu0 0.0
    %8095 = vmatprep.subr.mxu0 0.0
    %8096 = vmatpush1.xpose.msra.mxu0 0.0
    %8097 = vmatprep.subr.mxu0 0.0
    %8098 = vmatpush1.xpose.msra.mxu0 0.0
    %8099 = vmatprep.subr.mxu0 0.0
    %8100 = vmatpush1.xpose.msra.mxu0 %v8067
    %8101 = vmatprep.subr.mxu0 0.0
    %8102 = vmatpush2.xpose.msra.mxu0 0.0
    %8103 = vmatprep.subr.mxu0 0.0
    %8104 = vmatpush2.xpose.msra.mxu0 0.0
    %8105 = vmatprep.subr.mxu0 0.0
    %8106 = vmatpush2.xpose.msra.mxu0 0.0
    %8107 = vmatprep.subr.mxu0 0.0
    %8108 = vmatpush2.xpose.msra.mxu0 0.0
    %8109 = vmatprep.subr.mxu0 0.0
    %8110 = vmatpush2.xpose.msra.mxu0 0.0
    %8111 = vmatprep.subr.mxu0 0.0
    %8112 = vmatpush2.xpose.msra.mxu0 0.0
    %8113 = vmatprep.subr.mxu0 0.0
    %8114 = vmatpush2.xpose.msra.mxu0 0.0
    %8115 = vmatprep.subr.mxu0 0.0
    %8116 = vmatpush2.xpose.msra.mxu0 0.0
    %8117 = vmatprep.subr.mxu0 0.0
    %8118 = vmatpush2.xpose.msra.mxu0 0.0
    %8119 = vmatprep.subr.mxu0 0.0
    %8120 = vmatpush2.xpose.msra.mxu0 0.0
    %8121 = vmatprep.subr.mxu0 0.0
    %8122 = vmatpush2.xpose.msra.mxu0 0.0
    %8123 = vmatprep.subr.mxu0 0.0
    %8124 = vmatpush2.xpose.msra.mxu0 0.0
    %8125 = vmatprep.subr.mxu0 0.0
    %8126 = vmatpush2.xpose.msra.mxu0 0.0
    %8127 = vmatprep.subr.mxu0 0.0
    %8128 = vmatpush2.xpose.msra.mxu0 0.0
    %8129 = vmatprep.subr.mxu0 0.0
    %8130 = vmatpush2.xpose.msra.mxu0 0.0
    %8131 = vmatprep.subr.mxu0 0.0
    %8132 = vmatpush2.xpose.msra.mxu0 0.0
    %8133 = vmatprep.mubr.f32.mxu0 0.0
    %8134 = vmatmul.mubr.f32.gmra.mxu0 %v8065
    %v8135 = vpop.f32.mrf.mxu0
    %v8136 = vadd.f32 0.0, %v8135
    %v8137 = vpop.f32.mrf.mxu0
    %8138 = vdwg.mxu0
    %v8139 = vmul.f32 %v7604, 0.35355338
    %v8140 = vmul.f32 %v7680, 0.35355338
    %v8141 = vmul.f32 %v7756, 0.35355338
    %v8142 = vmul.f32 %v7832, 0.35355338
    %v8143 = vmul.f32 %v7908, 0.35355338
    %v8144 = vmul.f32 %v7984, 0.35355338
    %v8145 = vmul.f32 %v8060, 0.35355338
    %v8146 = vmul.f32 %v8136, 0.35355338
    %v8147 = vsel %vm486, %v8139, -inf
    %8148 = vmax.xlane.f32.xlu0 %v8147
    %v8149 = vpop.xlane.xlu0 %8148
    %v8150 = vsel %vm486, %v8140, -inf
    %8151 = vmax.xlane.f32.xlu0 %v8150
    %v8152 = vpop.xlane.xlu0 %8151
    %v8153 = vsel %vm486, %v8141, -inf
    %8154 = vmax.xlane.f32.xlu0 %v8153
    %v8155 = vpop.xlane.xlu0 %8154
    %v8156 = vsel %vm486, %v8142, -inf
    %8157 = vmax.xlane.f32.xlu0 %v8156
    %v8158 = vpop.xlane.xlu0 %8157
    %v8159 = vsel %vm486, %v8143, -inf
    %8160 = vmax.xlane.f32.xlu0 %v8159
    %v8161 = vpop.xlane.xlu0 %8160
    %v8162 = vsel %vm486, %v8144, -inf
    %8163 = vmax.xlane.f32.xlu0 %v8162
    %v8164 = vpop.xlane.xlu0 %8163
    %v8165 = vsel %vm486, %v8145, -inf
    %8166 = vmax.xlane.f32.xlu0 %v8165
    %v8167 = vpop.xlane.xlu0 %8166
    %v8168 = vsel %vm486, %v8146, -inf
    %8169 = vmax.xlane.f32.xlu0 %v8168
    %v8170 = vpop.xlane.xlu0 %8169
    %v8171 = vsub.f32 %v8139, %v8149
    %v8172 = vsub.f32 %v8140, %v8152
    %v8173 = vsub.f32 %v8141, %v8155
    %v8174 = vsub.f32 %v8142, %v8158
    %v8175 = vsub.f32 %v8143, %v8161
    %v8176 = vsub.f32 %v8144, %v8164
    %v8177 = vsub.f32 %v8145, %v8167
    %v8178 = vsub.f32 %v8146, %v8170
    %v8179 = vmul.f32 %v8171, 1.442695
    %v8180 = vpow.pop %v8179
    %v8181 = vmul.f32 %v8172, 1.442695
    %v8182 = vpow.pop %v8181
    %v8183 = vmul.f32 %v8173, 1.442695
    %v8184 = vpow.pop %v8183
    %v8185 = vmul.f32 %v8174, 1.442695
    %v8186 = vpow.pop %v8185
    %v8187 = vmul.f32 %v8175, 1.442695
    %v8188 = vpow.pop %v8187
    %v8189 = vmul.f32 %v8176, 1.442695
    %v8190 = vpow.pop %v8189
    %v8191 = vmul.f32 %v8177, 1.442695
    %v8192 = vpow.pop %v8191
    %v8193 = vmul.f32 %v8178, 1.442695
    %v8194 = vpow.pop %v8193
    %v8195 = vsel %vm486, %v8180, 0.0
    %8196 = vadd.xlane.f32.xlu0 %v8195
    %v8197 = vpop.xlane.xlu0 %8196
    %v8198 = vsel %vm486, %v8182, 0.0
    %8199 = vadd.xlane.f32.xlu0 %v8198
    %v8200 = vpop.xlane.xlu0 %8199
    %v8201 = vsel %vm486, %v8184, 0.0
    %8202 = vadd.xlane.f32.xlu0 %v8201
    %v8203 = vpop.xlane.xlu0 %8202
    %v8204 = vsel %vm486, %v8186, 0.0
    %8205 = vadd.xlane.f32.xlu0 %v8204
    %v8206 = vpop.xlane.xlu0 %8205
    %v8207 = vsel %vm486, %v8188, 0.0
    %8208 = vadd.xlane.f32.xlu0 %v8207
    %v8209 = vpop.xlane.xlu0 %8208
    %v8210 = vsel %vm486, %v8190, 0.0
    %8211 = vadd.xlane.f32.xlu0 %v8210
    %v8212 = vpop.xlane.xlu0 %8211
    %v8213 = vsel %vm486, %v8192, 0.0
    %8214 = vadd.xlane.f32.xlu0 %v8213
    %v8215 = vpop.xlane.xlu0 %8214
    %v8216 = vsel %vm486, %v8194, 0.0
    %8217 = vadd.xlane.f32.xlu0 %v8216
    %v8218 = vpop.xlane.xlu0 %8217
    %v8219 = vrcp.pop %v8197
    %v8220 = vrcp.pop %v8200
    %v8221 = vrcp.pop %v8203
    %v8222 = vrcp.pop %v8206
    %v8223 = vrcp.pop %v8209
    %v8224 = vrcp.pop %v8212
    %v8225 = vrcp.pop %v8215
    %v8226 = vrcp.pop %v8218
    %v8227 = vmul.f32 %v8180, %v8219
    %v8228 = vmul.f32 %v8182, %v8220
    %v8229 = vmul.f32 %v8184, %v8221
    %v8230 = vmul.f32 %v8186, %v8222
    %v8231 = vmul.f32 %v8188, %v8223
    %v8232 = vmul.f32 %v8190, %v8224
    %v8233 = vmul.f32 %v8192, %v8225
    %v8234 = vmul.f32 %v8194, %v8226
    %8235 = vrot.lane.b32.xlu0 %v7509, 64
    %v8236 = vpop.permute.xlu0 %8235
    %v8239 = vsel %vm486, %v8227, 0
    %8241 = vmatprep.subr.mxu0 0.0
    %8242 = vmatpush1.msra.mxu0 0.0
    %8243 = vmatprep.subr.mxu0 0.0
    %8244 = vmatpush1.msra.mxu0 0.0
    %8245 = vmatprep.subr.mxu0 0.0
    %8246 = vmatpush1.msra.mxu0 0.0
    %8247 = vmatprep.subr.mxu0 0.0
    %8248 = vmatpush1.msra.mxu0 0.0
    %8249 = vmatprep.subr.mxu0 0.0
    %8250 = vmatpush1.msra.mxu0 0.0
    %8251 = vmatprep.subr.mxu0 0.0
    %8252 = vmatpush1.msra.mxu0 0.0
    %8253 = vmatprep.subr.mxu0 0.0
    %8254 = vmatpush1.msra.mxu0 0.0
    %8255 = vmatprep.subr.mxu0 0.0
    %8256 = vmatpush1.msra.mxu0 0.0
    %8257 = vmatprep.subr.mxu0 0.0
    %8258 = vmatpush1.msra.mxu0 0.0
    %8259 = vmatprep.subr.mxu0 0.0
    %8260 = vmatpush1.msra.mxu0 0.0
    %8261 = vmatprep.subr.mxu0 0.0
    %8262 = vmatpush1.msra.mxu0 0.0
    %8263 = vmatprep.subr.mxu0 0.0
    %8264 = vmatpush1.msra.mxu0 0.0
    %8265 = vmatprep.subr.mxu0 0.0
    %8266 = vmatpush1.msra.mxu0 0.0
    %8267 = vmatprep.subr.mxu0 0.0
    %8268 = vmatpush1.msra.mxu0 0.0
    %8269 = vmatprep.subr.mxu0 0.0
    %8270 = vmatpush1.msra.mxu0 0.0
    %8271 = vmatprep.subr.mxu0 0.0
    %8272 = vmatpush1.msra.mxu0 %v8236
    %8273 = vmatprep.subr.mxu0 0.0
    %8274 = vmatpush2.msra.mxu0 0.0
    %8275 = vmatprep.subr.mxu0 0.0
    %8276 = vmatpush2.msra.mxu0 0.0
    %8277 = vmatprep.subr.mxu0 0.0
    %8278 = vmatpush2.msra.mxu0 0.0
    %8279 = vmatprep.subr.mxu0 0.0
    %8280 = vmatpush2.msra.mxu0 0.0
    %8281 = vmatprep.subr.mxu0 0.0
    %8282 = vmatpush2.msra.mxu0 0.0
    %8283 = vmatprep.subr.mxu0 0.0
    %8284 = vmatpush2.msra.mxu0 0.0
    %8285 = vmatprep.subr.mxu0 0.0
    %8286 = vmatpush2.msra.mxu0 0.0
    %8287 = vmatprep.subr.mxu0 0.0
    %8288 = vmatpush2.msra.mxu0 0.0
    %8289 = vmatprep.subr.mxu0 0.0
    %8290 = vmatpush2.msra.mxu0 0.0
    %8291 = vmatprep.subr.mxu0 0.0
    %8292 = vmatpush2.msra.mxu0 0.0
    %8293 = vmatprep.subr.mxu0 0.0
    %8294 = vmatpush2.msra.mxu0 0.0
    %8295 = vmatprep.subr.mxu0 0.0
    %8296 = vmatpush2.msra.mxu0 0.0
    %8297 = vmatprep.subr.mxu0 0.0
    %8298 = vmatpush2.msra.mxu0 0.0
    %8299 = vmatprep.subr.mxu0 0.0
    %8300 = vmatpush2.msra.mxu0 0.0
    %8301 = vmatprep.subr.mxu0 0.0
    %8302 = vmatpush2.msra.mxu0 0.0
    %8303 = vmatprep.subr.mxu0 0.0
    %8304 = vmatpush2.msra.mxu0 0.0
    %8305 = vmatprep.mubr.f32.mxu0 0.0
    %8306 = vmatmul.mubr.f32.gmra.mxu0 %v8239
    %v8307 = vpop.f32.mrf.mxu0
    %v8308 = vadd.f32 0.0, %v8307
    %v8309 = vpop.f32.mrf.mxu0
    %8310 = vdwg.mxu0
    %8311 = vrot.lane.b32.xlu0 %v7520, 64
    %v8312 = vpop.permute.xlu0 %8311
    %v8315 = vsel %vm486, %v8228, 0
    %8317 = vmatprep.subr.mxu0 0.0
    %8318 = vmatpush1.msra.mxu0 0.0
    %8319 = vmatprep.subr.mxu0 0.0
    %8320 = vmatpush1.msra.mxu0 0.0
    %8321 = vmatprep.subr.mxu0 0.0
    %8322 = vmatpush1.msra.mxu0 0.0
    %8323 = vmatprep.subr.mxu0 0.0
    %8324 = vmatpush1.msra.mxu0 0.0
    %8325 = vmatprep.subr.mxu0 0.0
    %8326 = vmatpush1.msra.mxu0 0.0
    %8327 = vmatprep.subr.mxu0 0.0
    %8328 = vmatpush1.msra.mxu0 0.0
    %8329 = vmatprep.subr.mxu0 0.0
    %8330 = vmatpush1.msra.mxu0 0.0
    %8331 = vmatprep.subr.mxu0 0.0
    %8332 = vmatpush1.msra.mxu0 0.0
    %8333 = vmatprep.subr.mxu0 0.0
    %8334 = vmatpush1.msra.mxu0 0.0
    %8335 = vmatprep.subr.mxu0 0.0
    %8336 = vmatpush1.msra.mxu0 0.0
    %8337 = vmatprep.subr.mxu0 0.0
    %8338 = vmatpush1.msra.mxu0 0.0
    %8339 = vmatprep.subr.mxu0 0.0
    %8340 = vmatpush1.msra.mxu0 0.0
    %8341 = vmatprep.subr.mxu0 0.0
    %8342 = vmatpush1.msra.mxu0 0.0
    %8343 = vmatprep.subr.mxu0 0.0
    %8344 = vmatpush1.msra.mxu0 0.0
    %8345 = vmatprep.subr.mxu0 0.0
    %8346 = vmatpush1.msra.mxu0 0.0
    %8347 = vmatprep.subr.mxu0 0.0
    %8348 = vmatpush1.msra.mxu0 %v8312
    %8349 = vmatprep.subr.mxu0 0.0
    %8350 = vmatpush2.msra.mxu0 0.0
    %8351 = vmatprep.subr.mxu0 0.0
    %8352 = vmatpush2.msra.mxu0 0.0
    %8353 = vmatprep.subr.mxu0 0.0
    %8354 = vmatpush2.msra.mxu0 0.0
    %8355 = vmatprep.subr.mxu0 0.0
    %8356 = vmatpush2.msra.mxu0 0.0
    %8357 = vmatprep.subr.mxu0 0.0
    %8358 = vmatpush2.msra.mxu0 0.0
    %8359 = vmatprep.subr.mxu0 0.0
    %8360 = vmatpush2.msra.mxu0 0.0
    %8361 = vmatprep.subr.mxu0 0.0
    %8362 = vmatpush2.msra.mxu0 0.0
    %8363 = vmatprep.subr.mxu0 0.0
    %8364 = vmatpush2.msra.mxu0 0.0
    %8365 = vmatprep.subr.mxu0 0.0
    %8366 = vmatpush2.msra.mxu0 0.0
    %8367 = vmatprep.subr.mxu0 0.0
    %8368 = vmatpush2.msra.mxu0 0.0
    %8369 = vmatprep.subr.mxu0 0.0
    %8370 = vmatpush2.msra.mxu0 0.0
    %8371 = vmatprep.subr.mxu0 0.0
    %8372 = vmatpush2.msra.mxu0 0.0
    %8373 = vmatprep.subr.mxu0 0.0
    %8374 = vmatpush2.msra.mxu0 0.0
    %8375 = vmatprep.subr.mxu0 0.0
    %8376 = vmatpush2.msra.mxu0 0.0
    %8377 = vmatprep.subr.mxu0 0.0
    %8378 = vmatpush2.msra.mxu0 0.0
    %8379 = vmatprep.subr.mxu0 0.0
    %8380 = vmatpush2.msra.mxu0 0.0
    %8381 = vmatprep.mubr.f32.mxu0 0.0
    %8382 = vmatmul.mubr.f32.gmra.mxu0 %v8315
    %v8383 = vpop.f32.mrf.mxu0
    %v8384 = vadd.f32 0.0, %v8383
    %v8385 = vpop.f32.mrf.mxu0
    %8386 = vdwg.mxu0
    %8387 = vrot.lane.b32.xlu0 %v7524, 64
    %v8388 = vpop.permute.xlu0 %8387
    %v8391 = vsel %vm486, %v8229, 0
    %8393 = vmatprep.subr.mxu0 0.0
    %8394 = vmatpush1.msra.mxu0 0.0
    %8395 = vmatprep.subr.mxu0 0.0
    %8396 = vmatpush1.msra.mxu0 0.0
    %8397 = vmatprep.subr.mxu0 0.0
    %8398 = vmatpush1.msra.mxu0 0.0
    %8399 = vmatprep.subr.mxu0 0.0
    %8400 = vmatpush1.msra.mxu0 0.0
    %8401 = vmatprep.subr.mxu0 0.0
    %8402 = vmatpush1.msra.mxu0 0.0
    %8403 = vmatprep.subr.mxu0 0.0
    %8404 = vmatpush1.msra.mxu0 0.0
    %8405 = vmatprep.subr.mxu0 0.0
    %8406 = vmatpush1.msra.mxu0 0.0
    %8407 = vmatprep.subr.mxu0 0.0
    %8408 = vmatpush1.msra.mxu0 0.0
    %8409 = vmatprep.subr.mxu0 0.0
    %8410 = vmatpush1.msra.mxu0 0.0
    %8411 = vmatprep.subr.mxu0 0.0
    %8412 = vmatpush1.msra.mxu0 0.0
    %8413 = vmatprep.subr.mxu0 0.0
    %8414 = vmatpush1.msra.mxu0 0.0
    %8415 = vmatprep.subr.mxu0 0.0
    %8416 = vmatpush1.msra.mxu0 0.0
    %8417 = vmatprep.subr.mxu0 0.0
    %8418 = vmatpush1.msra.mxu0 0.0
    %8419 = vmatprep.subr.mxu0 0.0
    %8420 = vmatpush1.msra.mxu0 0.0
    %8421 = vmatprep.subr.mxu0 0.0
    %8422 = vmatpush1.msra.mxu0 0.0
    %8423 = vmatprep.subr.mxu0 0.0
    %8424 = vmatpush1.msra.mxu0 %v8388
    %8425 = vmatprep.subr.mxu0 0.0
    %8426 = vmatpush2.msra.mxu0 0.0
    %8427 = vmatprep.subr.mxu0 0.0
    %8428 = vmatpush2.msra.mxu0 0.0
    %8429 = vmatprep.subr.mxu0 0.0
    %8430 = vmatpush2.msra.mxu0 0.0
    %8431 = vmatprep.subr.mxu0 0.0
    %8432 = vmatpush2.msra.mxu0 0.0
    %8433 = vmatprep.subr.mxu0 0.0
    %8434 = vmatpush2.msra.mxu0 0.0
    %8435 = vmatprep.subr.mxu0 0.0
    %8436 = vmatpush2.msra.mxu0 0.0
    %8437 = vmatprep.subr.mxu0 0.0
    %8438 = vmatpush2.msra.mxu0 0.0
    %8439 = vmatprep.subr.mxu0 0.0
    %8440 = vmatpush2.msra.mxu0 0.0
    %8441 = vmatprep.subr.mxu0 0.0
    %8442 = vmatpush2.msra.mxu0 0.0
    %8443 = vmatprep.subr.mxu0 0.0
    %8444 = vmatpush2.msra.mxu0 0.0
    %8445 = vmatprep.subr.mxu0 0.0
    %8446 = vmatpush2.msra.mxu0 0.0
    %8447 = vmatprep.subr.mxu0 0.0
    %8448 = vmatpush2.msra.mxu0 0.0
    %8449 = vmatprep.subr.mxu0 0.0
    %8450 = vmatpush2.msra.mxu0 0.0
    %8451 = vmatprep.subr.mxu0 0.0
    %8452 = vmatpush2.msra.mxu0 0.0
    %8453 = vmatprep.subr.mxu0 0.0
    %8454 = vmatpush2.msra.mxu0 0.0
    %8455 = vmatprep.subr.mxu0 0.0
    %8456 = vmatpush2.msra.mxu0 0.0
    %8457 = vmatprep.mubr.f32.mxu0 0.0
    %8458 = vmatmul.mubr.f32.gmra.mxu0 %v8391
    %v8459 = vpop.f32.mrf.mxu0
    %v8460 = vadd.f32 0.0, %v8459
    %v8461 = vpop.f32.mrf.mxu0
    %8462 = vdwg.mxu0
    %8463 = vrot.lane.b32.xlu0 %v7528, 64
    %v8464 = vpop.permute.xlu0 %8463
    %v8467 = vsel %vm486, %v8230, 0
    %8469 = vmatprep.subr.mxu0 0.0
    %8470 = vmatpush1.msra.mxu0 0.0
    %8471 = vmatprep.subr.mxu0 0.0
    %8472 = vmatpush1.msra.mxu0 0.0
    %8473 = vmatprep.subr.mxu0 0.0
    %8474 = vmatpush1.msra.mxu0 0.0
    %8475 = vmatprep.subr.mxu0 0.0
    %8476 = vmatpush1.msra.mxu0 0.0
    %8477 = vmatprep.subr.mxu0 0.0
    %8478 = vmatpush1.msra.mxu0 0.0
    %8479 = vmatprep.subr.mxu0 0.0
    %8480 = vmatpush1.msra.mxu0 0.0
    %8481 = vmatprep.subr.mxu0 0.0
    %8482 = vmatpush1.msra.mxu0 0.0
    %8483 = vmatprep.subr.mxu0 0.0
    %8484 = vmatpush1.msra.mxu0 0.0
    %8485 = vmatprep.subr.mxu0 0.0
    %8486 = vmatpush1.msra.mxu0 0.0
    %8487 = vmatprep.subr.mxu0 0.0
    %8488 = vmatpush1.msra.mxu0 0.0
    %8489 = vmatprep.subr.mxu0 0.0
    %8490 = vmatpush1.msra.mxu0 0.0
    %8491 = vmatprep.subr.mxu0 0.0
    %8492 = vmatpush1.msra.mxu0 0.0
    %8493 = vmatprep.subr.mxu0 0.0
    %8494 = vmatpush1.msra.mxu0 0.0
    %8495 = vmatprep.subr.mxu0 0.0
    %8496 = vmatpush1.msra.mxu0 0.0
    %8497 = vmatprep.subr.mxu0 0.0
    %8498 = vmatpush1.msra.mxu0 0.0
    %8499 = vmatprep.subr.mxu0 0.0
    %8500 = vmatpush1.msra.mxu0 %v8464
    %8501 = vmatprep.subr.mxu0 0.0
    %8502 = vmatpush2.msra.mxu0 0.0
    %8503 = vmatprep.subr.mxu0 0.0
    %8504 = vmatpush2.msra.mxu0 0.0
    %8505 = vmatprep.subr.mxu0 0.0
    %8506 = vmatpush2.msra.mxu0 0.0
    %8507 = vmatprep.subr.mxu0 0.0
    %8508 = vmatpush2.msra.mxu0 0.0
    %8509 = vmatprep.subr.mxu0 0.0
    %8510 = vmatpush2.msra.mxu0 0.0
    %8511 = vmatprep.subr.mxu0 0.0
    %8512 = vmatpush2.msra.mxu0 0.0
    %8513 = vmatprep.subr.mxu0 0.0
    %8514 = vmatpush2.msra.mxu0 0.0
    %8515 = vmatprep.subr.mxu0 0.0
    %8516 = vmatpush2.msra.mxu0 0.0
    %8517 = vmatprep.subr.mxu0 0.0
    %8518 = vmatpush2.msra.mxu0 0.0
    %8519 = vmatprep.subr.mxu0 0.0
    %8520 = vmatpush2.msra.mxu0 0.0
    %8521 = vmatprep.subr.mxu0 0.0
    %8522 = vmatpush2.msra.mxu0 0.0
    %8523 = vmatprep.subr.mxu0 0.0
    %8524 = vmatpush2.msra.mxu0 0.0
    %8525 = vmatprep.subr.mxu0 0.0
    %8526 = vmatpush2.msra.mxu0 0.0
    %8527 = vmatprep.subr.mxu0 0.0
    %8528 = vmatpush2.msra.mxu0 0.0
    %8529 = vmatprep.subr.mxu0 0.0
    %8530 = vmatpush2.msra.mxu0 0.0
    %8531 = vmatprep.subr.mxu0 0.0
    %8532 = vmatpush2.msra.mxu0 0.0
    %8533 = vmatprep.mubr.f32.mxu0 0.0
    %8534 = vmatmul.mubr.f32.gmra.mxu0 %v8467
    %v8535 = vpop.f32.mrf.mxu0
    %v8536 = vadd.f32 0.0, %v8535
    %v8537 = vpop.f32.mrf.mxu0
    %8538 = vdwg.mxu0
    %8539 = vrot.lane.b32.xlu0 %v7514, 64
    %v8540 = vpop.permute.xlu0 %8539
    %v8543 = vsel %vm486, %v8231, 0
    %8545 = vmatprep.subr.mxu0 0.0
    %8546 = vmatpush1.msra.mxu0 0.0
    %8547 = vmatprep.subr.mxu0 0.0
    %8548 = vmatpush1.msra.mxu0 0.0
    %8549 = vmatprep.subr.mxu0 0.0
    %8550 = vmatpush1.msra.mxu0 0.0
    %8551 = vmatprep.subr.mxu0 0.0
    %8552 = vmatpush1.msra.mxu0 0.0
    %8553 = vmatprep.subr.mxu0 0.0
    %8554 = vmatpush1.msra.mxu0 0.0
    %8555 = vmatprep.subr.mxu0 0.0
    %8556 = vmatpush1.msra.mxu0 0.0
    %8557 = vmatprep.subr.mxu0 0.0
    %8558 = vmatpush1.msra.mxu0 0.0
    %8559 = vmatprep.subr.mxu0 0.0
    %8560 = vmatpush1.msra.mxu0 0.0
    %8561 = vmatprep.subr.mxu0 0.0
    %8562 = vmatpush1.msra.mxu0 0.0
    %8563 = vmatprep.subr.mxu0 0.0
    %8564 = vmatpush1.msra.mxu0 0.0
    %8565 = vmatprep.subr.mxu0 0.0
    %8566 = vmatpush1.msra.mxu0 0.0
    %8567 = vmatprep.subr.mxu0 0.0
    %8568 = vmatpush1.msra.mxu0 0.0
    %8569 = vmatprep.subr.mxu0 0.0
    %8570 = vmatpush1.msra.mxu0 0.0
    %8571 = vmatprep.subr.mxu0 0.0
    %8572 = vmatpush1.msra.mxu0 0.0
    %8573 = vmatprep.subr.mxu0 0.0
    %8574 = vmatpush1.msra.mxu0 0.0
    %8575 = vmatprep.subr.mxu0 0.0
    %8576 = vmatpush1.msra.mxu0 %v8540
    %8577 = vmatprep.subr.mxu0 0.0
    %8578 = vmatpush2.msra.mxu0 0.0
    %8579 = vmatprep.subr.mxu0 0.0
    %8580 = vmatpush2.msra.mxu0 0.0
    %8581 = vmatprep.subr.mxu0 0.0
    %8582 = vmatpush2.msra.mxu0 0.0
    %8583 = vmatprep.subr.mxu0 0.0
    %8584 = vmatpush2.msra.mxu0 0.0
    %8585 = vmatprep.subr.mxu0 0.0
    %8586 = vmatpush2.msra.mxu0 0.0
    %8587 = vmatprep.subr.mxu0 0.0
    %8588 = vmatpush2.msra.mxu0 0.0
    %8589 = vmatprep.subr.mxu0 0.0
    %8590 = vmatpush2.msra.mxu0 0.0
    %8591 = vmatprep.subr.mxu0 0.0
    %8592 = vmatpush2.msra.mxu0 0.0
    %8593 = vmatprep.subr.mxu0 0.0
    %8594 = vmatpush2.msra.mxu0 0.0
    %8595 = vmatprep.subr.mxu0 0.0
    %8596 = vmatpush2.msra.mxu0 0.0
    %8597 = vmatprep.subr.mxu0 0.0
    %8598 = vmatpush2.msra.mxu0 0.0
    %8599 = vmatprep.subr.mxu0 0.0
    %8600 = vmatpush2.msra.mxu0 0.0
    %8601 = vmatprep.subr.mxu0 0.0
    %8602 = vmatpush2.msra.mxu0 0.0
    %8603 = vmatprep.subr.mxu0 0.0
    %8604 = vmatpush2.msra.mxu0 0.0
    %8605 = vmatprep.subr.mxu0 0.0
    %8606 = vmatpush2.msra.mxu0 0.0
    %8607 = vmatprep.subr.mxu0 0.0
    %8608 = vmatpush2.msra.mxu0 0.0
    %8609 = vmatprep.mubr.f32.mxu0 0.0
    %8610 = vmatmul.mubr.f32.gmra.mxu0 %v8543
    %v8611 = vpop.f32.mrf.mxu0
    %v8612 = vadd.f32 0.0, %v8611
    %v8613 = vpop.f32.mrf.mxu0
    %8614 = vdwg.mxu0
    %8615 = vrot.lane.b32.xlu0 %v7522, 64
    %v8616 = vpop.permute.xlu0 %8615
    %v8619 = vsel %vm486, %v8232, 0
    %8621 = vmatprep.subr.mxu0 0.0
    %8622 = vmatpush1.msra.mxu0 0.0
    %8623 = vmatprep.subr.mxu0 0.0
    %8624 = vmatpush1.msra.mxu0 0.0
    %8625 = vmatprep.subr.mxu0 0.0
    %8626 = vmatpush1.msra.mxu0 0.0
    %8627 = vmatprep.subr.mxu0 0.0
    %8628 = vmatpush1.msra.mxu0 0.0
    %8629 = vmatprep.subr.mxu0 0.0
    %8630 = vmatpush1.msra.mxu0 0.0
    %8631 = vmatprep.subr.mxu0 0.0
    %8632 = vmatpush1.msra.mxu0 0.0
    %8633 = vmatprep.subr.mxu0 0.0
    %8634 = vmatpush1.msra.mxu0 0.0
    %8635 = vmatprep.subr.mxu0 0.0
    %8636 = vmatpush1.msra.mxu0 0.0
    %8637 = vmatprep.subr.mxu0 0.0
    %8638 = vmatpush1.msra.mxu0 0.0
    %8639 = vmatprep.subr.mxu0 0.0
    %8640 = vmatpush1.msra.mxu0 0.0
    %8641 = vmatprep.subr.mxu0 0.0
    %8642 = vmatpush1.msra.mxu0 0.0
    %8643 = vmatprep.subr.mxu0 0.0
    %8644 = vmatpush1.msra.mxu0 0.0
    %8645 = vmatprep.subr.mxu0 0.0
    %8646 = vmatpush1.msra.mxu0 0.0
    %8647 = vmatprep.subr.mxu0 0.0
    %8648 = vmatpush1.msra.mxu0 0.0
    %8649 = vmatprep.subr.mxu0 0.0
    %8650 = vmatpush1.msra.mxu0 0.0
    %8651 = vmatprep.subr.mxu0 0.0
    %8652 = vmatpush1.msra.mxu0 %v8616
    %8653 = vmatprep.subr.mxu0 0.0
    %8654 = vmatpush2.msra.mxu0 0.0
    %8655 = vmatprep.subr.mxu0 0.0
    %8656 = vmatpush2.msra.mxu0 0.0
    %8657 = vmatprep.subr.mxu0 0.0
    %8658 = vmatpush2.msra.mxu0 0.0
    %8659 = vmatprep.subr.mxu0 0.0
    %8660 = vmatpush2.msra.mxu0 0.0
    %8661 = vmatprep.subr.mxu0 0.0
    %8662 = vmatpush2.msra.mxu0 0.0
    %8663 = vmatprep.subr.mxu0 0.0
    %8664 = vmatpush2.msra.mxu0 0.0
    %8665 = vmatprep.subr.mxu0 0.0
    %8666 = vmatpush2.msra.mxu0 0.0
    %8667 = vmatprep.subr.mxu0 0.0
    %8668 = vmatpush2.msra.mxu0 0.0
    %8669 = vmatprep.subr.mxu0 0.0
    %8670 = vmatpush2.msra.mxu0 0.0
    %8671 = vmatprep.subr.mxu0 0.0
    %8672 = vmatpush2.msra.mxu0 0.0
    %8673 = vmatprep.subr.mxu0 0.0
    %8674 = vmatpush2.msra.mxu0 0.0
    %8675 = vmatprep.subr.mxu0 0.0
    %8676 = vmatpush2.msra.mxu0 0.0
    %8677 = vmatprep.subr.mxu0 0.0
    %8678 = vmatpush2.msra.mxu0 0.0
    %8679 = vmatprep.subr.mxu0 0.0
    %8680 = vmatpush2.msra.mxu0 0.0
    %8681 = vmatprep.subr.mxu0 0.0
    %8682 = vmatpush2.msra.mxu0 0.0
    %8683 = vmatprep.subr.mxu0 0.0
    %8684 = vmatpush2.msra.mxu0 0.0
    %8685 = vmatprep.mubr.f32.mxu0 0.0
    %8686 = vmatmul.mubr.f32.gmra.mxu0 %v8619
    %v8687 = vpop.f32.mrf.mxu0
    %v8688 = vadd.f32 0.0, %v8687
    %v8689 = vpop.f32.mrf.mxu0
    %8690 = vdwg.mxu0
    %8691 = vrot.lane.b32.xlu0 %v7526, 64
    %v8692 = vpop.permute.xlu0 %8691
    %v8695 = vsel %vm486, %v8233, 0
    %8697 = vmatprep.subr.mxu0 0.0
    %8698 = vmatpush1.msra.mxu0 0.0
    %8699 = vmatprep.subr.mxu0 0.0
    %8700 = vmatpush1.msra.mxu0 0.0
    %8701 = vmatprep.subr.mxu0 0.0
    %8702 = vmatpush1.msra.mxu0 0.0
    %8703 = vmatprep.subr.mxu0 0.0
    %8704 = vmatpush1.msra.mxu0 0.0
    %8705 = vmatprep.subr.mxu0 0.0
    %8706 = vmatpush1.msra.mxu0 0.0
    %8707 = vmatprep.subr.mxu0 0.0
    %8708 = vmatpush1.msra.mxu0 0.0
    %8709 = vmatprep.subr.mxu0 0.0
    %8710 = vmatpush1.msra.mxu0 0.0
    %8711 = vmatprep.subr.mxu0 0.0
    %8712 = vmatpush1.msra.mxu0 0.0
    %8713 = vmatprep.subr.mxu0 0.0
    %8714 = vmatpush1.msra.mxu0 0.0
    %8715 = vmatprep.subr.mxu0 0.0
    %8716 = vmatpush1.msra.mxu0 0.0
    %8717 = vmatprep.subr.mxu0 0.0
    %8718 = vmatpush1.msra.mxu0 0.0
    %8719 = vmatprep.subr.mxu0 0.0
    %8720 = vmatpush1.msra.mxu0 0.0
    %8721 = vmatprep.subr.mxu0 0.0
    %8722 = vmatpush1.msra.mxu0 0.0
    %8723 = vmatprep.subr.mxu0 0.0
    %8724 = vmatpush1.msra.mxu0 0.0
    %8725 = vmatprep.subr.mxu0 0.0
    %8726 = vmatpush1.msra.mxu0 0.0
    %8727 = vmatprep.subr.mxu0 0.0
    %8728 = vmatpush1.msra.mxu0 %v8692
    %8729 = vmatprep.subr.mxu0 0.0
    %8730 = vmatpush2.msra.mxu0 0.0
    %8731 = vmatprep.subr.mxu0 0.0
    %8732 = vmatpush2.msra.mxu0 0.0
    %8733 = vmatprep.subr.mxu0 0.0
    %8734 = vmatpush2.msra.mxu0 0.0
    %8735 = vmatprep.subr.mxu0 0.0
    %8736 = vmatpush2.msra.mxu0 0.0
    %8737 = vmatprep.subr.mxu0 0.0
    %8738 = vmatpush2.msra.mxu0 0.0
    %8739 = vmatprep.subr.mxu0 0.0
    %8740 = vmatpush2.msra.mxu0 0.0
    %8741 = vmatprep.subr.mxu0 0.0
    %8742 = vmatpush2.msra.mxu0 0.0
    %8743 = vmatprep.subr.mxu0 0.0
    %8744 = vmatpush2.msra.mxu0 0.0
    %8745 = vmatprep.subr.mxu0 0.0
    %8746 = vmatpush2.msra.mxu0 0.0
    %8747 = vmatprep.subr.mxu0 0.0
    %8748 = vmatpush2.msra.mxu0 0.0
    %8749 = vmatprep.subr.mxu0 0.0
    %8750 = vmatpush2.msra.mxu0 0.0
    %8751 = vmatprep.subr.mxu0 0.0
    %8752 = vmatpush2.msra.mxu0 0.0
    %8753 = vmatprep.subr.mxu0 0.0
    %8754 = vmatpush2.msra.mxu0 0.0
    %8755 = vmatprep.subr.mxu0 0.0
    %8756 = vmatpush2.msra.mxu0 0.0
    %8757 = vmatprep.subr.mxu0 0.0
    %8758 = vmatpush2.msra.mxu0 0.0
    %8759 = vmatprep.subr.mxu0 0.0
    %8760 = vmatpush2.msra.mxu0 0.0
    %8761 = vmatprep.mubr.f32.mxu0 0.0
    %8762 = vmatmul.mubr.f32.gmra.mxu0 %v8695
    %v8763 = vpop.f32.mrf.mxu0
    %v8764 = vadd.f32 0.0, %v8763
    %v8765 = vpop.f32.mrf.mxu0
    %8766 = vdwg.mxu0
    %8767 = vrot.lane.b32.xlu0 %v7530, 64
    %v8768 = vpop.permute.xlu0 %8767
    %v8771 = vsel %vm486, %v8234, 0
    %8773 = vmatprep.subr.mxu0 0.0
    %8774 = vmatpush1.msra.mxu0 0.0
    %8775 = vmatprep.subr.mxu0 0.0
    %8776 = vmatpush1.msra.mxu0 0.0
    %8777 = vmatprep.subr.mxu0 0.0
    %8778 = vmatpush1.msra.mxu0 0.0
    %8779 = vmatprep.subr.mxu0 0.0
    %8780 = vmatpush1.msra.mxu0 0.0
    %8781 = vmatprep.subr.mxu0 0.0
    %8782 = vmatpush1.msra.mxu0 0.0
    %8783 = vmatprep.subr.mxu0 0.0
    %8784 = vmatpush1.msra.mxu0 0.0
    %8785 = vmatprep.subr.mxu0 0.0
    %8786 = vmatpush1.msra.mxu0 0.0
    %8787 = vmatprep.subr.mxu0 0.0
    %8788 = vmatpush1.msra.mxu0 0.0
    %8789 = vmatprep.subr.mxu0 0.0
    %8790 = vmatpush1.msra.mxu0 0.0
    %8791 = vmatprep.subr.mxu0 0.0
    %8792 = vmatpush1.msra.mxu0 0.0
    %8793 = vmatprep.subr.mxu0 0.0
    %8794 = vmatpush1.msra.mxu0 0.0
    %8795 = vmatprep.subr.mxu0 0.0
    %8796 = vmatpush1.msra.mxu0 0.0
    %8797 = vmatprep.subr.mxu0 0.0
    %8798 = vmatpush1.msra.mxu0 0.0
    %8799 = vmatprep.subr.mxu0 0.0
    %8800 = vmatpush1.msra.mxu0 0.0
    %8801 = vmatprep.subr.mxu0 0.0
    %8802 = vmatpush1.msra.mxu0 0.0
    %8803 = vmatprep.subr.mxu0 0.0
    %8804 = vmatpush1.msra.mxu0 %v8768
    %8805 = vmatprep.subr.mxu0 0.0
    %8806 = vmatpush2.msra.mxu0 0.0
    %8807 = vmatprep.subr.mxu0 0.0
    %8808 = vmatpush2.msra.mxu0 0.0
    %8809 = vmatprep.subr.mxu0 0.0
    %8810 = vmatpush2.msra.mxu0 0.0
    %8811 = vmatprep.subr.mxu0 0.0
    %8812 = vmatpush2.msra.mxu0 0.0
    %8813 = vmatprep.subr.mxu0 0.0
    %8814 = vmatpush2.msra.mxu0 0.0
    %8815 = vmatprep.subr.mxu0 0.0
    %8816 = vmatpush2.msra.mxu0 0.0
    %8817 = vmatprep.subr.mxu0 0.0
    %8818 = vmatpush2.msra.mxu0 0.0
    %8819 = vmatprep.subr.mxu0 0.0
    %8820 = vmatpush2.msra.mxu0 0.0
    %8821 = vmatprep.subr.mxu0 0.0
    %8822 = vmatpush2.msra.mxu0 0.0
    %8823 = vmatprep.subr.mxu0 0.0
    %8824 = vmatpush2.msra.mxu0 0.0
    %8825 = vmatprep.subr.mxu0 0.0
    %8826 = vmatpush2.msra.mxu0 0.0
    %8827 = vmatprep.subr.mxu0 0.0
    %8828 = vmatpush2.msra.mxu0 0.0
    %8829 = vmatprep.subr.mxu0 0.0
    %8830 = vmatpush2.msra.mxu0 0.0
    %8831 = vmatprep.subr.mxu0 0.0
    %8832 = vmatpush2.msra.mxu0 0.0
    %8833 = vmatprep.subr.mxu0 0.0
    %8834 = vmatpush2.msra.mxu0 0.0
    %8835 = vmatprep.subr.mxu0 0.0
    %8836 = vmatpush2.msra.mxu0 0.0
    %8837 = vmatprep.mubr.f32.mxu0 0.0
    %8838 = vmatmul.mubr.f32.gmra.mxu0 %v8771
    %v8839 = vpop.f32.mrf.mxu0
    %v8840 = vadd.f32 0.0, %v8839
    %v8841 = vpop.f32.mrf.mxu0
    %8842 = vdwg.mxu0
    %8845 = vrot.lane.b32.xlu0 %v8384, 8
    %v8846 = vpop.permute.xlu0 %8845
    %8847 = vrot.lane.b32.xlu0 %v8688, 8
    %v8848 = vpop.permute.xlu0 %8847
    %8853 = vrot.lane.b32.xlu0 %v8460, 16
    %v8854 = vpop.permute.xlu0 %8853
    %8855 = vrot.lane.b32.xlu0 %v8764, 16
    %v8856 = vpop.permute.xlu0 %8855
    %8861 = vrot.lane.b32.xlu0 %v8536, 24
    %v8862 = vpop.permute.xlu0 %8861
    %8863 = vrot.lane.b32.xlu0 %v8840, 24
    %v8864 = vpop.permute.xlu0 %8863
    %v8867 = vsel %vm486, %v8308, %v8846
    %v8868 = vsel %vm486, %v8612, %v8848
    %v8869 = vsel %vm1823, %v8867, %v8854
    %v8870 = vsel %vm1823, %v8868, %v8856
    %v8871 = vsel %vm1826, %v8869, %v8862
    %v8872 = vsel %vm1826, %v8870, %v8864
    %v8874 = vsel %vm388, %v8871, 0
    %v8877 = vsel %vm388, %v8872, 0
    %8879 = vmatprep.subr.mxu0 0.0
    %8880 = vmatpush1.msra.mxu0 0.0
    %8881 = vmatprep.subr.mxu0 0.0
    %8882 = vmatpush1.msra.mxu0 0.0
    %8883 = vmatprep.subr.mxu0 0.0
    %8884 = vmatpush1.msra.mxu0 0.0
    %8885 = vmatprep.subr.mxu0 0.0
    %8886 = vmatpush1.msra.mxu0 0.0
    %8887 = vmatprep.subr.mxu0 0.0
    %8888 = vmatpush1.msra.mxu0 0.0
    %8889 = vmatprep.subr.mxu0 0.0
    %8890 = vmatpush1.msra.mxu0 0.0
    %8891 = vmatprep.subr.mxu0 0.0
    %8892 = vmatpush1.msra.mxu0 0.0
    %8893 = vmatprep.subr.mxu0 0.0
    %8894 = vmatpush1.msra.mxu0 0.0
    %8895 = vmatprep.subr.mxu0 0.0
    %8896 = vmatpush1.msra.mxu0 0.0
    %8897 = vmatprep.subr.mxu0 0.0
    %8898 = vmatpush1.msra.mxu0 0.0
    %8899 = vmatprep.subr.mxu0 0.0
    %8900 = vmatpush1.msra.mxu0 0.0
    %8901 = vmatprep.subr.mxu0 0.0
    %8902 = vmatpush1.msra.mxu0 0.0
    %8903 = vmatprep.subr.mxu0 0.0
    %8904 = vmatpush1.msra.mxu0 %v3944
    %8905 = vmatprep.subr.mxu0 0.0
    %8906 = vmatpush1.msra.mxu0 %v3943
    %8907 = vmatprep.subr.mxu0 0.0
    %8908 = vmatpush1.msra.mxu0 %v3942
    %8909 = vmatprep.subr.mxu0 0.0
    %8910 = vmatpush1.msra.mxu0 %v3941
    %8911 = vmatprep.subr.mxu0 0.0
    %8912 = vmatpush2.msra.mxu0 0.0
    %8913 = vmatprep.subr.mxu0 0.0
    %8914 = vmatpush2.msra.mxu0 0.0
    %8915 = vmatprep.subr.mxu0 0.0
    %8916 = vmatpush2.msra.mxu0 0.0
    %8917 = vmatprep.subr.mxu0 0.0
    %8918 = vmatpush2.msra.mxu0 0.0
    %8919 = vmatprep.subr.mxu0 0.0
    %8920 = vmatpush2.msra.mxu0 0.0
    %8921 = vmatprep.subr.mxu0 0.0
    %8922 = vmatpush2.msra.mxu0 0.0
    %8923 = vmatprep.subr.mxu0 0.0
    %8924 = vmatpush2.msra.mxu0 0.0
    %8925 = vmatprep.subr.mxu0 0.0
    %8926 = vmatpush2.msra.mxu0 0.0
    %8927 = vmatprep.subr.mxu0 0.0
    %8928 = vmatpush2.msra.mxu0 0.0
    %8929 = vmatprep.subr.mxu0 0.0
    %8930 = vmatpush2.msra.mxu0 0.0
    %8931 = vmatprep.subr.mxu0 0.0
    %8932 = vmatpush2.msra.mxu0 0.0
    %8933 = vmatprep.subr.mxu0 0.0
    %8934 = vmatpush2.msra.mxu0 0.0
    %8935 = vmatprep.subr.mxu0 0.0
    %8936 = vmatpush2.msra.mxu0 0.0
    %8937 = vmatprep.subr.mxu0 0.0
    %8938 = vmatpush2.msra.mxu0 0.0
    %8939 = vmatprep.subr.mxu0 0.0
    %8940 = vmatpush2.msra.mxu0 0.0
    %8941 = vmatprep.subr.mxu0 0.0
    %8942 = vmatpush2.msra.mxu0 0.0
    %8943 = vmatprep.mubr.f32.mxu0 0.0
    %8944 = vmatmul.mubr.f32.gmra.mxu0 %v8874
    %v8945 = vpop.f32.mrf.mxu0
    %v8946 = vadd.f32 %v5527, %v8945
    %v8947 = vpop.f32.mrf.mxu0
    %8948 = vmatprep.mubr.f32.mxu0 0.0
    %8949 = vmatmul.mubr.f32.gmra.mxu0 %v8877
    %v8950 = vpop.f32.mrf.mxu0
    %v8951 = vadd.f32 %v5527, %v8950
    %v8952 = vpop.f32.mrf.mxu0
    %8953 = vdwg.mxu0
    %8954 = vst.msk [vmem:[#allocation36] sm:$0xff] %vm486, %v8227
    %8955 = vst.msk [vmem:[#allocation36 + $0x8] sm:$0xff] %vm486, %v8228
    %8956 = vst.msk [vmem:[#allocation36 + $0x10] sm:$0xff] %vm486, %v8229
    %8957 = vst.msk [vmem:[#allocation36 + $0x18] sm:$0xff] %vm486, %v8230
    %8958 = vst.msk [vmem:[#allocation36 + $0x20] sm:$0xff] %vm486, %v8231
    %8959 = vst.msk [vmem:[#allocation36 + $0x28] sm:$0xff] %vm486, %v8232
    %8960 = vst.msk [vmem:[#allocation36 + $0x30] sm:$0xff] %vm486, %v8233
    %8961 = vst.msk [vmem:[#allocation36 + $0x38] sm:$0xff] %vm486, %v8234
    %v8962 = vadd.f32 %v7434, %v8946
    %v8963 = vadd.f32 %v7435, %v8951
    %v8964 = vsel %vm388, %v8962, 0.0
    %8965 = vadd.xlane.f32.xlu0 %v8964
    %v8966 = vpop.xlane.xlu0 %8965
    %v8967 = vsel %vm388, %v8963, 0.0
    %8968 = vadd.xlane.f32.xlu0 %v8967
    %v8969 = vpop.xlane.xlu0 %8968
    %v8970 = vmul.f32 %v8966, %v1932
    %v8971 = vmul.f32 %v8969, %v1932
    %v8972 = vsub.f32 %v8962, %v8970
    %v8973 = vsub.f32 %v8963, %v8971
    %v8974 = vmul.f32 %v8972, %v8972
    %v8975 = vmul.f32 %v8973, %v8973
    %v8976 = vsel %vm388, %v8974, 0.0
    %8977 = vadd.xlane.f32.xlu0 %v8976
    %v8978 = vpop.xlane.xlu0 %8977
    %v8979 = vsel %vm388, %v8975, 0.0
    %8980 = vadd.xlane.f32.xlu0 %v8979
    %v8981 = vpop.xlane.xlu0 %8980
    %v8982 = vmul.f32 %v8978, %v1932
    %v8983 = vmul.f32 %v8981, %v1932
    %v8984 = vadd.f32 %v8982, 1e-05
    %v8985 = vadd.f32 %v8983, 1e-05
    %v8986 = vrsqrt.pop %v8984
    %v8987 = vrsqrt.pop %v8985
    %v8988 = vmul.f32 %v8972, %v8986
    %v8989 = vmul.f32 %v8973, %v8987
    %v8990 = vmul.f32 %v8988, %v5650
    %v8991 = vmul.f32 %v8989, %v5650
    %v8992 = vadd.f32 %v8990, %v5658
    %v8993 = vadd.f32 %v8991, %v5658
    %v8995 = vsel %vm388, %v8992, 0
    %v8998 = vsel %vm388, %v8993, 0
    %9000 = vmatprep.subr.mxu0 0.0
    %9001 = vmatpush1.msra.mxu0 0.0
    %9002 = vmatprep.subr.mxu0 0.0
    %9003 = vmatpush1.msra.mxu0 0.0
    %9004 = vmatprep.subr.mxu0 0.0
    %9005 = vmatpush1.msra.mxu0 0.0
    %9006 = vmatprep.subr.mxu0 0.0
    %9007 = vmatpush1.msra.mxu0 0.0
    %9008 = vmatprep.subr.mxu0 0.0
    %9009 = vmatpush1.msra.mxu0 0.0
    %9010 = vmatprep.subr.mxu0 0.0
    %9011 = vmatpush1.msra.mxu0 0.0
    %9012 = vmatprep.subr.mxu0 0.0
    %9013 = vmatpush1.msra.mxu0 0.0
    %9014 = vmatprep.subr.mxu0 0.0
    %9015 = vmatpush1.msra.mxu0 0.0
    %9016 = vmatprep.subr.mxu0 0.0
    %9017 = vmatpush1.msra.mxu0 0.0
    %9018 = vmatprep.subr.mxu0 0.0
    %9019 = vmatpush1.msra.mxu0 0.0
    %9020 = vmatprep.subr.mxu0 0.0
    %9021 = vmatpush1.msra.mxu0 0.0
    %9022 = vmatprep.subr.mxu0 0.0
    %9023 = vmatpush1.msra.mxu0 0.0
    %9024 = vmatprep.subr.mxu0 0.0
    %9025 = vmatpush1.msra.mxu0 %v3949
    %9026 = vmatprep.subr.mxu0 0.0
    %9027 = vmatpush1.msra.mxu0 %v3948
    %9028 = vmatprep.subr.mxu0 0.0
    %9029 = vmatpush1.msra.mxu0 %v3947
    %9030 = vmatprep.subr.mxu0 0.0
    %9031 = vmatpush1.msra.mxu0 %v3946
    %9032 = vmatprep.subr.mxu0 0.0
    %9033 = vmatpush2.msra.mxu0 0.0
    %9034 = vmatprep.subr.mxu0 0.0
    %9035 = vmatpush2.msra.mxu0 0.0
    %9036 = vmatprep.subr.mxu0 0.0
    %9037 = vmatpush2.msra.mxu0 0.0
    %9038 = vmatprep.subr.mxu0 0.0
    %9039 = vmatpush2.msra.mxu0 0.0
    %9040 = vmatprep.subr.mxu0 0.0
    %9041 = vmatpush2.msra.mxu0 0.0
    %9042 = vmatprep.subr.mxu0 0.0
    %9043 = vmatpush2.msra.mxu0 0.0
    %9044 = vmatprep.subr.mxu0 0.0
    %9045 = vmatpush2.msra.mxu0 0.0
    %9046 = vmatprep.subr.mxu0 0.0
    %9047 = vmatpush2.msra.mxu0 0.0
    %9048 = vmatprep.subr.mxu0 0.0
    %9049 = vmatpush2.msra.mxu0 0.0
    %9050 = vmatprep.subr.mxu0 0.0
    %9051 = vmatpush2.msra.mxu0 0.0
    %9052 = vmatprep.subr.mxu0 0.0
    %9053 = vmatpush2.msra.mxu0 0.0
    %9054 = vmatprep.subr.mxu0 0.0
    %9055 = vmatpush2.msra.mxu0 0.0
    %9056 = vmatprep.subr.mxu0 0.0
    %9057 = vmatpush2.msra.mxu0 0.0
    %9058 = vmatprep.subr.mxu0 0.0
    %9059 = vmatpush2.msra.mxu0 0.0
    %9060 = vmatprep.subr.mxu0 0.0
    %9061 = vmatpush2.msra.mxu0 0.0
    %9062 = vmatprep.subr.mxu0 0.0
    %9063 = vmatpush2.msra.mxu0 0.0
    %9064 = vmatprep.mubr.f32.mxu0 0.0
    %9065 = vmatmul.mubr.f32.gmra.mxu0 %v8995
    %v9066 = vpop.f32.mrf.mxu0
    %v9067 = vadd.f32 %v5666, %v9066
    %v9068 = vpop.f32.mrf.mxu0
    %9069 = vmatprep.mubr.f32.mxu0 0.0
    %9070 = vmatmul.mubr.f32.gmra.mxu0 %v8998
    %v9071 = vpop.f32.mrf.mxu0
    %v9072 = vadd.f32 %v5666, %v9071
    %v9073 = vpop.f32.mrf.mxu0
    %9074 = vdwg.mxu0
    %9077 = vrot.lane.b32.xlu0 %v9067, 120
    %v9078 = vpop.permute.xlu0 %9077
    %9079 = vrot.lane.b32.xlu0 %v9072, 120
    %v9080 = vpop.permute.xlu0 %9079
    %9081 = vrot.lane.b32.xlu0 %v9067, 112
    %v9082 = vpop.permute.xlu0 %9081
    %9083 = vrot.lane.b32.xlu0 %v9072, 112
    %v9084 = vpop.permute.xlu0 %9083
    %9085 = vrot.lane.b32.xlu0 %v9067, 104
    %v9086 = vpop.permute.xlu0 %9085
    %9087 = vrot.lane.b32.xlu0 %v9072, 104
    %v9088 = vpop.permute.xlu0 %9087
    %v9089 = vsel %vm486, %v9067, 0
    %9091 = vmatprep.subr.mxu0 0.0
    %9092 = vmatpush1.xpose.msra.mxu0 0.0
    %9093 = vmatprep.subr.mxu0 0.0
    %9094 = vmatpush1.xpose.msra.mxu0 0.0
    %9095 = vmatprep.subr.mxu0 0.0
    %9096 = vmatpush1.xpose.msra.mxu0 0.0
    %9097 = vmatprep.subr.mxu0 0.0
    %9098 = vmatpush1.xpose.msra.mxu0 0.0
    %9099 = vmatprep.subr.mxu0 0.0
    %9100 = vmatpush1.xpose.msra.mxu0 0.0
    %9101 = vmatprep.subr.mxu0 0.0
    %9102 = vmatpush1.xpose.msra.mxu0 0.0
    %9103 = vmatprep.subr.mxu0 0.0
    %9104 = vmatpush1.xpose.msra.mxu0 0.0
    %9105 = vmatprep.subr.mxu0 0.0
    %9106 = vmatpush1.xpose.msra.mxu0 0.0
    %9107 = vmatprep.subr.mxu0 0.0
    %9108 = vmatpush1.xpose.msra.mxu0 0.0
    %9109 = vmatprep.subr.mxu0 0.0
    %9110 = vmatpush1.xpose.msra.mxu0 0.0
    %9111 = vmatprep.subr.mxu0 0.0
    %9112 = vmatpush1.xpose.msra.mxu0 0.0
    %9113 = vmatprep.subr.mxu0 0.0
    %9114 = vmatpush1.xpose.msra.mxu0 0.0
    %9115 = vmatprep.subr.mxu0 0.0
    %9116 = vmatpush1.xpose.msra.mxu0 0.0
    %9117 = vmatprep.subr.mxu0 0.0
    %9118 = vmatpush1.xpose.msra.mxu0 0.0
    %9119 = vmatprep.subr.mxu0 0.0
    %9120 = vmatpush1.xpose.msra.mxu0 0.0
    %9121 = vmatprep.subr.mxu0 0.0
    %9122 = vmatpush1.xpose.msra.mxu0 %v5765
    %9123 = vmatprep.subr.mxu0 0.0
    %9124 = vmatpush2.xpose.msra.mxu0 0.0
    %9125 = vmatprep.subr.mxu0 0.0
    %9126 = vmatpush2.xpose.msra.mxu0 0.0
    %9127 = vmatprep.subr.mxu0 0.0
    %9128 = vmatpush2.xpose.msra.mxu0 0.0
    %9129 = vmatprep.subr.mxu0 0.0
    %9130 = vmatpush2.xpose.msra.mxu0 0.0
    %9131 = vmatprep.subr.mxu0 0.0
    %9132 = vmatpush2.xpose.msra.mxu0 0.0
    %9133 = vmatprep.subr.mxu0 0.0
    %9134 = vmatpush2.xpose.msra.mxu0 0.0
    %9135 = vmatprep.subr.mxu0 0.0
    %9136 = vmatpush2.xpose.msra.mxu0 0.0
    %9137 = vmatprep.subr.mxu0 0.0
    %9138 = vmatpush2.xpose.msra.mxu0 0.0
    %9139 = vmatprep.subr.mxu0 0.0
    %9140 = vmatpush2.xpose.msra.mxu0 0.0
    %9141 = vmatprep.subr.mxu0 0.0
    %9142 = vmatpush2.xpose.msra.mxu0 0.0
    %9143 = vmatprep.subr.mxu0 0.0
    %9144 = vmatpush2.xpose.msra.mxu0 0.0
    %9145 = vmatprep.subr.mxu0 0.0
    %9146 = vmatpush2.xpose.msra.mxu0 0.0
    %9147 = vmatprep.subr.mxu0 0.0
    %9148 = vmatpush2.xpose.msra.mxu0 0.0
    %9149 = vmatprep.subr.mxu0 0.0
    %9150 = vmatpush2.xpose.msra.mxu0 0.0
    %9151 = vmatprep.subr.mxu0 0.0
    %9152 = vmatpush2.xpose.msra.mxu0 0.0
    %9153 = vmatprep.subr.mxu0 0.0
    %9154 = vmatpush2.xpose.msra.mxu0 0.0
    %9155 = vmatprep.mubr.f32.mxu0 0.0
    %9156 = vmatmul.mubr.f32.gmra.mxu0 %v9089
    %v9157 = vpop.f32.mrf.mxu0
    %v9158 = vadd.f32 0.0, %v9157
    %v9159 = vpop.f32.mrf.mxu0
    %9160 = vdwg.mxu0
    %v9161 = vsel %vm486, %v9078, 0
    %9163 = vmatprep.subr.mxu0 0.0
    %9164 = vmatpush1.xpose.msra.mxu0 0.0
    %9165 = vmatprep.subr.mxu0 0.0
    %9166 = vmatpush1.xpose.msra.mxu0 0.0
    %9167 = vmatprep.subr.mxu0 0.0
    %9168 = vmatpush1.xpose.msra.mxu0 0.0
    %9169 = vmatprep.subr.mxu0 0.0
    %9170 = vmatpush1.xpose.msra.mxu0 0.0
    %9171 = vmatprep.subr.mxu0 0.0
    %9172 = vmatpush1.xpose.msra.mxu0 0.0
    %9173 = vmatprep.subr.mxu0 0.0
    %9174 = vmatpush1.xpose.msra.mxu0 0.0
    %9175 = vmatprep.subr.mxu0 0.0
    %9176 = vmatpush1.xpose.msra.mxu0 0.0
    %9177 = vmatprep.subr.mxu0 0.0
    %9178 = vmatpush1.xpose.msra.mxu0 0.0
    %9179 = vmatprep.subr.mxu0 0.0
    %9180 = vmatpush1.xpose.msra.mxu0 0.0
    %9181 = vmatprep.subr.mxu0 0.0
    %9182 = vmatpush1.xpose.msra.mxu0 0.0
    %9183 = vmatprep.subr.mxu0 0.0
    %9184 = vmatpush1.xpose.msra.mxu0 0.0
    %9185 = vmatprep.subr.mxu0 0.0
    %9186 = vmatpush1.xpose.msra.mxu0 0.0
    %9187 = vmatprep.subr.mxu0 0.0
    %9188 = vmatpush1.xpose.msra.mxu0 0.0
    %9189 = vmatprep.subr.mxu0 0.0
    %9190 = vmatpush1.xpose.msra.mxu0 0.0
    %9191 = vmatprep.subr.mxu0 0.0
    %9192 = vmatpush1.xpose.msra.mxu0 0.0
    %9193 = vmatprep.subr.mxu0 0.0
    %9194 = vmatpush1.xpose.msra.mxu0 %v5839
    %9195 = vmatprep.subr.mxu0 0.0
    %9196 = vmatpush2.xpose.msra.mxu0 0.0
    %9197 = vmatprep.subr.mxu0 0.0
    %9198 = vmatpush2.xpose.msra.mxu0 0.0
    %9199 = vmatprep.subr.mxu0 0.0
    %9200 = vmatpush2.xpose.msra.mxu0 0.0
    %9201 = vmatprep.subr.mxu0 0.0
    %9202 = vmatpush2.xpose.msra.mxu0 0.0
    %9203 = vmatprep.subr.mxu0 0.0
    %9204 = vmatpush2.xpose.msra.mxu0 0.0
    %9205 = vmatprep.subr.mxu0 0.0
    %9206 = vmatpush2.xpose.msra.mxu0 0.0
    %9207 = vmatprep.subr.mxu0 0.0
    %9208 = vmatpush2.xpose.msra.mxu0 0.0
    %9209 = vmatprep.subr.mxu0 0.0
    %9210 = vmatpush2.xpose.msra.mxu0 0.0
    %9211 = vmatprep.subr.mxu0 0.0
    %9212 = vmatpush2.xpose.msra.mxu0 0.0
    %9213 = vmatprep.subr.mxu0 0.0
    %9214 = vmatpush2.xpose.msra.mxu0 0.0
    %9215 = vmatprep.subr.mxu0 0.0
    %9216 = vmatpush2.xpose.msra.mxu0 0.0
    %9217 = vmatprep.subr.mxu0 0.0
    %9218 = vmatpush2.xpose.msra.mxu0 0.0
    %9219 = vmatprep.subr.mxu0 0.0
    %9220 = vmatpush2.xpose.msra.mxu0 0.0
    %9221 = vmatprep.subr.mxu0 0.0
    %9222 = vmatpush2.xpose.msra.mxu0 0.0
    %9223 = vmatprep.subr.mxu0 0.0
    %9224 = vmatpush2.xpose.msra.mxu0 0.0
    %9225 = vmatprep.subr.mxu0 0.0
    %9226 = vmatpush2.xpose.msra.mxu0 0.0
    %9227 = vmatprep.mubr.f32.mxu0 0.0
    %9228 = vmatmul.mubr.f32.gmra.mxu0 %v9161
    %v9229 = vpop.f32.mrf.mxu0
    %v9230 = vadd.f32 0.0, %v9229
    %v9231 = vpop.f32.mrf.mxu0
    %9232 = vdwg.mxu0
    %v9233 = vsel %vm486, %v9082, 0
    %9235 = vmatprep.subr.mxu0 0.0
    %9236 = vmatpush1.xpose.msra.mxu0 0.0
    %9237 = vmatprep.subr.mxu0 0.0
    %9238 = vmatpush1.xpose.msra.mxu0 0.0
    %9239 = vmatprep.subr.mxu0 0.0
    %9240 = vmatpush1.xpose.msra.mxu0 0.0
    %9241 = vmatprep.subr.mxu0 0.0
    %9242 = vmatpush1.xpose.msra.mxu0 0.0
    %9243 = vmatprep.subr.mxu0 0.0
    %9244 = vmatpush1.xpose.msra.mxu0 0.0
    %9245 = vmatprep.subr.mxu0 0.0
    %9246 = vmatpush1.xpose.msra.mxu0 0.0
    %9247 = vmatprep.subr.mxu0 0.0
    %9248 = vmatpush1.xpose.msra.mxu0 0.0
    %9249 = vmatprep.subr.mxu0 0.0
    %9250 = vmatpush1.xpose.msra.mxu0 0.0
    %9251 = vmatprep.subr.mxu0 0.0
    %9252 = vmatpush1.xpose.msra.mxu0 0.0
    %9253 = vmatprep.subr.mxu0 0.0
    %9254 = vmatpush1.xpose.msra.mxu0 0.0
    %9255 = vmatprep.subr.mxu0 0.0
    %9256 = vmatpush1.xpose.msra.mxu0 0.0
    %9257 = vmatprep.subr.mxu0 0.0
    %9258 = vmatpush1.xpose.msra.mxu0 0.0
    %9259 = vmatprep.subr.mxu0 0.0
    %9260 = vmatpush1.xpose.msra.mxu0 0.0
    %9261 = vmatprep.subr.mxu0 0.0
    %9262 = vmatpush1.xpose.msra.mxu0 0.0
    %9263 = vmatprep.subr.mxu0 0.0
    %9264 = vmatpush1.xpose.msra.mxu0 0.0
    %9265 = vmatprep.subr.mxu0 0.0
    %9266 = vmatpush1.xpose.msra.mxu0 %v5913
    %9267 = vmatprep.subr.mxu0 0.0
    %9268 = vmatpush2.xpose.msra.mxu0 0.0
    %9269 = vmatprep.subr.mxu0 0.0
    %9270 = vmatpush2.xpose.msra.mxu0 0.0
    %9271 = vmatprep.subr.mxu0 0.0
    %9272 = vmatpush2.xpose.msra.mxu0 0.0
    %9273 = vmatprep.subr.mxu0 0.0
    %9274 = vmatpush2.xpose.msra.mxu0 0.0
    %9275 = vmatprep.subr.mxu0 0.0
    %9276 = vmatpush2.xpose.msra.mxu0 0.0
    %9277 = vmatprep.subr.mxu0 0.0
    %9278 = vmatpush2.xpose.msra.mxu0 0.0
    %9279 = vmatprep.subr.mxu0 0.0
    %9280 = vmatpush2.xpose.msra.mxu0 0.0
    %9281 = vmatprep.subr.mxu0 0.0
    %9282 = vmatpush2.xpose.msra.mxu0 0.0
    %9283 = vmatprep.subr.mxu0 0.0
    %9284 = vmatpush2.xpose.msra.mxu0 0.0
    %9285 = vmatprep.subr.mxu0 0.0
    %9286 = vmatpush2.xpose.msra.mxu0 0.0
    %9287 = vmatprep.subr.mxu0 0.0
    %9288 = vmatpush2.xpose.msra.mxu0 0.0
    %9289 = vmatprep.subr.mxu0 0.0
    %9290 = vmatpush2.xpose.msra.mxu0 0.0
    %9291 = vmatprep.subr.mxu0 0.0
    %9292 = vmatpush2.xpose.msra.mxu0 0.0
    %9293 = vmatprep.subr.mxu0 0.0
    %9294 = vmatpush2.xpose.msra.mxu0 0.0
    %9295 = vmatprep.subr.mxu0 0.0
    %9296 = vmatpush2.xpose.msra.mxu0 0.0
    %9297 = vmatprep.subr.mxu0 0.0
    %9298 = vmatpush2.xpose.msra.mxu0 0.0
    %9299 = vmatprep.mubr.f32.mxu0 0.0
    %9300 = vmatmul.mubr.f32.gmra.mxu0 %v9233
    %v9301 = vpop.f32.mrf.mxu0
    %v9302 = vadd.f32 0.0, %v9301
    %v9303 = vpop.f32.mrf.mxu0
    %9304 = vdwg.mxu0
    %v9305 = vsel %vm486, %v9086, 0
    %9307 = vmatprep.subr.mxu0 0.0
    %9308 = vmatpush1.xpose.msra.mxu0 0.0
    %9309 = vmatprep.subr.mxu0 0.0
    %9310 = vmatpush1.xpose.msra.mxu0 0.0
    %9311 = vmatprep.subr.mxu0 0.0
    %9312 = vmatpush1.xpose.msra.mxu0 0.0
    %9313 = vmatprep.subr.mxu0 0.0
    %9314 = vmatpush1.xpose.msra.mxu0 0.0
    %9315 = vmatprep.subr.mxu0 0.0
    %9316 = vmatpush1.xpose.msra.mxu0 0.0
    %9317 = vmatprep.subr.mxu0 0.0
    %9318 = vmatpush1.xpose.msra.mxu0 0.0
    %9319 = vmatprep.subr.mxu0 0.0
    %9320 = vmatpush1.xpose.msra.mxu0 0.0
    %9321 = vmatprep.subr.mxu0 0.0
    %9322 = vmatpush1.xpose.msra.mxu0 0.0
    %9323 = vmatprep.subr.mxu0 0.0
    %9324 = vmatpush1.xpose.msra.mxu0 0.0
    %9325 = vmatprep.subr.mxu0 0.0
    %9326 = vmatpush1.xpose.msra.mxu0 0.0
    %9327 = vmatprep.subr.mxu0 0.0
    %9328 = vmatpush1.xpose.msra.mxu0 0.0
    %9329 = vmatprep.subr.mxu0 0.0
    %9330 = vmatpush1.xpose.msra.mxu0 0.0
    %9331 = vmatprep.subr.mxu0 0.0
    %9332 = vmatpush1.xpose.msra.mxu0 0.0
    %9333 = vmatprep.subr.mxu0 0.0
    %9334 = vmatpush1.xpose.msra.mxu0 0.0
    %9335 = vmatprep.subr.mxu0 0.0
    %9336 = vmatpush1.xpose.msra.mxu0 0.0
    %9337 = vmatprep.subr.mxu0 0.0
    %9338 = vmatpush1.xpose.msra.mxu0 %v5987
    %9339 = vmatprep.subr.mxu0 0.0
    %9340 = vmatpush2.xpose.msra.mxu0 0.0
    %9341 = vmatprep.subr.mxu0 0.0
    %9342 = vmatpush2.xpose.msra.mxu0 0.0
    %9343 = vmatprep.subr.mxu0 0.0
    %9344 = vmatpush2.xpose.msra.mxu0 0.0
    %9345 = vmatprep.subr.mxu0 0.0
    %9346 = vmatpush2.xpose.msra.mxu0 0.0
    %9347 = vmatprep.subr.mxu0 0.0
    %9348 = vmatpush2.xpose.msra.mxu0 0.0
    %9349 = vmatprep.subr.mxu0 0.0
    %9350 = vmatpush2.xpose.msra.mxu0 0.0
    %9351 = vmatprep.subr.mxu0 0.0
    %9352 = vmatpush2.xpose.msra.mxu0 0.0
    %9353 = vmatprep.subr.mxu0 0.0
    %9354 = vmatpush2.xpose.msra.mxu0 0.0
    %9355 = vmatprep.subr.mxu0 0.0
    %9356 = vmatpush2.xpose.msra.mxu0 0.0
    %9357 = vmatprep.subr.mxu0 0.0
    %9358 = vmatpush2.xpose.msra.mxu0 0.0
    %9359 = vmatprep.subr.mxu0 0.0
    %9360 = vmatpush2.xpose.msra.mxu0 0.0
    %9361 = vmatprep.subr.mxu0 0.0
    %9362 = vmatpush2.xpose.msra.mxu0 0.0
    %9363 = vmatprep.subr.mxu0 0.0
    %9364 = vmatpush2.xpose.msra.mxu0 0.0
    %9365 = vmatprep.subr.mxu0 0.0
    %9366 = vmatpush2.xpose.msra.mxu0 0.0
    %9367 = vmatprep.subr.mxu0 0.0
    %9368 = vmatpush2.xpose.msra.mxu0 0.0
    %9369 = vmatprep.subr.mxu0 0.0
    %9370 = vmatpush2.xpose.msra.mxu0 0.0
    %9371 = vmatprep.mubr.f32.mxu0 0.0
    %9372 = vmatmul.mubr.f32.gmra.mxu0 %v9305
    %v9373 = vpop.f32.mrf.mxu0
    %v9374 = vadd.f32 0.0, %v9373
    %v9375 = vpop.f32.mrf.mxu0
    %9376 = vdwg.mxu0
    %v9377 = vsel %vm486, %v9072, 0
    %9379 = vmatprep.subr.mxu0 0.0
    %9380 = vmatpush1.xpose.msra.mxu0 0.0
    %9381 = vmatprep.subr.mxu0 0.0
    %9382 = vmatpush1.xpose.msra.mxu0 0.0
    %9383 = vmatprep.subr.mxu0 0.0
    %9384 = vmatpush1.xpose.msra.mxu0 0.0
    %9385 = vmatprep.subr.mxu0 0.0
    %9386 = vmatpush1.xpose.msra.mxu0 0.0
    %9387 = vmatprep.subr.mxu0 0.0
    %9388 = vmatpush1.xpose.msra.mxu0 0.0
    %9389 = vmatprep.subr.mxu0 0.0
    %9390 = vmatpush1.xpose.msra.mxu0 0.0
    %9391 = vmatprep.subr.mxu0 0.0
    %9392 = vmatpush1.xpose.msra.mxu0 0.0
    %9393 = vmatprep.subr.mxu0 0.0
    %9394 = vmatpush1.xpose.msra.mxu0 0.0
    %9395 = vmatprep.subr.mxu0 0.0
    %9396 = vmatpush1.xpose.msra.mxu0 0.0
    %9397 = vmatprep.subr.mxu0 0.0
    %9398 = vmatpush1.xpose.msra.mxu0 0.0
    %9399 = vmatprep.subr.mxu0 0.0
    %9400 = vmatpush1.xpose.msra.mxu0 0.0
    %9401 = vmatprep.subr.mxu0 0.0
    %9402 = vmatpush1.xpose.msra.mxu0 0.0
    %9403 = vmatprep.subr.mxu0 0.0
    %9404 = vmatpush1.xpose.msra.mxu0 0.0
    %9405 = vmatprep.subr.mxu0 0.0
    %9406 = vmatpush1.xpose.msra.mxu0 0.0
    %9407 = vmatprep.subr.mxu0 0.0
    %9408 = vmatpush1.xpose.msra.mxu0 0.0
    %9409 = vmatprep.subr.mxu0 0.0
    %9410 = vmatpush1.xpose.msra.mxu0 %v6061
    %9411 = vmatprep.subr.mxu0 0.0
    %9412 = vmatpush2.xpose.msra.mxu0 0.0
    %9413 = vmatprep.subr.mxu0 0.0
    %9414 = vmatpush2.xpose.msra.mxu0 0.0
    %9415 = vmatprep.subr.mxu0 0.0
    %9416 = vmatpush2.xpose.msra.mxu0 0.0
    %9417 = vmatprep.subr.mxu0 0.0
    %9418 = vmatpush2.xpose.msra.mxu0 0.0
    %9419 = vmatprep.subr.mxu0 0.0
    %9420 = vmatpush2.xpose.msra.mxu0 0.0
    %9421 = vmatprep.subr.mxu0 0.0
    %9422 = vmatpush2.xpose.msra.mxu0 0.0
    %9423 = vmatprep.subr.mxu0 0.0
    %9424 = vmatpush2.xpose.msra.mxu0 0.0
    %9425 = vmatprep.subr.mxu0 0.0
    %9426 = vmatpush2.xpose.msra.mxu0 0.0
    %9427 = vmatprep.subr.mxu0 0.0
    %9428 = vmatpush2.xpose.msra.mxu0 0.0
    %9429 = vmatprep.subr.mxu0 0.0
    %9430 = vmatpush2.xpose.msra.mxu0 0.0
    %9431 = vmatprep.subr.mxu0 0.0
    %9432 = vmatpush2.xpose.msra.mxu0 0.0
    %9433 = vmatprep.subr.mxu0 0.0
    %9434 = vmatpush2.xpose.msra.mxu0 0.0
    %9435 = vmatprep.subr.mxu0 0.0
    %9436 = vmatpush2.xpose.msra.mxu0 0.0
    %9437 = vmatprep.subr.mxu0 0.0
    %9438 = vmatpush2.xpose.msra.mxu0 0.0
    %9439 = vmatprep.subr.mxu0 0.0
    %9440 = vmatpush2.xpose.msra.mxu0 0.0
    %9441 = vmatprep.subr.mxu0 0.0
    %9442 = vmatpush2.xpose.msra.mxu0 0.0
    %9443 = vmatprep.mubr.f32.mxu0 0.0
    %9444 = vmatmul.mubr.f32.gmra.mxu0 %v9377
    %v9445 = vpop.f32.mrf.mxu0
    %v9446 = vadd.f32 0.0, %v9445
    %v9447 = vpop.f32.mrf.mxu0
    %9448 = vdwg.mxu0
    %v9449 = vsel %vm486, %v9080, 0
    %9451 = vmatprep.subr.mxu0 0.0
    %9452 = vmatpush1.xpose.msra.mxu0 0.0
    %9453 = vmatprep.subr.mxu0 0.0
    %9454 = vmatpush1.xpose.msra.mxu0 0.0
    %9455 = vmatprep.subr.mxu0 0.0
    %9456 = vmatpush1.xpose.msra.mxu0 0.0
    %9457 = vmatprep.subr.mxu0 0.0
    %9458 = vmatpush1.xpose.msra.mxu0 0.0
    %9459 = vmatprep.subr.mxu0 0.0
    %9460 = vmatpush1.xpose.msra.mxu0 0.0
    %9461 = vmatprep.subr.mxu0 0.0
    %9462 = vmatpush1.xpose.msra.mxu0 0.0
    %9463 = vmatprep.subr.mxu0 0.0
    %9464 = vmatpush1.xpose.msra.mxu0 0.0
    %9465 = vmatprep.subr.mxu0 0.0
    %9466 = vmatpush1.xpose.msra.mxu0 0.0
    %9467 = vmatprep.subr.mxu0 0.0
    %9468 = vmatpush1.xpose.msra.mxu0 0.0
    %9469 = vmatprep.subr.mxu0 0.0
    %9470 = vmatpush1.xpose.msra.mxu0 0.0
    %9471 = vmatprep.subr.mxu0 0.0
    %9472 = vmatpush1.xpose.msra.mxu0 0.0
    %9473 = vmatprep.subr.mxu0 0.0
    %9474 = vmatpush1.xpose.msra.mxu0 0.0
    %9475 = vmatprep.subr.mxu0 0.0
    %9476 = vmatpush1.xpose.msra.mxu0 0.0
    %9477 = vmatprep.subr.mxu0 0.0
    %9478 = vmatpush1.xpose.msra.mxu0 0.0
    %9479 = vmatprep.subr.mxu0 0.0
    %9480 = vmatpush1.xpose.msra.mxu0 0.0
    %9481 = vmatprep.subr.mxu0 0.0
    %9482 = vmatpush1.xpose.msra.mxu0 %v6135
    %9483 = vmatprep.subr.mxu0 0.0
    %9484 = vmatpush2.xpose.msra.mxu0 0.0
    %9485 = vmatprep.subr.mxu0 0.0
    %9486 = vmatpush2.xpose.msra.mxu0 0.0
    %9487 = vmatprep.subr.mxu0 0.0
    %9488 = vmatpush2.xpose.msra.mxu0 0.0
    %9489 = vmatprep.subr.mxu0 0.0
    %9490 = vmatpush2.xpose.msra.mxu0 0.0
    %9491 = vmatprep.subr.mxu0 0.0
    %9492 = vmatpush2.xpose.msra.mxu0 0.0
    %9493 = vmatprep.subr.mxu0 0.0
    %9494 = vmatpush2.xpose.msra.mxu0 0.0
    %9495 = vmatprep.subr.mxu0 0.0
    %9496 = vmatpush2.xpose.msra.mxu0 0.0
    %9497 = vmatprep.subr.mxu0 0.0
    %9498 = vmatpush2.xpose.msra.mxu0 0.0
    %9499 = vmatprep.subr.mxu0 0.0
    %9500 = vmatpush2.xpose.msra.mxu0 0.0
    %9501 = vmatprep.subr.mxu0 0.0
    %9502 = vmatpush2.xpose.msra.mxu0 0.0
    %9503 = vmatprep.subr.mxu0 0.0
    %9504 = vmatpush2.xpose.msra.mxu0 0.0
    %9505 = vmatprep.subr.mxu0 0.0
    %9506 = vmatpush2.xpose.msra.mxu0 0.0
    %9507 = vmatprep.subr.mxu0 0.0
    %9508 = vmatpush2.xpose.msra.mxu0 0.0
    %9509 = vmatprep.subr.mxu0 0.0
    %9510 = vmatpush2.xpose.msra.mxu0 0.0
    %9511 = vmatprep.subr.mxu0 0.0
    %9512 = vmatpush2.xpose.msra.mxu0 0.0
    %9513 = vmatprep.subr.mxu0 0.0
    %9514 = vmatpush2.xpose.msra.mxu0 0.0
    %9515 = vmatprep.mubr.f32.mxu0 0.0
    %9516 = vmatmul.mubr.f32.gmra.mxu0 %v9449
    %v9517 = vpop.f32.mrf.mxu0
    %v9518 = vadd.f32 0.0, %v9517
    %v9519 = vpop.f32.mrf.mxu0
    %9520 = vdwg.mxu0
    %v9521 = vsel %vm486, %v9084, 0
    %9523 = vmatprep.subr.mxu0 0.0
    %9524 = vmatpush1.xpose.msra.mxu0 0.0
    %9525 = vmatprep.subr.mxu0 0.0
    %9526 = vmatpush1.xpose.msra.mxu0 0.0
    %9527 = vmatprep.subr.mxu0 0.0
    %9528 = vmatpush1.xpose.msra.mxu0 0.0
    %9529 = vmatprep.subr.mxu0 0.0
    %9530 = vmatpush1.xpose.msra.mxu0 0.0
    %9531 = vmatprep.subr.mxu0 0.0
    %9532 = vmatpush1.xpose.msra.mxu0 0.0
    %9533 = vmatprep.subr.mxu0 0.0
    %9534 = vmatpush1.xpose.msra.mxu0 0.0
    %9535 = vmatprep.subr.mxu0 0.0
    %9536 = vmatpush1.xpose.msra.mxu0 0.0
    %9537 = vmatprep.subr.mxu0 0.0
    %9538 = vmatpush1.xpose.msra.mxu0 0.0
    %9539 = vmatprep.subr.mxu0 0.0
    %9540 = vmatpush1.xpose.msra.mxu0 0.0
    %9541 = vmatprep.subr.mxu0 0.0
    %9542 = vmatpush1.xpose.msra.mxu0 0.0
    %9543 = vmatprep.subr.mxu0 0.0
    %9544 = vmatpush1.xpose.msra.mxu0 0.0
    %9545 = vmatprep.subr.mxu0 0.0
    %9546 = vmatpush1.xpose.msra.mxu0 0.0
    %9547 = vmatprep.subr.mxu0 0.0
    %9548 = vmatpush1.xpose.msra.mxu0 0.0
    %9549 = vmatprep.subr.mxu0 0.0
    %9550 = vmatpush1.xpose.msra.mxu0 0.0
    %9551 = vmatprep.subr.mxu0 0.0
    %9552 = vmatpush1.xpose.msra.mxu0 0.0
    %9553 = vmatprep.subr.mxu0 0.0
    %9554 = vmatpush1.xpose.msra.mxu0 %v6209
    %9555 = vmatprep.subr.mxu0 0.0
    %9556 = vmatpush2.xpose.msra.mxu0 0.0
    %9557 = vmatprep.subr.mxu0 0.0
    %9558 = vmatpush2.xpose.msra.mxu0 0.0
    %9559 = vmatprep.subr.mxu0 0.0
    %9560 = vmatpush2.xpose.msra.mxu0 0.0
    %9561 = vmatprep.subr.mxu0 0.0
    %9562 = vmatpush2.xpose.msra.mxu0 0.0
    %9563 = vmatprep.subr.mxu0 0.0
    %9564 = vmatpush2.xpose.msra.mxu0 0.0
    %9565 = vmatprep.subr.mxu0 0.0
    %9566 = vmatpush2.xpose.msra.mxu0 0.0
    %9567 = vmatprep.subr.mxu0 0.0
    %9568 = vmatpush2.xpose.msra.mxu0 0.0
    %9569 = vmatprep.subr.mxu0 0.0
    %9570 = vmatpush2.xpose.msra.mxu0 0.0
    %9571 = vmatprep.subr.mxu0 0.0
    %9572 = vmatpush2.xpose.msra.mxu0 0.0
    %9573 = vmatprep.subr.mxu0 0.0
    %9574 = vmatpush2.xpose.msra.mxu0 0.0
    %9575 = vmatprep.subr.mxu0 0.0
    %9576 = vmatpush2.xpose.msra.mxu0 0.0
    %9577 = vmatprep.subr.mxu0 0.0
    %9578 = vmatpush2.xpose.msra.mxu0 0.0
    %9579 = vmatprep.subr.mxu0 0.0
    %9580 = vmatpush2.xpose.msra.mxu0 0.0
    %9581 = vmatprep.subr.mxu0 0.0
    %9582 = vmatpush2.xpose.msra.mxu0 0.0
    %9583 = vmatprep.subr.mxu0 0.0
    %9584 = vmatpush2.xpose.msra.mxu0 0.0
    %9585 = vmatprep.subr.mxu0 0.0
    %9586 = vmatpush2.xpose.msra.mxu0 0.0
    %9587 = vmatprep.mubr.f32.mxu0 0.0
    %9588 = vmatmul.mubr.f32.gmra.mxu0 %v9521
    %v9589 = vpop.f32.mrf.mxu0
    %v9590 = vadd.f32 0.0, %v9589
    %v9591 = vpop.f32.mrf.mxu0
    %9592 = vdwg.mxu0
    %v9593 = vsel %vm486, %v9088, 0
    %9595 = vmatprep.subr.mxu0 0.0
    %9596 = vmatpush1.xpose.msra.mxu0 0.0
    %9597 = vmatprep.subr.mxu0 0.0
    %9598 = vmatpush1.xpose.msra.mxu0 0.0
    %9599 = vmatprep.subr.mxu0 0.0
    %9600 = vmatpush1.xpose.msra.mxu0 0.0
    %9601 = vmatprep.subr.mxu0 0.0
    %9602 = vmatpush1.xpose.msra.mxu0 0.0
    %9603 = vmatprep.subr.mxu0 0.0
    %9604 = vmatpush1.xpose.msra.mxu0 0.0
    %9605 = vmatprep.subr.mxu0 0.0
    %9606 = vmatpush1.xpose.msra.mxu0 0.0
    %9607 = vmatprep.subr.mxu0 0.0
    %9608 = vmatpush1.xpose.msra.mxu0 0.0
    %9609 = vmatprep.subr.mxu0 0.0
    %9610 = vmatpush1.xpose.msra.mxu0 0.0
    %9611 = vmatprep.subr.mxu0 0.0
    %9612 = vmatpush1.xpose.msra.mxu0 0.0
    %9613 = vmatprep.subr.mxu0 0.0
    %9614 = vmatpush1.xpose.msra.mxu0 0.0
    %9615 = vmatprep.subr.mxu0 0.0
    %9616 = vmatpush1.xpose.msra.mxu0 0.0
    %9617 = vmatprep.subr.mxu0 0.0
    %9618 = vmatpush1.xpose.msra.mxu0 0.0
    %9619 = vmatprep.subr.mxu0 0.0
    %9620 = vmatpush1.xpose.msra.mxu0 0.0
    %9621 = vmatprep.subr.mxu0 0.0
    %9622 = vmatpush1.xpose.msra.mxu0 0.0
    %9623 = vmatprep.subr.mxu0 0.0
    %9624 = vmatpush1.xpose.msra.mxu0 0.0
    %9625 = vmatprep.subr.mxu0 0.0
    %9626 = vmatpush1.xpose.msra.mxu0 %v6283
    %9627 = vmatprep.subr.mxu0 0.0
    %9628 = vmatpush2.xpose.msra.mxu0 0.0
    %9629 = vmatprep.subr.mxu0 0.0
    %9630 = vmatpush2.xpose.msra.mxu0 0.0
    %9631 = vmatprep.subr.mxu0 0.0
    %9632 = vmatpush2.xpose.msra.mxu0 0.0
    %9633 = vmatprep.subr.mxu0 0.0
    %9634 = vmatpush2.xpose.msra.mxu0 0.0
    %9635 = vmatprep.subr.mxu0 0.0
    %9636 = vmatpush2.xpose.msra.mxu0 0.0
    %9637 = vmatprep.subr.mxu0 0.0
    %9638 = vmatpush2.xpose.msra.mxu0 0.0
    %9639 = vmatprep.subr.mxu0 0.0
    %9640 = vmatpush2.xpose.msra.mxu0 0.0
    %9641 = vmatprep.subr.mxu0 0.0
    %9642 = vmatpush2.xpose.msra.mxu0 0.0
    %9643 = vmatprep.subr.mxu0 0.0
    %9644 = vmatpush2.xpose.msra.mxu0 0.0
    %9645 = vmatprep.subr.mxu0 0.0
    %9646 = vmatpush2.xpose.msra.mxu0 0.0
    %9647 = vmatprep.subr.mxu0 0.0
    %9648 = vmatpush2.xpose.msra.mxu0 0.0
    %9649 = vmatprep.subr.mxu0 0.0
    %9650 = vmatpush2.xpose.msra.mxu0 0.0
    %9651 = vmatprep.subr.mxu0 0.0
    %9652 = vmatpush2.xpose.msra.mxu0 0.0
    %9653 = vmatprep.subr.mxu0 0.0
    %9654 = vmatpush2.xpose.msra.mxu0 0.0
    %9655 = vmatprep.subr.mxu0 0.0
    %9656 = vmatpush2.xpose.msra.mxu0 0.0
    %9657 = vmatprep.subr.mxu0 0.0
    %9658 = vmatpush2.xpose.msra.mxu0 0.0
    %9659 = vmatprep.mubr.f32.mxu0 0.0
    %9660 = vmatmul.mubr.f32.gmra.mxu0 %v9593
    %v9661 = vpop.f32.mrf.mxu0
    %v9662 = vadd.f32 0.0, %v9661
    %v9663 = vpop.f32.mrf.mxu0
    %9664 = vdwg.mxu0
    %v9665 = vmul.f32 %v9158, 0.35355338
    %v9666 = vmul.f32 %v9230, 0.35355338
    %v9667 = vmul.f32 %v9302, 0.35355338
    %v9668 = vmul.f32 %v9374, 0.35355338
    %v9669 = vmul.f32 %v9446, 0.35355338
    %v9670 = vmul.f32 %v9518, 0.35355338
    %v9671 = vmul.f32 %v9590, 0.35355338
    %v9672 = vmul.f32 %v9662, 0.35355338
    %v9673 = vsel %vm486, %v9665, -inf
    %9674 = vmax.xlane.f32.xlu0 %v9673
    %v9675 = vpop.xlane.xlu0 %9674
    %v9676 = vsel %vm486, %v9666, -inf
    %9677 = vmax.xlane.f32.xlu0 %v9676
    %v9678 = vpop.xlane.xlu0 %9677
    %v9679 = vsel %vm486, %v9667, -inf
    %9680 = vmax.xlane.f32.xlu0 %v9679
    %v9681 = vpop.xlane.xlu0 %9680
    %v9682 = vsel %vm486, %v9668, -inf
    %9683 = vmax.xlane.f32.xlu0 %v9682
    %v9684 = vpop.xlane.xlu0 %9683
    %v9685 = vsel %vm486, %v9669, -inf
    %9686 = vmax.xlane.f32.xlu0 %v9685
    %v9687 = vpop.xlane.xlu0 %9686
    %v9688 = vsel %vm486, %v9670, -inf
    %9689 = vmax.xlane.f32.xlu0 %v9688
    %v9690 = vpop.xlane.xlu0 %9689
    %v9691 = vsel %vm486, %v9671, -inf
    %9692 = vmax.xlane.f32.xlu0 %v9691
    %v9693 = vpop.xlane.xlu0 %9692
    %v9694 = vsel %vm486, %v9672, -inf
    %9695 = vmax.xlane.f32.xlu0 %v9694
    %v9696 = vpop.xlane.xlu0 %9695
    %v9697 = vsub.f32 %v9665, %v9675
    %v9698 = vsub.f32 %v9666, %v9678
    %v9699 = vsub.f32 %v9667, %v9681
    %v9700 = vsub.f32 %v9668, %v9684
    %v9701 = vsub.f32 %v9669, %v9687
    %v9702 = vsub.f32 %v9670, %v9690
    %v9703 = vsub.f32 %v9671, %v9693
    %v9704 = vsub.f32 %v9672, %v9696
    %v9705 = vmul.f32 %v9697, 1.442695
    %v9706 = vpow.pop %v9705
    %v9707 = vmul.f32 %v9698, 1.442695
    %v9708 = vpow.pop %v9707
    %v9709 = vmul.f32 %v9699, 1.442695
    %v9710 = vpow.pop %v9709
    %v9711 = vmul.f32 %v9700, 1.442695
    %v9712 = vpow.pop %v9711
    %v9713 = vmul.f32 %v9701, 1.442695
    %v9714 = vpow.pop %v9713
    %v9715 = vmul.f32 %v9702, 1.442695
    %v9716 = vpow.pop %v9715
    %v9717 = vmul.f32 %v9703, 1.442695
    %v9718 = vpow.pop %v9717
    %v9719 = vmul.f32 %v9704, 1.442695
    %v9720 = vpow.pop %v9719
    %v9721 = vsel %vm486, %v9706, 0.0
    %9722 = vadd.xlane.f32.xlu0 %v9721
    %v9723 = vpop.xlane.xlu0 %9722
    %v9724 = vsel %vm486, %v9708, 0.0
    %9725 = vadd.xlane.f32.xlu0 %v9724
    %v9726 = vpop.xlane.xlu0 %9725
    %v9727 = vsel %vm486, %v9710, 0.0
    %9728 = vadd.xlane.f32.xlu0 %v9727
    %v9729 = vpop.xlane.xlu0 %9728
    %v9730 = vsel %vm486, %v9712, 0.0
    %9731 = vadd.xlane.f32.xlu0 %v9730
    %v9732 = vpop.xlane.xlu0 %9731
    %v9733 = vsel %vm486, %v9714, 0.0
    %9734 = vadd.xlane.f32.xlu0 %v9733
    %v9735 = vpop.xlane.xlu0 %9734
    %v9736 = vsel %vm486, %v9716, 0.0
    %9737 = vadd.xlane.f32.xlu0 %v9736
    %v9738 = vpop.xlane.xlu0 %9737
    %v9739 = vsel %vm486, %v9718, 0.0
    %9740 = vadd.xlane.f32.xlu0 %v9739
    %v9741 = vpop.xlane.xlu0 %9740
    %v9742 = vsel %vm486, %v9720, 0.0
    %9743 = vadd.xlane.f32.xlu0 %v9742
    %v9744 = vpop.xlane.xlu0 %9743
    %v9745 = vrcp.pop %v9723
    %v9746 = vrcp.pop %v9726
    %v9747 = vrcp.pop %v9729
    %v9748 = vrcp.pop %v9732
    %v9749 = vrcp.pop %v9735
    %v9750 = vrcp.pop %v9738
    %v9751 = vrcp.pop %v9741
    %v9752 = vrcp.pop %v9744
    %v9753 = vmul.f32 %v9706, %v9745
    %v9754 = vmul.f32 %v9708, %v9746
    %v9755 = vmul.f32 %v9710, %v9747
    %v9756 = vmul.f32 %v9712, %v9748
    %v9757 = vmul.f32 %v9714, %v9749
    %v9758 = vmul.f32 %v9716, %v9750
    %v9759 = vmul.f32 %v9718, %v9751
    %v9760 = vmul.f32 %v9720, %v9752
    %v9762 = vsel %vm486, %v9753, 0
    %9764 = vmatprep.subr.mxu0 0.0
    %9765 = vmatpush1.msra.mxu0 0.0
    %9766 = vmatprep.subr.mxu0 0.0
    %9767 = vmatpush1.msra.mxu0 0.0
    %9768 = vmatprep.subr.mxu0 0.0
    %9769 = vmatpush1.msra.mxu0 0.0
    %9770 = vmatprep.subr.mxu0 0.0
    %9771 = vmatpush1.msra.mxu0 0.0
    %9772 = vmatprep.subr.mxu0 0.0
    %9773 = vmatpush1.msra.mxu0 0.0
    %9774 = vmatprep.subr.mxu0 0.0
    %9775 = vmatpush1.msra.mxu0 0.0
    %9776 = vmatprep.subr.mxu0 0.0
    %9777 = vmatpush1.msra.mxu0 0.0
    %9778 = vmatprep.subr.mxu0 0.0
    %9779 = vmatpush1.msra.mxu0 0.0
    %9780 = vmatprep.subr.mxu0 0.0
    %9781 = vmatpush1.msra.mxu0 0.0
    %9782 = vmatprep.subr.mxu0 0.0
    %9783 = vmatpush1.msra.mxu0 0.0
    %9784 = vmatprep.subr.mxu0 0.0
    %9785 = vmatpush1.msra.mxu0 0.0
    %9786 = vmatprep.subr.mxu0 0.0
    %9787 = vmatpush1.msra.mxu0 0.0
    %9788 = vmatprep.subr.mxu0 0.0
    %9789 = vmatpush1.msra.mxu0 0.0
    %9790 = vmatprep.subr.mxu0 0.0
    %9791 = vmatpush1.msra.mxu0 0.0
    %9792 = vmatprep.subr.mxu0 0.0
    %9793 = vmatpush1.msra.mxu0 0.0
    %9794 = vmatprep.subr.mxu0 0.0
    %9795 = vmatpush1.msra.mxu0 %v6452
    %9796 = vmatprep.subr.mxu0 0.0
    %9797 = vmatpush2.msra.mxu0 0.0
    %9798 = vmatprep.subr.mxu0 0.0
    %9799 = vmatpush2.msra.mxu0 0.0
    %9800 = vmatprep.subr.mxu0 0.0
    %9801 = vmatpush2.msra.mxu0 0.0
    %9802 = vmatprep.subr.mxu0 0.0
    %9803 = vmatpush2.msra.mxu0 0.0
    %9804 = vmatprep.subr.mxu0 0.0
    %9805 = vmatpush2.msra.mxu0 0.0
    %9806 = vmatprep.subr.mxu0 0.0
    %9807 = vmatpush2.msra.mxu0 0.0
    %9808 = vmatprep.subr.mxu0 0.0
    %9809 = vmatpush2.msra.mxu0 0.0
    %9810 = vmatprep.subr.mxu0 0.0
    %9811 = vmatpush2.msra.mxu0 0.0
    %9812 = vmatprep.subr.mxu0 0.0
    %9813 = vmatpush2.msra.mxu0 0.0
    %9814 = vmatprep.subr.mxu0 0.0
    %9815 = vmatpush2.msra.mxu0 0.0
    %9816 = vmatprep.subr.mxu0 0.0
    %9817 = vmatpush2.msra.mxu0 0.0
    %9818 = vmatprep.subr.mxu0 0.0
    %9819 = vmatpush2.msra.mxu0 0.0
    %9820 = vmatprep.subr.mxu0 0.0
    %9821 = vmatpush2.msra.mxu0 0.0
    %9822 = vmatprep.subr.mxu0 0.0
    %9823 = vmatpush2.msra.mxu0 0.0
    %9824 = vmatprep.subr.mxu0 0.0
    %9825 = vmatpush2.msra.mxu0 0.0
    %9826 = vmatprep.subr.mxu0 0.0
    %9827 = vmatpush2.msra.mxu0 0.0
    %9828 = vmatprep.mubr.f32.mxu0 0.0
    %9829 = vmatmul.mubr.f32.gmra.mxu0 %v9762
    %v9830 = vpop.f32.mrf.mxu0
    %v9831 = vadd.f32 0.0, %v9830
    %v9832 = vpop.f32.mrf.mxu0
    %9833 = vdwg.mxu0
    %v9835 = vsel %vm486, %v9754, 0
    %9837 = vmatprep.subr.mxu0 0.0
    %9838 = vmatpush1.msra.mxu0 0.0
    %9839 = vmatprep.subr.mxu0 0.0
    %9840 = vmatpush1.msra.mxu0 0.0
    %9841 = vmatprep.subr.mxu0 0.0
    %9842 = vmatpush1.msra.mxu0 0.0
    %9843 = vmatprep.subr.mxu0 0.0
    %9844 = vmatpush1.msra.mxu0 0.0
    %9845 = vmatprep.subr.mxu0 0.0
    %9846 = vmatpush1.msra.mxu0 0.0
    %9847 = vmatprep.subr.mxu0 0.0
    %9848 = vmatpush1.msra.mxu0 0.0
    %9849 = vmatprep.subr.mxu0 0.0
    %9850 = vmatpush1.msra.mxu0 0.0
    %9851 = vmatprep.subr.mxu0 0.0
    %9852 = vmatpush1.msra.mxu0 0.0
    %9853 = vmatprep.subr.mxu0 0.0
    %9854 = vmatpush1.msra.mxu0 0.0
    %9855 = vmatprep.subr.mxu0 0.0
    %9856 = vmatpush1.msra.mxu0 0.0
    %9857 = vmatprep.subr.mxu0 0.0
    %9858 = vmatpush1.msra.mxu0 0.0
    %9859 = vmatprep.subr.mxu0 0.0
    %9860 = vmatpush1.msra.mxu0 0.0
    %9861 = vmatprep.subr.mxu0 0.0
    %9862 = vmatpush1.msra.mxu0 0.0
    %9863 = vmatprep.subr.mxu0 0.0
    %9864 = vmatpush1.msra.mxu0 0.0
    %9865 = vmatprep.subr.mxu0 0.0
    %9866 = vmatpush1.msra.mxu0 0.0
    %9867 = vmatprep.subr.mxu0 0.0
    %9868 = vmatpush1.msra.mxu0 %v6528
    %9869 = vmatprep.subr.mxu0 0.0
    %9870 = vmatpush2.msra.mxu0 0.0
    %9871 = vmatprep.subr.mxu0 0.0
    %9872 = vmatpush2.msra.mxu0 0.0
    %9873 = vmatprep.subr.mxu0 0.0
    %9874 = vmatpush2.msra.mxu0 0.0
    %9875 = vmatprep.subr.mxu0 0.0
    %9876 = vmatpush2.msra.mxu0 0.0
    %9877 = vmatprep.subr.mxu0 0.0
    %9878 = vmatpush2.msra.mxu0 0.0
    %9879 = vmatprep.subr.mxu0 0.0
    %9880 = vmatpush2.msra.mxu0 0.0
    %9881 = vmatprep.subr.mxu0 0.0
    %9882 = vmatpush2.msra.mxu0 0.0
    %9883 = vmatprep.subr.mxu0 0.0
    %9884 = vmatpush2.msra.mxu0 0.0
    %9885 = vmatprep.subr.mxu0 0.0
    %9886 = vmatpush2.msra.mxu0 0.0
    %9887 = vmatprep.subr.mxu0 0.0
    %9888 = vmatpush2.msra.mxu0 0.0
    %9889 = vmatprep.subr.mxu0 0.0
    %9890 = vmatpush2.msra.mxu0 0.0
    %9891 = vmatprep.subr.mxu0 0.0
    %9892 = vmatpush2.msra.mxu0 0.0
    %9893 = vmatprep.subr.mxu0 0.0
    %9894 = vmatpush2.msra.mxu0 0.0
    %9895 = vmatprep.subr.mxu0 0.0
    %9896 = vmatpush2.msra.mxu0 0.0
    %9897 = vmatprep.subr.mxu0 0.0
    %9898 = vmatpush2.msra.mxu0 0.0
    %9899 = vmatprep.subr.mxu0 0.0
    %9900 = vmatpush2.msra.mxu0 0.0
    %9901 = vmatprep.mubr.f32.mxu0 0.0
    %9902 = vmatmul.mubr.f32.gmra.mxu0 %v9835
    %v9903 = vpop.f32.mrf.mxu0
    %v9904 = vadd.f32 0.0, %v9903
    %v9905 = vpop.f32.mrf.mxu0
    %9906 = vdwg.mxu0
    %v9908 = vsel %vm486, %v9755, 0
    %9910 = vmatprep.subr.mxu0 0.0
    %9911 = vmatpush1.msra.mxu0 0.0
    %9912 = vmatprep.subr.mxu0 0.0
    %9913 = vmatpush1.msra.mxu0 0.0
    %9914 = vmatprep.subr.mxu0 0.0
    %9915 = vmatpush1.msra.mxu0 0.0
    %9916 = vmatprep.subr.mxu0 0.0
    %9917 = vmatpush1.msra.mxu0 0.0
    %9918 = vmatprep.subr.mxu0 0.0
    %9919 = vmatpush1.msra.mxu0 0.0
    %9920 = vmatprep.subr.mxu0 0.0
    %9921 = vmatpush1.msra.mxu0 0.0
    %9922 = vmatprep.subr.mxu0 0.0
    %9923 = vmatpush1.msra.mxu0 0.0
    %9924 = vmatprep.subr.mxu0 0.0
    %9925 = vmatpush1.msra.mxu0 0.0
    %9926 = vmatprep.subr.mxu0 0.0
    %9927 = vmatpush1.msra.mxu0 0.0
    %9928 = vmatprep.subr.mxu0 0.0
    %9929 = vmatpush1.msra.mxu0 0.0
    %9930 = vmatprep.subr.mxu0 0.0
    %9931 = vmatpush1.msra.mxu0 0.0
    %9932 = vmatprep.subr.mxu0 0.0
    %9933 = vmatpush1.msra.mxu0 0.0
    %9934 = vmatprep.subr.mxu0 0.0
    %9935 = vmatpush1.msra.mxu0 0.0
    %9936 = vmatprep.subr.mxu0 0.0
    %9937 = vmatpush1.msra.mxu0 0.0
    %9938 = vmatprep.subr.mxu0 0.0
    %9939 = vmatpush1.msra.mxu0 0.0
    %9940 = vmatprep.subr.mxu0 0.0
    %9941 = vmatpush1.msra.mxu0 %v6604
    %9942 = vmatprep.subr.mxu0 0.0
    %9943 = vmatpush2.msra.mxu0 0.0
    %9944 = vmatprep.subr.mxu0 0.0
    %9945 = vmatpush2.msra.mxu0 0.0
    %9946 = vmatprep.subr.mxu0 0.0
    %9947 = vmatpush2.msra.mxu0 0.0
    %9948 = vmatprep.subr.mxu0 0.0
    %9949 = vmatpush2.msra.mxu0 0.0
    %9950 = vmatprep.subr.mxu0 0.0
    %9951 = vmatpush2.msra.mxu0 0.0
    %9952 = vmatprep.subr.mxu0 0.0
    %9953 = vmatpush2.msra.mxu0 0.0
    %9954 = vmatprep.subr.mxu0 0.0
    %9955 = vmatpush2.msra.mxu0 0.0
    %9956 = vmatprep.subr.mxu0 0.0
    %9957 = vmatpush2.msra.mxu0 0.0
    %9958 = vmatprep.subr.mxu0 0.0
    %9959 = vmatpush2.msra.mxu0 0.0
    %9960 = vmatprep.subr.mxu0 0.0
    %9961 = vmatpush2.msra.mxu0 0.0
    %9962 = vmatprep.subr.mxu0 0.0
    %9963 = vmatpush2.msra.mxu0 0.0
    %9964 = vmatprep.subr.mxu0 0.0
    %9965 = vmatpush2.msra.mxu0 0.0
    %9966 = vmatprep.subr.mxu0 0.0
    %9967 = vmatpush2.msra.mxu0 0.0
    %9968 = vmatprep.subr.mxu0 0.0
    %9969 = vmatpush2.msra.mxu0 0.0
    %9970 = vmatprep.subr.mxu0 0.0
    %9971 = vmatpush2.msra.mxu0 0.0
    %9972 = vmatprep.subr.mxu0 0.0
    %9973 = vmatpush2.msra.mxu0 0.0
    %9974 = vmatprep.mubr.f32.mxu0 0.0
    %9975 = vmatmul.mubr.f32.gmra.mxu0 %v9908
    %v9976 = vpop.f32.mrf.mxu0
    %v9977 = vadd.f32 0.0, %v9976
    %v9978 = vpop.f32.mrf.mxu0
    %9979 = vdwg.mxu0
    %v9981 = vsel %vm486, %v9756, 0
    %9983 = vmatprep.subr.mxu0 0.0
    %9984 = vmatpush1.msra.mxu0 0.0
    %9985 = vmatprep.subr.mxu0 0.0
    %9986 = vmatpush1.msra.mxu0 0.0
    %9987 = vmatprep.subr.mxu0 0.0
    %9988 = vmatpush1.msra.mxu0 0.0
    %9989 = vmatprep.subr.mxu0 0.0
    %9990 = vmatpush1.msra.mxu0 0.0
    %9991 = vmatprep.subr.mxu0 0.0
    %9992 = vmatpush1.msra.mxu0 0.0
    %9993 = vmatprep.subr.mxu0 0.0
    %9994 = vmatpush1.msra.mxu0 0.0
    %9995 = vmatprep.subr.mxu0 0.0
    %9996 = vmatpush1.msra.mxu0 0.0
    %9997 = vmatprep.subr.mxu0 0.0
    %9998 = vmatpush1.msra.mxu0 0.0
    %9999 = vmatprep.subr.mxu0 0.0
    %10000 = vmatpush1.msra.mxu0 0.0
    %10001 = vmatprep.subr.mxu0 0.0
    %10002 = vmatpush1.msra.mxu0 0.0
    %10003 = vmatprep.subr.mxu0 0.0
    %10004 = vmatpush1.msra.mxu0 0.0
    %10005 = vmatprep.subr.mxu0 0.0
    %10006 = vmatpush1.msra.mxu0 0.0
    %10007 = vmatprep.subr.mxu0 0.0
    %10008 = vmatpush1.msra.mxu0 0.0
    %10009 = vmatprep.subr.mxu0 0.0
    %10010 = vmatpush1.msra.mxu0 0.0
    %10011 = vmatprep.subr.mxu0 0.0
    %10012 = vmatpush1.msra.mxu0 0.0
    %10013 = vmatprep.subr.mxu0 0.0
    %10014 = vmatpush1.msra.mxu0 %v6680
    %10015 = vmatprep.subr.mxu0 0.0
    %10016 = vmatpush2.msra.mxu0 0.0
    %10017 = vmatprep.subr.mxu0 0.0
    %10018 = vmatpush2.msra.mxu0 0.0
    %10019 = vmatprep.subr.mxu0 0.0
    %10020 = vmatpush2.msra.mxu0 0.0
    %10021 = vmatprep.subr.mxu0 0.0
    %10022 = vmatpush2.msra.mxu0 0.0
    %10023 = vmatprep.subr.mxu0 0.0
    %10024 = vmatpush2.msra.mxu0 0.0
    %10025 = vmatprep.subr.mxu0 0.0
    %10026 = vmatpush2.msra.mxu0 0.0
    %10027 = vmatprep.subr.mxu0 0.0
    %10028 = vmatpush2.msra.mxu0 0.0
    %10029 = vmatprep.subr.mxu0 0.0
    %10030 = vmatpush2.msra.mxu0 0.0
    %10031 = vmatprep.subr.mxu0 0.0
    %10032 = vmatpush2.msra.mxu0 0.0
    %10033 = vmatprep.subr.mxu0 0.0
    %10034 = vmatpush2.msra.mxu0 0.0
    %10035 = vmatprep.subr.mxu0 0.0
    %10036 = vmatpush2.msra.mxu0 0.0
    %10037 = vmatprep.subr.mxu0 0.0
    %10038 = vmatpush2.msra.mxu0 0.0
    %10039 = vmatprep.subr.mxu0 0.0
    %10040 = vmatpush2.msra.mxu0 0.0
    %10041 = vmatprep.subr.mxu0 0.0
    %10042 = vmatpush2.msra.mxu0 0.0
    %10043 = vmatprep.subr.mxu0 0.0
    %10044 = vmatpush2.msra.mxu0 0.0
    %10045 = vmatprep.subr.mxu0 0.0
    %10046 = vmatpush2.msra.mxu0 0.0
    %10047 = vmatprep.mubr.f32.mxu0 0.0
    %10048 = vmatmul.mubr.f32.gmra.mxu0 %v9981
    %v10049 = vpop.f32.mrf.mxu0
    %v10050 = vadd.f32 0.0, %v10049
    %v10051 = vpop.f32.mrf.mxu0
    %10052 = vdwg.mxu0
    %v10054 = vsel %vm486, %v9757, 0
    %10056 = vmatprep.subr.mxu0 0.0
    %10057 = vmatpush1.msra.mxu0 0.0
    %10058 = vmatprep.subr.mxu0 0.0
    %10059 = vmatpush1.msra.mxu0 0.0
    %10060 = vmatprep.subr.mxu0 0.0
    %10061 = vmatpush1.msra.mxu0 0.0
    %10062 = vmatprep.subr.mxu0 0.0
    %10063 = vmatpush1.msra.mxu0 0.0
    %10064 = vmatprep.subr.mxu0 0.0
    %10065 = vmatpush1.msra.mxu0 0.0
    %10066 = vmatprep.subr.mxu0 0.0
    %10067 = vmatpush1.msra.mxu0 0.0
    %10068 = vmatprep.subr.mxu0 0.0
    %10069 = vmatpush1.msra.mxu0 0.0
    %10070 = vmatprep.subr.mxu0 0.0
    %10071 = vmatpush1.msra.mxu0 0.0
    %10072 = vmatprep.subr.mxu0 0.0
    %10073 = vmatpush1.msra.mxu0 0.0
    %10074 = vmatprep.subr.mxu0 0.0
    %10075 = vmatpush1.msra.mxu0 0.0
    %10076 = vmatprep.subr.mxu0 0.0
    %10077 = vmatpush1.msra.mxu0 0.0
    %10078 = vmatprep.subr.mxu0 0.0
    %10079 = vmatpush1.msra.mxu0 0.0
    %10080 = vmatprep.subr.mxu0 0.0
    %10081 = vmatpush1.msra.mxu0 0.0
    %10082 = vmatprep.subr.mxu0 0.0
    %10083 = vmatpush1.msra.mxu0 0.0
    %10084 = vmatprep.subr.mxu0 0.0
    %10085 = vmatpush1.msra.mxu0 0.0
    %10086 = vmatprep.subr.mxu0 0.0
    %10087 = vmatpush1.msra.mxu0 %v6756
    %10088 = vmatprep.subr.mxu0 0.0
    %10089 = vmatpush2.msra.mxu0 0.0
    %10090 = vmatprep.subr.mxu0 0.0
    %10091 = vmatpush2.msra.mxu0 0.0
    %10092 = vmatprep.subr.mxu0 0.0
    %10093 = vmatpush2.msra.mxu0 0.0
    %10094 = vmatprep.subr.mxu0 0.0
    %10095 = vmatpush2.msra.mxu0 0.0
    %10096 = vmatprep.subr.mxu0 0.0
    %10097 = vmatpush2.msra.mxu0 0.0
    %10098 = vmatprep.subr.mxu0 0.0
    %10099 = vmatpush2.msra.mxu0 0.0
    %10100 = vmatprep.subr.mxu0 0.0
    %10101 = vmatpush2.msra.mxu0 0.0
    %10102 = vmatprep.subr.mxu0 0.0
    %10103 = vmatpush2.msra.mxu0 0.0
    %10104 = vmatprep.subr.mxu0 0.0
    %10105 = vmatpush2.msra.mxu0 0.0
    %10106 = vmatprep.subr.mxu0 0.0
    %10107 = vmatpush2.msra.mxu0 0.0
    %10108 = vmatprep.subr.mxu0 0.0
    %10109 = vmatpush2.msra.mxu0 0.0
    %10110 = vmatprep.subr.mxu0 0.0
    %10111 = vmatpush2.msra.mxu0 0.0
    %10112 = vmatprep.subr.mxu0 0.0
    %10113 = vmatpush2.msra.mxu0 0.0
    %10114 = vmatprep.subr.mxu0 0.0
    %10115 = vmatpush2.msra.mxu0 0.0
    %10116 = vmatprep.subr.mxu0 0.0
    %10117 = vmatpush2.msra.mxu0 0.0
    %10118 = vmatprep.subr.mxu0 0.0
    %10119 = vmatpush2.msra.mxu0 0.0
    %10120 = vmatprep.mubr.f32.mxu0 0.0
    %10121 = vmatmul.mubr.f32.gmra.mxu0 %v10054
    %v10122 = vpop.f32.mrf.mxu0
    %v10123 = vadd.f32 0.0, %v10122
    %v10124 = vpop.f32.mrf.mxu0
    %10125 = vdwg.mxu0
    %v10127 = vsel %vm486, %v9758, 0
    %10129 = vmatprep.subr.mxu0 0.0
    %10130 = vmatpush1.msra.mxu0 0.0
    %10131 = vmatprep.subr.mxu0 0.0
    %10132 = vmatpush1.msra.mxu0 0.0
    %10133 = vmatprep.subr.mxu0 0.0
    %10134 = vmatpush1.msra.mxu0 0.0
    %10135 = vmatprep.subr.mxu0 0.0
    %10136 = vmatpush1.msra.mxu0 0.0
    %10137 = vmatprep.subr.mxu0 0.0
    %10138 = vmatpush1.msra.mxu0 0.0
    %10139 = vmatprep.subr.mxu0 0.0
    %10140 = vmatpush1.msra.mxu0 0.0
    %10141 = vmatprep.subr.mxu0 0.0
    %10142 = vmatpush1.msra.mxu0 0.0
    %10143 = vmatprep.subr.mxu0 0.0
    %10144 = vmatpush1.msra.mxu0 0.0
    %10145 = vmatprep.subr.mxu0 0.0
    %10146 = vmatpush1.msra.mxu0 0.0
    %10147 = vmatprep.subr.mxu0 0.0
    %10148 = vmatpush1.msra.mxu0 0.0
    %10149 = vmatprep.subr.mxu0 0.0
    %10150 = vmatpush1.msra.mxu0 0.0
    %10151 = vmatprep.subr.mxu0 0.0
    %10152 = vmatpush1.msra.mxu0 0.0
    %10153 = vmatprep.subr.mxu0 0.0
    %10154 = vmatpush1.msra.mxu0 0.0
    %10155 = vmatprep.subr.mxu0 0.0
    %10156 = vmatpush1.msra.mxu0 0.0
    %10157 = vmatprep.subr.mxu0 0.0
    %10158 = vmatpush1.msra.mxu0 0.0
    %10159 = vmatprep.subr.mxu0 0.0
    %10160 = vmatpush1.msra.mxu0 %v6832
    %10161 = vmatprep.subr.mxu0 0.0
    %10162 = vmatpush2.msra.mxu0 0.0
    %10163 = vmatprep.subr.mxu0 0.0
    %10164 = vmatpush2.msra.mxu0 0.0
    %10165 = vmatprep.subr.mxu0 0.0
    %10166 = vmatpush2.msra.mxu0 0.0
    %10167 = vmatprep.subr.mxu0 0.0
    %10168 = vmatpush2.msra.mxu0 0.0
    %10169 = vmatprep.subr.mxu0 0.0
    %10170 = vmatpush2.msra.mxu0 0.0
    %10171 = vmatprep.subr.mxu0 0.0
    %10172 = vmatpush2.msra.mxu0 0.0
    %10173 = vmatprep.subr.mxu0 0.0
    %10174 = vmatpush2.msra.mxu0 0.0
    %10175 = vmatprep.subr.mxu0 0.0
    %10176 = vmatpush2.msra.mxu0 0.0
    %10177 = vmatprep.subr.mxu0 0.0
    %10178 = vmatpush2.msra.mxu0 0.0
    %10179 = vmatprep.subr.mxu0 0.0
    %10180 = vmatpush2.msra.mxu0 0.0
    %10181 = vmatprep.subr.mxu0 0.0
    %10182 = vmatpush2.msra.mxu0 0.0
    %10183 = vmatprep.subr.mxu0 0.0
    %10184 = vmatpush2.msra.mxu0 0.0
    %10185 = vmatprep.subr.mxu0 0.0
    %10186 = vmatpush2.msra.mxu0 0.0
    %10187 = vmatprep.subr.mxu0 0.0
    %10188 = vmatpush2.msra.mxu0 0.0
    %10189 = vmatprep.subr.mxu0 0.0
    %10190 = vmatpush2.msra.mxu0 0.0
    %10191 = vmatprep.subr.mxu0 0.0
    %10192 = vmatpush2.msra.mxu0 0.0
    %10193 = vmatprep.mubr.f32.mxu0 0.0
    %10194 = vmatmul.mubr.f32.gmra.mxu0 %v10127
    %v10195 = vpop.f32.mrf.mxu0
    %v10196 = vadd.f32 0.0, %v10195
    %v10197 = vpop.f32.mrf.mxu0
    %10198 = vdwg.mxu0
    %v10200 = vsel %vm486, %v9759, 0
    %10202 = vmatprep.subr.mxu0 0.0
    %10203 = vmatpush1.msra.mxu0 0.0
    %10204 = vmatprep.subr.mxu0 0.0
    %10205 = vmatpush1.msra.mxu0 0.0
    %10206 = vmatprep.subr.mxu0 0.0
    %10207 = vmatpush1.msra.mxu0 0.0
    %10208 = vmatprep.subr.mxu0 0.0
    %10209 = vmatpush1.msra.mxu0 0.0
    %10210 = vmatprep.subr.mxu0 0.0
    %10211 = vmatpush1.msra.mxu0 0.0
    %10212 = vmatprep.subr.mxu0 0.0
    %10213 = vmatpush1.msra.mxu0 0.0
    %10214 = vmatprep.subr.mxu0 0.0
    %10215 = vmatpush1.msra.mxu0 0.0
    %10216 = vmatprep.subr.mxu0 0.0
    %10217 = vmatpush1.msra.mxu0 0.0
    %10218 = vmatprep.subr.mxu0 0.0
    %10219 = vmatpush1.msra.mxu0 0.0
    %10220 = vmatprep.subr.mxu0 0.0
    %10221 = vmatpush1.msra.mxu0 0.0
    %10222 = vmatprep.subr.mxu0 0.0
    %10223 = vmatpush1.msra.mxu0 0.0
    %10224 = vmatprep.subr.mxu0 0.0
    %10225 = vmatpush1.msra.mxu0 0.0
    %10226 = vmatprep.subr.mxu0 0.0
    %10227 = vmatpush1.msra.mxu0 0.0
    %10228 = vmatprep.subr.mxu0 0.0
    %10229 = vmatpush1.msra.mxu0 0.0
    %10230 = vmatprep.subr.mxu0 0.0
    %10231 = vmatpush1.msra.mxu0 0.0
    %10232 = vmatprep.subr.mxu0 0.0
    %10233 = vmatpush1.msra.mxu0 %v6908
    %10234 = vmatprep.subr.mxu0 0.0
    %10235 = vmatpush2.msra.mxu0 0.0
    %10236 = vmatprep.subr.mxu0 0.0
    %10237 = vmatpush2.msra.mxu0 0.0
    %10238 = vmatprep.subr.mxu0 0.0
    %10239 = vmatpush2.msra.mxu0 0.0
    %10240 = vmatprep.subr.mxu0 0.0
    %10241 = vmatpush2.msra.mxu0 0.0
    %10242 = vmatprep.subr.mxu0 0.0
    %10243 = vmatpush2.msra.mxu0 0.0
    %10244 = vmatprep.subr.mxu0 0.0
    %10245 = vmatpush2.msra.mxu0 0.0
    %10246 = vmatprep.subr.mxu0 0.0
    %10247 = vmatpush2.msra.mxu0 0.0
    %10248 = vmatprep.subr.mxu0 0.0
    %10249 = vmatpush2.msra.mxu0 0.0
    %10250 = vmatprep.subr.mxu0 0.0
    %10251 = vmatpush2.msra.mxu0 0.0
    %10252 = vmatprep.subr.mxu0 0.0
    %10253 = vmatpush2.msra.mxu0 0.0
    %10254 = vmatprep.subr.mxu0 0.0
    %10255 = vmatpush2.msra.mxu0 0.0
    %10256 = vmatprep.subr.mxu0 0.0
    %10257 = vmatpush2.msra.mxu0 0.0
    %10258 = vmatprep.subr.mxu0 0.0
    %10259 = vmatpush2.msra.mxu0 0.0
    %10260 = vmatprep.subr.mxu0 0.0
    %10261 = vmatpush2.msra.mxu0 0.0
    %10262 = vmatprep.subr.mxu0 0.0
    %10263 = vmatpush2.msra.mxu0 0.0
    %10264 = vmatprep.subr.mxu0 0.0
    %10265 = vmatpush2.msra.mxu0 0.0
    %10266 = vmatprep.mubr.f32.mxu0 0.0
    %10267 = vmatmul.mubr.f32.gmra.mxu0 %v10200
    %v10268 = vpop.f32.mrf.mxu0
    %v10269 = vadd.f32 0.0, %v10268
    %v10270 = vpop.f32.mrf.mxu0
    %10271 = vdwg.mxu0
    %v10273 = vsel %vm486, %v9760, 0
    %10275 = vmatprep.subr.mxu0 0.0
    %10276 = vmatpush1.msra.mxu0 0.0
    %10277 = vmatprep.subr.mxu0 0.0
    %10278 = vmatpush1.msra.mxu0 0.0
    %10279 = vmatprep.subr.mxu0 0.0
    %10280 = vmatpush1.msra.mxu0 0.0
    %10281 = vmatprep.subr.mxu0 0.0
    %10282 = vmatpush1.msra.mxu0 0.0
    %10283 = vmatprep.subr.mxu0 0.0
    %10284 = vmatpush1.msra.mxu0 0.0
    %10285 = vmatprep.subr.mxu0 0.0
    %10286 = vmatpush1.msra.mxu0 0.0
    %10287 = vmatprep.subr.mxu0 0.0
    %10288 = vmatpush1.msra.mxu0 0.0
    %10289 = vmatprep.subr.mxu0 0.0
    %10290 = vmatpush1.msra.mxu0 0.0
    %10291 = vmatprep.subr.mxu0 0.0
    %10292 = vmatpush1.msra.mxu0 0.0
    %10293 = vmatprep.subr.mxu0 0.0
    %10294 = vmatpush1.msra.mxu0 0.0
    %10295 = vmatprep.subr.mxu0 0.0
    %10296 = vmatpush1.msra.mxu0 0.0
    %10297 = vmatprep.subr.mxu0 0.0
    %10298 = vmatpush1.msra.mxu0 0.0
    %10299 = vmatprep.subr.mxu0 0.0
    %10300 = vmatpush1.msra.mxu0 0.0
    %10301 = vmatprep.subr.mxu0 0.0
    %10302 = vmatpush1.msra.mxu0 0.0
    %10303 = vmatprep.subr.mxu0 0.0
    %10304 = vmatpush1.msra.mxu0 0.0
    %10305 = vmatprep.subr.mxu0 0.0
    %10306 = vmatpush1.msra.mxu0 %v6984
    %10307 = vmatprep.subr.mxu0 0.0
    %10308 = vmatpush2.msra.mxu0 0.0
    %10309 = vmatprep.subr.mxu0 0.0
    %10310 = vmatpush2.msra.mxu0 0.0
    %10311 = vmatprep.subr.mxu0 0.0
    %10312 = vmatpush2.msra.mxu0 0.0
    %10313 = vmatprep.subr.mxu0 0.0
    %10314 = vmatpush2.msra.mxu0 0.0
    %10315 = vmatprep.subr.mxu0 0.0
    %10316 = vmatpush2.msra.mxu0 0.0
    %10317 = vmatprep.subr.mxu0 0.0
    %10318 = vmatpush2.msra.mxu0 0.0
    %10319 = vmatprep.subr.mxu0 0.0
    %10320 = vmatpush2.msra.mxu0 0.0
    %10321 = vmatprep.subr.mxu0 0.0
    %10322 = vmatpush2.msra.mxu0 0.0
    %10323 = vmatprep.subr.mxu0 0.0
    %10324 = vmatpush2.msra.mxu0 0.0
    %10325 = vmatprep.subr.mxu0 0.0
    %10326 = vmatpush2.msra.mxu0 0.0
    %10327 = vmatprep.subr.mxu0 0.0
    %10328 = vmatpush2.msra.mxu0 0.0
    %10329 = vmatprep.subr.mxu0 0.0
    %10330 = vmatpush2.msra.mxu0 0.0
    %10331 = vmatprep.subr.mxu0 0.0
    %10332 = vmatpush2.msra.mxu0 0.0
    %10333 = vmatprep.subr.mxu0 0.0
    %10334 = vmatpush2.msra.mxu0 0.0
    %10335 = vmatprep.subr.mxu0 0.0
    %10336 = vmatpush2.msra.mxu0 0.0
    %10337 = vmatprep.subr.mxu0 0.0
    %10338 = vmatpush2.msra.mxu0 0.0
    %10339 = vmatprep.mubr.f32.mxu0 0.0
    %10340 = vmatmul.mubr.f32.gmra.mxu0 %v10273
    %v10341 = vpop.f32.mrf.mxu0
    %v10342 = vadd.f32 0.0, %v10341
    %v10343 = vpop.f32.mrf.mxu0
    %10344 = vdwg.mxu0
    %10347 = vrot.lane.b32.xlu0 %v9904, 8
    %v10348 = vpop.permute.xlu0 %10347
    %10349 = vrot.lane.b32.xlu0 %v10196, 8
    %v10350 = vpop.permute.xlu0 %10349
    %10355 = vrot.lane.b32.xlu0 %v9977, 16
    %v10356 = vpop.permute.xlu0 %10355
    %10357 = vrot.lane.b32.xlu0 %v10269, 16
    %v10358 = vpop.permute.xlu0 %10357
    %10363 = vrot.lane.b32.xlu0 %v10050, 24
    %v10364 = vpop.permute.xlu0 %10363
    %10365 = vrot.lane.b32.xlu0 %v10342, 24
    %v10366 = vpop.permute.xlu0 %10365
    %v10369 = vsel %vm486, %v9831, %v10348
    %v10370 = vsel %vm486, %v10123, %v10350
    %v10371 = vsel %vm1823, %v10369, %v10356
    %v10372 = vsel %vm1823, %v10370, %v10358
    %v10373 = vsel %vm1826, %v10371, %v10364
    %v10374 = vsel %vm1826, %v10372, %v10366
    %v10376 = vsel %vm388, %v10373, 0
    %v10379 = vsel %vm388, %v10374, 0
    %10381 = vmatprep.subr.mxu0 0.0
    %10382 = vmatpush1.msra.mxu0 0.0
    %10383 = vmatprep.subr.mxu0 0.0
    %10384 = vmatpush1.msra.mxu0 0.0
    %10385 = vmatprep.subr.mxu0 0.0
    %10386 = vmatpush1.msra.mxu0 0.0
    %10387 = vmatprep.subr.mxu0 0.0
    %10388 = vmatpush1.msra.mxu0 0.0
    %10389 = vmatprep.subr.mxu0 0.0
    %10390 = vmatpush1.msra.mxu0 0.0
    %10391 = vmatprep.subr.mxu0 0.0
    %10392 = vmatpush1.msra.mxu0 0.0
    %10393 = vmatprep.subr.mxu0 0.0
    %10394 = vmatpush1.msra.mxu0 0.0
    %10395 = vmatprep.subr.mxu0 0.0
    %10396 = vmatpush1.msra.mxu0 0.0
    %10397 = vmatprep.subr.mxu0 0.0
    %10398 = vmatpush1.msra.mxu0 0.0
    %10399 = vmatprep.subr.mxu0 0.0
    %10400 = vmatpush1.msra.mxu0 0.0
    %10401 = vmatprep.subr.mxu0 0.0
    %10402 = vmatpush1.msra.mxu0 0.0
    %10403 = vmatprep.subr.mxu0 0.0
    %10404 = vmatpush1.msra.mxu0 0.0
    %10405 = vmatprep.subr.mxu0 0.0
    %10406 = vmatpush1.msra.mxu0 %v3959
    %10407 = vmatprep.subr.mxu0 0.0
    %10408 = vmatpush1.msra.mxu0 %v3958
    %10409 = vmatprep.subr.mxu0 0.0
    %10410 = vmatpush1.msra.mxu0 %v3957
    %10411 = vmatprep.subr.mxu0 0.0
    %10412 = vmatpush1.msra.mxu0 %v3956
    %10413 = vmatprep.subr.mxu0 0.0
    %10414 = vmatpush2.msra.mxu0 0.0
    %10415 = vmatprep.subr.mxu0 0.0
    %10416 = vmatpush2.msra.mxu0 0.0
    %10417 = vmatprep.subr.mxu0 0.0
    %10418 = vmatpush2.msra.mxu0 0.0
    %10419 = vmatprep.subr.mxu0 0.0
    %10420 = vmatpush2.msra.mxu0 0.0
    %10421 = vmatprep.subr.mxu0 0.0
    %10422 = vmatpush2.msra.mxu0 0.0
    %10423 = vmatprep.subr.mxu0 0.0
    %10424 = vmatpush2.msra.mxu0 0.0
    %10425 = vmatprep.subr.mxu0 0.0
    %10426 = vmatpush2.msra.mxu0 0.0
    %10427 = vmatprep.subr.mxu0 0.0
    %10428 = vmatpush2.msra.mxu0 0.0
    %10429 = vmatprep.subr.mxu0 0.0
    %10430 = vmatpush2.msra.mxu0 0.0
    %10431 = vmatprep.subr.mxu0 0.0
    %10432 = vmatpush2.msra.mxu0 0.0
    %10433 = vmatprep.subr.mxu0 0.0
    %10434 = vmatpush2.msra.mxu0 0.0
    %10435 = vmatprep.subr.mxu0 0.0
    %10436 = vmatpush2.msra.mxu0 0.0
    %10437 = vmatprep.subr.mxu0 0.0
    %10438 = vmatpush2.msra.mxu0 0.0
    %10439 = vmatprep.subr.mxu0 0.0
    %10440 = vmatpush2.msra.mxu0 0.0
    %10441 = vmatprep.subr.mxu0 0.0
    %10442 = vmatpush2.msra.mxu0 0.0
    %10443 = vmatprep.subr.mxu0 0.0
    %10444 = vmatpush2.msra.mxu0 0.0
    %10445 = vmatprep.mubr.f32.mxu0 0.0
    %10446 = vmatmul.mubr.f32.gmra.mxu0 %v10376
    %v10447 = vpop.f32.mrf.mxu0
    %v10448 = vadd.f32 %v7093, %v10447
    %v10449 = vpop.f32.mrf.mxu0
    %10450 = vmatprep.mubr.f32.mxu0 0.0
    %10451 = vmatmul.mubr.f32.gmra.mxu0 %v10379
    %v10452 = vpop.f32.mrf.mxu0
    %v10453 = vadd.f32 %v7093, %v10452
    %v10454 = vpop.f32.mrf.mxu0
    %10455 = vdwg.mxu0
    %10456 = vst.msk [vmem:[#allocation39] sm:$0xff] %vm486, %v9753
    %10457 = vst.msk [vmem:[#allocation39 + $0x8] sm:$0xff] %vm486, %v9754
    %10458 = vst.msk [vmem:[#allocation39 + $0x10] sm:$0xff] %vm486, %v9755
    %10459 = vst.msk [vmem:[#allocation39 + $0x18] sm:$0xff] %vm486, %v9756
    %10460 = vst.msk [vmem:[#allocation39 + $0x20] sm:$0xff] %vm486, %v9757
    %10461 = vst.msk [vmem:[#allocation39 + $0x28] sm:$0xff] %vm486, %v9758
    %10462 = vst.msk [vmem:[#allocation39 + $0x30] sm:$0xff] %vm486, %v9759
    %10463 = vst.msk [vmem:[#allocation39 + $0x38] sm:$0xff] %vm486, %v9760
    %v10464 = vadd.f32 %v8992, %v10448
    %v10465 = vadd.f32 %v8993, %v10453
    %v10466 = vsel %vm388, %v10464, 0.0
    %10467 = vadd.xlane.f32.xlu0 %v10466
    %v10468 = vpop.xlane.xlu0 %10467
    %v10469 = vsel %vm388, %v10465, 0.0
    %10470 = vadd.xlane.f32.xlu0 %v10469
    %v10471 = vpop.xlane.xlu0 %10470
    %v10472 = vmul.f32 %v10468, %v1932
    %v10473 = vmul.f32 %v10471, %v1932
    %v10474 = vsub.f32 %v10464, %v10472
    %v10475 = vsub.f32 %v10465, %v10473
    %v10476 = vmul.f32 %v10474, %v10474
    %v10477 = vmul.f32 %v10475, %v10475
    %v10478 = vsel %vm388, %v10476, 0.0
    %10479 = vadd.xlane.f32.xlu0 %v10478
    %v10480 = vpop.xlane.xlu0 %10479
    %v10481 = vsel %vm388, %v10477, 0.0
    %10482 = vadd.xlane.f32.xlu0 %v10481
    %v10483 = vpop.xlane.xlu0 %10482
    %v10484 = vmul.f32 %v10480, %v1932
    %v10485 = vmul.f32 %v10483, %v1932
    %v10486 = vadd.f32 %v10484, 1e-05
    %v10487 = vadd.f32 %v10485, 1e-05
    %v10488 = vrsqrt.pop %v10486
    %v10489 = vrsqrt.pop %v10487
    %v10490 = vmul.f32 %v10474, %v10488
    %v10491 = vmul.f32 %v10475, %v10489
    %v10492 = vmul.f32 %v10490, %v7216
    %v10493 = vmul.f32 %v10491, %v7216
    %v10494 = vadd.f32 %v10492, %v7224
    %v10495 = vadd.f32 %v10493, %v7224
    %v10497 = vsel %vm388, %v10494, 0
    %v10500 = vsel %vm388, %v10495, 0
    %10502 = vmatprep.subr.mxu0 0.0
    %10503 = vmatpush1.msra.mxu0 0.0
    %10504 = vmatprep.subr.mxu0 0.0
    %10505 = vmatpush1.msra.mxu0 0.0
    %10506 = vmatprep.subr.mxu0 0.0
    %10507 = vmatpush1.msra.mxu0 0.0
    %10508 = vmatprep.subr.mxu0 0.0
    %10509 = vmatpush1.msra.mxu0 0.0
    %10510 = vmatprep.subr.mxu0 0.0
    %10511 = vmatpush1.msra.mxu0 0.0
    %10512 = vmatprep.subr.mxu0 0.0
    %10513 = vmatpush1.msra.mxu0 0.0
    %10514 = vmatprep.subr.mxu0 0.0
    %10515 = vmatpush1.msra.mxu0 0.0
    %10516 = vmatprep.subr.mxu0 0.0
    %10517 = vmatpush1.msra.mxu0 0.0
    %10518 = vmatprep.subr.mxu0 0.0
    %10519 = vmatpush1.msra.mxu0 0.0
    %10520 = vmatprep.subr.mxu0 0.0
    %10521 = vmatpush1.msra.mxu0 0.0
    %10522 = vmatprep.subr.mxu0 0.0
    %10523 = vmatpush1.msra.mxu0 0.0
    %10524 = vmatprep.subr.mxu0 0.0
    %10525 = vmatpush1.msra.mxu0 0.0
    %10526 = vmatprep.subr.mxu0 0.0
    %10527 = vmatpush1.msra.mxu0 %v3964
    %10528 = vmatprep.subr.mxu0 0.0
    %10529 = vmatpush1.msra.mxu0 %v3963
    %10530 = vmatprep.subr.mxu0 0.0
    %10531 = vmatpush1.msra.mxu0 %v3962
    %10532 = vmatprep.subr.mxu0 0.0
    %10533 = vmatpush1.msra.mxu0 %v3961
    %10534 = vmatprep.subr.mxu0 0.0
    %10535 = vmatpush2.msra.mxu0 0.0
    %10536 = vmatprep.subr.mxu0 0.0
    %10537 = vmatpush2.msra.mxu0 0.0
    %10538 = vmatprep.subr.mxu0 0.0
    %10539 = vmatpush2.msra.mxu0 0.0
    %10540 = vmatprep.subr.mxu0 0.0
    %10541 = vmatpush2.msra.mxu0 0.0
    %10542 = vmatprep.subr.mxu0 0.0
    %10543 = vmatpush2.msra.mxu0 0.0
    %10544 = vmatprep.subr.mxu0 0.0
    %10545 = vmatpush2.msra.mxu0 0.0
    %10546 = vmatprep.subr.mxu0 0.0
    %10547 = vmatpush2.msra.mxu0 0.0
    %10548 = vmatprep.subr.mxu0 0.0
    %10549 = vmatpush2.msra.mxu0 0.0
    %10550 = vmatprep.subr.mxu0 0.0
    %10551 = vmatpush2.msra.mxu0 0.0
    %10552 = vmatprep.subr.mxu0 0.0
    %10553 = vmatpush2.msra.mxu0 0.0
    %10554 = vmatprep.subr.mxu0 0.0
    %10555 = vmatpush2.msra.mxu0 0.0
    %10556 = vmatprep.subr.mxu0 0.0
    %10557 = vmatpush2.msra.mxu0 0.0
    %10558 = vmatprep.subr.mxu0 0.0
    %10559 = vmatpush2.msra.mxu0 0.0
    %10560 = vmatprep.subr.mxu0 0.0
    %10561 = vmatpush2.msra.mxu0 0.0
    %10562 = vmatprep.subr.mxu0 0.0
    %10563 = vmatpush2.msra.mxu0 0.0
    %10564 = vmatprep.subr.mxu0 0.0
    %10565 = vmatpush2.msra.mxu0 0.0
    %10566 = vmatprep.mubr.f32.mxu0 0.0
    %10567 = vmatmul.mubr.f32.gmra.mxu0 %v10497
    %v10568 = vpop.f32.mrf.mxu0
    %v10569 = vadd.f32 0.0, %v10568
    %v10570 = vpop.f32.mrf.mxu0
    %10571 = vmatprep.mubr.f32.mxu0 0.0
    %10572 = vmatmul.mubr.f32.gmra.mxu0 %v10500
    %v10573 = vpop.f32.mrf.mxu0
    %v10574 = vadd.f32 0.0, %v10573
    %v10575 = vpop.f32.mrf.mxu0
    %10576 = vdwg.mxu0
    %v10577 = vmax.f32 %v10569, 0.0
    %v10578 = vmax.f32 %v10574, 0.0
    %v10580 = vsel %vm2052, %v10577, 0
    %v10583 = vsel %vm2052, %v10578, 0
    %10585 = vmatprep.subr.mxu0 0.0
    %10586 = vmatpush1.msra.mxu0 0.0
    %10587 = vmatprep.subr.mxu0 0.0
    %10588 = vmatpush1.msra.mxu0 0.0
    %10589 = vmatprep.subr.mxu0 0.0
    %10590 = vmatpush1.msra.mxu0 0.0
    %10591 = vmatprep.subr.mxu0 0.0
    %10592 = vmatpush1.msra.mxu0 0.0
    %10593 = vmatprep.subr.mxu0 0.0
    %10594 = vmatpush1.msra.mxu0 0.0
    %10595 = vmatprep.subr.mxu0 0.0
    %10596 = vmatpush1.msra.mxu0 0.0
    %10597 = vmatprep.subr.mxu0 0.0
    %10598 = vmatpush1.msra.mxu0 0.0
    %10599 = vmatprep.subr.mxu0 0.0
    %10600 = vmatpush1.msra.mxu0 0.0
    %10601 = vmatprep.subr.mxu0 0.0
    %10602 = vmatpush1.msra.mxu0 %v3972
    %10603 = vmatprep.subr.mxu0 0.0
    %10604 = vmatpush1.msra.mxu0 %v3971
    %10605 = vmatprep.subr.mxu0 0.0
    %10606 = vmatpush1.msra.mxu0 %v3970
    %10607 = vmatprep.subr.mxu0 0.0
    %10608 = vmatpush1.msra.mxu0 %v3969
    %10609 = vmatprep.subr.mxu0 0.0
    %10610 = vmatpush1.msra.mxu0 %v3968
    %10611 = vmatprep.subr.mxu0 0.0
    %10612 = vmatpush1.msra.mxu0 %v3967
    %10613 = vmatprep.subr.mxu0 0.0
    %10614 = vmatpush1.msra.mxu0 %v3966
    %10615 = vmatprep.subr.mxu0 0.0
    %10616 = vmatpush1.msra.mxu0 %v3965
    %10617 = vmatprep.subr.mxu0 0.0
    %10618 = vmatpush2.msra.mxu0 0.0
    %10619 = vmatprep.subr.mxu0 0.0
    %10620 = vmatpush2.msra.mxu0 0.0
    %10621 = vmatprep.subr.mxu0 0.0
    %10622 = vmatpush2.msra.mxu0 0.0
    %10623 = vmatprep.subr.mxu0 0.0
    %10624 = vmatpush2.msra.mxu0 0.0
    %10625 = vmatprep.subr.mxu0 0.0
    %10626 = vmatpush2.msra.mxu0 0.0
    %10627 = vmatprep.subr.mxu0 0.0
    %10628 = vmatpush2.msra.mxu0 0.0
    %10629 = vmatprep.subr.mxu0 0.0
    %10630 = vmatpush2.msra.mxu0 0.0
    %10631 = vmatprep.subr.mxu0 0.0
    %10632 = vmatpush2.msra.mxu0 0.0
    %10633 = vmatprep.subr.mxu0 0.0
    %10634 = vmatpush2.msra.mxu0 0.0
    %10635 = vmatprep.subr.mxu0 0.0
    %10636 = vmatpush2.msra.mxu0 0.0
    %10637 = vmatprep.subr.mxu0 0.0
    %10638 = vmatpush2.msra.mxu0 0.0
    %10639 = vmatprep.subr.mxu0 0.0
    %10640 = vmatpush2.msra.mxu0 0.0
    %10641 = vmatprep.subr.mxu0 0.0
    %10642 = vmatpush2.msra.mxu0 0.0
    %10643 = vmatprep.subr.mxu0 0.0
    %10644 = vmatpush2.msra.mxu0 0.0
    %10645 = vmatprep.subr.mxu0 0.0
    %10646 = vmatpush2.msra.mxu0 0.0
    %10647 = vmatprep.subr.mxu0 0.0
    %10648 = vmatpush2.msra.mxu0 0.0
    %10649 = vmatprep.mubr.f32.mxu0 0.0
    %10650 = vmatmul.mubr.f32.gmra.mxu0 %v10580
    %v10651 = vpop.f32.mrf.mxu0
    %v10652 = vadd.f32 0.0, %v10651
    %v10653 = vpop.f32.mrf.mxu0
    %10654 = vmatprep.mubr.f32.mxu0 0.0
    %10655 = vmatmul.mubr.f32.gmra.mxu0 %v10583
    %v10656 = vpop.f32.mrf.mxu0
    %v10657 = vadd.f32 0.0, %v10656
    %v10658 = vpop.f32.mrf.mxu0
    %10659 = vdwg.mxu0
    %v10660 = vadd.f32 %v10494, %v10652
    %v10661 = vadd.f32 %v10495, %v10657
    %v10662 = vsel %vm388, %v10660, 0.0
    %10663 = vadd.xlane.f32.xlu0 %v10662
    %v10664 = vpop.xlane.xlu0 %10663
    %v10665 = vsel %vm388, %v10661, 0.0
    %10666 = vadd.xlane.f32.xlu0 %v10665
    %v10667 = vpop.xlane.xlu0 %10666
    %v10668 = vmul.f32 %v10664, %v1932
    %v10669 = vmul.f32 %v10667, %v1932
    %v10670 = vsub.f32 %v10660, %v10668
    %v10671 = vsub.f32 %v10661, %v10669
    %v10672 = vmul.f32 %v10670, %v10670
    %v10673 = vmul.f32 %v10671, %v10671
    %v10674 = vsel %vm388, %v10672, 0.0
    %10675 = vadd.xlane.f32.xlu0 %v10674
    %v10676 = vpop.xlane.xlu0 %10675
    %v10677 = vsel %vm388, %v10673, 0.0
    %10678 = vadd.xlane.f32.xlu0 %v10677
    %v10679 = vpop.xlane.xlu0 %10678
    %v10680 = vmul.f32 %v10676, %v1932
    %v10681 = vmul.f32 %v10679, %v1932
    %v10682 = vadd.f32 %v10680, 1e-05
    %v10683 = vadd.f32 %v10681, 1e-05
    %v10684 = vrsqrt.pop %v10682
    %v10685 = vrsqrt.pop %v10683
    %v10686 = vmul.f32 %v10670, %v10684
    %v10687 = vmul.f32 %v10671, %v10685
    %v10688 = vmul.f32 %v10686, %v7424
    %v10689 = vmul.f32 %v10687, %v7424
    %v10690 = vadd.f32 %v10688, %v7432
    %v10691 = vadd.f32 %v10689, %v7432
    %10692 = vst.msk [vmem:[#allocation30] sm:$0xff] %vm388, %v10690
    %10693 = vst.msk [vmem:[#allocation30 + $0x8] sm:$0xff] %vm388, %v10691
    // Predicated region
    $region190: #{transformer_fwd.1} parent=1 // pred_check
      _
    $region191: #{transformer_fwd.1} parent=1 // pred_check_branch
      %10695 = sbr.rel (0) target = $region193
    $region192: #{transformer_fwd.1} parent=1 // pred_region
      %s10697 = ssub.s32 256, 256
      %10698 = vsyncadd [#allocation4], %s10697
      %s10699 = sshll.u32 [#allocation29], 4
      %s10700 = int_to_ptr.vmem [resolvable:$true] %s10699
      %10705 = dma.vmem_to_hbm [thread:$0]  %s10700, 256, %s61, [#allocation4], 128, 128, 8
    $region193: #{transformer_fwd.1} parent=1 // pred_fallthru
      _
    // Predicated region
    $region194: #{transformer_fwd.1} parent=1 // pred_check
      _
    $region195: #{transformer_fwd.1} parent=1 // pred_check_branch
      %10707 = sbr.rel (0) target = $region197
    $region196: #{transformer_fwd.1} parent=1 // pred_region
      %s10709 = ssub.s32 256, 256
      %10710 = vsyncadd [#allocation31], %s10709
      %s10711 = sshll.u32 [#allocation30], 4
      %s10712 = int_to_ptr.vmem [resolvable:$true] %s10711
      %10717 = dma.vmem_to_hbm [thread:$0]  %s10712, 256, %s63, [#allocation31], 128, 128, 8
    $region197: #{transformer_fwd.1} parent=1 // pred_fallthru
      _
    // Predicated region
    $region198: #{transformer_fwd.1} parent=1 // pred_check
      _
    $region199: #{transformer_fwd.1} parent=1 // pred_check_branch
      %10719 = sbr.rel (0) target = $region201
    $region200: #{transformer_fwd.1} parent=1 // pred_region
      %s10721 = ssub.s32 1024, 1024
      %10722 = vsyncadd [#allocation31], %s10721
      %s10723 = sshll.u32 [#allocation32], 4
      %s10724 = int_to_ptr.vmem [resolvable:$true] %s10723
      %10729 = dma.vmem_to_hbm [thread:$0]  %s10724, 1024, %s65, [#allocation31], 128, 128, 8
    $region201: #{transformer_fwd.1} parent=1 // pred_fallthru
      _
    // Predicated region
    $region202: #{transformer_fwd.1} parent=1 // pred_check
      _
    $region203: #{transformer_fwd.1} parent=1 // pred_check_branch
      %10731 = sbr.rel (0) target = $region205
    $region204: #{transformer_fwd.1} parent=1 // pred_region
      %s10733 = ssub.s32 1024, 1024
      %10734 = vsyncadd [#allocation34], %s10733
      %s10735 = sshll.u32 [#allocation33], 4
      %s10736 = int_to_ptr.vmem [resolvable:$true] %s10735
      %10741 = dma.vmem_to_hbm [thread:$0]  %s10736, 1024, %s67, [#allocation34], 128, 128, 8
    $region205: #{transformer_fwd.1} parent=1 // pred_fallthru
      _
    // Predicated region
    $region206: #{transformer_fwd.1} parent=1 // pred_check
      _
    $region207: #{transformer_fwd.1} parent=1 // pred_check_branch
      %10743 = sbr.rel (0) target = $region209
    $region208: #{transformer_fwd.1} parent=1 // pred_region
      %s10745 = ssub.s32 1024, 1024
      %10746 = vsyncadd [#allocation34], %s10745
      %s10747 = sshll.u32 [#allocation35], 4
      %s10748 = int_to_ptr.vmem [resolvable:$true] %s10747
      %10753 = dma.vmem_to_hbm [thread:$0]  %s10748, 1024, %s69, [#allocation34], 128, 128, 8
    $region209: #{transformer_fwd.1} parent=1 // pred_fallthru
      _
    // Predicated region
    $region210: #{transformer_fwd.1} parent=1 // pred_check
      _
    $region211: #{transformer_fwd.1} parent=1 // pred_check_branch
      %10755 = sbr.rel (0) target = $region213
    $region212: #{transformer_fwd.1} parent=1 // pred_region
      %s10757 = ssub.s32 1024, 1024
      %10758 = vsyncadd [#allocation37], %s10757
      %s10759 = sshll.u32 [#allocation36], 4
      %s10760 = int_to_ptr.vmem [resolvable:$true] %s10759
      %10765 = dma.vmem_to_hbm [thread:$0]  %s10760, 1024, %s71, [#allocation37], 128, 128, 8
    $region213: #{transformer_fwd.1} parent=1 // pred_fallthru
      _
    // Predicated region
    $region214: #{transformer_fwd.1} parent=1 // pred_check
      _
    $region215: #{transformer_fwd.1} parent=1 // pred_check_branch
      %10767 = sbr.rel (0) target = $region217
    $region216: #{transformer_fwd.1} parent=1 // pred_region
      %s10769 = ssub.s32 1024, 1024
      %10770 = vsyncadd [#allocation37], %s10769
      %s10771 = sshll.u32 [#allocation38], 4
      %s10772 = int_to_ptr.vmem [resolvable:$true] %s10771
      %10777 = dma.vmem_to_hbm [thread:$0]  %s10772, 1024, %s73, [#allocation37], 128, 128, 8
    $region217: #{transformer_fwd.1} parent=1 // pred_fallthru
      _
    // Predicated region
    $region218: #{transformer_fwd.1} parent=1 // pred_check
      _
    $region219: #{transformer_fwd.1} parent=1 // pred_check_branch
      %10779 = sbr.rel (0) target = $region221
    $region220: #{transformer_fwd.1} parent=1 // pred_region
      %s10781 = ssub.s32 1024, 1024
      %10782 = vsyncadd [#allocation40], %s10781
      %s10783 = sshll.u32 [#allocation39], 4
      %s10784 = int_to_ptr.vmem [resolvable:$true] %s10783
      %10789 = dma.vmem_to_hbm [thread:$0]  %s10784, 1024, %s75, [#allocation40], 128, 128, 8
    $region221: #{transformer_fwd.1} parent=1 // pred_fallthru
      _
    // Predicated region
    $region222: #{transformer_fwd.1} parent=1 // pred_check
      _
    $region223: #{transformer_fwd.1} parent=1 // pred_check_branch
      %10791 = sbr.rel (0) target = $region225
    $region224: #{transformer_fwd.1} parent=1 // pred_region
      %10792 = dma.done [#allocation4], 256
    $region225: #{transformer_fwd.1} parent=1 // pred_fallthru
      _
    // Predicated region
    $region226: #{transformer_fwd.1} parent=1 // pred_check
      _
    $region227: #{transformer_fwd.1} parent=1 // pred_check_branch
      %10794 = sbr.rel (0) target = $region229
    $region228: #{transformer_fwd.1} parent=1 // pred_region
      %10795 = dma.done [#allocation31], 256
    $region229: #{transformer_fwd.1} parent=1 // pred_fallthru
      _
    // Predicated region
    $region230: #{transformer_fwd.1} parent=1 // pred_check
      _
    $region231: #{transformer_fwd.1} parent=1 // pred_check_branch
      %10797 = sbr.rel (0) target = $region233
    $region232: #{transformer_fwd.1} parent=1 // pred_region
      %10798 = dma.done [#allocation31], 1024
    $region233: #{transformer_fwd.1} parent=1 // pred_fallthru
      _
    // Predicated region
    $region234: #{transformer_fwd.1} parent=1 // pred_check
      _
    $region235: #{transformer_fwd.1} parent=1 // pred_check_branch
      %10800 = sbr.rel (0) target = $region237
    $region236: #{transformer_fwd.1} parent=1 // pred_region
      %10801 = dma.done [#allocation34], 1024
    $region237: #{transformer_fwd.1} parent=1 // pred_fallthru
      _
    // Predicated region
    $region238: #{transformer_fwd.1} parent=1 // pred_check
      _
    $region239: #{transformer_fwd.1} parent=1 // pred_check_branch
      %10803 = sbr.rel (0) target = $region241
    $region240: #{transformer_fwd.1} parent=1 // pred_region
      %10804 = dma.done [#allocation34], 1024
    $region241: #{transformer_fwd.1} parent=1 // pred_fallthru
      _
    // Predicated region
    $region242: #{transformer_fwd.1} parent=1 // pred_check
      _
    $region243: #{transformer_fwd.1} parent=1 // pred_check_branch
      %10806 = sbr.rel (0) target = $region245
    $region244: #{transformer_fwd.1} parent=1 // pred_region
      %10807 = dma.done [#allocation37], 1024
    $region245: #{transformer_fwd.1} parent=1 // pred_fallthru
      _
    // Predicated region
    $region246: #{transformer_fwd.1} parent=1 // pred_check
      _
    $region247: #{transformer_fwd.1} parent=1 // pred_check_branch
      %10809 = sbr.rel (0) target = $region249
    $region248: #{transformer_fwd.1} parent=1 // pred_region
      %10810 = dma.done [#allocation37], 1024
    $region249: #{transformer_fwd.1} parent=1 // pred_fallthru
      _
    // Predicated region
    $region250: #{transformer_fwd.1} parent=1 // pred_check
      _
    $region251: #{transformer_fwd.1} parent=1 // pred_check_branch
      %10812 = sbr.rel (0) target = $region253
    $region252: #{transformer_fwd.1} parent=1 // pred_region
      %10813 = dma.done [#allocation40], 1024
    $region253: #{transformer_fwd.1} parent=1 // pred_fallthru
      _
    %10814 = vsyncpa [#allocation3], 1
    %10815 = vsyncpa [#allocation6], 1
    %10816 = vsyncpa [#allocation9], 1
    %10817 = vsyncpa [#allocation12], 1
    %10818 = vsyncpa [#allocation15], 1
    %10819 = vsyncpa [#allocation18], 1
    %10820 = vsyncpa [#allocation21], 1
    %10821 = vsyncpa [#allocation24], 1
    %10822 = vsyncpa [#allocation27], 1
    %10823 = vsyncpa [#allocation4], 1
    %10824 = vsyncpa [#allocation31], 1
    %10825 = vsyncpa [#allocation34], 1
    %10826 = vsyncpa [#allocation37], 1
    %10827 = vsyncpa [#allocation40], 1

</llo_original>
